<compile_context>
chip_gen: v7x
topology: tpu7x:2x2x1
jax: 0.10.0
libtpu: 0.0.40
codegen_flags: <defaults>
</compile_context>

<pallas_src>
import functools

import jax
import jax.numpy as jnp
from jax.experimental import pallas as pl
from jax.experimental.pallas import tpu as pltpu

C_PAD = 128   # lane-dense padded output-channel count
K_SIZE = 4    # conv kernel size
KK = K_SIZE * K_SIZE


def _round_up(x, m):
    return (x + m - 1) // m * m


# --------------------------------------------------------------------------
# Pallas kernels
# --------------------------------------------------------------------------
def _layer_kernel(p_ref, w_ref, g_ref, be_ref, o_ref, sum_ref, ssq_ref, *,
                  inv_m, eps, slope):
    """Conv(as matmul) + BatchNorm(batch stats) + LeakyReLU, M tiled.

    grid = (2, T): phase 0 accumulates per-channel sum / sum-of-squares over
    all M tiles into VMEM scratch; phase 1 recomputes the conv tile and
    applies the folded BN scale/shift + LeakyReLU, storing bf16.
    """
    phase = pl.program_id(0)
    tile = pl.program_id(1)

    # bf16 x bf16 -> f32 accumulate on the MXU.  (Conv bias dropped: it is
    # cancelled exactly by the BN mean subtraction.)
    x = jnp.dot(p_ref[...], w_ref[...], preferred_element_type=jnp.float32)

    @pl.when(jnp.logical_and(phase == 0, tile == 0))
    def _():
        sum_ref[...] = jnp.zeros_like(sum_ref)
        ssq_ref[...] = jnp.zeros_like(ssq_ref)

    @pl.when(phase == 0)
    def _():
        sum_ref[...] += jnp.sum(x, axis=0, keepdims=True)
        ssq_ref[...] += jnp.sum(x * x, axis=0, keepdims=True)

    @pl.when(phase == 1)
    def _():
        mean = sum_ref[...] * inv_m
        var = jnp.maximum(ssq_ref[...] * inv_m - mean * mean, 0.0)
        scale = g_ref[...] * jax.lax.rsqrt(var + eps)
        shift = be_ref[...] - mean * scale
        y = x * scale + shift
        o_ref[...] = jnp.where(y > 0, y, slope * y).astype(o_ref.dtype)


def _last_layer_kernel(p_ref, w_ref, g_ref, be_ref, wf_ref, bf_ref, o_ref, *,
                       inv_m, eps, slope, n, kk):
    # Layer 4: conv + BN (folded scale/shift, clamped variance) + LeakyReLU.
    x = jnp.dot(p_ref[...], w_ref[...], preferred_element_type=jnp.float32)
    mean = jnp.sum(x, axis=0, keepdims=True) * inv_m
    var = jnp.maximum(
        jnp.sum(x * x, axis=0, keepdims=True) * inv_m - mean * mean, 0.0)
    scale = g_ref[...] * jax.lax.rsqrt(var + eps)
    shift = be_ref[...] - mean * scale
    y = x * scale + shift
    y = jnp.where(y > 0, y, slope * y)                      # (n*kk, C_PAD) f32
    # Finisher epilogue: 4x4 valid conv == per-sample weighted sum over
    # (kk, C) + bias, then sigmoid.  Rows of y are ordered (n, kh*4+kw);
    # wf_ref is (kk, C_PAD) in the same order with padded channels zeroed.
    y3 = y.reshape(n, kk, C_PAD)
    t = jnp.sum(y3 * wf_ref[...][None, :, :], axis=2)       # (n, kk)
    z = jnp.sum(t, axis=1, keepdims=True) + bf_ref[...]     # (n, 1)
    o_ref[...] = jax.nn.sigmoid(z)


# --------------------------------------------------------------------------
# Pallas wrappers
# --------------------------------------------------------------------------
def fused_layer(patches, w, gamma, beta, *, eps=1e-5, slope=0.2, tile_m=1024):
    """patches: (M, K) bf16, w: (K, C_PAD) bf16, gamma/beta: (1, C_PAD) f32.

    Returns (M, C_PAD) bf16 = LeakyReLU(BN(conv)).  M is zero-padded to a
    multiple of the tile size; padded rows contribute exactly 0 to the BN
    sums (no conv bias) and are sliced off again.
    """
    M, K = patches.shape
    TM = min(tile_m, _round_up(M, 8))
    M_pad = _round_up(M, TM)
    if M_pad != M:
        patches = jnp.pad(patches, ((0, M_pad - M), (0, 0)))
    T = M_pad // TM
    kern = functools.partial(_layer_kernel, inv_m=1.0 / M, eps=eps, slope=slope)
    out = pl.pallas_call(
        kern,
        out_shape=jax.ShapeDtypeStruct((M_pad, C_PAD), jnp.bfloat16),
        grid=(2, T),
        in_specs=[
            pl.BlockSpec((TM, K), lambda p, t: (t, 0)),
            pl.BlockSpec((K, C_PAD), lambda p, t: (0, 0)),
            pl.BlockSpec((1, C_PAD), lambda p, t: (0, 0)),
            pl.BlockSpec((1, C_PAD), lambda p, t: (0, 0)),
        ],
        # p*t: during the stats phase every step maps to block 0 (never
        # written, never flushed); during phase 1 blocks 0..T-1 are each
        # written exactly once -> one lane-dense writeback per output tile.
        out_specs=pl.BlockSpec((TM, C_PAD), lambda p, t: (p * t, 0)),
        scratch_shapes=[pltpu.VMEM((1, C_PAD), jnp.float32),
                        pltpu.VMEM((1, C_PAD), jnp.float32)],
        compiler_params=pltpu.CompilerParams(
            dimension_semantics=("arbitrary", "arbitrary")),
    )(patches, w, gamma, beta)
    return out[:M] if M_pad != M else out


def fused_last_layer(patches, w, gamma, beta, wf, bf, n, kk,
                     *, eps=1e-5, slope=0.2):
    """Layer-4 conv+BN+LReLU with the finisher (4x4 conv + sigmoid) fused in."""
    M, K = patches.shape                     # M = n*kk (tiny), full-M block
    kern = functools.partial(
        _last_layer_kernel, inv_m=1.0 / M, eps=eps, slope=slope, n=n, kk=kk)
    return pl.pallas_call(
        kern,
        out_shape=jax.ShapeDtypeStruct((n, 1), jnp.float32),
        grid=(1,),
        in_specs=[
            pl.BlockSpec((M, K), lambda i: (0, 0)),
            pl.BlockSpec((K, C_PAD), lambda i: (0, 0)),
            pl.BlockSpec((1, C_PAD), lambda i: (0, 0)),
            pl.BlockSpec((1, C_PAD), lambda i: (0, 0)),
            pl.BlockSpec((kk, C_PAD), lambda i: (0, 0)),
            pl.BlockSpec((1, 1), lambda i: (0, 0)),
        ],
        out_specs=pl.BlockSpec((n, 1), lambda i: (0, 0)),
        compiler_params=pltpu.CompilerParams(
            dimension_semantics=("arbitrary",),
            vmem_limit_bytes=32 * 1024 * 1024),  # v5e scoped default is 16 MiB
    )(patches, w, gamma, beta, wf, bf)


# --------------------------------------------------------------------------
# Plain-JAX glue: im2col (NHWC), parameter setup, layer plumbing
# --------------------------------------------------------------------------
def im2col_nhwc(x, k=4, stride=2, pad=1):
    """x: (N, H, W, C) -> (N*Ho*Wo, k*k*C) with (kh, kw, c) column order."""
    N, H, W, C = x.shape
    Ho = (H + 2 * pad - k) // stride + 1
    Wo = (W + 2 * pad - k) // stride + 1
    xp = jnp.pad(x, ((0, 0), (pad, pad), (pad, pad), (0, 0))) if pad else x
    cols = []
    for kh in range(k):
        for kw in range(k):
            cols.append(
                xp[:, kh: kh + stride * Ho: stride,
                      kw: kw + stride * Wo: stride, :]
            )
    p = jnp.stack(cols, axis=3)                        # (N, Ho, Wo, k*k, C)
    return p.reshape(N * Ho * Wo, k * k * C), Ho, Wo


def init_params(key):
    layer_dims = [(3, 16), (16, 36), (36, 84), (84, 84)]
    params = []
    for cin, cout in layer_dims:
        key, kw_, kb_ = jax.random.split(key, 3)
        bound = 1.0 / float(cin * KK) ** 0.5
        params.append(
            dict(
                w=jax.random.uniform(kw_, (cout, cin, 4, 4), jnp.float32,
                                     -bound, bound),
                b=jax.random.uniform(kb_, (cout,), jnp.float32, -bound, bound),
                gamma=jnp.ones((cout,), jnp.float32),
                beta=jnp.zeros((cout,), jnp.float32),
            )
        )
    key, kw_, kb_ = jax.random.split(key, 3)
    bound = 1.0 / float(84 * KK) ** 0.5
    wf = jax.random.uniform(kw_, (1, 84, 4, 4), jnp.float32, -bound, bound)
    bf = jax.random.uniform(kb_, (1,), jnp.float32, -bound, bound)
    return params, (wf, bf)


def prepare_params(params, fin):
    """(kh, kw, cin_pad)-row matmul weights, Cout padded to 128, bf16 operands.

    The per-layer conv bias is intentionally dropped: with training-mode
    BatchNorm it is cancelled exactly by the mean subtraction.  BN params
    stay f32.  cin is padded to a multiple of 8 so K is a multiple of 128.
    """
    prepped = []
    for p in params:
        cout, cin = p["w"].shape[0], p["w"].shape[1]
        cin_pad = _round_up(cin, 8)
        w = jnp.pad(p["w"], ((0, 0), (0, cin_pad - cin), (0, 0), (0, 0)))
        wmat = w.transpose(2, 3, 1, 0).reshape(KK * cin_pad, cout)   # (K, Cout)
        wmat = jnp.pad(wmat, ((0, 0), (0, C_PAD - cout))).astype(jnp.bfloat16)
        prepped.append(
            dict(
                w=wmat,
                gamma=jnp.pad(p["gamma"], (0, C_PAD - cout)).reshape(1, C_PAD),
                beta=jnp.pad(p["beta"], (0, C_PAD - cout)).reshape(1, C_PAD),
            )
        )
    wf, bf = fin
    wf2 = wf[0].transpose(1, 2, 0).reshape(KK, 84)        # rows = kh*4+kw
    wf2 = jnp.pad(wf2, ((0, 0), (0, C_PAD - 84)))          # (16, C_PAD) f32
    bf2 = bf.reshape(1, 1)
    return prepped, (wf2, bf2)


def discriminator64(x_nchw, prepped, fin_prepped):
    """x_nchw: (N, 3, 64, 64) f32 -> (N, 1) sigmoid scores."""
    wf2, bf2 = fin_prepped
    n = x_nchw.shape[0]
    x = x_nchw.transpose(0, 2, 3, 1)                      # NHWC, once
    # Pad input channels 3 -> 8 once (zero channels match zero weight rows).
    x = jnp.pad(x, ((0, 0), (0, 0), (0, 0), (0, 8 - x.shape[-1])))
    num_layers = len(prepped)
    out = None
    for li, p in enumerate(prepped):
        cin_pad = p["w"].shape[0] // KK                   # static
        patches, ho, wo = im2col_nhwc(x[..., :cin_pad], k=4, stride=2, pad=1)
        if patches.dtype != jnp.bfloat16:                 # layer 1 only
            patches = patches.astype(jnp.bfloat16)
        if li < num_layers - 1:
            y = fused_layer(patches, p["w"], p["gamma"], p["beta"])
            x = y.reshape(n, ho, wo, C_PAD)               # bf16, padded ch == 0
        else:
            out = fused_last_layer(patches, p["w"], p["gamma"], p["beta"],
                                   wf2, bf2, n, ho * wo)
    return out


if __name__ == "__main__":
    key = jax.random.PRNGKey(0)
    kx, kp = jax.random.split(key)
    # Discriminator64 implies 64x64 RGB input; batch=2 keeps it small.
    x = jax.random.normal(kx, (2, 3, 64, 64), dtype=jnp.float32)
    params, fin = init_params(kp)
    prepped, fin_prepped = prepare_params(params, fin)

    fwd = jax.jit(discriminator64)
    out = jax.block_until_ready(fwd(x, prepped, fin_prepped))

    assert out.shape == (2, 1)
    assert bool(jnp.all(jnp.isfinite(out)))
    assert bool(jnp.all((out >= 0.0) & (out <= 1.0)))
    print("KERNEL_OK")
</pallas_src>

<mosaic_0001>
module attributes {stable_mosaic.version = 11 : i64} {
  func.func @_layer_kernel(%arg0: i32, %arg1: i32, %arg2: memref<1024x128xbf16, #tpu.memory_space<vmem>>, %arg3: memref<128x128xbf16, #tpu.memory_space<vmem>>, %arg4: memref<1x128xf32, #tpu.memory_space<vmem>>, %arg5: memref<1x128xf32, #tpu.memory_space<vmem>>, %arg6: memref<1024x128xbf16, #tpu.memory_space<vmem>>, %arg7: memref<1x128xf32, #tpu.memory_space<vmem>>, %arg8: memref<1x128xf32, #tpu.memory_space<vmem>>) attributes {dimension_semantics = [#tpu.dimension_semantics<arbitrary>, #tpu.dimension_semantics<arbitrary>], iteration_bounds = array<i64: 2, 2>, scalar_prefetch = 0 : i64, scratch_operands = 2 : i64, tpu.core_type = #tpu.core_type<tc>, window_params = [{transform_indices = @transform_0, window_bounds = array<i64: 1024, 128>}, {pipeline_mode = #tpu.pipeline_mode<synchronous>, transform_indices = @transform_1, window_bounds = array<i64: 128, 128>}, {pipeline_mode = #tpu.pipeline_mode<synchronous>, transform_indices = @transform_2, window_bounds = array<i64: 1, 128>}, {pipeline_mode = #tpu.pipeline_mode<synchronous>, transform_indices = @transform_3, window_bounds = array<i64: 1, 128>}, {transform_indices = @transform_4, window_bounds = array<i64: 1024, 128>}]} {
    %c0 = arith.constant 0 : index
    %c0_0 = arith.constant 0 : index
    %0 = vector.load %arg2[%c0, %c0_0] : memref<1024x128xbf16, #tpu.memory_space<vmem>>, vector<1024x128xbf16>
    %c0_1 = arith.constant 0 : index
    %c0_2 = arith.constant 0 : index
    %1 = vector.load %arg3[%c0_1, %c0_2] : memref<128x128xbf16, #tpu.memory_space<vmem>>, vector<128x128xbf16>
    %cst = arith.constant dense<0.000000e+00> : vector<1024x128xf32>
    %2 = tpu.matmul %0, %1, %cst {dimension_numbers = #tpu.dot_dimension_numbers<[1], [0], [0], [1], [0, 0, 1, 1], [], []>} : vector<1024x128xbf16>, vector<128x128xbf16>, vector<1024x128xf32> -> vector<1024x128xf32>
    %c0_i32 = arith.constant 0 : i32
    %3 = arith.cmpi eq, %arg0, %c0_i32 : i32
    %c0_i32_3 = arith.constant 0 : i32
    %4 = arith.cmpi eq, %arg1, %c0_i32_3 : i32
    %5 = arith.andi %3, %4 : i1
    %6 = arith.extui %5 : i1 to i32
    %c0_i32_4 = arith.constant 0 : i32
    %7 = arith.cmpi ne, %6, %c0_i32_4 : i32
    scf.if %7 {
      %cst_8 = arith.constant 0.000000e+00 : f32
      %14 = vector.broadcast %cst_8 : f32 to vector<1x128xf32>
      %c0_9 = arith.constant 0 : index
      %c0_10 = arith.constant 0 : index
      %15 = vector.load %arg7[%c0_9, %c0_10] : memref<1x128xf32, #tpu.memory_space<vmem>>, vector<1x128xf32>
      tpu.vector_store %arg7[%c0_9, %c0_10], %14 {strides = array<i32>} : memref<1x128xf32, #tpu.memory_space<vmem>>, vector<1x128xf32>,
      %cst_11 = arith.constant 0.000000e+00 : f32
      %16 = vector.broadcast %cst_11 : f32 to vector<1x128xf32>
      %c0_12 = arith.constant 0 : index
      %c0_13 = arith.constant 0 : index
      %17 = vector.load %arg8[%c0_12, %c0_13] : memref<1x128xf32, #tpu.memory_space<vmem>>, vector<1x128xf32>
      tpu.vector_store %arg8[%c0_12, %c0_13], %16 {strides = array<i32>} : memref<1x128xf32, #tpu.memory_space<vmem>>, vector<1x128xf32>,
    } else {
    }
    %c0_i32_5 = arith.constant 0 : i32
    %8 = arith.cmpi eq, %arg0, %c0_i32_5 : i32
    %9 = arith.extui %8 : i1 to i32
    %c0_i32_6 = arith.constant 0 : i32
    %10 = arith.cmpi ne, %9, %c0_i32_6 : i32
    scf.if %10 {
      %c0_8 = arith.constant 0 : index
      %c0_9 = arith.constant 0 : index
      %14 = vector.load %arg7[%c0_8, %c0_9] : memref<1x128xf32, #tpu.memory_space<vmem>>, vector<1x128xf32>
      %cst_10 = arith.constant dense<0.000000e+00> : vector<128xf32>
      %15 = vector.multi_reduction <add>, %2, %cst_10 [0] : vector<1024x128xf32> to vector<128xf32>
      %16 = vector.shape_cast %15 : vector<128xf32> to vector<1x128xf32>
      %17 = arith.addf %14, %16 : vector<1x128xf32>
      %c0_11 = arith.constant 0 : index
      %c0_12 = arith.constant 0 : index
      %18 = vector.load %arg7[%c0_11, %c0_12] : memref<1x128xf32, #tpu.memory_space<vmem>>, vector<1x128xf32>
      tpu.vector_store %arg7[%c0_11, %c0_12], %17 {strides = array<i32>} : memref<1x128xf32, #tpu.memory_space<vmem>>, vector<1x128xf32>,
      %c0_13 = arith.constant 0 : index
      %c0_14 = arith.constant 0 : index
      %19 = vector.load %arg8[%c0_13, %c0_14] : memref<1x128xf32, #tpu.memory_space<vmem>>, vector<1x128xf32>
      %20 = arith.mulf %2, %2 : vector<1024x128xf32>
      %cst_15 = arith.constant dense<0.000000e+00> : vector<128xf32>
      %21 = vector.multi_reduction <add>, %20, %cst_15 [0] : vector<1024x128xf32> to vector<128xf32>
      %22 = vector.shape_cast %21 : vector<128xf32> to vector<1x128xf32>
      %23 = arith.addf %19, %22 : vector<1x128xf32>
      %c0_16 = arith.constant 0 : index
      %c0_17 = arith.constant 0 : index
      %24 = vector.load %arg8[%c0_16, %c0_17] : memref<1x128xf32, #tpu.memory_space<vmem>>, vector<1x128xf32>
      tpu.vector_store %arg8[%c0_16, %c0_17], %23 {strides = array<i32>} : memref<1x128xf32, #tpu.memory_space<vmem>>, vector<1x128xf32>,
    } else {
    }
    %c1_i32 = arith.constant 1 : i32
    %11 = arith.cmpi eq, %arg0, %c1_i32 : i32
    %12 = arith.extui %11 : i1 to i32
    %c0_i32_7 = arith.constant 0 : i32
    %13 = arith.cmpi ne, %12, %c0_i32_7 : i32
    scf.if %13 {
      %c0_8 = arith.constant 0 : index
      %c0_9 = arith.constant 0 : index
      %14 = vector.load %arg7[%c0_8, %c0_9] : memref<1x128xf32, #tpu.memory_space<vmem>>, vector<1x128xf32>
      %cst_10 = arith.constant 4.8828125E-4 : f32
      %15 = vector.broadcast %cst_10 : f32 to vector<1x128xf32>
      %16 = arith.mulf %14, %15 : vector<1x128xf32>
      %c0_11 = arith.constant 0 : index
      %c0_12 = arith.constant 0 : index
      %17 = vector.load %arg8[%c0_11, %c0_12] : memref<1x128xf32, #tpu.memory_space<vmem>>, vector<1x128xf32>
      %cst_13 = arith.constant 4.8828125E-4 : f32
      %18 = vector.broadcast %cst_13 : f32 to vector<1x128xf32>
      %19 = arith.mulf %17, %18 : vector<1x128xf32>
      %20 = arith.mulf %16, %16 : vector<1x128xf32>
      %21 = arith.subf %19, %20 : vector<1x128xf32>
      %cst_14 = arith.constant 0.000000e+00 : f32
      %22 = vector.broadcast %cst_14 : f32 to vector<1x128xf32>
      %23 = arith.maximumf %21, %22 : vector<1x128xf32>
      %c0_15 = arith.constant 0 : index
      %c0_16 = arith.constant 0 : index
      %24 = vector.load %arg4[%c0_15, %c0_16] : memref<1x128xf32, #tpu.memory_space<vmem>>, vector<1x128xf32>
      %cst_17 = arith.constant 9.99999974E-6 : f32
      %25 = vector.broadcast %cst_17 : f32 to vector<1x128xf32>
      %26 = arith.addf %23, %25 : vector<1x128xf32>
      %27 = math.rsqrt %26 : vector<1x128xf32>
      %28 = arith.mulf %24, %27 : vector<1x128xf32>
      %c0_18 = arith.constant 0 : index
      %c0_19 = arith.constant 0 : index
      %29 = vector.load %arg5[%c0_18, %c0_19] : memref<1x128xf32, #tpu.memory_space<vmem>>, vector<1x128xf32>
      %30 = arith.mulf %16, %28 : vector<1x128xf32>
      %31 = arith.subf %29, %30 : vector<1x128xf32>
      %32 = vector.broadcast %28 : vector<1x128xf32> to vector<1024x128xf32>
      %33 = arith.mulf %2, %32 : vector<1024x128xf32>
      %34 = vector.broadcast %31 : vector<1x128xf32> to vector<1024x128xf32>
      %35 = arith.addf %33, %34 : vector<1024x128xf32>
      %cst_20 = arith.constant 0.000000e+00 : f32
      %36 = vector.broadcast %cst_20 : f32 to vector<1024x128xf32>
      %37 = arith.cmpf ogt, %35, %36 : vector<1024x128xf32>
      %cst_21 = arith.constant 2.000000e-01 : f32
      %38 = vector.broadcast %cst_21 : f32 to vector<1024x128xf32>
      %39 = arith.mulf %38, %35 : vector<1024x128xf32>
      %40 = arith.select %37, %35, %39 : vector<1024x128xi1>, vector<1024x128xf32>
      %41 = arith.truncf %40 : vector<1024x128xf32> to vector<1024x128xbf16>
      %c0_22 = arith.constant 0 : index
      %c0_23 = arith.constant 0 : index
      %42 = vector.load %arg6[%c0_22, %c0_23] : memref<1024x128xbf16, #tpu.memory_space<vmem>>, vector<1024x128xbf16>
      tpu.vector_store %arg6[%c0_22, %c0_23], %41 {strides = array<i32>} : memref<1024x128xbf16, #tpu.memory_space<vmem>>, vector<1024x128xbf16>,
    } else {
    }
    return
  }
  func.func @transform_0(%arg0: i32, %arg1: i32) -> (i32, i32) {
    %c0_i32 = arith.constant 0 : i32
    %c0_i32_0 = arith.constant 0 : i32
    return %arg1, %c0_i32 : i32, i32
  }
  func.func @transform_1(%arg0: i32, %arg1: i32) -> (i32, i32) {
    %c0_i32 = arith.constant 0 : i32
    %c0_i32_0 = arith.constant 0 : i32
    %c0_i32_1 = arith.constant 0 : i32
    return %c0_i32, %c0_i32_0 : i32, i32
  }
  func.func @transform_2(%arg0: i32, %arg1: i32) -> (i32, i32) {
    %c0_i32 = arith.constant 0 : i32
    %c0_i32_0 = arith.constant 0 : i32
    %c0_i32_1 = arith.constant 0 : i32
    return %c0_i32, %c0_i32_0 : i32, i32
  }
  func.func @transform_3(%arg0: i32, %arg1: i32) -> (i32, i32) {
    %c0_i32 = arith.constant 0 : i32
    %c0_i32_0 = arith.constant 0 : i32
    %c0_i32_1 = arith.constant 0 : i32
    return %c0_i32, %c0_i32_0 : i32, i32
  }
  func.func @transform_4(%arg0: i32, %arg1: i32) -> (i32, i32) {
    %0 = arith.muli %arg0, %arg1 : i32
    %c0_i32 = arith.constant 0 : i32
    %c0_i32_0 = arith.constant 0 : i32
    return %0, %c0_i32 : i32, i32
  }
}

module attributes {stable_mosaic.version = 11 : i64} {
  func.func @_layer_kernel(%arg0: i32, %arg1: i32, %arg2: memref<512x256xbf16, #tpu.memory_space<vmem>>, %arg3: memref<256x128xbf16, #tpu.memory_space<vmem>>, %arg4: memref<1x128xf32, #tpu.memory_space<vmem>>, %arg5: memref<1x128xf32, #tpu.memory_space<vmem>>, %arg6: memref<512x128xbf16, #tpu.memory_space<vmem>>, %arg7: memref<1x128xf32, #tpu.memory_space<vmem>>, %arg8: memref<1x128xf32, #tpu.memory_space<vmem>>) attributes {dimension_semantics = [#tpu.dimension_semantics<arbitrary>, #tpu.dimension_semantics<arbitrary>], iteration_bounds = array<i64: 2, 1>, scalar_prefetch = 0 : i64, scratch_operands = 2 : i64, tpu.core_type = #tpu.core_type<tc>, window_params = [{transform_indices = @transform_0, window_bounds = array<i64: 512, 256>}, {pipeline_mode = #tpu.pipeline_mode<synchronous>, transform_indices = @transform_1, window_bounds = array<i64: 256, 128>}, {pipeline_mode = #tpu.pipeline_mode<synchronous>, transform_indices = @transform_2, window_bounds = array<i64: 1, 128>}, {pipeline_mode = #tpu.pipeline_mode<synchronous>, transform_indices = @transform_3, window_bounds = array<i64: 1, 128>}, {transform_indices = @transform_4, window_bounds = array<i64: 512, 128>}]} {
    %c0 = arith.constant 0 : index
    %c0_0 = arith.constant 0 : index
    %0 = vector.load %arg2[%c0, %c0_0] : memref<512x256xbf16, #tpu.memory_space<vmem>>, vector<512x256xbf16>
    %c0_1 = arith.constant 0 : index
    %c0_2 = arith.constant 0 : index
    %1 = vector.load %arg3[%c0_1, %c0_2] : memref<256x128xbf16, #tpu.memory_space<vmem>>, vector<256x128xbf16>
    %cst = arith.constant dense<0.000000e+00> : vector<512x128xf32>
    %2 = tpu.matmul %0, %1, %cst {dimension_numbers = #tpu.dot_dimension_numbers<[1], [0], [0], [1], [0, 0, 1, 1], [], []>} : vector<512x256xbf16>, vector<256x128xbf16>, vector<512x128xf32> -> vector<512x128xf32>
    %c0_i32 = arith.constant 0 : i32
    %3 = arith.cmpi eq, %arg0, %c0_i32 : i32
    %c0_i32_3 = arith.constant 0 : i32
    %4 = arith.cmpi eq, %arg1, %c0_i32_3 : i32
    %5 = arith.andi %3, %4 : i1
    %6 = arith.extui %5 : i1 to i32
    %c0_i32_4 = arith.constant 0 : i32
    %7 = arith.cmpi ne, %6, %c0_i32_4 : i32
    scf.if %7 {
      %cst_8 = arith.constant 0.000000e+00 : f32
      %14 = vector.broadcast %cst_8 : f32 to vector<1x128xf32>
      %c0_9 = arith.constant 0 : index
      %c0_10 = arith.constant 0 : index
      %15 = vector.load %arg7[%c0_9, %c0_10] : memref<1x128xf32, #tpu.memory_space<vmem>>, vector<1x128xf32>
      tpu.vector_store %arg7[%c0_9, %c0_10], %14 {strides = array<i32>} : memref<1x128xf32, #tpu.memory_space<vmem>>, vector<1x128xf32>,
      %cst_11 = arith.constant 0.000000e+00 : f32
      %16 = vector.broadcast %cst_11 : f32 to vector<1x128xf32>
      %c0_12 = arith.constant 0 : index
      %c0_13 = arith.constant 0 : index
      %17 = vector.load %arg8[%c0_12, %c0_13] : memref<1x128xf32, #tpu.memory_space<vmem>>, vector<1x128xf32>
      tpu.vector_store %arg8[%c0_12, %c0_13], %16 {strides = array<i32>} : memref<1x128xf32, #tpu.memory_space<vmem>>, vector<1x128xf32>,
    } else {
    }
    %c0_i32_5 = arith.constant 0 : i32
    %8 = arith.cmpi eq, %arg0, %c0_i32_5 : i32
    %9 = arith.extui %8 : i1 to i32
    %c0_i32_6 = arith.constant 0 : i32
    %10 = arith.cmpi ne, %9, %c0_i32_6 : i32
    scf.if %10 {
      %c0_8 = arith.constant 0 : index
      %c0_9 = arith.constant 0 : index
      %14 = vector.load %arg7[%c0_8, %c0_9] : memref<1x128xf32, #tpu.memory_space<vmem>>, vector<1x128xf32>
      %cst_10 = arith.constant dense<0.000000e+00> : vector<128xf32>
      %15 = vector.multi_reduction <add>, %2, %cst_10 [0] : vector<512x128xf32> to vector<128xf32>
      %16 = vector.shape_cast %15 : vector<128xf32> to vector<1x128xf32>
      %17 = arith.addf %14, %16 : vector<1x128xf32>
      %c0_11 = arith.constant 0 : index
      %c0_12 = arith.constant 0 : index
      %18 = vector.load %arg7[%c0_11, %c0_12] : memref<1x128xf32, #tpu.memory_space<vmem>>, vector<1x128xf32>
      tpu.vector_store %arg7[%c0_11, %c0_12], %17 {strides = array<i32>} : memref<1x128xf32, #tpu.memory_space<vmem>>, vector<1x128xf32>,
      %c0_13 = arith.constant 0 : index
      %c0_14 = arith.constant 0 : index
      %19 = vector.load %arg8[%c0_13, %c0_14] : memref<1x128xf32, #tpu.memory_space<vmem>>, vector<1x128xf32>
      %20 = arith.mulf %2, %2 : vector<512x128xf32>
      %cst_15 = arith.constant dense<0.000000e+00> : vector<128xf32>
      %21 = vector.multi_reduction <add>, %20, %cst_15 [0] : vector<512x128xf32> to vector<128xf32>
      %22 = vector.shape_cast %21 : vector<128xf32> to vector<1x128xf32>
      %23 = arith.addf %19, %22 : vector<1x128xf32>
      %c0_16 = arith.constant 0 : index
      %c0_17 = arith.constant 0 : index
      %24 = vector.load %arg8[%c0_16, %c0_17] : memref<1x128xf32, #tpu.memory_space<vmem>>, vector<1x128xf32>
      tpu.vector_store %arg8[%c0_16, %c0_17], %23 {strides = array<i32>} : memref<1x128xf32, #tpu.memory_space<vmem>>, vector<1x128xf32>,
    } else {
    }
    %c1_i32 = arith.constant 1 : i32
    %11 = arith.cmpi eq, %arg0, %c1_i32 : i32
    %12 = arith.extui %11 : i1 to i32
    %c0_i32_7 = arith.constant 0 : i32
    %13 = arith.cmpi ne, %12, %c0_i32_7 : i32
    scf.if %13 {
      %c0_8 = arith.constant 0 : index
      %c0_9 = arith.constant 0 : index
      %14 = vector.load %arg7[%c0_8, %c0_9] : memref<1x128xf32, #tpu.memory_space<vmem>>, vector<1x128xf32>
      %cst_10 = arith.constant 0.001953125 : f32
      %15 = vector.broadcast %cst_10 : f32 to vector<1x128xf32>
      %16 = arith.mulf %14, %15 : vector<1x128xf32>
      %c0_11 = arith.constant 0 : index
      %c0_12 = arith.constant 0 : index
      %17 = vector.load %arg8[%c0_11, %c0_12] : memref<1x128xf32, #tpu.memory_space<vmem>>, vector<1x128xf32>
      %cst_13 = arith.constant 0.001953125 : f32
      %18 = vector.broadcast %cst_13 : f32 to vector<1x128xf32>
      %19 = arith.mulf %17, %18 : vector<1x128xf32>
      %20 = arith.mulf %16, %16 : vector<1x128xf32>
      %21 = arith.subf %19, %20 : vector<1x128xf32>
      %cst_14 = arith.constant 0.000000e+00 : f32
      %22 = vector.broadcast %cst_14 : f32 to vector<1x128xf32>
      %23 = arith.maximumf %21, %22 : vector<1x128xf32>
      %c0_15 = arith.constant 0 : index
      %c0_16 = arith.constant 0 : index
      %24 = vector.load %arg4[%c0_15, %c0_16] : memref<1x128xf32, #tpu.memory_space<vmem>>, vector<1x128xf32>
      %cst_17 = arith.constant 9.99999974E-6 : f32
      %25 = vector.broadcast %cst_17 : f32 to vector<1x128xf32>
      %26 = arith.addf %23, %25 : vector<1x128xf32>
      %27 = math.rsqrt %26 : vector<1x128xf32>
      %28 = arith.mulf %24, %27 : vector<1x128xf32>
      %c0_18 = arith.constant 0 : index
      %c0_19 = arith.constant 0 : index
      %29 = vector.load %arg5[%c0_18, %c0_19] : memref<1x128xf32, #tpu.memory_space<vmem>>, vector<1x128xf32>
      %30 = arith.mulf %16, %28 : vector<1x128xf32>
      %31 = arith.subf %29, %30 : vector<1x128xf32>
      %32 = vector.broadcast %28 : vector<1x128xf32> to vector<512x128xf32>
      %33 = arith.mulf %2, %32 : vector<512x128xf32>
      %34 = vector.broadcast %31 : vector<1x128xf32> to vector<512x128xf32>
      %35 = arith.addf %33, %34 : vector<512x128xf32>
      %cst_20 = arith.constant 0.000000e+00 : f32
      %36 = vector.broadcast %cst_20 : f32 to vector<512x128xf32>
      %37 = arith.cmpf ogt, %35, %36 : vector<512x128xf32>
      %cst_21 = arith.constant 2.000000e-01 : f32
      %38 = vector.broadcast %cst_21 : f32 to vector<512x128xf32>
      %39 = arith.mulf %38, %35 : vector<512x128xf32>
      %40 = arith.select %37, %35, %39 : vector<512x128xi1>, vector<512x128xf32>
      %41 = arith.truncf %40 : vector<512x128xf32> to vector<512x128xbf16>
      %c0_22 = arith.constant 0 : index
      %c0_23 = arith.constant 0 : index
      %42 = vector.load %arg6[%c0_22, %c0_23] : memref<512x128xbf16, #tpu.memory_space<vmem>>, vector<512x128xbf16>
      tpu.vector_store %arg6[%c0_22, %c0_23], %41 {strides = array<i32>} : memref<512x128xbf16, #tpu.memory_space<vmem>>, vector<512x128xbf16>,
    } else {
    }
    return
  }
  func.func @transform_0(%arg0: i32, %arg1: i32) -> (i32, i32) {
    %c0_i32 = arith.constant 0 : i32
    %c0_i32_0 = arith.constant 0 : i32
    return %arg1, %c0_i32 : i32, i32
  }
  func.func @transform_1(%arg0: i32, %arg1: i32) -> (i32, i32) {
    %c0_i32 = arith.constant 0 : i32
    %c0_i32_0 = arith.constant 0 : i32
    %c0_i32_1 = arith.constant 0 : i32
    return %c0_i32, %c0_i32_0 : i32, i32
  }
  func.func @transform_2(%arg0: i32, %arg1: i32) -> (i32, i32) {
    %c0_i32 = arith.constant 0 : i32
    %c0_i32_0 = arith.constant 0 : i32
    %c0_i32_1 = arith.constant 0 : i32
    return %c0_i32, %c0_i32_0 : i32, i32
  }
  func.func @transform_3(%arg0: i32, %arg1: i32) -> (i32, i32) {
    %c0_i32 = arith.constant 0 : i32
    %c0_i32_0 = arith.constant 0 : i32
    %c0_i32_1 = arith.constant 0 : i32
    return %c0_i32, %c0_i32_0 : i32, i32
  }
  func.func @transform_4(%arg0: i32, %arg1: i32) -> (i32, i32) {
    %0 = arith.muli %arg0, %arg1 : i32
    %c0_i32 = arith.constant 0 : i32
    %c0_i32_0 = arith.constant 0 : i32
    return %0, %c0_i32 : i32, i32
  }
}

module attributes {stable_mosaic.version = 11 : i64} {
  func.func @_layer_kernel(%arg0: i32, %arg1: i32, %arg2: memref<128x640xbf16, #tpu.memory_space<vmem>>, %arg3: memref<640x128xbf16, #tpu.memory_space<vmem>>, %arg4: memref<1x128xf32, #tpu.memory_space<vmem>>, %arg5: memref<1x128xf32, #tpu.memory_space<vmem>>, %arg6: memref<128x128xbf16, #tpu.memory_space<vmem>>, %arg7: memref<1x128xf32, #tpu.memory_space<vmem>>, %arg8: memref<1x128xf32, #tpu.memory_space<vmem>>) attributes {dimension_semantics = [#tpu.dimension_semantics<arbitrary>, #tpu.dimension_semantics<arbitrary>], iteration_bounds = array<i64: 2, 1>, scalar_prefetch = 0 : i64, scratch_operands = 2 : i64, tpu.core_type = #tpu.core_type<tc>, window_params = [{transform_indices = @transform_0, window_bounds = array<i64: 128, 640>}, {pipeline_mode = #tpu.pipeline_mode<synchronous>, transform_indices = @transform_1, window_bounds = array<i64: 640, 128>}, {pipeline_mode = #tpu.pipeline_mode<synchronous>, transform_indices = @transform_2, window_bounds = array<i64: 1, 128>}, {pipeline_mode = #tpu.pipeline_mode<synchronous>, transform_indices = @transform_3, window_bounds = array<i64: 1, 128>}, {transform_indices = @transform_4, window_bounds = array<i64: 128, 128>}]} {
    %c0 = arith.constant 0 : index
    %c0_0 = arith.constant 0 : index
    %0 = vector.load %arg2[%c0, %c0_0] : memref<128x640xbf16, #tpu.memory_space<vmem>>, vector<128x640xbf16>
    %c0_1 = arith.constant 0 : index
    %c0_2 = arith.constant 0 : index
    %1 = vector.load %arg3[%c0_1, %c0_2] : memref<640x128xbf16, #tpu.memory_space<vmem>>, vector<640x128xbf16>
    %cst = arith.constant dense<0.000000e+00> : vector<128x128xf32>
    %2 = tpu.matmul %0, %1, %cst {dimension_numbers = #tpu.dot_dimension_numbers<[1], [0], [0], [1], [0, 0, 1, 1], [], []>} : vector<128x640xbf16>, vector<640x128xbf16>, vector<128x128xf32> -> vector<128x128xf32>
    %c0_i32 = arith.constant 0 : i32
    %3 = arith.cmpi eq, %arg0, %c0_i32 : i32
    %c0_i32_3 = arith.constant 0 : i32
    %4 = arith.cmpi eq, %arg1, %c0_i32_3 : i32
    %5 = arith.andi %3, %4 : i1
    %6 = arith.extui %5 : i1 to i32
    %c0_i32_4 = arith.constant 0 : i32
    %7 = arith.cmpi ne, %6, %c0_i32_4 : i32
    scf.if %7 {
      %cst_8 = arith.constant 0.000000e+00 : f32
      %14 = vector.broadcast %cst_8 : f32 to vector<1x128xf32>
      %c0_9 = arith.constant 0 : index
      %c0_10 = arith.constant 0 : index
      %15 = vector.load %arg7[%c0_9, %c0_10] : memref<1x128xf32, #tpu.memory_space<vmem>>, vector<1x128xf32>
      tpu.vector_store %arg7[%c0_9, %c0_10], %14 {strides = array<i32>} : memref<1x128xf32, #tpu.memory_space<vmem>>, vector<1x128xf32>,
      %cst_11 = arith.constant 0.000000e+00 : f32
      %16 = vector.broadcast %cst_11 : f32 to vector<1x128xf32>
      %c0_12 = arith.constant 0 : index
      %c0_13 = arith.constant 0 : index
      %17 = vector.load %arg8[%c0_12, %c0_13] : memref<1x128xf32, #tpu.memory_space<vmem>>, vector<1x128xf32>
      tpu.vector_store %arg8[%c0_12, %c0_13], %16 {strides = array<i32>} : memref<1x128xf32, #tpu.memory_space<vmem>>, vector<1x128xf32>,
    } else {
    }
    %c0_i32_5 = arith.constant 0 : i32
    %8 = arith.cmpi eq, %arg0, %c0_i32_5 : i32
    %9 = arith.extui %8 : i1 to i32
    %c0_i32_6 = arith.constant 0 : i32
    %10 = arith.cmpi ne, %9, %c0_i32_6 : i32
    scf.if %10 {
      %c0_8 = arith.constant 0 : index
      %c0_9 = arith.constant 0 : index
      %14 = vector.load %arg7[%c0_8, %c0_9] : memref<1x128xf32, #tpu.memory_space<vmem>>, vector<1x128xf32>
      %cst_10 = arith.constant dense<0.000000e+00> : vector<128xf32>
      %15 = vector.multi_reduction <add>, %2, %cst_10 [0] : vector<128x128xf32> to vector<128xf32>
      %16 = vector.shape_cast %15 : vector<128xf32> to vector<1x128xf32>
      %17 = arith.addf %14, %16 : vector<1x128xf32>
      %c0_11 = arith.constant 0 : index
      %c0_12 = arith.constant 0 : index
      %18 = vector.load %arg7[%c0_11, %c0_12] : memref<1x128xf32, #tpu.memory_space<vmem>>, vector<1x128xf32>
      tpu.vector_store %arg7[%c0_11, %c0_12], %17 {strides = array<i32>} : memref<1x128xf32, #tpu.memory_space<vmem>>, vector<1x128xf32>,
      %c0_13 = arith.constant 0 : index
      %c0_14 = arith.constant 0 : index
      %19 = vector.load %arg8[%c0_13, %c0_14] : memref<1x128xf32, #tpu.memory_space<vmem>>, vector<1x128xf32>
      %20 = arith.mulf %2, %2 : vector<128x128xf32>
      %cst_15 = arith.constant dense<0.000000e+00> : vector<128xf32>
      %21 = vector.multi_reduction <add>, %20, %cst_15 [0] : vector<128x128xf32> to vector<128xf32>
      %22 = vector.shape_cast %21 : vector<128xf32> to vector<1x128xf32>
      %23 = arith.addf %19, %22 : vector<1x128xf32>
      %c0_16 = arith.constant 0 : index
      %c0_17 = arith.constant 0 : index
      %24 = vector.load %arg8[%c0_16, %c0_17] : memref<1x128xf32, #tpu.memory_space<vmem>>, vector<1x128xf32>
      tpu.vector_store %arg8[%c0_16, %c0_17], %23 {strides = array<i32>} : memref<1x128xf32, #tpu.memory_space<vmem>>, vector<1x128xf32>,
    } else {
    }
    %c1_i32 = arith.constant 1 : i32
    %11 = arith.cmpi eq, %arg0, %c1_i32 : i32
    %12 = arith.extui %11 : i1 to i32
    %c0_i32_7 = arith.constant 0 : i32
    %13 = arith.cmpi ne, %12, %c0_i32_7 : i32
    scf.if %13 {
      %c0_8 = arith.constant 0 : index
      %c0_9 = arith.constant 0 : index
      %14 = vector.load %arg7[%c0_8, %c0_9] : memref<1x128xf32, #tpu.memory_space<vmem>>, vector<1x128xf32>
      %cst_10 = arith.constant 7.812500e-03 : f32
      %15 = vector.broadcast %cst_10 : f32 to vector<1x128xf32>
      %16 = arith.mulf %14, %15 : vector<1x128xf32>
      %c0_11 = arith.constant 0 : index
      %c0_12 = arith.constant 0 : index
      %17 = vector.load %arg8[%c0_11, %c0_12] : memref<1x128xf32, #tpu.memory_space<vmem>>, vector<1x128xf32>
      %cst_13 = arith.constant 7.812500e-03 : f32
      %18 = vector.broadcast %cst_13 : f32 to vector<1x128xf32>
      %19 = arith.mulf %17, %18 : vector<1x128xf32>
      %20 = arith.mulf %16, %16 : vector<1x128xf32>
      %21 = arith.subf %19, %20 : vector<1x128xf32>
      %cst_14 = arith.constant 0.000000e+00 : f32
      %22 = vector.broadcast %cst_14 : f32 to vector<1x128xf32>
      %23 = arith.maximumf %21, %22 : vector<1x128xf32>
      %c0_15 = arith.constant 0 : index
      %c0_16 = arith.constant 0 : index
      %24 = vector.load %arg4[%c0_15, %c0_16] : memref<1x128xf32, #tpu.memory_space<vmem>>, vector<1x128xf32>
      %cst_17 = arith.constant 9.99999974E-6 : f32
      %25 = vector.broadcast %cst_17 : f32 to vector<1x128xf32>
      %26 = arith.addf %23, %25 : vector<1x128xf32>
      %27 = math.rsqrt %26 : vector<1x128xf32>
      %28 = arith.mulf %24, %27 : vector<1x128xf32>
      %c0_18 = arith.constant 0 : index
      %c0_19 = arith.constant 0 : index
      %29 = vector.load %arg5[%c0_18, %c0_19] : memref<1x128xf32, #tpu.memory_space<vmem>>, vector<1x128xf32>
      %30 = arith.mulf %16, %28 : vector<1x128xf32>
      %31 = arith.subf %29, %30 : vector<1x128xf32>
      %32 = vector.broadcast %28 : vector<1x128xf32> to vector<128x128xf32>
      %33 = arith.mulf %2, %32 : vector<128x128xf32>
      %34 = vector.broadcast %31 : vector<1x128xf32> to vector<128x128xf32>
      %35 = arith.addf %33, %34 : vector<128x128xf32>
      %cst_20 = arith.constant 0.000000e+00 : f32
      %36 = vector.broadcast %cst_20 : f32 to vector<128x128xf32>
      %37 = arith.cmpf ogt, %35, %36 : vector<128x128xf32>
      %cst_21 = arith.constant 2.000000e-01 : f32
      %38 = vector.broadcast %cst_21 : f32 to vector<128x128xf32>
      %39 = arith.mulf %38, %35 : vector<128x128xf32>
      %40 = arith.select %37, %35, %39 : vector<128x128xi1>, vector<128x128xf32>
      %41 = arith.truncf %40 : vector<128x128xf32> to vector<128x128xbf16>
      %c0_22 = arith.constant 0 : index
      %c0_23 = arith.constant 0 : index
      %42 = vector.load %arg6[%c0_22, %c0_23] : memref<128x128xbf16, #tpu.memory_space<vmem>>, vector<128x128xbf16>
      tpu.vector_store %arg6[%c0_22, %c0_23], %41 {strides = array<i32>} : memref<128x128xbf16, #tpu.memory_space<vmem>>, vector<128x128xbf16>,
    } else {
    }
    return
  }
  func.func @transform_0(%arg0: i32, %arg1: i32) -> (i32, i32) {
    %c0_i32 = arith.constant 0 : i32
    %c0_i32_0 = arith.constant 0 : i32
    return %arg1, %c0_i32 : i32, i32
  }
  func.func @transform_1(%arg0: i32, %arg1: i32) -> (i32, i32) {
    %c0_i32 = arith.constant 0 : i32
    %c0_i32_0 = arith.constant 0 : i32
    %c0_i32_1 = arith.constant 0 : i32
    return %c0_i32, %c0_i32_0 : i32, i32
  }
  func.func @transform_2(%arg0: i32, %arg1: i32) -> (i32, i32) {
    %c0_i32 = arith.constant 0 : i32
    %c0_i32_0 = arith.constant 0 : i32
    %c0_i32_1 = arith.constant 0 : i32
    return %c0_i32, %c0_i32_0 : i32, i32
  }
  func.func @transform_3(%arg0: i32, %arg1: i32) -> (i32, i32) {
    %c0_i32 = arith.constant 0 : i32
    %c0_i32_0 = arith.constant 0 : i32
    %c0_i32_1 = arith.constant 0 : i32
    return %c0_i32, %c0_i32_0 : i32, i32
  }
  func.func @transform_4(%arg0: i32, %arg1: i32) -> (i32, i32) {
    %0 = arith.muli %arg0, %arg1 : i32
    %c0_i32 = arith.constant 0 : i32
    %c0_i32_0 = arith.constant 0 : i32
    return %0, %c0_i32 : i32, i32
  }
}

module attributes {stable_mosaic.version = 11 : i64} {
  func.func @_last_layer_kernel(%arg0: i32, %arg1: memref<32x1408xbf16, #tpu.memory_space<vmem>>, %arg2: memref<1408x128xbf16, #tpu.memory_space<vmem>>, %arg3: memref<1x128xf32, #tpu.memory_space<vmem>>, %arg4: memref<1x128xf32, #tpu.memory_space<vmem>>, %arg5: memref<16x128xf32, #tpu.memory_space<vmem>>, %arg6: memref<1x1xf32, #tpu.memory_space<vmem>>, %arg7: memref<2x1xf32, #tpu.memory_space<vmem>>) attributes {dimension_semantics = [#tpu.dimension_semantics<arbitrary>], iteration_bounds = array<i64: 1>, scalar_prefetch = 0 : i64, scratch_operands = 0 : i64, tpu.core_type = #tpu.core_type<tc>, window_params = [{pipeline_mode = #tpu.pipeline_mode<synchronous>, transform_indices = @transform_0, window_bounds = array<i64: 32, 1408>}, {pipeline_mode = #tpu.pipeline_mode<synchronous>, transform_indices = @transform_1, window_bounds = array<i64: 1408, 128>}, {pipeline_mode = #tpu.pipeline_mode<synchronous>, transform_indices = @transform_2, window_bounds = array<i64: 1, 128>}, {pipeline_mode = #tpu.pipeline_mode<synchronous>, transform_indices = @transform_3, window_bounds = array<i64: 1, 128>}, {pipeline_mode = #tpu.pipeline_mode<synchronous>, transform_indices = @transform_4, window_bounds = array<i64: 16, 128>}, {pipeline_mode = #tpu.pipeline_mode<synchronous>, transform_indices = @transform_5, window_bounds = array<i64: 1, 1>}, {pipeline_mode = #tpu.pipeline_mode<synchronous>, transform_indices = @transform_6, window_bounds = array<i64: 2, 1>}]} {
    %c0 = arith.constant 0 : index
    %c0_0 = arith.constant 0 : index
    %0 = vector.load %arg1[%c0, %c0_0] : memref<32x1408xbf16, #tpu.memory_space<vmem>>, vector<32x1408xbf16>
    %c0_1 = arith.constant 0 : index
    %c0_2 = arith.constant 0 : index
    %1 = vector.load %arg2[%c0_1, %c0_2] : memref<1408x128xbf16, #tpu.memory_space<vmem>>, vector<1408x128xbf16>
    %cst = arith.constant dense<0.000000e+00> : vector<32x128xf32>
    %2 = tpu.matmul %0, %1, %cst {dimension_numbers = #tpu.dot_dimension_numbers<[1], [0], [0], [1], [0, 0, 1, 1], [], []>} : vector<32x1408xbf16>, vector<1408x128xbf16>, vector<32x128xf32> -> vector<32x128xf32>
    %cst_3 = arith.constant dense<0.000000e+00> : vector<128xf32>
    %3 = vector.multi_reduction <add>, %2, %cst_3 [0] : vector<32x128xf32> to vector<128xf32>
    %4 = vector.shape_cast %3 : vector<128xf32> to vector<1x128xf32>
    %cst_4 = arith.constant 3.125000e-02 : f32
    %5 = vector.broadcast %cst_4 : f32 to vector<1x128xf32>
    %6 = arith.mulf %4, %5 : vector<1x128xf32>
    %7 = arith.mulf %2, %2 : vector<32x128xf32>
    %cst_5 = arith.constant dense<0.000000e+00> : vector<128xf32>
    %8 = vector.multi_reduction <add>, %7, %cst_5 [0] : vector<32x128xf32> to vector<128xf32>
    %9 = vector.shape_cast %8 : vector<128xf32> to vector<1x128xf32>
    %cst_6 = arith.constant 3.125000e-02 : f32
    %10 = vector.broadcast %cst_6 : f32 to vector<1x128xf32>
    %11 = arith.mulf %9, %10 : vector<1x128xf32>
    %12 = arith.mulf %6, %6 : vector<1x128xf32>
    %13 = arith.subf %11, %12 : vector<1x128xf32>
    %cst_7 = arith.constant 0.000000e+00 : f32
    %14 = vector.broadcast %cst_7 : f32 to vector<1x128xf32>
    %15 = arith.maximumf %13, %14 : vector<1x128xf32>
    %c0_8 = arith.constant 0 : index
    %c0_9 = arith.constant 0 : index
    %16 = vector.load %arg3[%c0_8, %c0_9] : memref<1x128xf32, #tpu.memory_space<vmem>>, vector<1x128xf32>
    %cst_10 = arith.constant 9.99999974E-6 : f32
    %17 = vector.broadcast %cst_10 : f32 to vector<1x128xf32>
    %18 = arith.addf %15, %17 : vector<1x128xf32>
    %19 = math.rsqrt %18 : vector<1x128xf32>
    %20 = arith.mulf %16, %19 : vector<1x128xf32>
    %c0_11 = arith.constant 0 : index
    %c0_12 = arith.constant 0 : index
    %21 = vector.load %arg4[%c0_11, %c0_12] : memref<1x128xf32, #tpu.memory_space<vmem>>, vector<1x128xf32>
    %22 = arith.mulf %6, %20 : vector<1x128xf32>
    %23 = arith.subf %21, %22 : vector<1x128xf32>
    %24 = vector.broadcast %20 : vector<1x128xf32> to vector<32x128xf32>
    %25 = arith.mulf %2, %24 : vector<32x128xf32>
    %26 = vector.broadcast %23 : vector<1x128xf32> to vector<32x128xf32>
    %27 = arith.addf %25, %26 : vector<32x128xf32>
    %cst_13 = arith.constant 0.000000e+00 : f32
    %28 = vector.broadcast %cst_13 : f32 to vector<32x128xf32>
    %29 = arith.cmpf ogt, %27, %28 : vector<32x128xf32>
    %cst_14 = arith.constant 2.000000e-01 : f32
    %30 = vector.broadcast %cst_14 : f32 to vector<32x128xf32>
    %31 = arith.mulf %30, %27 : vector<32x128xf32>
    %32 = arith.select %29, %27, %31 : vector<32x128xi1>, vector<32x128xf32>
    %33 = vector.shape_cast %32 : vector<32x128xf32> to vector<2x16x128xf32>
    %c0_15 = arith.constant 0 : index
    %c0_16 = arith.constant 0 : index
    %34 = vector.load %arg5[%c0_15, %c0_16] : memref<16x128xf32, #tpu.memory_space<vmem>>, vector<16x128xf32>
    %35 = vector.shape_cast %34 : vector<16x128xf32> to vector<1x16x128xf32>
    %36 = vector.broadcast %35 : vector<1x16x128xf32> to vector<2x16x128xf32>
    %37 = arith.mulf %33, %36 : vector<2x16x128xf32>
    %cst_17 = arith.constant dense<0.000000e+00> : vector<2x16xf32>
    %38 = vector.multi_reduction <add>, %37, %cst_17 [2] : vector<2x16x128xf32> to vector<2x16xf32>
    %cst_18 = arith.constant dense<0.000000e+00> : vector<2xf32>
    %39 = vector.multi_reduction <add>, %38, %cst_18 [1] : vector<2x16xf32> to vector<2xf32>
    %40 = vector.shape_cast %39 : vector<2xf32> to vector<2x1xf32>
    %c0_19 = arith.constant 0 : index
    %c0_20 = arith.constant 0 : index
    %41 = vector.load %arg6[%c0_19, %c0_20] : memref<1x1xf32, #tpu.memory_space<vmem>>, vector<1x1xf32>
    %42 = vector.broadcast %41 : vector<1x1xf32> to vector<2x1xf32>
    %43 = arith.addf %40, %42 : vector<2x1xf32>
    %44 = arith.negf %43 : vector<2x1xf32>
    %45 = math.exp %44 : vector<2x1xf32>
    %cst_21 = arith.constant 1.000000e+00 : f32
    %46 = vector.broadcast %cst_21 : f32 to vector<2x1xf32>
    %47 = arith.addf %46, %45 : vector<2x1xf32>
    %48 = arith.divf %46, %47 : vector<2x1xf32>
    %c0_22 = arith.constant 0 : index
    %c0_23 = arith.constant 0 : index
    %49 = vector.load %arg7[%c0_22, %c0_23] : memref<2x1xf32, #tpu.memory_space<vmem>>, vector<2x1xf32>
    tpu.vector_store %arg7[%c0_22, %c0_23], %48 {strides = array<i32>} : memref<2x1xf32, #tpu.memory_space<vmem>>, vector<2x1xf32>,
    return
  }
  func.func @transform_0(%arg0: i32) -> (i32, i32) {
    %c0_i32 = arith.constant 0 : i32
    %c0_i32_0 = arith.constant 0 : i32
    %c0_i32_1 = arith.constant 0 : i32
    return %c0_i32, %c0_i32_0 : i32, i32
  }
  func.func @transform_1(%arg0: i32) -> (i32, i32) {
    %c0_i32 = arith.constant 0 : i32
    %c0_i32_0 = arith.constant 0 : i32
    %c0_i32_1 = arith.constant 0 : i32
    return %c0_i32, %c0_i32_0 : i32, i32
  }
  func.func @transform_2(%arg0: i32) -> (i32, i32) {
    %c0_i32 = arith.constant 0 : i32
    %c0_i32_0 = arith.constant 0 : i32
    %c0_i32_1 = arith.constant 0 : i32
    return %c0_i32, %c0_i32_0 : i32, i32
  }
  func.func @transform_3(%arg0: i32) -> (i32, i32) {
    %c0_i32 = arith.constant 0 : i32
    %c0_i32_0 = arith.constant 0 : i32
    %c0_i32_1 = arith.constant 0 : i32
    return %c0_i32, %c0_i32_0 : i32, i32
  }
  func.func @transform_4(%arg0: i32) -> (i32, i32) {
    %c0_i32 = arith.constant 0 : i32
    %c0_i32_0 = arith.constant 0 : i32
    %c0_i32_1 = arith.constant 0 : i32
    return %c0_i32, %c0_i32_0 : i32, i32
  }
  func.func @transform_5(%arg0: i32) -> (i32, i32) {
    %c0_i32 = arith.constant 0 : i32
    %c0_i32_0 = arith.constant 0 : i32
    %c0_i32_1 = arith.constant 0 : i32
    return %c0_i32, %c0_i32_0 : i32, i32
  }
  func.func @transform_6(%arg0: i32) -> (i32, i32) {
    %c0_i32 = arith.constant 0 : i32
    %c0_i32_0 = arith.constant 0 : i32
    %c0_i32_1 = arith.constant 0 : i32
    return %c0_i32, %c0_i32_0 : i32, i32
  }
}

</mosaic_0001>

<llo_original>
// kernel: discriminator64.4
$region0: #{discriminator64.4}
  #allocation0 [shape = 'u32[]', space=smem, size = 0x4, offset = 0x4, fixed_abs, tag = 'smem constant byte address 0x4 - core index']
  #allocation1 [shape = 'u32[144,128]{1,0:T(1,128)}', space=vmem, size = 0x12000, scoped, tag = 'internal scratch']
  #allocation2 [shape = 'f32[1,128]{1,0:T(1,128)}', space=vmem, size = 0x200, scoped, tag = 'scratch operand']
  #allocation3 [shape = 'f32[1,128]{1,0:T(1,128)}', space=vmem, size = 0x200, scoped, tag = 'scratch operand']
  %s0 = inlined_call_operand.vmem [shape: bf16[2048,128], index: 0, kind: input, shape index: {}]
  %s1 = inlined_call_operand.vmem [shape: bf16[128,128], index: 1, kind: input, shape index: {}]
  %s2 = inlined_call_operand.vmem [shape: f32[1,128], index: 2, kind: input, shape index: {}]
  %s3 = inlined_call_operand.vmem [shape: f32[1,128], index: 3, kind: input, shape index: {}]
  %s4 = inlined_call_operand.vmem [shape: bf16[2048,128], index: 4, kind: output, shape index: {}]
  %s5 = sld [smem:[#allocation0]]
  $region61: #{discriminator64.4} parent=0
    _
  %s7 = ssub.s32 1, %s5
  %s8 = scalar_select 0, %s7, %s5
  loop: start=0, step=1, limit=6
  $region2: #{discriminator64.4} parent=0 // loop_pre_header
    _
  $region3: #{discriminator64.4} parent=0 // loop_header
    %s10 = sphi 0, %s14
    %p11 = scmp.ge.s32.totalorder %s10, 6
    %s17 = sphi 0, %s29
    %s18 = sphi 0, %s25
    %s19 = sphi 0, %s17
    %s20 = sphi 0, %s18
    %s21 = sphi 0, %s19
    %s22 = sphi 0, %s20
    %s32 = sphi 0, %s34
    %s35 = sphi 0, %s32
    %s36 = sphi 0, %s35
    %s52 = sphi 0, %s36
    %s56 = sphi 0, %s56
    %s58 = sphi 0, %s56
    %s59 = sphi 0, %s58
    %s73 = sphi 0, %s59
    %s77 = sphi 0, %s77
    %s79 = sphi 0, %s77
    %s80 = sphi 0, %s79
    %s94 = sphi 0, %s80
    %s98 = sphi 0, %s98
    %s100 = sphi 0, %s98
    %s101 = sphi 0, %s100
    %s115 = sphi 0, %s101
    %s123 = sphi 0, %s125
    %s126 = sphi 0, %s123
    %s127 = sphi 0, %s126
    %s143 = sphi 0, %s127
  $region4: #{discriminator64.4} parent=0 // loop_header_branch
    %13 = sbr.rel (%p11) target = $region8
  $region5: #{discriminator64.4} parent=0 // loop_body
    %s15 = ssub.s32 %s10, 1
    %s16 = ssub.s32 %s10, 2
    %s23 = sadd.s32 1, %s18
    %p24 = scmp.ge.s32.totalorder %s23, 2
    %s25 = scalar_select %p24, 0, %s23
    %s26 = sadd.s32 1, %s17
    %s27 = scalar_select %p24, %s26, %s17
    %p28 = scmp.ge.s32.totalorder %s27, 2
    %s29 = scalar_select %p28, 0, %s27
    %s30 = ssub.s32 %s18, %s25
    %p31 = scmp.eq.s32.totalorder %s30, 0
    %s33 = sadd.s32 %s32, 1
    %s34 = scalar_select %p31, %s32, %s33
    %p37 = pneg %p31
    %p38 = scmp.eq.s32.totalorder %s10, 3
    %p39 = por %p37, %p38
    %p40 = scmp.ne.s32.totalorder %s32, %s35
    %p41 = scmp.eq.s32.totalorder %s10, 0
    %p42 = por %p40, %p41
    %p43 = scmp.ne.s32.totalorder %s32, %s35
    %p44 = scmp.eq.s32.totalorder %s15, 3
    %p45 = por %p43, %p44
    %p46 = scmp.ne.s32.totalorder %s35, %s36
    %p47 = scmp.eq.s32.totalorder %s15, 0
    %p48 = por %p46, %p47
    %p49 = scmp.ne.s32.totalorder %s35, %s36
    %p50 = scmp.eq.s32.totalorder %s16, 3
    %p51 = por %p49, %p50
    %p53 = scmp.ne.s32.totalorder %s36, %s52
    %p54 = scmp.eq.s32.totalorder %s16, 0
    %p55 = por %p53, %p54
    %s57 = sadd.s32 %s56, 1
    %p60 = scmp.eq.s32.totalorder %s10, 3
    %p61 = scmp.ne.s32.totalorder %s56, %s58
    %p62 = scmp.eq.s32.totalorder %s10, 0
    %p63 = por %p61, %p62
    %p64 = scmp.ne.s32.totalorder %s56, %s58
    %p65 = scmp.eq.s32.totalorder %s15, 3
    %p66 = por %p64, %p65
    %p67 = scmp.ne.s32.totalorder %s58, %s59
    %p68 = scmp.eq.s32.totalorder %s15, 0
    %p69 = por %p67, %p68
    %p70 = scmp.ne.s32.totalorder %s58, %s59
    %p71 = scmp.eq.s32.totalorder %s16, 3
    %p72 = por %p70, %p71
    %p74 = scmp.ne.s32.totalorder %s59, %s73
    %p75 = scmp.eq.s32.totalorder %s16, 0
    %p76 = por %p74, %p75
    %s78 = sadd.s32 %s77, 1
    %p81 = scmp.eq.s32.totalorder %s10, 3
    %p82 = scmp.ne.s32.totalorder %s77, %s79
    %p83 = scmp.eq.s32.totalorder %s10, 0
    %p84 = por %p82, %p83
    %p85 = scmp.ne.s32.totalorder %s77, %s79
    %p86 = scmp.eq.s32.totalorder %s15, 3
    %p87 = por %p85, %p86
    %p88 = scmp.ne.s32.totalorder %s79, %s80
    %p89 = scmp.eq.s32.totalorder %s15, 0
    %p90 = por %p88, %p89
    %p91 = scmp.ne.s32.totalorder %s79, %s80
    %p92 = scmp.eq.s32.totalorder %s16, 3
    %p93 = por %p91, %p92
    %p95 = scmp.ne.s32.totalorder %s80, %s94
    %p96 = scmp.eq.s32.totalorder %s16, 0
    %p97 = por %p95, %p96
    %s99 = sadd.s32 %s98, 1
    %p102 = scmp.eq.s32.totalorder %s10, 3
    %p103 = scmp.ne.s32.totalorder %s98, %s100
    %p104 = scmp.eq.s32.totalorder %s10, 0
    %p105 = por %p103, %p104
    %p106 = scmp.ne.s32.totalorder %s98, %s100
    %p107 = scmp.eq.s32.totalorder %s15, 3
    %p108 = por %p106, %p107
    %p109 = scmp.ne.s32.totalorder %s100, %s101
    %p110 = scmp.eq.s32.totalorder %s15, 0
    %p111 = por %p109, %p110
    %p112 = scmp.ne.s32.totalorder %s100, %s101
    %p113 = scmp.eq.s32.totalorder %s16, 3
    %p114 = por %p112, %p113
    %p116 = scmp.ne.s32.totalorder %s101, %s115
    %p117 = scmp.eq.s32.totalorder %s16, 0
    %p118 = por %p116, %p117
    %s119 = smul.u32 %s17, %s18
    %s120 = smul.u32 %s29, %s25
    %s121 = ssub.s32 %s119, %s120
    %p122 = scmp.eq.s32.totalorder %s121, 0
    %s124 = sadd.s32 %s123, 1
    %s125 = scalar_select %p122, %s123, %s124
    %p128 = pneg %p122
    %p129 = scmp.eq.s32.totalorder %s10, 3
    %p130 = por %p128, %p129
    %p131 = scmp.ne.s32.totalorder %s123, %s126
    %p132 = scmp.eq.s32.totalorder %s10, 0
    %p133 = por %p131, %p132
    %p134 = scmp.ne.s32.totalorder %s123, %s126
    %p135 = scmp.eq.s32.totalorder %s15, 3
    %p136 = por %p134, %p135
    %p137 = scmp.ne.s32.totalorder %s126, %s127
    %p138 = scmp.eq.s32.totalorder %s15, 0
    %p139 = por %p137, %p138
    %p140 = scmp.ne.s32.totalorder %s126, %s127
    %p141 = scmp.eq.s32.totalorder %s16, 3
    %p142 = por %p140, %p141
    %p144 = scmp.ne.s32.totalorder %s127, %s143
    %p145 = scmp.eq.s32.totalorder %s16, 0
    %p146 = por %p144, %p145
    %p147 = scmp.le.s32.totalorder 1, %s10
    %p148 = scmp.lt.s32.totalorder %s10, 5
    %p149 = pnand %p147, %p148
    %p150 = pneg %p149
    // Predicated region
    $region9: #{discriminator64.4} parent=5 // pred_check
      _
    $region10: #{discriminator64.4} parent=5 // pred_check_branch
      %152 = sbr.rel (%p149) target = $region12
    $region11: #{discriminator64.4} parent=5 // pred_region
      %s153 = ssub.s32 %s10, 1
      // Predicated region
      $region13: #{discriminator64.4} parent=11 // pred_check
        %p154 = pneg %p69
      $region14: #{discriminator64.4} parent=11 // pred_check_branch
        %156 = sbr.rel (%p154) target = $region16
      $region15: #{discriminator64.4} parent=11 // pred_region
        _
      $region16: #{discriminator64.4} parent=11 // pred_fallthru
        _
      // Predicated region
      $region17: #{discriminator64.4} parent=11 // pred_check
        %p157 = pneg %p90
      $region18: #{discriminator64.4} parent=11 // pred_check_branch
        %159 = sbr.rel (%p157) target = $region20
      $region19: #{discriminator64.4} parent=11 // pred_region
        _
      $region20: #{discriminator64.4} parent=11 // pred_fallthru
        _
      // Predicated region
      $region21: #{discriminator64.4} parent=11 // pred_check
        %p160 = pneg %p111
      $region22: #{discriminator64.4} parent=11 // pred_check_branch
        %162 = sbr.rel (%p160) target = $region24
      $region23: #{discriminator64.4} parent=11 // pred_region
        _
      $region24: #{discriminator64.4} parent=11 // pred_fallthru
        _
    $region12: #{discriminator64.4} parent=5 // pred_fallthru
      _
    %p163 = scmp.lt.s32.totalorder %s10, 4
    // Predicated region
    $region25: #{discriminator64.4} parent=5 // pred_check
      %p164 = pneg %p163
    $region26: #{discriminator64.4} parent=5 // pred_check_branch
      %166 = sbr.rel (%p164) target = $region28
    $region27: #{discriminator64.4} parent=5 // pred_region
      // Predicated region
      $region29: #{discriminator64.4} parent=27 // pred_check
        %p167 = pneg %p42
      $region30: #{discriminator64.4} parent=27 // pred_check_branch
        %169 = sbr.rel (%p167) target = $region32
      $region31: #{discriminator64.4} parent=27 // pred_region
        %s170 = smul.u32 128, %s18
        %p171 = scmp.lt.s32.totalorder %s170, 255
        %s172 = scalar_select %p171, %s170, 255
        %s173 = smul.addr %s172, 4
        %s174 = scalar_lea.vmem %s0, %s173
        %s175 = smul.u32 128, %s18
      $region32: #{discriminator64.4} parent=27 // pred_fallthru
        _
    $region28: #{discriminator64.4} parent=5 // pred_fallthru
      _
    %p176 = scmp.le.s32.totalorder 1, %s10
    %p177 = scmp.lt.s32.totalorder %s10, 5
    %p178 = pnand %p176, %p177
    %p179 = pneg %p178
    // Predicated region
    $region33: #{discriminator64.4} parent=5 // pred_check
      _
    $region34: #{discriminator64.4} parent=5 // pred_check_branch
      %181 = sbr.rel (%p178) target = $region36
    $region35: #{discriminator64.4} parent=5 // pred_region
      %s182 = ssub.s32 %s10, 1
      %s183 = smul.u32 128, %s20
      %p184 = scmp.lt.s32.totalorder %s183, 255
      %s185 = scalar_select %p184, %s183, 255
      %s186 = smul.addr %s185, 4
      %s187 = scalar_lea.vmem %s0, %s186
      %p188 = pneg %p48
      %p189 = pneg %p45
      %p190 = pneg %p69
      %p191 = pneg %p66
      %p192 = pneg %p90
      %p193 = pneg %p87
      %p194 = pneg %p111
      %p195 = pneg %p108
      %p196 = pneg %p139
      %p197 = pneg %p136
      %s198 = smul.u32 %s19, %s20
      %s199 = smul.u32 128, %s198
      %p200 = scmp.lt.s32.totalorder %s199, 255
      %s201 = scalar_select %p200, %s199, 255
      %s202 = smul.addr %s201, 4
      %s203 = scalar_lea.vmem %s4, %s202
      %s204 = smul.u32 128, %s20
      %p205 = scmp.lt.s32.totalorder %s204, 255
      %s206 = scalar_select %p205, %s204, 255
      %s207 = smul.addr %s206, 4
      %s208 = scalar_lea.vmem %s0, %s207
      %s209 = smul.u32 128, %s20
      %s210 = smul.u32 %s19, %s20
      %s211 = smul.u32 128, %s210
      %p212 = scmp.lt.s32.totalorder %s211, 255
      %s213 = scalar_select %p212, %s211, 255
      %s214 = smul.addr %s213, 4
      %s215 = scalar_lea.vmem %s4, %s214
      %s216 = smul.u32 %s19, %s20
      %s217 = smul.u32 128, %s216
      %v219 = vld [vmem:[%s208] sm:$0xf]
      %v220 = vld [vmem:[%s208 + $0x4] sm:$0xf]
      %v221 = vld [vmem:[%s208 + $0x8] sm:$0xf]
      %v222 = vld [vmem:[%s208 + $0xc] sm:$0xf]
      %v223 = vld [vmem:[%s208 + $0x10] sm:$0xf]
      %v224 = vld [vmem:[%s208 + $0x14] sm:$0xf]
      %v225 = vld [vmem:[%s208 + $0x18] sm:$0xf]
      %v226 = vld [vmem:[%s208 + $0x1c] sm:$0xf]
      %v227 = vld [vmem:[%s208 + $0x20] sm:$0xf]
      %v228 = vld [vmem:[%s208 + $0x24] sm:$0xf]
      %v229 = vld [vmem:[%s208 + $0x28] sm:$0xf]
      %v230 = vld [vmem:[%s208 + $0x2c] sm:$0xf]
      %v231 = vld [vmem:[%s208 + $0x30] sm:$0xf]
      %v232 = vld [vmem:[%s208 + $0x34] sm:$0xf]
      %v233 = vld [vmem:[%s208 + $0x38] sm:$0xf]
      %v234 = vld [vmem:[%s208 + $0x3c] sm:$0xf]
      %v235 = vld [vmem:[%s208 + $0x40] sm:$0xf]
      %v236 = vld [vmem:[%s208 + $0x44] sm:$0xf]
      %v237 = vld [vmem:[%s208 + $0x48] sm:$0xf]
      %v238 = vld [vmem:[%s208 + $0x4c] sm:$0xf]
      %v239 = vld [vmem:[%s208 + $0x50] sm:$0xf]
      %v240 = vld [vmem:[%s208 + $0x54] sm:$0xf]
      %v241 = vld [vmem:[%s208 + $0x58] sm:$0xf]
      %v242 = vld [vmem:[%s208 + $0x5c] sm:$0xf]
      %v243 = vld [vmem:[%s208 + $0x60] sm:$0xf]
      %v244 = vld [vmem:[%s208 + $0x64] sm:$0xf]
      %v245 = vld [vmem:[%s208 + $0x68] sm:$0xf]
      %v246 = vld [vmem:[%s208 + $0x6c] sm:$0xf]
      %v247 = vld [vmem:[%s208 + $0x70] sm:$0xf]
      %v248 = vld [vmem:[%s208 + $0x74] sm:$0xf]
      %v249 = vld [vmem:[%s208 + $0x78] sm:$0xf]
      %v250 = vld [vmem:[%s208 + $0x7c] sm:$0xf]
      %v251 = vld [vmem:[%s208 + $0x80] sm:$0xf]
      %v252 = vld [vmem:[%s208 + $0x84] sm:$0xf]
      %v253 = vld [vmem:[%s208 + $0x88] sm:$0xf]
      %v254 = vld [vmem:[%s208 + $0x8c] sm:$0xf]
      %v255 = vld [vmem:[%s208 + $0x90] sm:$0xf]
      %v256 = vld [vmem:[%s208 + $0x94] sm:$0xf]
      %v257 = vld [vmem:[%s208 + $0x98] sm:$0xf]
      %v258 = vld [vmem:[%s208 + $0x9c] sm:$0xf]
      %v259 = vld [vmem:[%s208 + $0xa0] sm:$0xf]
      %v260 = vld [vmem:[%s208 + $0xa4] sm:$0xf]
      %v261 = vld [vmem:[%s208 + $0xa8] sm:$0xf]
      %v262 = vld [vmem:[%s208 + $0xac] sm:$0xf]
      %v263 = vld [vmem:[%s208 + $0xb0] sm:$0xf]
      %v264 = vld [vmem:[%s208 + $0xb4] sm:$0xf]
      %v265 = vld [vmem:[%s208 + $0xb8] sm:$0xf]
      %v266 = vld [vmem:[%s208 + $0xbc] sm:$0xf]
      %v267 = vld [vmem:[%s208 + $0xc0] sm:$0xf]
      %v268 = vld [vmem:[%s208 + $0xc4] sm:$0xf]
      %v269 = vld [vmem:[%s208 + $0xc8] sm:$0xf]
      %v270 = vld [vmem:[%s208 + $0xcc] sm:$0xf]
      %v271 = vld [vmem:[%s208 + $0xd0] sm:$0xf]
      %v272 = vld [vmem:[%s208 + $0xd4] sm:$0xf]
      %v273 = vld [vmem:[%s208 + $0xd8] sm:$0xf]
      %v274 = vld [vmem:[%s208 + $0xdc] sm:$0xf]
      %v275 = vld [vmem:[%s208 + $0xe0] sm:$0xf]
      %v276 = vld [vmem:[%s208 + $0xe4] sm:$0xf]
      %v277 = vld [vmem:[%s208 + $0xe8] sm:$0xf]
      %v278 = vld [vmem:[%s208 + $0xec] sm:$0xf]
      %v279 = vld [vmem:[%s208 + $0xf0] sm:$0xf]
      %v280 = vld [vmem:[%s208 + $0xf4] sm:$0xf]
      %v281 = vld [vmem:[%s208 + $0xf8] sm:$0xf]
      %v282 = vld [vmem:[%s208 + $0xfc] sm:$0xf]
      %v283 = vld [vmem:[%s208 + $0x100] sm:$0xf]
      %v284 = vld [vmem:[%s208 + $0x104] sm:$0xf]
      %v285 = vld [vmem:[%s208 + $0x108] sm:$0xf]
      %v286 = vld [vmem:[%s208 + $0x10c] sm:$0xf]
      %v287 = vld [vmem:[%s208 + $0x110] sm:$0xf]
      %v288 = vld [vmem:[%s208 + $0x114] sm:$0xf]
      %v289 = vld [vmem:[%s208 + $0x118] sm:$0xf]
      %v290 = vld [vmem:[%s208 + $0x11c] sm:$0xf]
      %v291 = vld [vmem:[%s208 + $0x120] sm:$0xf]
      %v292 = vld [vmem:[%s208 + $0x124] sm:$0xf]
      %v293 = vld [vmem:[%s208 + $0x128] sm:$0xf]
      %v294 = vld [vmem:[%s208 + $0x12c] sm:$0xf]
      %v295 = vld [vmem:[%s208 + $0x130] sm:$0xf]
      %v296 = vld [vmem:[%s208 + $0x134] sm:$0xf]
      %v297 = vld [vmem:[%s208 + $0x138] sm:$0xf]
      %v298 = vld [vmem:[%s208 + $0x13c] sm:$0xf]
      %v299 = vld [vmem:[%s208 + $0x140] sm:$0xf]
      %v300 = vld [vmem:[%s208 + $0x144] sm:$0xf]
      %v301 = vld [vmem:[%s208 + $0x148] sm:$0xf]
      %v302 = vld [vmem:[%s208 + $0x14c] sm:$0xf]
      %v303 = vld [vmem:[%s208 + $0x150] sm:$0xf]
      %v304 = vld [vmem:[%s208 + $0x154] sm:$0xf]
      %v305 = vld [vmem:[%s208 + $0x158] sm:$0xf]
      %v306 = vld [vmem:[%s208 + $0x15c] sm:$0xf]
      %v307 = vld [vmem:[%s208 + $0x160] sm:$0xf]
      %v308 = vld [vmem:[%s208 + $0x164] sm:$0xf]
      %v309 = vld [vmem:[%s208 + $0x168] sm:$0xf]
      %v310 = vld [vmem:[%s208 + $0x16c] sm:$0xf]
      %v311 = vld [vmem:[%s208 + $0x170] sm:$0xf]
      %v312 = vld [vmem:[%s208 + $0x174] sm:$0xf]
      %v313 = vld [vmem:[%s208 + $0x178] sm:$0xf]
      %v314 = vld [vmem:[%s208 + $0x17c] sm:$0xf]
      %v315 = vld [vmem:[%s208 + $0x180] sm:$0xf]
      %v316 = vld [vmem:[%s208 + $0x184] sm:$0xf]
      %v317 = vld [vmem:[%s208 + $0x188] sm:$0xf]
      %v318 = vld [vmem:[%s208 + $0x18c] sm:$0xf]
      %v319 = vld [vmem:[%s208 + $0x190] sm:$0xf]
      %v320 = vld [vmem:[%s208 + $0x194] sm:$0xf]
      %v321 = vld [vmem:[%s208 + $0x198] sm:$0xf]
      %v322 = vld [vmem:[%s208 + $0x19c] sm:$0xf]
      %v323 = vld [vmem:[%s208 + $0x1a0] sm:$0xf]
      %v324 = vld [vmem:[%s208 + $0x1a4] sm:$0xf]
      %v325 = vld [vmem:[%s208 + $0x1a8] sm:$0xf]
      %v326 = vld [vmem:[%s208 + $0x1ac] sm:$0xf]
      %v327 = vld [vmem:[%s208 + $0x1b0] sm:$0xf]
      %v328 = vld [vmem:[%s208 + $0x1b4] sm:$0xf]
      %v329 = vld [vmem:[%s208 + $0x1b8] sm:$0xf]
      %v330 = vld [vmem:[%s208 + $0x1bc] sm:$0xf]
      %v331 = vld [vmem:[%s208 + $0x1c0] sm:$0xf]
      %v332 = vld [vmem:[%s208 + $0x1c4] sm:$0xf]
      %v333 = vld [vmem:[%s208 + $0x1c8] sm:$0xf]
      %v334 = vld [vmem:[%s208 + $0x1cc] sm:$0xf]
      %v335 = vld [vmem:[%s208 + $0x1d0] sm:$0xf]
      %v336 = vld [vmem:[%s208 + $0x1d4] sm:$0xf]
      %v337 = vld [vmem:[%s208 + $0x1d8] sm:$0xf]
      %v338 = vld [vmem:[%s208 + $0x1dc] sm:$0xf]
      %v339 = vld [vmem:[%s208 + $0x1e0] sm:$0xf]
      %v340 = vld [vmem:[%s208 + $0x1e4] sm:$0xf]
      %v341 = vld [vmem:[%s208 + $0x1e8] sm:$0xf]
      %v342 = vld [vmem:[%s208 + $0x1ec] sm:$0xf]
      %v343 = vld [vmem:[%s208 + $0x1f0] sm:$0xf]
      %v344 = vld [vmem:[%s208 + $0x1f4] sm:$0xf]
      %v345 = vld [vmem:[%s208 + $0x1f8] sm:$0xf]
      %v346 = vld [vmem:[%s208 + $0x1fc] sm:$0xf]
      %v347 = vld [vmem:[%s1] sm:$0xf]
      %v348 = vld [vmem:[%s1 + $0x4] sm:$0xf]
      %v349 = vld [vmem:[%s1 + $0x8] sm:$0xf]
      %v350 = vld [vmem:[%s1 + $0xc] sm:$0xf]
      %v351 = vld [vmem:[%s1 + $0x10] sm:$0xf]
      %v352 = vld [vmem:[%s1 + $0x14] sm:$0xf]
      %v353 = vld [vmem:[%s1 + $0x18] sm:$0xf]
      %v354 = vld [vmem:[%s1 + $0x1c] sm:$0xf]
      %v355 = vld [vmem:[%s1 + $0x20] sm:$0xf]
      %v356 = vld [vmem:[%s1 + $0x24] sm:$0xf]
      %v357 = vld [vmem:[%s1 + $0x28] sm:$0xf]
      %v358 = vld [vmem:[%s1 + $0x2c] sm:$0xf]
      %v359 = vld [vmem:[%s1 + $0x30] sm:$0xf]
      %v360 = vld [vmem:[%s1 + $0x34] sm:$0xf]
      %v361 = vld [vmem:[%s1 + $0x38] sm:$0xf]
      %v362 = vld [vmem:[%s1 + $0x3c] sm:$0xf]
      %v491 = vunpack.c.l.b16 %v219
      %v492 = vunpack.c.l.b16 %v220
      %v493 = vunpack.c.l.b16 %v221
      %v494 = vunpack.c.l.b16 %v222
      %v495 = vunpack.c.l.b16 %v223
      %v496 = vunpack.c.l.b16 %v224
      %v497 = vunpack.c.l.b16 %v225
      %v498 = vunpack.c.l.b16 %v226
      %v499 = vunpack.c.l.b16 %v227
      %v500 = vunpack.c.l.b16 %v228
      %v501 = vunpack.c.l.b16 %v229
      %v502 = vunpack.c.l.b16 %v230
      %v503 = vunpack.c.l.b16 %v231
      %v504 = vunpack.c.l.b16 %v232
      %v505 = vunpack.c.l.b16 %v233
      %v506 = vunpack.c.l.b16 %v234
      %v507 = vunpack.c.l.b16 %v235
      %v508 = vunpack.c.l.b16 %v236
      %v509 = vunpack.c.l.b16 %v237
      %v510 = vunpack.c.l.b16 %v238
      %v511 = vunpack.c.l.b16 %v239
      %v512 = vunpack.c.l.b16 %v240
      %v513 = vunpack.c.l.b16 %v241
      %v514 = vunpack.c.l.b16 %v242
      %v515 = vunpack.c.l.b16 %v243
      %v516 = vunpack.c.l.b16 %v244
      %v517 = vunpack.c.l.b16 %v245
      %v518 = vunpack.c.l.b16 %v246
      %v519 = vunpack.c.l.b16 %v247
      %v520 = vunpack.c.l.b16 %v248
      %v521 = vunpack.c.l.b16 %v249
      %v522 = vunpack.c.l.b16 %v250
      %v523 = vunpack.c.l.b16 %v251
      %v524 = vunpack.c.l.b16 %v252
      %v525 = vunpack.c.l.b16 %v253
      %v526 = vunpack.c.l.b16 %v254
      %v527 = vunpack.c.l.b16 %v255
      %v528 = vunpack.c.l.b16 %v256
      %v529 = vunpack.c.l.b16 %v257
      %v530 = vunpack.c.l.b16 %v258
      %v531 = vunpack.c.l.b16 %v259
      %v532 = vunpack.c.l.b16 %v260
      %v533 = vunpack.c.l.b16 %v261
      %v534 = vunpack.c.l.b16 %v262
      %v535 = vunpack.c.l.b16 %v263
      %v536 = vunpack.c.l.b16 %v264
      %v537 = vunpack.c.l.b16 %v265
      %v538 = vunpack.c.l.b16 %v266
      %v539 = vunpack.c.l.b16 %v267
      %v540 = vunpack.c.l.b16 %v268
      %v541 = vunpack.c.l.b16 %v269
      %v542 = vunpack.c.l.b16 %v270
      %v543 = vunpack.c.l.b16 %v271
      %v544 = vunpack.c.l.b16 %v272
      %v545 = vunpack.c.l.b16 %v273
      %v546 = vunpack.c.l.b16 %v274
      %v547 = vunpack.c.l.b16 %v275
      %v548 = vunpack.c.l.b16 %v276
      %v549 = vunpack.c.l.b16 %v277
      %v550 = vunpack.c.l.b16 %v278
      %v551 = vunpack.c.l.b16 %v279
      %v552 = vunpack.c.l.b16 %v280
      %v553 = vunpack.c.l.b16 %v281
      %v554 = vunpack.c.l.b16 %v282
      %v555 = vunpack.c.l.b16 %v283
      %v556 = vunpack.c.l.b16 %v284
      %v557 = vunpack.c.l.b16 %v285
      %v558 = vunpack.c.l.b16 %v286
      %v559 = vunpack.c.l.b16 %v287
      %v560 = vunpack.c.l.b16 %v288
      %v561 = vunpack.c.l.b16 %v289
      %v562 = vunpack.c.l.b16 %v290
      %v563 = vunpack.c.l.b16 %v291
      %v564 = vunpack.c.l.b16 %v292
      %v565 = vunpack.c.l.b16 %v293
      %v566 = vunpack.c.l.b16 %v294
      %v567 = vunpack.c.l.b16 %v295
      %v568 = vunpack.c.l.b16 %v296
      %v569 = vunpack.c.l.b16 %v297
      %v570 = vunpack.c.l.b16 %v298
      %v571 = vunpack.c.l.b16 %v299
      %v572 = vunpack.c.l.b16 %v300
      %v573 = vunpack.c.l.b16 %v301
      %v574 = vunpack.c.l.b16 %v302
      %v575 = vunpack.c.l.b16 %v303
      %v576 = vunpack.c.l.b16 %v304
      %v577 = vunpack.c.l.b16 %v305
      %v578 = vunpack.c.l.b16 %v306
      %v579 = vunpack.c.l.b16 %v307
      %v580 = vunpack.c.l.b16 %v308
      %v581 = vunpack.c.l.b16 %v309
      %v582 = vunpack.c.l.b16 %v310
      %v583 = vunpack.c.l.b16 %v311
      %v584 = vunpack.c.l.b16 %v312
      %v585 = vunpack.c.l.b16 %v313
      %v586 = vunpack.c.l.b16 %v314
      %v587 = vunpack.c.l.b16 %v315
      %v588 = vunpack.c.l.b16 %v316
      %v589 = vunpack.c.l.b16 %v317
      %v590 = vunpack.c.l.b16 %v318
      %v591 = vunpack.c.l.b16 %v319
      %v592 = vunpack.c.l.b16 %v320
      %v593 = vunpack.c.l.b16 %v321
      %v594 = vunpack.c.l.b16 %v322
      %v595 = vunpack.c.l.b16 %v323
      %v596 = vunpack.c.l.b16 %v324
      %v597 = vunpack.c.l.b16 %v325
      %v598 = vunpack.c.l.b16 %v326
      %v599 = vunpack.c.l.b16 %v327
      %v600 = vunpack.c.l.b16 %v328
      %v601 = vunpack.c.l.b16 %v329
      %v602 = vunpack.c.l.b16 %v330
      %v603 = vunpack.c.l.b16 %v331
      %v604 = vunpack.c.l.b16 %v332
      %v605 = vunpack.c.l.b16 %v333
      %v606 = vunpack.c.l.b16 %v334
      %v607 = vunpack.c.l.b16 %v335
      %v608 = vunpack.c.l.b16 %v336
      %v609 = vunpack.c.l.b16 %v337
      %v610 = vunpack.c.l.b16 %v338
      %v611 = vunpack.c.l.b16 %v339
      %v612 = vunpack.c.l.b16 %v340
      %v613 = vunpack.c.l.b16 %v341
      %v614 = vunpack.c.l.b16 %v342
      %v615 = vunpack.c.l.b16 %v343
      %v616 = vunpack.c.l.b16 %v344
      %v617 = vunpack.c.l.b16 %v345
      %v618 = vunpack.c.l.b16 %v346
      %v619 = vpack.c.b16 %v492, %v491
      %v620 = vpack.c.b16 %v494, %v493
      %v621 = vpack.c.b16 %v496, %v495
      %v622 = vpack.c.b16 %v498, %v497
      %v623 = vpack.c.b16 %v500, %v499
      %v624 = vpack.c.b16 %v502, %v501
      %v625 = vpack.c.b16 %v504, %v503
      %v626 = vpack.c.b16 %v506, %v505
      %v627 = vpack.c.b16 %v508, %v507
      %v628 = vpack.c.b16 %v510, %v509
      %v629 = vpack.c.b16 %v512, %v511
      %v630 = vpack.c.b16 %v514, %v513
      %v631 = vpack.c.b16 %v516, %v515
      %v632 = vpack.c.b16 %v518, %v517
      %v633 = vpack.c.b16 %v520, %v519
      %v634 = vpack.c.b16 %v522, %v521
      %v635 = vpack.c.b16 %v524, %v523
      %v636 = vpack.c.b16 %v526, %v525
      %v637 = vpack.c.b16 %v528, %v527
      %v638 = vpack.c.b16 %v530, %v529
      %v639 = vpack.c.b16 %v532, %v531
      %v640 = vpack.c.b16 %v534, %v533
      %v641 = vpack.c.b16 %v536, %v535
      %v642 = vpack.c.b16 %v538, %v537
      %v643 = vpack.c.b16 %v540, %v539
      %v644 = vpack.c.b16 %v542, %v541
      %v645 = vpack.c.b16 %v544, %v543
      %v646 = vpack.c.b16 %v546, %v545
      %v647 = vpack.c.b16 %v548, %v547
      %v648 = vpack.c.b16 %v550, %v549
      %v649 = vpack.c.b16 %v552, %v551
      %v650 = vpack.c.b16 %v554, %v553
      %v651 = vpack.c.b16 %v556, %v555
      %v652 = vpack.c.b16 %v558, %v557
      %v653 = vpack.c.b16 %v560, %v559
      %v654 = vpack.c.b16 %v562, %v561
      %v655 = vpack.c.b16 %v564, %v563
      %v656 = vpack.c.b16 %v566, %v565
      %v657 = vpack.c.b16 %v568, %v567
      %v658 = vpack.c.b16 %v570, %v569
      %v659 = vpack.c.b16 %v572, %v571
      %v660 = vpack.c.b16 %v574, %v573
      %v661 = vpack.c.b16 %v576, %v575
      %v662 = vpack.c.b16 %v578, %v577
      %v663 = vpack.c.b16 %v580, %v579
      %v664 = vpack.c.b16 %v582, %v581
      %v665 = vpack.c.b16 %v584, %v583
      %v666 = vpack.c.b16 %v586, %v585
      %v667 = vpack.c.b16 %v588, %v587
      %v668 = vpack.c.b16 %v590, %v589
      %v669 = vpack.c.b16 %v592, %v591
      %v670 = vpack.c.b16 %v594, %v593
      %v671 = vpack.c.b16 %v596, %v595
      %v672 = vpack.c.b16 %v598, %v597
      %v673 = vpack.c.b16 %v600, %v599
      %v674 = vpack.c.b16 %v602, %v601
      %v675 = vpack.c.b16 %v604, %v603
      %v676 = vpack.c.b16 %v606, %v605
      %v677 = vpack.c.b16 %v608, %v607
      %v678 = vpack.c.b16 %v610, %v609
      %v679 = vpack.c.b16 %v612, %v611
      %v680 = vpack.c.b16 %v614, %v613
      %v681 = vpack.c.b16 %v616, %v615
      %v682 = vpack.c.b16 %v618, %v617
      %v763 = vunpack.c.l.b16 %v347
      %v764 = vunpack.c.l.b16 %v348
      %v765 = vunpack.c.l.b16 %v349
      %v766 = vunpack.c.l.b16 %v350
      %v767 = vunpack.c.l.b16 %v351
      %v768 = vunpack.c.l.b16 %v352
      %v769 = vunpack.c.l.b16 %v353
      %v770 = vunpack.c.l.b16 %v354
      %v771 = vunpack.c.l.b16 %v355
      %v772 = vunpack.c.l.b16 %v356
      %v773 = vunpack.c.l.b16 %v357
      %v774 = vunpack.c.l.b16 %v358
      %v775 = vunpack.c.l.b16 %v359
      %v776 = vunpack.c.l.b16 %v360
      %v777 = vunpack.c.l.b16 %v361
      %v778 = vunpack.c.l.b16 %v362
      %v779 = vpack.c.b16 %v764, %v763
      %v780 = vpack.c.b16 %v766, %v765
      %v781 = vpack.c.b16 %v768, %v767
      %v782 = vpack.c.b16 %v770, %v769
      %v783 = vpack.c.b16 %v772, %v771
      %v784 = vpack.c.b16 %v774, %v773
      %v785 = vpack.c.b16 %v776, %v775
      %v786 = vpack.c.b16 %v778, %v777
      %795 = vmatprep.subr.bf16.mxu0 0
      %796 = vmatpush1.bf16.msra.mxu0 %v779
      %797 = vmatprep.subr.bf16.mxu0 0
      %798 = vmatpush1.bf16.msra.mxu0 %v780
      %799 = vmatprep.subr.bf16.mxu0 0
      %800 = vmatpush1.bf16.msra.mxu0 %v781
      %801 = vmatprep.subr.bf16.mxu0 0
      %802 = vmatpush1.bf16.msra.mxu0 %v782
      %803 = vmatprep.subr.bf16.mxu0 0
      %804 = vmatpush1.bf16.msra.mxu0 %v783
      %805 = vmatprep.subr.bf16.mxu0 0
      %806 = vmatpush1.bf16.msra.mxu0 %v784
      %807 = vmatprep.subr.bf16.mxu0 0
      %808 = vmatpush1.bf16.msra.mxu0 %v785
      %809 = vmatprep.subr.bf16.mxu0 0
      %810 = vmatpush1.bf16.msra.mxu0 %v786
      %811 = vmatprep.subr.bf16.mxu0 0
      %812 = vmatpush1.bf16.msra.mxu0 0
      %813 = vmatprep.subr.bf16.mxu0 0
      %814 = vmatpush1.bf16.msra.mxu0 0
      %815 = vmatprep.subr.bf16.mxu0 0
      %816 = vmatpush1.bf16.msra.mxu0 0
      %817 = vmatprep.subr.bf16.mxu0 0
      %818 = vmatpush1.bf16.msra.mxu0 0
      %819 = vmatprep.subr.bf16.mxu0 0
      %820 = vmatpush1.bf16.msra.mxu0 0
      %821 = vmatprep.subr.bf16.mxu0 0
      %822 = vmatpush1.bf16.msra.mxu0 0
      %823 = vmatprep.subr.bf16.mxu0 0
      %824 = vmatpush1.bf16.msra.mxu0 0
      %825 = vmatprep.subr.bf16.mxu0 0
      %826 = vmatpush1.bf16.msra.mxu0 0
      %827 = vmatprep.mubr.bf16.mxu0 0
      %828 = vmatmul.mubr.bf16.gmra.mrb[0].mxu0 %v619
      %v829 = vpop.f32.mrb[0].mxu0
      %v830 = vadd.f32 0.0, %v829
      %v831 = vpop.f32.mrb[0].mxu0
      %v832 = vpop.f32.mrb[0].mxu0
      %v833 = vadd.f32 0.0, %v832
      %v834 = vpop.f32.mrb[0].mxu0
      %835 = vmatprep.mubr.bf16.mxu0 0
      %836 = vmatmul.mubr.bf16.gmra.mrb[0].mxu0 %v620
      %v837 = vpop.f32.mrb[0].mxu0
      %v838 = vadd.f32 0.0, %v837
      %v839 = vpop.f32.mrb[0].mxu0
      %v840 = vpop.f32.mrb[0].mxu0
      %v841 = vadd.f32 0.0, %v840
      %v842 = vpop.f32.mrb[0].mxu0
      %843 = vmatprep.mubr.bf16.mxu0 0
      %844 = vmatmul.mubr.bf16.gmra.mrb[0].mxu0 %v621
      %v845 = vpop.f32.mrb[0].mxu0
      %v846 = vadd.f32 0.0, %v845
      %v847 = vpop.f32.mrb[0].mxu0
      %v848 = vpop.f32.mrb[0].mxu0
      %v849 = vadd.f32 0.0, %v848
      %v850 = vpop.f32.mrb[0].mxu0
      %851 = vmatprep.mubr.bf16.mxu0 0
      %852 = vmatmul.mubr.bf16.gmra.mrb[0].mxu0 %v622
      %v853 = vpop.f32.mrb[0].mxu0
      %v854 = vadd.f32 0.0, %v853
      %v855 = vpop.f32.mrb[0].mxu0
      %v856 = vpop.f32.mrb[0].mxu0
      %v857 = vadd.f32 0.0, %v856
      %v858 = vpop.f32.mrb[0].mxu0
      %859 = vmatprep.mubr.bf16.mxu0 0
      %860 = vmatmul.mubr.bf16.gmra.mrb[0].mxu0 %v623
      %v861 = vpop.f32.mrb[0].mxu0
      %v862 = vadd.f32 0.0, %v861
      %v863 = vpop.f32.mrb[0].mxu0
      %v864 = vpop.f32.mrb[0].mxu0
      %v865 = vadd.f32 0.0, %v864
      %v866 = vpop.f32.mrb[0].mxu0
      %867 = vmatprep.mubr.bf16.mxu0 0
      %868 = vmatmul.mubr.bf16.gmra.mrb[0].mxu0 %v624
      %v869 = vpop.f32.mrb[0].mxu0
      %v870 = vadd.f32 0.0, %v869
      %v871 = vpop.f32.mrb[0].mxu0
      %v872 = vpop.f32.mrb[0].mxu0
      %v873 = vadd.f32 0.0, %v872
      %v874 = vpop.f32.mrb[0].mxu0
      %875 = vmatprep.mubr.bf16.mxu0 0
      %876 = vmatmul.mubr.bf16.gmra.mrb[0].mxu0 %v625
      %v877 = vpop.f32.mrb[0].mxu0
      %v878 = vadd.f32 0.0, %v877
      %v879 = vpop.f32.mrb[0].mxu0
      %v880 = vpop.f32.mrb[0].mxu0
      %v881 = vadd.f32 0.0, %v880
      %v882 = vpop.f32.mrb[0].mxu0
      %883 = vmatprep.mubr.bf16.mxu0 0
      %884 = vmatmul.mubr.bf16.gmra.mrb[0].mxu0 %v626
      %v885 = vpop.f32.mrb[0].mxu0
      %v886 = vadd.f32 0.0, %v885
      %v887 = vpop.f32.mrb[0].mxu0
      %v888 = vpop.f32.mrb[0].mxu0
      %v889 = vadd.f32 0.0, %v888
      %v890 = vpop.f32.mrb[0].mxu0
      %891 = vmatprep.mubr.bf16.mxu0 0
      %892 = vmatmul.mubr.bf16.gmra.mrb[0].mxu0 %v627
      %v893 = vpop.f32.mrb[0].mxu0
      %v894 = vadd.f32 0.0, %v893
      %v895 = vpop.f32.mrb[0].mxu0
      %v896 = vpop.f32.mrb[0].mxu0
      %v897 = vadd.f32 0.0, %v896
      %v898 = vpop.f32.mrb[0].mxu0
      %899 = vmatprep.mubr.bf16.mxu0 0
      %900 = vmatmul.mubr.bf16.gmra.mrb[0].mxu0 %v628
      %v901 = vpop.f32.mrb[0].mxu0
      %v902 = vadd.f32 0.0, %v901
      %v903 = vpop.f32.mrb[0].mxu0
      %v904 = vpop.f32.mrb[0].mxu0
      %v905 = vadd.f32 0.0, %v904
      %v906 = vpop.f32.mrb[0].mxu0
      %907 = vmatprep.mubr.bf16.mxu0 0
      %908 = vmatmul.mubr.bf16.gmra.mrb[0].mxu0 %v629
      %v909 = vpop.f32.mrb[0].mxu0
      %v910 = vadd.f32 0.0, %v909
      %v911 = vpop.f32.mrb[0].mxu0
      %v912 = vpop.f32.mrb[0].mxu0
      %v913 = vadd.f32 0.0, %v912
      %v914 = vpop.f32.mrb[0].mxu0
      %915 = vmatprep.mubr.bf16.mxu0 0
      %916 = vmatmul.mubr.bf16.gmra.mrb[0].mxu0 %v630
      %v917 = vpop.f32.mrb[0].mxu0
      %v918 = vadd.f32 0.0, %v917
      %v919 = vpop.f32.mrb[0].mxu0
      %v920 = vpop.f32.mrb[0].mxu0
      %v921 = vadd.f32 0.0, %v920
      %v922 = vpop.f32.mrb[0].mxu0
      %923 = vmatprep.mubr.bf16.mxu0 0
      %924 = vmatmul.mubr.bf16.gmra.mrb[0].mxu0 %v631
      %v925 = vpop.f32.mrb[0].mxu0
      %v926 = vadd.f32 0.0, %v925
      %v927 = vpop.f32.mrb[0].mxu0
      %v928 = vpop.f32.mrb[0].mxu0
      %v929 = vadd.f32 0.0, %v928
      %v930 = vpop.f32.mrb[0].mxu0
      %931 = vmatprep.mubr.bf16.mxu0 0
      %932 = vmatmul.mubr.bf16.gmra.mrb[0].mxu0 %v632
      %v933 = vpop.f32.mrb[0].mxu0
      %v934 = vadd.f32 0.0, %v933
      %v935 = vpop.f32.mrb[0].mxu0
      %v936 = vpop.f32.mrb[0].mxu0
      %v937 = vadd.f32 0.0, %v936
      %v938 = vpop.f32.mrb[0].mxu0
      %939 = vmatprep.mubr.bf16.mxu0 0
      %940 = vmatmul.mubr.bf16.gmra.mrb[0].mxu0 %v633
      %v941 = vpop.f32.mrb[0].mxu0
      %v942 = vadd.f32 0.0, %v941
      %v943 = vpop.f32.mrb[0].mxu0
      %v944 = vpop.f32.mrb[0].mxu0
      %v945 = vadd.f32 0.0, %v944
      %v946 = vpop.f32.mrb[0].mxu0
      %947 = vmatprep.mubr.bf16.mxu0 0
      %948 = vmatmul.mubr.bf16.gmra.mrb[0].mxu0 %v634
      %v949 = vpop.f32.mrb[0].mxu0
      %v950 = vadd.f32 0.0, %v949
      %v951 = vpop.f32.mrb[0].mxu0
      %v952 = vpop.f32.mrb[0].mxu0
      %v953 = vadd.f32 0.0, %v952
      %v954 = vpop.f32.mrb[0].mxu0
      %955 = vmatprep.mubr.bf16.mxu0 0
      %956 = vmatmul.mubr.bf16.gmra.mrb[0].mxu0 %v635
      %v957 = vpop.f32.mrb[0].mxu0
      %v958 = vadd.f32 0.0, %v957
      %v959 = vpop.f32.mrb[0].mxu0
      %v960 = vpop.f32.mrb[0].mxu0
      %v961 = vadd.f32 0.0, %v960
      %v962 = vpop.f32.mrb[0].mxu0
      %963 = vmatprep.mubr.bf16.mxu0 0
      %964 = vmatmul.mubr.bf16.gmra.mrb[0].mxu0 %v636
      %v965 = vpop.f32.mrb[0].mxu0
      %v966 = vadd.f32 0.0, %v965
      %v967 = vpop.f32.mrb[0].mxu0
      %v968 = vpop.f32.mrb[0].mxu0
      %v969 = vadd.f32 0.0, %v968
      %v970 = vpop.f32.mrb[0].mxu0
      %971 = vmatprep.mubr.bf16.mxu0 0
      %972 = vmatmul.mubr.bf16.gmra.mrb[0].mxu0 %v637
      %v973 = vpop.f32.mrb[0].mxu0
      %v974 = vadd.f32 0.0, %v973
      %v975 = vpop.f32.mrb[0].mxu0
      %v976 = vpop.f32.mrb[0].mxu0
      %v977 = vadd.f32 0.0, %v976
      %v978 = vpop.f32.mrb[0].mxu0
      %979 = vmatprep.mubr.bf16.mxu0 0
      %980 = vmatmul.mubr.bf16.gmra.mrb[0].mxu0 %v638
      %v981 = vpop.f32.mrb[0].mxu0
      %v982 = vadd.f32 0.0, %v981
      %v983 = vpop.f32.mrb[0].mxu0
      %v984 = vpop.f32.mrb[0].mxu0
      %v985 = vadd.f32 0.0, %v984
      %v986 = vpop.f32.mrb[0].mxu0
      %987 = vmatprep.mubr.bf16.mxu0 0
      %988 = vmatmul.mubr.bf16.gmra.mrb[0].mxu0 %v639
      %v989 = vpop.f32.mrb[0].mxu0
      %v990 = vadd.f32 0.0, %v989
      %v991 = vpop.f32.mrb[0].mxu0
      %v992 = vpop.f32.mrb[0].mxu0
      %v993 = vadd.f32 0.0, %v992
      %v994 = vpop.f32.mrb[0].mxu0
      %995 = vmatprep.mubr.bf16.mxu0 0
      %996 = vmatmul.mubr.bf16.gmra.mrb[0].mxu0 %v640
      %v997 = vpop.f32.mrb[0].mxu0
      %v998 = vadd.f32 0.0, %v997
      %v999 = vpop.f32.mrb[0].mxu0
      %v1000 = vpop.f32.mrb[0].mxu0
      %v1001 = vadd.f32 0.0, %v1000
      %v1002 = vpop.f32.mrb[0].mxu0
      %1003 = vmatprep.mubr.bf16.mxu0 0
      %1004 = vmatmul.mubr.bf16.gmra.mrb[0].mxu0 %v641
      %v1005 = vpop.f32.mrb[0].mxu0
      %v1006 = vadd.f32 0.0, %v1005
      %v1007 = vpop.f32.mrb[0].mxu0
      %v1008 = vpop.f32.mrb[0].mxu0
      %v1009 = vadd.f32 0.0, %v1008
      %v1010 = vpop.f32.mrb[0].mxu0
      %1011 = vmatprep.mubr.bf16.mxu0 0
      %1012 = vmatmul.mubr.bf16.gmra.mrb[0].mxu0 %v642
      %v1013 = vpop.f32.mrb[0].mxu0
      %v1014 = vadd.f32 0.0, %v1013
      %v1015 = vpop.f32.mrb[0].mxu0
      %v1016 = vpop.f32.mrb[0].mxu0
      %v1017 = vadd.f32 0.0, %v1016
      %v1018 = vpop.f32.mrb[0].mxu0
      %1019 = vmatprep.mubr.bf16.mxu0 0
      %1020 = vmatmul.mubr.bf16.gmra.mrb[0].mxu0 %v643
      %v1021 = vpop.f32.mrb[0].mxu0
      %v1022 = vadd.f32 0.0, %v1021
      %v1023 = vpop.f32.mrb[0].mxu0
      %v1024 = vpop.f32.mrb[0].mxu0
      %v1025 = vadd.f32 0.0, %v1024
      %v1026 = vpop.f32.mrb[0].mxu0
      %1027 = vmatprep.mubr.bf16.mxu0 0
      %1028 = vmatmul.mubr.bf16.gmra.mrb[0].mxu0 %v644
      %v1029 = vpop.f32.mrb[0].mxu0
      %v1030 = vadd.f32 0.0, %v1029
      %v1031 = vpop.f32.mrb[0].mxu0
      %v1032 = vpop.f32.mrb[0].mxu0
      %v1033 = vadd.f32 0.0, %v1032
      %v1034 = vpop.f32.mrb[0].mxu0
      %1035 = vmatprep.mubr.bf16.mxu0 0
      %1036 = vmatmul.mubr.bf16.gmra.mrb[0].mxu0 %v645
      %v1037 = vpop.f32.mrb[0].mxu0
      %v1038 = vadd.f32 0.0, %v1037
      %v1039 = vpop.f32.mrb[0].mxu0
      %v1040 = vpop.f32.mrb[0].mxu0
      %v1041 = vadd.f32 0.0, %v1040
      %v1042 = vpop.f32.mrb[0].mxu0
      %1043 = vmatprep.mubr.bf16.mxu0 0
      %1044 = vmatmul.mubr.bf16.gmra.mrb[0].mxu0 %v646
      %v1045 = vpop.f32.mrb[0].mxu0
      %v1046 = vadd.f32 0.0, %v1045
      %v1047 = vpop.f32.mrb[0].mxu0
      %v1048 = vpop.f32.mrb[0].mxu0
      %v1049 = vadd.f32 0.0, %v1048
      %v1050 = vpop.f32.mrb[0].mxu0
      %1051 = vmatprep.mubr.bf16.mxu0 0
      %1052 = vmatmul.mubr.bf16.gmra.mrb[0].mxu0 %v647
      %v1053 = vpop.f32.mrb[0].mxu0
      %v1054 = vadd.f32 0.0, %v1053
      %v1055 = vpop.f32.mrb[0].mxu0
      %v1056 = vpop.f32.mrb[0].mxu0
      %v1057 = vadd.f32 0.0, %v1056
      %v1058 = vpop.f32.mrb[0].mxu0
      %1059 = vmatprep.mubr.bf16.mxu0 0
      %1060 = vmatmul.mubr.bf16.gmra.mrb[0].mxu0 %v648
      %v1061 = vpop.f32.mrb[0].mxu0
      %v1062 = vadd.f32 0.0, %v1061
      %v1063 = vpop.f32.mrb[0].mxu0
      %v1064 = vpop.f32.mrb[0].mxu0
      %v1065 = vadd.f32 0.0, %v1064
      %v1066 = vpop.f32.mrb[0].mxu0
      %1067 = vmatprep.mubr.bf16.mxu0 0
      %1068 = vmatmul.mubr.bf16.gmra.mrb[0].mxu0 %v649
      %v1069 = vpop.f32.mrb[0].mxu0
      %v1070 = vadd.f32 0.0, %v1069
      %v1071 = vpop.f32.mrb[0].mxu0
      %v1072 = vpop.f32.mrb[0].mxu0
      %v1073 = vadd.f32 0.0, %v1072
      %v1074 = vpop.f32.mrb[0].mxu0
      %1075 = vmatprep.mubr.bf16.mxu0 0
      %1076 = vmatmul.mubr.bf16.gmra.mrb[0].mxu0 %v650
      %v1077 = vpop.f32.mrb[0].mxu0
      %v1078 = vadd.f32 0.0, %v1077
      %v1079 = vpop.f32.mrb[0].mxu0
      %v1080 = vpop.f32.mrb[0].mxu0
      %v1081 = vadd.f32 0.0, %v1080
      %v1082 = vpop.f32.mrb[0].mxu0
      %1083 = vmatprep.mubr.bf16.mxu0 0
      %1084 = vmatmul.mubr.bf16.gmra.mrb[0].mxu0 %v651
      %v1085 = vpop.f32.mrb[0].mxu0
      %v1086 = vadd.f32 0.0, %v1085
      %v1087 = vpop.f32.mrb[0].mxu0
      %v1088 = vpop.f32.mrb[0].mxu0
      %v1089 = vadd.f32 0.0, %v1088
      %v1090 = vpop.f32.mrb[0].mxu0
      %1091 = vmatprep.mubr.bf16.mxu0 0
      %1092 = vmatmul.mubr.bf16.gmra.mrb[0].mxu0 %v652
      %v1093 = vpop.f32.mrb[0].mxu0
      %v1094 = vadd.f32 0.0, %v1093
      %v1095 = vpop.f32.mrb[0].mxu0
      %v1096 = vpop.f32.mrb[0].mxu0
      %v1097 = vadd.f32 0.0, %v1096
      %v1098 = vpop.f32.mrb[0].mxu0
      %1099 = vmatprep.mubr.bf16.mxu0 0
      %1100 = vmatmul.mubr.bf16.gmra.mrb[0].mxu0 %v653
      %v1101 = vpop.f32.mrb[0].mxu0
      %v1102 = vadd.f32 0.0, %v1101
      %v1103 = vpop.f32.mrb[0].mxu0
      %v1104 = vpop.f32.mrb[0].mxu0
      %v1105 = vadd.f32 0.0, %v1104
      %v1106 = vpop.f32.mrb[0].mxu0
      %1107 = vmatprep.mubr.bf16.mxu0 0
      %1108 = vmatmul.mubr.bf16.gmra.mrb[0].mxu0 %v654
      %v1109 = vpop.f32.mrb[0].mxu0
      %v1110 = vadd.f32 0.0, %v1109
      %v1111 = vpop.f32.mrb[0].mxu0
      %v1112 = vpop.f32.mrb[0].mxu0
      %v1113 = vadd.f32 0.0, %v1112
      %v1114 = vpop.f32.mrb[0].mxu0
      %1115 = vmatprep.mubr.bf16.mxu0 0
      %1116 = vmatmul.mubr.bf16.gmra.mrb[0].mxu0 %v655
      %v1117 = vpop.f32.mrb[0].mxu0
      %v1118 = vadd.f32 0.0, %v1117
      %v1119 = vpop.f32.mrb[0].mxu0
      %v1120 = vpop.f32.mrb[0].mxu0
      %v1121 = vadd.f32 0.0, %v1120
      %v1122 = vpop.f32.mrb[0].mxu0
      %1123 = vmatprep.mubr.bf16.mxu0 0
      %1124 = vmatmul.mubr.bf16.gmra.mrb[0].mxu0 %v656
      %v1125 = vpop.f32.mrb[0].mxu0
      %v1126 = vadd.f32 0.0, %v1125
      %v1127 = vpop.f32.mrb[0].mxu0
      %v1128 = vpop.f32.mrb[0].mxu0
      %v1129 = vadd.f32 0.0, %v1128
      %v1130 = vpop.f32.mrb[0].mxu0
      %1131 = vmatprep.mubr.bf16.mxu0 0
      %1132 = vmatmul.mubr.bf16.gmra.mrb[0].mxu0 %v657
      %v1133 = vpop.f32.mrb[0].mxu0
      %v1134 = vadd.f32 0.0, %v1133
      %v1135 = vpop.f32.mrb[0].mxu0
      %v1136 = vpop.f32.mrb[0].mxu0
      %v1137 = vadd.f32 0.0, %v1136
      %v1138 = vpop.f32.mrb[0].mxu0
      %1139 = vmatprep.mubr.bf16.mxu0 0
      %1140 = vmatmul.mubr.bf16.gmra.mrb[0].mxu0 %v658
      %v1141 = vpop.f32.mrb[0].mxu0
      %v1142 = vadd.f32 0.0, %v1141
      %v1143 = vpop.f32.mrb[0].mxu0
      %v1144 = vpop.f32.mrb[0].mxu0
      %v1145 = vadd.f32 0.0, %v1144
      %v1146 = vpop.f32.mrb[0].mxu0
      %1147 = vmatprep.mubr.bf16.mxu0 0
      %1148 = vmatmul.mubr.bf16.gmra.mrb[0].mxu0 %v659
      %v1149 = vpop.f32.mrb[0].mxu0
      %v1150 = vadd.f32 0.0, %v1149
      %v1151 = vpop.f32.mrb[0].mxu0
      %v1152 = vpop.f32.mrb[0].mxu0
      %v1153 = vadd.f32 0.0, %v1152
      %v1154 = vpop.f32.mrb[0].mxu0
      %1155 = vmatprep.mubr.bf16.mxu0 0
      %1156 = vmatmul.mubr.bf16.gmra.mrb[0].mxu0 %v660
      %v1157 = vpop.f32.mrb[0].mxu0
      %v1158 = vadd.f32 0.0, %v1157
      %v1159 = vpop.f32.mrb[0].mxu0
      %v1160 = vpop.f32.mrb[0].mxu0
      %v1161 = vadd.f32 0.0, %v1160
      %v1162 = vpop.f32.mrb[0].mxu0
      %1163 = vmatprep.mubr.bf16.mxu0 0
      %1164 = vmatmul.mubr.bf16.gmra.mrb[0].mxu0 %v661
      %v1165 = vpop.f32.mrb[0].mxu0
      %v1166 = vadd.f32 0.0, %v1165
      %v1167 = vpop.f32.mrb[0].mxu0
      %v1168 = vpop.f32.mrb[0].mxu0
      %v1169 = vadd.f32 0.0, %v1168
      %v1170 = vpop.f32.mrb[0].mxu0
      %1171 = vmatprep.mubr.bf16.mxu0 0
      %1172 = vmatmul.mubr.bf16.gmra.mrb[0].mxu0 %v662
      %v1173 = vpop.f32.mrb[0].mxu0
      %v1174 = vadd.f32 0.0, %v1173
      %v1175 = vpop.f32.mrb[0].mxu0
      %v1176 = vpop.f32.mrb[0].mxu0
      %v1177 = vadd.f32 0.0, %v1176
      %v1178 = vpop.f32.mrb[0].mxu0
      %1179 = vmatprep.mubr.bf16.mxu0 0
      %1180 = vmatmul.mubr.bf16.gmra.mrb[0].mxu0 %v663
      %v1181 = vpop.f32.mrb[0].mxu0
      %v1182 = vadd.f32 0.0, %v1181
      %v1183 = vpop.f32.mrb[0].mxu0
      %v1184 = vpop.f32.mrb[0].mxu0
      %v1185 = vadd.f32 0.0, %v1184
      %v1186 = vpop.f32.mrb[0].mxu0
      %1187 = vmatprep.mubr.bf16.mxu0 0
      %1188 = vmatmul.mubr.bf16.gmra.mrb[0].mxu0 %v664
      %v1189 = vpop.f32.mrb[0].mxu0
      %v1190 = vadd.f32 0.0, %v1189
      %v1191 = vpop.f32.mrb[0].mxu0
      %v1192 = vpop.f32.mrb[0].mxu0
      %v1193 = vadd.f32 0.0, %v1192
      %v1194 = vpop.f32.mrb[0].mxu0
      %1195 = vmatprep.mubr.bf16.mxu0 0
      %1196 = vmatmul.mubr.bf16.gmra.mrb[0].mxu0 %v665
      %v1197 = vpop.f32.mrb[0].mxu0
      %v1198 = vadd.f32 0.0, %v1197
      %v1199 = vpop.f32.mrb[0].mxu0
      %v1200 = vpop.f32.mrb[0].mxu0
      %v1201 = vadd.f32 0.0, %v1200
      %v1202 = vpop.f32.mrb[0].mxu0
      %1203 = vmatprep.mubr.bf16.mxu0 0
      %1204 = vmatmul.mubr.bf16.gmra.mrb[0].mxu0 %v666
      %v1205 = vpop.f32.mrb[0].mxu0
      %v1206 = vadd.f32 0.0, %v1205
      %v1207 = vpop.f32.mrb[0].mxu0
      %v1208 = vpop.f32.mrb[0].mxu0
      %v1209 = vadd.f32 0.0, %v1208
      %v1210 = vpop.f32.mrb[0].mxu0
      %1211 = vmatprep.mubr.bf16.mxu0 0
      %1212 = vmatmul.mubr.bf16.gmra.mrb[0].mxu0 %v667
      %v1213 = vpop.f32.mrb[0].mxu0
      %v1214 = vadd.f32 0.0, %v1213
      %v1215 = vpop.f32.mrb[0].mxu0
      %v1216 = vpop.f32.mrb[0].mxu0
      %v1217 = vadd.f32 0.0, %v1216
      %v1218 = vpop.f32.mrb[0].mxu0
      %1219 = vmatprep.mubr.bf16.mxu0 0
      %1220 = vmatmul.mubr.bf16.gmra.mrb[0].mxu0 %v668
      %v1221 = vpop.f32.mrb[0].mxu0
      %v1222 = vadd.f32 0.0, %v1221
      %v1223 = vpop.f32.mrb[0].mxu0
      %v1224 = vpop.f32.mrb[0].mxu0
      %v1225 = vadd.f32 0.0, %v1224
      %v1226 = vpop.f32.mrb[0].mxu0
      %1227 = vmatprep.mubr.bf16.mxu0 0
      %1228 = vmatmul.mubr.bf16.gmra.mrb[0].mxu0 %v669
      %v1229 = vpop.f32.mrb[0].mxu0
      %v1230 = vadd.f32 0.0, %v1229
      %v1231 = vpop.f32.mrb[0].mxu0
      %v1232 = vpop.f32.mrb[0].mxu0
      %v1233 = vadd.f32 0.0, %v1232
      %v1234 = vpop.f32.mrb[0].mxu0
      %1235 = vmatprep.mubr.bf16.mxu0 0
      %1236 = vmatmul.mubr.bf16.gmra.mrb[0].mxu0 %v670
      %v1237 = vpop.f32.mrb[0].mxu0
      %v1238 = vadd.f32 0.0, %v1237
      %v1239 = vpop.f32.mrb[0].mxu0
      %v1240 = vpop.f32.mrb[0].mxu0
      %v1241 = vadd.f32 0.0, %v1240
      %v1242 = vpop.f32.mrb[0].mxu0
      %1243 = vmatprep.mubr.bf16.mxu0 0
      %1244 = vmatmul.mubr.bf16.gmra.mrb[0].mxu0 %v671
      %v1245 = vpop.f32.mrb[0].mxu0
      %v1246 = vadd.f32 0.0, %v1245
      %v1247 = vpop.f32.mrb[0].mxu0
      %v1248 = vpop.f32.mrb[0].mxu0
      %v1249 = vadd.f32 0.0, %v1248
      %v1250 = vpop.f32.mrb[0].mxu0
      %1251 = vmatprep.mubr.bf16.mxu0 0
      %1252 = vmatmul.mubr.bf16.gmra.mrb[0].mxu0 %v672
      %v1253 = vpop.f32.mrb[0].mxu0
      %v1254 = vadd.f32 0.0, %v1253
      %v1255 = vpop.f32.mrb[0].mxu0
      %v1256 = vpop.f32.mrb[0].mxu0
      %v1257 = vadd.f32 0.0, %v1256
      %v1258 = vpop.f32.mrb[0].mxu0
      %1259 = vmatprep.mubr.bf16.mxu0 0
      %1260 = vmatmul.mubr.bf16.gmra.mrb[0].mxu0 %v673
      %v1261 = vpop.f32.mrb[0].mxu0
      %v1262 = vadd.f32 0.0, %v1261
      %v1263 = vpop.f32.mrb[0].mxu0
      %v1264 = vpop.f32.mrb[0].mxu0
      %v1265 = vadd.f32 0.0, %v1264
      %v1266 = vpop.f32.mrb[0].mxu0
      %1267 = vmatprep.mubr.bf16.mxu0 0
      %1268 = vmatmul.mubr.bf16.gmra.mrb[0].mxu0 %v674
      %v1269 = vpop.f32.mrb[0].mxu0
      %v1270 = vadd.f32 0.0, %v1269
      %v1271 = vpop.f32.mrb[0].mxu0
      %v1272 = vpop.f32.mrb[0].mxu0
      %v1273 = vadd.f32 0.0, %v1272
      %v1274 = vpop.f32.mrb[0].mxu0
      %1275 = vmatprep.mubr.bf16.mxu0 0
      %1276 = vmatmul.mubr.bf16.gmra.mrb[0].mxu0 %v675
      %v1277 = vpop.f32.mrb[0].mxu0
      %v1278 = vadd.f32 0.0, %v1277
      %v1279 = vpop.f32.mrb[0].mxu0
      %v1280 = vpop.f32.mrb[0].mxu0
      %v1281 = vadd.f32 0.0, %v1280
      %v1282 = vpop.f32.mrb[0].mxu0
      %1283 = vmatprep.mubr.bf16.mxu0 0
      %1284 = vmatmul.mubr.bf16.gmra.mrb[0].mxu0 %v676
      %v1285 = vpop.f32.mrb[0].mxu0
      %v1286 = vadd.f32 0.0, %v1285
      %v1287 = vpop.f32.mrb[0].mxu0
      %v1288 = vpop.f32.mrb[0].mxu0
      %v1289 = vadd.f32 0.0, %v1288
      %v1290 = vpop.f32.mrb[0].mxu0
      %1291 = vmatprep.mubr.bf16.mxu0 0
      %1292 = vmatmul.mubr.bf16.gmra.mrb[0].mxu0 %v677
      %v1293 = vpop.f32.mrb[0].mxu0
      %v1294 = vadd.f32 0.0, %v1293
      %v1295 = vpop.f32.mrb[0].mxu0
      %v1296 = vpop.f32.mrb[0].mxu0
      %v1297 = vadd.f32 0.0, %v1296
      %v1298 = vpop.f32.mrb[0].mxu0
      %1299 = vmatprep.mubr.bf16.mxu0 0
      %1300 = vmatmul.mubr.bf16.gmra.mrb[0].mxu0 %v678
      %v1301 = vpop.f32.mrb[0].mxu0
      %v1302 = vadd.f32 0.0, %v1301
      %v1303 = vpop.f32.mrb[0].mxu0
      %v1304 = vpop.f32.mrb[0].mxu0
      %v1305 = vadd.f32 0.0, %v1304
      %v1306 = vpop.f32.mrb[0].mxu0
      %1307 = vmatprep.mubr.bf16.mxu0 0
      %1308 = vmatmul.mubr.bf16.gmra.mrb[0].mxu0 %v679
      %v1309 = vpop.f32.mrb[0].mxu0
      %v1310 = vadd.f32 0.0, %v1309
      %v1311 = vpop.f32.mrb[0].mxu0
      %v1312 = vpop.f32.mrb[0].mxu0
      %v1313 = vadd.f32 0.0, %v1312
      %v1314 = vpop.f32.mrb[0].mxu0
      %1315 = vmatprep.mubr.bf16.mxu0 0
      %1316 = vmatmul.mubr.bf16.gmra.mrb[0].mxu0 %v680
      %v1317 = vpop.f32.mrb[0].mxu0
      %v1318 = vadd.f32 0.0, %v1317
      %v1319 = vpop.f32.mrb[0].mxu0
      %v1320 = vpop.f32.mrb[0].mxu0
      %v1321 = vadd.f32 0.0, %v1320
      %v1322 = vpop.f32.mrb[0].mxu0
      %1323 = vmatprep.mubr.bf16.mxu0 0
      %1324 = vmatmul.mubr.bf16.gmra.mrb[0].mxu0 %v681
      %v1325 = vpop.f32.mrb[0].mxu0
      %v1326 = vadd.f32 0.0, %v1325
      %v1327 = vpop.f32.mrb[0].mxu0
      %v1328 = vpop.f32.mrb[0].mxu0
      %v1329 = vadd.f32 0.0, %v1328
      %v1330 = vpop.f32.mrb[0].mxu0
      %1331 = vmatprep.mubr.bf16.mxu0 0
      %1332 = vmatmul.mubr.bf16.gmra.mrb[0].mxu0 %v682
      %v1333 = vpop.f32.mrb[0].mxu0
      %v1334 = vadd.f32 0.0, %v1333
      %v1335 = vpop.f32.mrb[0].mxu0
      %v1336 = vpop.f32.mrb[0].mxu0
      %v1337 = vadd.f32 0.0, %v1336
      %v1338 = vpop.f32.mrb[0].mxu0
      %1339 = vdwg.mxu0
      %p1340 = scmp.eq.s32.totalorder %s19, 0
      %p1341 = scmp.eq.s32.totalorder %s20, 0
      %p1342 = pnand %p1340, %p1341
      %p1343 = pneg %p1342
      // Predicated region
      $region37: #{discriminator64.4} parent=35 // pred_check
        _
      $region38: #{discriminator64.4} parent=35 // pred_check_branch
        %1345 = sbr.rel (%p1342) target = $region40
      $region39: #{discriminator64.4} parent=35 // pred_region
        %1346 = vst [vmem:[#allocation2] sm:$0x1] 0.0
        %1347 = vst [vmem:[#allocation3] sm:$0x1] 0.0
      $region40: #{discriminator64.4} parent=35 // pred_fallthru
        _
      // Predicated region
      $region41: #{discriminator64.4} parent=35 // pred_check
        %p1348 = pneg %p1340
      $region42: #{discriminator64.4} parent=35 // pred_check_branch
        %1350 = sbr.rel (%p1348) target = $region44
      $region43: #{discriminator64.4} parent=35 // pred_region
        %v1351 = vld [vmem:[#allocation2] sm:$0x1]
        %v1352 = vadd.f32 %v830, %v833
        %v1353 = vadd.f32 %v1352, %v838
        %v1354 = vadd.f32 %v1353, %v841
        %v1355 = vadd.f32 %v1354, %v846
        %v1356 = vadd.f32 %v1355, %v849
        %v1357 = vadd.f32 %v1356, %v854
        %v1358 = vadd.f32 %v1357, %v857
        %v1359 = vadd.f32 %v1358, %v862
        %v1360 = vadd.f32 %v1359, %v865
        %v1361 = vadd.f32 %v1360, %v870
        %v1362 = vadd.f32 %v1361, %v873
        %v1363 = vadd.f32 %v1362, %v878
        %v1364 = vadd.f32 %v1363, %v881
        %v1365 = vadd.f32 %v1364, %v886
        %v1366 = vadd.f32 %v1365, %v889
        %v1367 = vadd.f32 %v1366, %v894
        %v1368 = vadd.f32 %v1367, %v897
        %v1369 = vadd.f32 %v1368, %v902
        %v1370 = vadd.f32 %v1369, %v905
        %v1371 = vadd.f32 %v1370, %v910
        %v1372 = vadd.f32 %v1371, %v913
        %v1373 = vadd.f32 %v1372, %v918
        %v1374 = vadd.f32 %v1373, %v921
        %v1375 = vadd.f32 %v1374, %v926
        %v1376 = vadd.f32 %v1375, %v929
        %v1377 = vadd.f32 %v1376, %v934
        %v1378 = vadd.f32 %v1377, %v937
        %v1379 = vadd.f32 %v1378, %v942
        %v1380 = vadd.f32 %v1379, %v945
        %v1381 = vadd.f32 %v1380, %v950
        %v1382 = vadd.f32 %v1381, %v953
        %v1383 = vadd.f32 %v1382, %v958
        %v1384 = vadd.f32 %v1383, %v961
        %v1385 = vadd.f32 %v1384, %v966
        %v1386 = vadd.f32 %v1385, %v969
        %v1387 = vadd.f32 %v1386, %v974
        %v1388 = vadd.f32 %v1387, %v977
        %v1389 = vadd.f32 %v1388, %v982
        %v1390 = vadd.f32 %v1389, %v985
        %v1391 = vadd.f32 %v1390, %v990
        %v1392 = vadd.f32 %v1391, %v993
        %v1393 = vadd.f32 %v1392, %v998
        %v1394 = vadd.f32 %v1393, %v1001
        %v1395 = vadd.f32 %v1394, %v1006
        %v1396 = vadd.f32 %v1395, %v1009
        %v1397 = vadd.f32 %v1396, %v1014
        %v1398 = vadd.f32 %v1397, %v1017
        %v1399 = vadd.f32 %v1398, %v1022
        %v1400 = vadd.f32 %v1399, %v1025
        %v1401 = vadd.f32 %v1400, %v1030
        %v1402 = vadd.f32 %v1401, %v1033
        %v1403 = vadd.f32 %v1402, %v1038
        %v1404 = vadd.f32 %v1403, %v1041
        %v1405 = vadd.f32 %v1404, %v1046
        %v1406 = vadd.f32 %v1405, %v1049
        %v1407 = vadd.f32 %v1406, %v1054
        %v1408 = vadd.f32 %v1407, %v1057
        %v1409 = vadd.f32 %v1408, %v1062
        %v1410 = vadd.f32 %v1409, %v1065
        %v1411 = vadd.f32 %v1410, %v1070
        %v1412 = vadd.f32 %v1411, %v1073
        %v1413 = vadd.f32 %v1412, %v1078
        %v1414 = vadd.f32 %v1413, %v1081
        %v1415 = vadd.f32 %v1414, %v1086
        %v1416 = vadd.f32 %v1415, %v1089
        %v1417 = vadd.f32 %v1416, %v1094
        %v1418 = vadd.f32 %v1417, %v1097
        %v1419 = vadd.f32 %v1418, %v1102
        %v1420 = vadd.f32 %v1419, %v1105
        %v1421 = vadd.f32 %v1420, %v1110
        %v1422 = vadd.f32 %v1421, %v1113
        %v1423 = vadd.f32 %v1422, %v1118
        %v1424 = vadd.f32 %v1423, %v1121
        %v1425 = vadd.f32 %v1424, %v1126
        %v1426 = vadd.f32 %v1425, %v1129
        %v1427 = vadd.f32 %v1426, %v1134
        %v1428 = vadd.f32 %v1427, %v1137
        %v1429 = vadd.f32 %v1428, %v1142
        %v1430 = vadd.f32 %v1429, %v1145
        %v1431 = vadd.f32 %v1430, %v1150
        %v1432 = vadd.f32 %v1431, %v1153
        %v1433 = vadd.f32 %v1432, %v1158
        %v1434 = vadd.f32 %v1433, %v1161
        %v1435 = vadd.f32 %v1434, %v1166
        %v1436 = vadd.f32 %v1435, %v1169
        %v1437 = vadd.f32 %v1436, %v1174
        %v1438 = vadd.f32 %v1437, %v1177
        %v1439 = vadd.f32 %v1438, %v1182
        %v1440 = vadd.f32 %v1439, %v1185
        %v1441 = vadd.f32 %v1440, %v1190
        %v1442 = vadd.f32 %v1441, %v1193
        %v1443 = vadd.f32 %v1442, %v1198
        %v1444 = vadd.f32 %v1443, %v1201
        %v1445 = vadd.f32 %v1444, %v1206
        %v1446 = vadd.f32 %v1445, %v1209
        %v1447 = vadd.f32 %v1446, %v1214
        %v1448 = vadd.f32 %v1447, %v1217
        %v1449 = vadd.f32 %v1448, %v1222
        %v1450 = vadd.f32 %v1449, %v1225
        %v1451 = vadd.f32 %v1450, %v1230
        %v1452 = vadd.f32 %v1451, %v1233
        %v1453 = vadd.f32 %v1452, %v1238
        %v1454 = vadd.f32 %v1453, %v1241
        %v1455 = vadd.f32 %v1454, %v1246
        %v1456 = vadd.f32 %v1455, %v1249
        %v1457 = vadd.f32 %v1456, %v1254
        %v1458 = vadd.f32 %v1457, %v1257
        %v1459 = vadd.f32 %v1458, %v1262
        %v1460 = vadd.f32 %v1459, %v1265
        %v1461 = vadd.f32 %v1460, %v1270
        %v1462 = vadd.f32 %v1461, %v1273
        %v1463 = vadd.f32 %v1462, %v1278
        %v1464 = vadd.f32 %v1463, %v1281
        %v1465 = vadd.f32 %v1464, %v1286
        %v1466 = vadd.f32 %v1465, %v1289
        %v1467 = vadd.f32 %v1466, %v1294
        %v1468 = vadd.f32 %v1467, %v1297
        %v1469 = vadd.f32 %v1468, %v1302
        %v1470 = vadd.f32 %v1469, %v1305
        %v1471 = vadd.f32 %v1470, %v1310
        %v1472 = vadd.f32 %v1471, %v1313
        %v1473 = vadd.f32 %v1472, %v1318
        %v1474 = vadd.f32 %v1473, %v1321
        %v1475 = vadd.f32 %v1474, %v1326
        %v1476 = vadd.f32 %v1475, %v1329
        %v1477 = vadd.f32 %v1476, %v1334
        %v1478 = vadd.f32 %v1477, %v1337
        %v1479 = vrot.slane %v1478, 4
        %v1480 = vadd.f32 %v1478, %v1479
        %v1481 = vrot.slane %v1480, 2
        %v1482 = vadd.f32 %v1480, %v1481
        %v1483 = vrot.slane %v1482, 1
        %v1484 = vadd.f32 %v1482, %v1483
        %v1485 = vadd.f32 %v1351, %v1484
        %1486 = vst [vmem:[#allocation2] sm:$0x1] %v1485
        %v1487 = vld [vmem:[#allocation3] sm:$0x1]
        %v1488 = vmul.f32 %v830, %v830
        %v1489 = vmul.f32 %v833, %v833
        %v1490 = vmul.f32 %v838, %v838
        %v1491 = vmul.f32 %v841, %v841
        %v1492 = vmul.f32 %v846, %v846
        %v1493 = vmul.f32 %v849, %v849
        %v1494 = vmul.f32 %v854, %v854
        %v1495 = vmul.f32 %v857, %v857
        %v1496 = vmul.f32 %v862, %v862
        %v1497 = vmul.f32 %v865, %v865
        %v1498 = vmul.f32 %v870, %v870
        %v1499 = vmul.f32 %v873, %v873
        %v1500 = vmul.f32 %v878, %v878
        %v1501 = vmul.f32 %v881, %v881
        %v1502 = vmul.f32 %v886, %v886
        %v1503 = vmul.f32 %v889, %v889
        %v1504 = vmul.f32 %v894, %v894
        %v1505 = vmul.f32 %v897, %v897
        %v1506 = vmul.f32 %v902, %v902
        %v1507 = vmul.f32 %v905, %v905
        %v1508 = vmul.f32 %v910, %v910
        %v1509 = vmul.f32 %v913, %v913
        %v1510 = vmul.f32 %v918, %v918
        %v1511 = vmul.f32 %v921, %v921
        %v1512 = vmul.f32 %v926, %v926
        %v1513 = vmul.f32 %v929, %v929
        %v1514 = vmul.f32 %v934, %v934
        %v1515 = vmul.f32 %v937, %v937
        %v1516 = vmul.f32 %v942, %v942
        %v1517 = vmul.f32 %v945, %v945
        %v1518 = vmul.f32 %v950, %v950
        %v1519 = vmul.f32 %v953, %v953
        %v1520 = vmul.f32 %v958, %v958
        %v1521 = vmul.f32 %v961, %v961
        %v1522 = vmul.f32 %v966, %v966
        %v1523 = vmul.f32 %v969, %v969
        %v1524 = vmul.f32 %v974, %v974
        %v1525 = vmul.f32 %v977, %v977
        %v1526 = vmul.f32 %v982, %v982
        %v1527 = vmul.f32 %v985, %v985
        %v1528 = vmul.f32 %v990, %v990
        %v1529 = vmul.f32 %v993, %v993
        %v1530 = vmul.f32 %v998, %v998
        %v1531 = vmul.f32 %v1001, %v1001
        %v1532 = vmul.f32 %v1006, %v1006
        %v1533 = vmul.f32 %v1009, %v1009
        %v1534 = vmul.f32 %v1014, %v1014
        %v1535 = vmul.f32 %v1017, %v1017
        %v1536 = vmul.f32 %v1022, %v1022
        %v1537 = vmul.f32 %v1025, %v1025
        %v1538 = vmul.f32 %v1030, %v1030
        %v1539 = vmul.f32 %v1033, %v1033
        %v1540 = vmul.f32 %v1038, %v1038
        %v1541 = vmul.f32 %v1041, %v1041
        %v1542 = vmul.f32 %v1046, %v1046
        %v1543 = vmul.f32 %v1049, %v1049
        %v1544 = vmul.f32 %v1054, %v1054
        %v1545 = vmul.f32 %v1057, %v1057
        %v1546 = vmul.f32 %v1062, %v1062
        %v1547 = vmul.f32 %v1065, %v1065
        %v1548 = vmul.f32 %v1070, %v1070
        %v1549 = vmul.f32 %v1073, %v1073
        %v1550 = vmul.f32 %v1078, %v1078
        %v1551 = vmul.f32 %v1081, %v1081
        %v1552 = vmul.f32 %v1086, %v1086
        %v1553 = vmul.f32 %v1089, %v1089
        %v1554 = vmul.f32 %v1094, %v1094
        %v1555 = vmul.f32 %v1097, %v1097
        %v1556 = vmul.f32 %v1102, %v1102
        %v1557 = vmul.f32 %v1105, %v1105
        %v1558 = vmul.f32 %v1110, %v1110
        %v1559 = vmul.f32 %v1113, %v1113
        %v1560 = vmul.f32 %v1118, %v1118
        %v1561 = vmul.f32 %v1121, %v1121
        %v1562 = vmul.f32 %v1126, %v1126
        %v1563 = vmul.f32 %v1129, %v1129
        %v1564 = vmul.f32 %v1134, %v1134
        %v1565 = vmul.f32 %v1137, %v1137
        %v1566 = vmul.f32 %v1142, %v1142
        %v1567 = vmul.f32 %v1145, %v1145
        %v1568 = vmul.f32 %v1150, %v1150
        %v1569 = vmul.f32 %v1153, %v1153
        %v1570 = vmul.f32 %v1158, %v1158
        %v1571 = vmul.f32 %v1161, %v1161
        %v1572 = vmul.f32 %v1166, %v1166
        %v1573 = vmul.f32 %v1169, %v1169
        %v1574 = vmul.f32 %v1174, %v1174
        %v1575 = vmul.f32 %v1177, %v1177
        %v1576 = vmul.f32 %v1182, %v1182
        %v1577 = vmul.f32 %v1185, %v1185
        %v1578 = vmul.f32 %v1190, %v1190
        %v1579 = vmul.f32 %v1193, %v1193
        %v1580 = vmul.f32 %v1198, %v1198
        %v1581 = vmul.f32 %v1201, %v1201
        %v1582 = vmul.f32 %v1206, %v1206
        %v1583 = vmul.f32 %v1209, %v1209
        %v1584 = vmul.f32 %v1214, %v1214
        %v1585 = vmul.f32 %v1217, %v1217
        %v1586 = vmul.f32 %v1222, %v1222
        %v1587 = vmul.f32 %v1225, %v1225
        %v1588 = vmul.f32 %v1230, %v1230
        %v1589 = vmul.f32 %v1233, %v1233
        %v1590 = vmul.f32 %v1238, %v1238
        %v1591 = vmul.f32 %v1241, %v1241
        %v1592 = vmul.f32 %v1246, %v1246
        %v1593 = vmul.f32 %v1249, %v1249
        %v1594 = vmul.f32 %v1254, %v1254
        %v1595 = vmul.f32 %v1257, %v1257
        %v1596 = vmul.f32 %v1262, %v1262
        %v1597 = vmul.f32 %v1265, %v1265
        %v1598 = vmul.f32 %v1270, %v1270
        %v1599 = vmul.f32 %v1273, %v1273
        %v1600 = vmul.f32 %v1278, %v1278
        %v1601 = vmul.f32 %v1281, %v1281
        %v1602 = vmul.f32 %v1286, %v1286
        %v1603 = vmul.f32 %v1289, %v1289
        %v1604 = vmul.f32 %v1294, %v1294
        %v1605 = vmul.f32 %v1297, %v1297
        %v1606 = vmul.f32 %v1302, %v1302
        %v1607 = vmul.f32 %v1305, %v1305
        %v1608 = vmul.f32 %v1310, %v1310
        %v1609 = vmul.f32 %v1313, %v1313
        %v1610 = vmul.f32 %v1318, %v1318
        %v1611 = vmul.f32 %v1321, %v1321
        %v1612 = vmul.f32 %v1326, %v1326
        %v1613 = vmul.f32 %v1329, %v1329
        %v1614 = vmul.f32 %v1334, %v1334
        %v1615 = vmul.f32 %v1337, %v1337
        %v1616 = vadd.f32 %v1488, %v1489
        %v1617 = vadd.f32 %v1616, %v1490
        %v1618 = vadd.f32 %v1617, %v1491
        %v1619 = vadd.f32 %v1618, %v1492
        %v1620 = vadd.f32 %v1619, %v1493
        %v1621 = vadd.f32 %v1620, %v1494
        %v1622 = vadd.f32 %v1621, %v1495
        %v1623 = vadd.f32 %v1622, %v1496
        %v1624 = vadd.f32 %v1623, %v1497
        %v1625 = vadd.f32 %v1624, %v1498
        %v1626 = vadd.f32 %v1625, %v1499
        %v1627 = vadd.f32 %v1626, %v1500
        %v1628 = vadd.f32 %v1627, %v1501
        %v1629 = vadd.f32 %v1628, %v1502
        %v1630 = vadd.f32 %v1629, %v1503
        %v1631 = vadd.f32 %v1630, %v1504
        %v1632 = vadd.f32 %v1631, %v1505
        %v1633 = vadd.f32 %v1632, %v1506
        %v1634 = vadd.f32 %v1633, %v1507
        %v1635 = vadd.f32 %v1634, %v1508
        %v1636 = vadd.f32 %v1635, %v1509
        %v1637 = vadd.f32 %v1636, %v1510
        %v1638 = vadd.f32 %v1637, %v1511
        %v1639 = vadd.f32 %v1638, %v1512
        %v1640 = vadd.f32 %v1639, %v1513
        %v1641 = vadd.f32 %v1640, %v1514
        %v1642 = vadd.f32 %v1641, %v1515
        %v1643 = vadd.f32 %v1642, %v1516
        %v1644 = vadd.f32 %v1643, %v1517
        %v1645 = vadd.f32 %v1644, %v1518
        %v1646 = vadd.f32 %v1645, %v1519
        %v1647 = vadd.f32 %v1646, %v1520
        %v1648 = vadd.f32 %v1647, %v1521
        %v1649 = vadd.f32 %v1648, %v1522
        %v1650 = vadd.f32 %v1649, %v1523
        %v1651 = vadd.f32 %v1650, %v1524
        %v1652 = vadd.f32 %v1651, %v1525
        %v1653 = vadd.f32 %v1652, %v1526
        %v1654 = vadd.f32 %v1653, %v1527
        %v1655 = vadd.f32 %v1654, %v1528
        %v1656 = vadd.f32 %v1655, %v1529
        %v1657 = vadd.f32 %v1656, %v1530
        %v1658 = vadd.f32 %v1657, %v1531
        %v1659 = vadd.f32 %v1658, %v1532
        %v1660 = vadd.f32 %v1659, %v1533
        %v1661 = vadd.f32 %v1660, %v1534
        %v1662 = vadd.f32 %v1661, %v1535
        %v1663 = vadd.f32 %v1662, %v1536
        %v1664 = vadd.f32 %v1663, %v1537
        %v1665 = vadd.f32 %v1664, %v1538
        %v1666 = vadd.f32 %v1665, %v1539
        %v1667 = vadd.f32 %v1666, %v1540
        %v1668 = vadd.f32 %v1667, %v1541
        %v1669 = vadd.f32 %v1668, %v1542
        %v1670 = vadd.f32 %v1669, %v1543
        %v1671 = vadd.f32 %v1670, %v1544
        %v1672 = vadd.f32 %v1671, %v1545
        %v1673 = vadd.f32 %v1672, %v1546
        %v1674 = vadd.f32 %v1673, %v1547
        %v1675 = vadd.f32 %v1674, %v1548
        %v1676 = vadd.f32 %v1675, %v1549
        %v1677 = vadd.f32 %v1676, %v1550
        %v1678 = vadd.f32 %v1677, %v1551
        %v1679 = vadd.f32 %v1678, %v1552
        %v1680 = vadd.f32 %v1679, %v1553
        %v1681 = vadd.f32 %v1680, %v1554
        %v1682 = vadd.f32 %v1681, %v1555
        %v1683 = vadd.f32 %v1682, %v1556
        %v1684 = vadd.f32 %v1683, %v1557
        %v1685 = vadd.f32 %v1684, %v1558
        %v1686 = vadd.f32 %v1685, %v1559
        %v1687 = vadd.f32 %v1686, %v1560
        %v1688 = vadd.f32 %v1687, %v1561
        %v1689 = vadd.f32 %v1688, %v1562
        %v1690 = vadd.f32 %v1689, %v1563
        %v1691 = vadd.f32 %v1690, %v1564
        %v1692 = vadd.f32 %v1691, %v1565
        %v1693 = vadd.f32 %v1692, %v1566
        %v1694 = vadd.f32 %v1693, %v1567
        %v1695 = vadd.f32 %v1694, %v1568
        %v1696 = vadd.f32 %v1695, %v1569
        %v1697 = vadd.f32 %v1696, %v1570
        %v1698 = vadd.f32 %v1697, %v1571
        %v1699 = vadd.f32 %v1698, %v1572
        %v1700 = vadd.f32 %v1699, %v1573
        %v1701 = vadd.f32 %v1700, %v1574
        %v1702 = vadd.f32 %v1701, %v1575
        %v1703 = vadd.f32 %v1702, %v1576
        %v1704 = vadd.f32 %v1703, %v1577
        %v1705 = vadd.f32 %v1704, %v1578
        %v1706 = vadd.f32 %v1705, %v1579
        %v1707 = vadd.f32 %v1706, %v1580
        %v1708 = vadd.f32 %v1707, %v1581
        %v1709 = vadd.f32 %v1708, %v1582
        %v1710 = vadd.f32 %v1709, %v1583
        %v1711 = vadd.f32 %v1710, %v1584
        %v1712 = vadd.f32 %v1711, %v1585
        %v1713 = vadd.f32 %v1712, %v1586
        %v1714 = vadd.f32 %v1713, %v1587
        %v1715 = vadd.f32 %v1714, %v1588
        %v1716 = vadd.f32 %v1715, %v1589
        %v1717 = vadd.f32 %v1716, %v1590
        %v1718 = vadd.f32 %v1717, %v1591
        %v1719 = vadd.f32 %v1718, %v1592
        %v1720 = vadd.f32 %v1719, %v1593
        %v1721 = vadd.f32 %v1720, %v1594
        %v1722 = vadd.f32 %v1721, %v1595
        %v1723 = vadd.f32 %v1722, %v1596
        %v1724 = vadd.f32 %v1723, %v1597
        %v1725 = vadd.f32 %v1724, %v1598
        %v1726 = vadd.f32 %v1725, %v1599
        %v1727 = vadd.f32 %v1726, %v1600
        %v1728 = vadd.f32 %v1727, %v1601
        %v1729 = vadd.f32 %v1728, %v1602
        %v1730 = vadd.f32 %v1729, %v1603
        %v1731 = vadd.f32 %v1730, %v1604
        %v1732 = vadd.f32 %v1731, %v1605
        %v1733 = vadd.f32 %v1732, %v1606
        %v1734 = vadd.f32 %v1733, %v1607
        %v1735 = vadd.f32 %v1734, %v1608
        %v1736 = vadd.f32 %v1735, %v1609
        %v1737 = vadd.f32 %v1736, %v1610
        %v1738 = vadd.f32 %v1737, %v1611
        %v1739 = vadd.f32 %v1738, %v1612
        %v1740 = vadd.f32 %v1739, %v1613
        %v1741 = vadd.f32 %v1740, %v1614
        %v1742 = vadd.f32 %v1741, %v1615
        %v1743 = vrot.slane %v1742, 4
        %v1744 = vadd.f32 %v1742, %v1743
        %v1745 = vrot.slane %v1744, 2
        %v1746 = vadd.f32 %v1744, %v1745
        %v1747 = vrot.slane %v1746, 1
        %v1748 = vadd.f32 %v1746, %v1747
        %v1749 = vadd.f32 %v1487, %v1748
        %1750 = vst [vmem:[#allocation3] sm:$0x1] %v1749
      $region44: #{discriminator64.4} parent=35 // pred_fallthru
        _
      %p1751 = scmp.eq.s32.totalorder %s19, 1
      // Predicated region
      $region45: #{discriminator64.4} parent=35 // pred_check
        %p1752 = pneg %p1751
      $region46: #{discriminator64.4} parent=35 // pred_check_branch
        %1754 = sbr.rel (%p1752) target = $region48
      $region47: #{discriminator64.4} parent=35 // pred_region
        %v1755 = vld [vmem:[#allocation2] sm:$0x1]
        %v1756 = vmul.f32 %v1755, 0.00048828125
        %v1757 = vld [vmem:[#allocation3] sm:$0x1]
        %v1758 = vmul.f32 %v1757, 0.00048828125
        %v1759 = vmul.f32 %v1756, %v1756
        %v1760 = vsub.f32 %v1758, %v1759
        %v1761 = vmax.f32 %v1760, 0.0
        %v1762 = vld [vmem:[%s2] sm:$0x1]
        %v1763 = vadd.f32 %v1761, 1e-05
        %v1764 = vrsqrt.pop %v1763
        %v1765 = vmul.f32 %v1762, %v1764
        %v1766 = vld [vmem:[%s3] sm:$0x1]
        %v1767 = vmul.f32 %v1756, %v1765
        %v1768 = vsub.f32 %v1766, %v1767
        %v1770 = vlaneseq
        %v1771 = vshrl.u32 %v1770, 7
        %v1772 = vsub.s32 0, %v1771
        %v1773 = vrot.slane %v1765, %v1772
        %v1775 = vmul.f32 %v830, %v1773
        %v1776 = vmul.f32 %v833, %v1773
        %v1777 = vmul.f32 %v838, %v1773
        %v1778 = vmul.f32 %v841, %v1773
        %v1779 = vmul.f32 %v846, %v1773
        %v1780 = vmul.f32 %v849, %v1773
        %v1781 = vmul.f32 %v854, %v1773
        %v1782 = vmul.f32 %v857, %v1773
        %v1783 = vmul.f32 %v862, %v1773
        %v1784 = vmul.f32 %v865, %v1773
        %v1785 = vmul.f32 %v870, %v1773
        %v1786 = vmul.f32 %v873, %v1773
        %v1787 = vmul.f32 %v878, %v1773
        %v1788 = vmul.f32 %v881, %v1773
        %v1789 = vmul.f32 %v886, %v1773
        %v1790 = vmul.f32 %v889, %v1773
        %v1791 = vmul.f32 %v894, %v1773
        %v1792 = vmul.f32 %v897, %v1773
        %v1793 = vmul.f32 %v902, %v1773
        %v1794 = vmul.f32 %v905, %v1773
        %v1795 = vmul.f32 %v910, %v1773
        %v1796 = vmul.f32 %v913, %v1773
        %v1797 = vmul.f32 %v918, %v1773
        %v1798 = vmul.f32 %v921, %v1773
        %v1799 = vmul.f32 %v926, %v1773
        %v1800 = vmul.f32 %v929, %v1773
        %v1801 = vmul.f32 %v934, %v1773
        %v1802 = vmul.f32 %v937, %v1773
        %v1803 = vmul.f32 %v942, %v1773
        %v1804 = vmul.f32 %v945, %v1773
        %v1805 = vmul.f32 %v950, %v1773
        %v1806 = vmul.f32 %v953, %v1773
        %v1807 = vmul.f32 %v958, %v1773
        %v1808 = vmul.f32 %v961, %v1773
        %v1809 = vmul.f32 %v966, %v1773
        %v1810 = vmul.f32 %v969, %v1773
        %v1811 = vmul.f32 %v974, %v1773
        %v1812 = vmul.f32 %v977, %v1773
        %v1813 = vmul.f32 %v982, %v1773
        %v1814 = vmul.f32 %v985, %v1773
        %v1815 = vmul.f32 %v990, %v1773
        %v1816 = vmul.f32 %v993, %v1773
        %v1817 = vmul.f32 %v998, %v1773
        %v1818 = vmul.f32 %v1001, %v1773
        %v1819 = vmul.f32 %v1006, %v1773
        %v1820 = vmul.f32 %v1009, %v1773
        %v1821 = vmul.f32 %v1014, %v1773
        %v1822 = vmul.f32 %v1017, %v1773
        %v1823 = vmul.f32 %v1022, %v1773
        %v1824 = vmul.f32 %v1025, %v1773
        %v1825 = vmul.f32 %v1030, %v1773
        %v1826 = vmul.f32 %v1033, %v1773
        %v1827 = vmul.f32 %v1038, %v1773
        %v1828 = vmul.f32 %v1041, %v1773
        %v1829 = vmul.f32 %v1046, %v1773
        %v1830 = vmul.f32 %v1049, %v1773
        %v1831 = vmul.f32 %v1054, %v1773
        %v1832 = vmul.f32 %v1057, %v1773
        %v1833 = vmul.f32 %v1062, %v1773
        %v1834 = vmul.f32 %v1065, %v1773
        %v1835 = vmul.f32 %v1070, %v1773
        %v1836 = vmul.f32 %v1073, %v1773
        %v1837 = vmul.f32 %v1078, %v1773
        %v1838 = vmul.f32 %v1081, %v1773
        %v1839 = vmul.f32 %v1086, %v1773
        %v1840 = vmul.f32 %v1089, %v1773
        %v1841 = vmul.f32 %v1094, %v1773
        %v1842 = vmul.f32 %v1097, %v1773
        %v1843 = vmul.f32 %v1102, %v1773
        %v1844 = vmul.f32 %v1105, %v1773
        %v1845 = vmul.f32 %v1110, %v1773
        %v1846 = vmul.f32 %v1113, %v1773
        %v1847 = vmul.f32 %v1118, %v1773
        %v1848 = vmul.f32 %v1121, %v1773
        %v1849 = vmul.f32 %v1126, %v1773
        %v1850 = vmul.f32 %v1129, %v1773
        %v1851 = vmul.f32 %v1134, %v1773
        %v1852 = vmul.f32 %v1137, %v1773
        %v1853 = vmul.f32 %v1142, %v1773
        %v1854 = vmul.f32 %v1145, %v1773
        %v1855 = vmul.f32 %v1150, %v1773
        %v1856 = vmul.f32 %v1153, %v1773
        %v1857 = vmul.f32 %v1158, %v1773
        %v1858 = vmul.f32 %v1161, %v1773
        %v1859 = vmul.f32 %v1166, %v1773
        %v1860 = vmul.f32 %v1169, %v1773
        %v1861 = vmul.f32 %v1174, %v1773
        %v1862 = vmul.f32 %v1177, %v1773
        %v1863 = vmul.f32 %v1182, %v1773
        %v1864 = vmul.f32 %v1185, %v1773
        %v1865 = vmul.f32 %v1190, %v1773
        %v1866 = vmul.f32 %v1193, %v1773
        %v1867 = vmul.f32 %v1198, %v1773
        %v1868 = vmul.f32 %v1201, %v1773
        %v1869 = vmul.f32 %v1206, %v1773
        %v1870 = vmul.f32 %v1209, %v1773
        %v1871 = vmul.f32 %v1214, %v1773
        %v1872 = vmul.f32 %v1217, %v1773
        %v1873 = vmul.f32 %v1222, %v1773
        %v1874 = vmul.f32 %v1225, %v1773
        %v1875 = vmul.f32 %v1230, %v1773
        %v1876 = vmul.f32 %v1233, %v1773
        %v1877 = vmul.f32 %v1238, %v1773
        %v1878 = vmul.f32 %v1241, %v1773
        %v1879 = vmul.f32 %v1246, %v1773
        %v1880 = vmul.f32 %v1249, %v1773
        %v1881 = vmul.f32 %v1254, %v1773
        %v1882 = vmul.f32 %v1257, %v1773
        %v1883 = vmul.f32 %v1262, %v1773
        %v1884 = vmul.f32 %v1265, %v1773
        %v1885 = vmul.f32 %v1270, %v1773
        %v1886 = vmul.f32 %v1273, %v1773
        %v1887 = vmul.f32 %v1278, %v1773
        %v1888 = vmul.f32 %v1281, %v1773
        %v1889 = vmul.f32 %v1286, %v1773
        %v1890 = vmul.f32 %v1289, %v1773
        %v1891 = vmul.f32 %v1294, %v1773
        %v1892 = vmul.f32 %v1297, %v1773
        %v1893 = vmul.f32 %v1302, %v1773
        %v1894 = vmul.f32 %v1305, %v1773
        %v1895 = vmul.f32 %v1310, %v1773
        %v1896 = vmul.f32 %v1313, %v1773
        %v1897 = vmul.f32 %v1318, %v1773
        %v1898 = vmul.f32 %v1321, %v1773
        %v1899 = vmul.f32 %v1326, %v1773
        %v1900 = vmul.f32 %v1329, %v1773
        %v1901 = vmul.f32 %v1334, %v1773
        %v1902 = vmul.f32 %v1337, %v1773
        %v1904 = vlaneseq
        %v1905 = vshrl.u32 %v1904, 7
        %v1906 = vsub.s32 0, %v1905
        %v1907 = vrot.slane %v1768, %v1906
        %v1909 = vadd.f32 %v1775, %v1907
        %v1910 = vadd.f32 %v1776, %v1907
        %v1911 = vadd.f32 %v1777, %v1907
        %v1912 = vadd.f32 %v1778, %v1907
        %v1913 = vadd.f32 %v1779, %v1907
        %v1914 = vadd.f32 %v1780, %v1907
        %v1915 = vadd.f32 %v1781, %v1907
        %v1916 = vadd.f32 %v1782, %v1907
        %v1917 = vadd.f32 %v1783, %v1907
        %v1918 = vadd.f32 %v1784, %v1907
        %v1919 = vadd.f32 %v1785, %v1907
        %v1920 = vadd.f32 %v1786, %v1907
        %v1921 = vadd.f32 %v1787, %v1907
        %v1922 = vadd.f32 %v1788, %v1907
        %v1923 = vadd.f32 %v1789, %v1907
        %v1924 = vadd.f32 %v1790, %v1907
        %v1925 = vadd.f32 %v1791, %v1907
        %v1926 = vadd.f32 %v1792, %v1907
        %v1927 = vadd.f32 %v1793, %v1907
        %v1928 = vadd.f32 %v1794, %v1907
        %v1929 = vadd.f32 %v1795, %v1907
        %v1930 = vadd.f32 %v1796, %v1907
        %v1931 = vadd.f32 %v1797, %v1907
        %v1932 = vadd.f32 %v1798, %v1907
        %v1933 = vadd.f32 %v1799, %v1907
        %v1934 = vadd.f32 %v1800, %v1907
        %v1935 = vadd.f32 %v1801, %v1907
        %v1936 = vadd.f32 %v1802, %v1907
        %v1937 = vadd.f32 %v1803, %v1907
        %v1938 = vadd.f32 %v1804, %v1907
        %v1939 = vadd.f32 %v1805, %v1907
        %v1940 = vadd.f32 %v1806, %v1907
        %v1941 = vadd.f32 %v1807, %v1907
        %v1942 = vadd.f32 %v1808, %v1907
        %v1943 = vadd.f32 %v1809, %v1907
        %v1944 = vadd.f32 %v1810, %v1907
        %v1945 = vadd.f32 %v1811, %v1907
        %v1946 = vadd.f32 %v1812, %v1907
        %v1947 = vadd.f32 %v1813, %v1907
        %v1948 = vadd.f32 %v1814, %v1907
        %v1949 = vadd.f32 %v1815, %v1907
        %v1950 = vadd.f32 %v1816, %v1907
        %v1951 = vadd.f32 %v1817, %v1907
        %v1952 = vadd.f32 %v1818, %v1907
        %v1953 = vadd.f32 %v1819, %v1907
        %v1954 = vadd.f32 %v1820, %v1907
        %v1955 = vadd.f32 %v1821, %v1907
        %v1956 = vadd.f32 %v1822, %v1907
        %v1957 = vadd.f32 %v1823, %v1907
        %v1958 = vadd.f32 %v1824, %v1907
        %v1959 = vadd.f32 %v1825, %v1907
        %v1960 = vadd.f32 %v1826, %v1907
        %v1961 = vadd.f32 %v1827, %v1907
        %v1962 = vadd.f32 %v1828, %v1907
        %v1963 = vadd.f32 %v1829, %v1907
        %v1964 = vadd.f32 %v1830, %v1907
        %v1965 = vadd.f32 %v1831, %v1907
        %v1966 = vadd.f32 %v1832, %v1907
        %v1967 = vadd.f32 %v1833, %v1907
        %v1968 = vadd.f32 %v1834, %v1907
        %v1969 = vadd.f32 %v1835, %v1907
        %v1970 = vadd.f32 %v1836, %v1907
        %v1971 = vadd.f32 %v1837, %v1907
        %v1972 = vadd.f32 %v1838, %v1907
        %v1973 = vadd.f32 %v1839, %v1907
        %v1974 = vadd.f32 %v1840, %v1907
        %v1975 = vadd.f32 %v1841, %v1907
        %v1976 = vadd.f32 %v1842, %v1907
        %v1977 = vadd.f32 %v1843, %v1907
        %v1978 = vadd.f32 %v1844, %v1907
        %v1979 = vadd.f32 %v1845, %v1907
        %v1980 = vadd.f32 %v1846, %v1907
        %v1981 = vadd.f32 %v1847, %v1907
        %v1982 = vadd.f32 %v1848, %v1907
        %v1983 = vadd.f32 %v1849, %v1907
        %v1984 = vadd.f32 %v1850, %v1907
        %v1985 = vadd.f32 %v1851, %v1907
        %v1986 = vadd.f32 %v1852, %v1907
        %v1987 = vadd.f32 %v1853, %v1907
        %v1988 = vadd.f32 %v1854, %v1907
        %v1989 = vadd.f32 %v1855, %v1907
        %v1990 = vadd.f32 %v1856, %v1907
        %v1991 = vadd.f32 %v1857, %v1907
        %v1992 = vadd.f32 %v1858, %v1907
        %v1993 = vadd.f32 %v1859, %v1907
        %v1994 = vadd.f32 %v1860, %v1907
        %v1995 = vadd.f32 %v1861, %v1907
        %v1996 = vadd.f32 %v1862, %v1907
        %v1997 = vadd.f32 %v1863, %v1907
        %v1998 = vadd.f32 %v1864, %v1907
        %v1999 = vadd.f32 %v1865, %v1907
        %v2000 = vadd.f32 %v1866, %v1907
        %v2001 = vadd.f32 %v1867, %v1907
        %v2002 = vadd.f32 %v1868, %v1907
        %v2003 = vadd.f32 %v1869, %v1907
        %v2004 = vadd.f32 %v1870, %v1907
        %v2005 = vadd.f32 %v1871, %v1907
        %v2006 = vadd.f32 %v1872, %v1907
        %v2007 = vadd.f32 %v1873, %v1907
        %v2008 = vadd.f32 %v1874, %v1907
        %v2009 = vadd.f32 %v1875, %v1907
        %v2010 = vadd.f32 %v1876, %v1907
        %v2011 = vadd.f32 %v1877, %v1907
        %v2012 = vadd.f32 %v1878, %v1907
        %v2013 = vadd.f32 %v1879, %v1907
        %v2014 = vadd.f32 %v1880, %v1907
        %v2015 = vadd.f32 %v1881, %v1907
        %v2016 = vadd.f32 %v1882, %v1907
        %v2017 = vadd.f32 %v1883, %v1907
        %v2018 = vadd.f32 %v1884, %v1907
        %v2019 = vadd.f32 %v1885, %v1907
        %v2020 = vadd.f32 %v1886, %v1907
        %v2021 = vadd.f32 %v1887, %v1907
        %v2022 = vadd.f32 %v1888, %v1907
        %v2023 = vadd.f32 %v1889, %v1907
        %v2024 = vadd.f32 %v1890, %v1907
        %v2025 = vadd.f32 %v1891, %v1907
        %v2026 = vadd.f32 %v1892, %v1907
        %v2027 = vadd.f32 %v1893, %v1907
        %v2028 = vadd.f32 %v1894, %v1907
        %v2029 = vadd.f32 %v1895, %v1907
        %v2030 = vadd.f32 %v1896, %v1907
        %v2031 = vadd.f32 %v1897, %v1907
        %v2032 = vadd.f32 %v1898, %v1907
        %v2033 = vadd.f32 %v1899, %v1907
        %v2034 = vadd.f32 %v1900, %v1907
        %v2035 = vadd.f32 %v1901, %v1907
        %v2036 = vadd.f32 %v1902, %v1907
        %vm2037 = vcmp.gt.f32.partialorder %v1909, 0.0
        %vm2038 = vcmp.gt.f32.partialorder %v1910, 0.0
        %vm2039 = vcmp.gt.f32.partialorder %v1911, 0.0
        %vm2040 = vcmp.gt.f32.partialorder %v1912, 0.0
        %vm2041 = vcmp.gt.f32.partialorder %v1913, 0.0
        %vm2042 = vcmp.gt.f32.partialorder %v1914, 0.0
        %vm2043 = vcmp.gt.f32.partialorder %v1915, 0.0
        %vm2044 = vcmp.gt.f32.partialorder %v1916, 0.0
        %vm2045 = vcmp.gt.f32.partialorder %v1917, 0.0
        %vm2046 = vcmp.gt.f32.partialorder %v1918, 0.0
        %vm2047 = vcmp.gt.f32.partialorder %v1919, 0.0
        %vm2048 = vcmp.gt.f32.partialorder %v1920, 0.0
        %vm2049 = vcmp.gt.f32.partialorder %v1921, 0.0
        %vm2050 = vcmp.gt.f32.partialorder %v1922, 0.0
        %vm2051 = vcmp.gt.f32.partialorder %v1923, 0.0
        %vm2052 = vcmp.gt.f32.partialorder %v1924, 0.0
        %vm2053 = vcmp.gt.f32.partialorder %v1925, 0.0
        %vm2054 = vcmp.gt.f32.partialorder %v1926, 0.0
        %vm2055 = vcmp.gt.f32.partialorder %v1927, 0.0
        %vm2056 = vcmp.gt.f32.partialorder %v1928, 0.0
        %vm2057 = vcmp.gt.f32.partialorder %v1929, 0.0
        %vm2058 = vcmp.gt.f32.partialorder %v1930, 0.0
        %vm2059 = vcmp.gt.f32.partialorder %v1931, 0.0
        %vm2060 = vcmp.gt.f32.partialorder %v1932, 0.0
        %vm2061 = vcmp.gt.f32.partialorder %v1933, 0.0
        %vm2062 = vcmp.gt.f32.partialorder %v1934, 0.0
        %vm2063 = vcmp.gt.f32.partialorder %v1935, 0.0
        %vm2064 = vcmp.gt.f32.partialorder %v1936, 0.0
        %vm2065 = vcmp.gt.f32.partialorder %v1937, 0.0
        %vm2066 = vcmp.gt.f32.partialorder %v1938, 0.0
        %vm2067 = vcmp.gt.f32.partialorder %v1939, 0.0
        %vm2068 = vcmp.gt.f32.partialorder %v1940, 0.0
        %vm2069 = vcmp.gt.f32.partialorder %v1941, 0.0
        %vm2070 = vcmp.gt.f32.partialorder %v1942, 0.0
        %vm2071 = vcmp.gt.f32.partialorder %v1943, 0.0
        %vm2072 = vcmp.gt.f32.partialorder %v1944, 0.0
        %vm2073 = vcmp.gt.f32.partialorder %v1945, 0.0
        %vm2074 = vcmp.gt.f32.partialorder %v1946, 0.0
        %vm2075 = vcmp.gt.f32.partialorder %v1947, 0.0
        %vm2076 = vcmp.gt.f32.partialorder %v1948, 0.0
        %vm2077 = vcmp.gt.f32.partialorder %v1949, 0.0
        %vm2078 = vcmp.gt.f32.partialorder %v1950, 0.0
        %vm2079 = vcmp.gt.f32.partialorder %v1951, 0.0
        %vm2080 = vcmp.gt.f32.partialorder %v1952, 0.0
        %vm2081 = vcmp.gt.f32.partialorder %v1953, 0.0
        %vm2082 = vcmp.gt.f32.partialorder %v1954, 0.0
        %vm2083 = vcmp.gt.f32.partialorder %v1955, 0.0
        %vm2084 = vcmp.gt.f32.partialorder %v1956, 0.0
        %vm2085 = vcmp.gt.f32.partialorder %v1957, 0.0
        %vm2086 = vcmp.gt.f32.partialorder %v1958, 0.0
        %vm2087 = vcmp.gt.f32.partialorder %v1959, 0.0
        %vm2088 = vcmp.gt.f32.partialorder %v1960, 0.0
        %vm2089 = vcmp.gt.f32.partialorder %v1961, 0.0
        %vm2090 = vcmp.gt.f32.partialorder %v1962, 0.0
        %vm2091 = vcmp.gt.f32.partialorder %v1963, 0.0
        %vm2092 = vcmp.gt.f32.partialorder %v1964, 0.0
        %vm2093 = vcmp.gt.f32.partialorder %v1965, 0.0
        %vm2094 = vcmp.gt.f32.partialorder %v1966, 0.0
        %vm2095 = vcmp.gt.f32.partialorder %v1967, 0.0
        %vm2096 = vcmp.gt.f32.partialorder %v1968, 0.0
        %vm2097 = vcmp.gt.f32.partialorder %v1969, 0.0
        %vm2098 = vcmp.gt.f32.partialorder %v1970, 0.0
        %vm2099 = vcmp.gt.f32.partialorder %v1971, 0.0
        %vm2100 = vcmp.gt.f32.partialorder %v1972, 0.0
        %vm2101 = vcmp.gt.f32.partialorder %v1973, 0.0
        %vm2102 = vcmp.gt.f32.partialorder %v1974, 0.0
        %vm2103 = vcmp.gt.f32.partialorder %v1975, 0.0
        %vm2104 = vcmp.gt.f32.partialorder %v1976, 0.0
        %vm2105 = vcmp.gt.f32.partialorder %v1977, 0.0
        %vm2106 = vcmp.gt.f32.partialorder %v1978, 0.0
        %vm2107 = vcmp.gt.f32.partialorder %v1979, 0.0
        %vm2108 = vcmp.gt.f32.partialorder %v1980, 0.0
        %vm2109 = vcmp.gt.f32.partialorder %v1981, 0.0
        %vm2110 = vcmp.gt.f32.partialorder %v1982, 0.0
        %vm2111 = vcmp.gt.f32.partialorder %v1983, 0.0
        %vm2112 = vcmp.gt.f32.partialorder %v1984, 0.0
        %vm2113 = vcmp.gt.f32.partialorder %v1985, 0.0
        %vm2114 = vcmp.gt.f32.partialorder %v1986, 0.0
        %vm2115 = vcmp.gt.f32.partialorder %v1987, 0.0
        %vm2116 = vcmp.gt.f32.partialorder %v1988, 0.0
        %vm2117 = vcmp.gt.f32.partialorder %v1989, 0.0
        %vm2118 = vcmp.gt.f32.partialorder %v1990, 0.0
        %vm2119 = vcmp.gt.f32.partialorder %v1991, 0.0
        %vm2120 = vcmp.gt.f32.partialorder %v1992, 0.0
        %vm2121 = vcmp.gt.f32.partialorder %v1993, 0.0
        %vm2122 = vcmp.gt.f32.partialorder %v1994, 0.0
        %vm2123 = vcmp.gt.f32.partialorder %v1995, 0.0
        %vm2124 = vcmp.gt.f32.partialorder %v1996, 0.0
        %vm2125 = vcmp.gt.f32.partialorder %v1997, 0.0
        %vm2126 = vcmp.gt.f32.partialorder %v1998, 0.0
        %vm2127 = vcmp.gt.f32.partialorder %v1999, 0.0
        %vm2128 = vcmp.gt.f32.partialorder %v2000, 0.0
        %vm2129 = vcmp.gt.f32.partialorder %v2001, 0.0
        %vm2130 = vcmp.gt.f32.partialorder %v2002, 0.0
        %vm2131 = vcmp.gt.f32.partialorder %v2003, 0.0
        %vm2132 = vcmp.gt.f32.partialorder %v2004, 0.0
        %vm2133 = vcmp.gt.f32.partialorder %v2005, 0.0
        %vm2134 = vcmp.gt.f32.partialorder %v2006, 0.0
        %vm2135 = vcmp.gt.f32.partialorder %v2007, 0.0
        %vm2136 = vcmp.gt.f32.partialorder %v2008, 0.0
        %vm2137 = vcmp.gt.f32.partialorder %v2009, 0.0
        %vm2138 = vcmp.gt.f32.partialorder %v2010, 0.0
        %vm2139 = vcmp.gt.f32.partialorder %v2011, 0.0
        %vm2140 = vcmp.gt.f32.partialorder %v2012, 0.0
        %vm2141 = vcmp.gt.f32.partialorder %v2013, 0.0
        %vm2142 = vcmp.gt.f32.partialorder %v2014, 0.0
        %vm2143 = vcmp.gt.f32.partialorder %v2015, 0.0
        %vm2144 = vcmp.gt.f32.partialorder %v2016, 0.0
        %vm2145 = vcmp.gt.f32.partialorder %v2017, 0.0
        %vm2146 = vcmp.gt.f32.partialorder %v2018, 0.0
        %vm2147 = vcmp.gt.f32.partialorder %v2019, 0.0
        %vm2148 = vcmp.gt.f32.partialorder %v2020, 0.0
        %vm2149 = vcmp.gt.f32.partialorder %v2021, 0.0
        %vm2150 = vcmp.gt.f32.partialorder %v2022, 0.0
        %vm2151 = vcmp.gt.f32.partialorder %v2023, 0.0
        %vm2152 = vcmp.gt.f32.partialorder %v2024, 0.0
        %vm2153 = vcmp.gt.f32.partialorder %v2025, 0.0
        %vm2154 = vcmp.gt.f32.partialorder %v2026, 0.0
        %vm2155 = vcmp.gt.f32.partialorder %v2027, 0.0
        %vm2156 = vcmp.gt.f32.partialorder %v2028, 0.0
        %vm2157 = vcmp.gt.f32.partialorder %v2029, 0.0
        %vm2158 = vcmp.gt.f32.partialorder %v2030, 0.0
        %vm2159 = vcmp.gt.f32.partialorder %v2031, 0.0
        %vm2160 = vcmp.gt.f32.partialorder %v2032, 0.0
        %vm2161 = vcmp.gt.f32.partialorder %v2033, 0.0
        %vm2162 = vcmp.gt.f32.partialorder %v2034, 0.0
        %vm2163 = vcmp.gt.f32.partialorder %v2035, 0.0
        %vm2164 = vcmp.gt.f32.partialorder %v2036, 0.0
        %v2165 = vmul.f32 %v1909, 0.2
        %v2166 = vmul.f32 %v1910, 0.2
        %v2167 = vmul.f32 %v1911, 0.2
        %v2168 = vmul.f32 %v1912, 0.2
        %v2169 = vmul.f32 %v1913, 0.2
        %v2170 = vmul.f32 %v1914, 0.2
        %v2171 = vmul.f32 %v1915, 0.2
        %v2172 = vmul.f32 %v1916, 0.2
        %v2173 = vmul.f32 %v1917, 0.2
        %v2174 = vmul.f32 %v1918, 0.2
        %v2175 = vmul.f32 %v1919, 0.2
        %v2176 = vmul.f32 %v1920, 0.2
        %v2177 = vmul.f32 %v1921, 0.2
        %v2178 = vmul.f32 %v1922, 0.2
        %v2179 = vmul.f32 %v1923, 0.2
        %v2180 = vmul.f32 %v1924, 0.2
        %v2181 = vmul.f32 %v1925, 0.2
        %v2182 = vmul.f32 %v1926, 0.2
        %v2183 = vmul.f32 %v1927, 0.2
        %v2184 = vmul.f32 %v1928, 0.2
        %v2185 = vmul.f32 %v1929, 0.2
        %v2186 = vmul.f32 %v1930, 0.2
        %v2187 = vmul.f32 %v1931, 0.2
        %v2188 = vmul.f32 %v1932, 0.2
        %v2189 = vmul.f32 %v1933, 0.2
        %v2190 = vmul.f32 %v1934, 0.2
        %v2191 = vmul.f32 %v1935, 0.2
        %v2192 = vmul.f32 %v1936, 0.2
        %v2193 = vmul.f32 %v1937, 0.2
        %v2194 = vmul.f32 %v1938, 0.2
        %v2195 = vmul.f32 %v1939, 0.2
        %v2196 = vmul.f32 %v1940, 0.2
        %v2197 = vmul.f32 %v1941, 0.2
        %v2198 = vmul.f32 %v1942, 0.2
        %v2199 = vmul.f32 %v1943, 0.2
        %v2200 = vmul.f32 %v1944, 0.2
        %v2201 = vmul.f32 %v1945, 0.2
        %v2202 = vmul.f32 %v1946, 0.2
        %v2203 = vmul.f32 %v1947, 0.2
        %v2204 = vmul.f32 %v1948, 0.2
        %v2205 = vmul.f32 %v1949, 0.2
        %v2206 = vmul.f32 %v1950, 0.2
        %v2207 = vmul.f32 %v1951, 0.2
        %v2208 = vmul.f32 %v1952, 0.2
        %v2209 = vmul.f32 %v1953, 0.2
        %v2210 = vmul.f32 %v1954, 0.2
        %v2211 = vmul.f32 %v1955, 0.2
        %v2212 = vmul.f32 %v1956, 0.2
        %v2213 = vmul.f32 %v1957, 0.2
        %v2214 = vmul.f32 %v1958, 0.2
        %v2215 = vmul.f32 %v1959, 0.2
        %v2216 = vmul.f32 %v1960, 0.2
        %v2217 = vmul.f32 %v1961, 0.2
        %v2218 = vmul.f32 %v1962, 0.2
        %v2219 = vmul.f32 %v1963, 0.2
        %v2220 = vmul.f32 %v1964, 0.2
        %v2221 = vmul.f32 %v1965, 0.2
        %v2222 = vmul.f32 %v1966, 0.2
        %v2223 = vmul.f32 %v1967, 0.2
        %v2224 = vmul.f32 %v1968, 0.2
        %v2225 = vmul.f32 %v1969, 0.2
        %v2226 = vmul.f32 %v1970, 0.2
        %v2227 = vmul.f32 %v1971, 0.2
        %v2228 = vmul.f32 %v1972, 0.2
        %v2229 = vmul.f32 %v1973, 0.2
        %v2230 = vmul.f32 %v1974, 0.2
        %v2231 = vmul.f32 %v1975, 0.2
        %v2232 = vmul.f32 %v1976, 0.2
        %v2233 = vmul.f32 %v1977, 0.2
        %v2234 = vmul.f32 %v1978, 0.2
        %v2235 = vmul.f32 %v1979, 0.2
        %v2236 = vmul.f32 %v1980, 0.2
        %v2237 = vmul.f32 %v1981, 0.2
        %v2238 = vmul.f32 %v1982, 0.2
        %v2239 = vmul.f32 %v1983, 0.2
        %v2240 = vmul.f32 %v1984, 0.2
        %v2241 = vmul.f32 %v1985, 0.2
        %v2242 = vmul.f32 %v1986, 0.2
        %v2243 = vmul.f32 %v1987, 0.2
        %v2244 = vmul.f32 %v1988, 0.2
        %v2245 = vmul.f32 %v1989, 0.2
        %v2246 = vmul.f32 %v1990, 0.2
        %v2247 = vmul.f32 %v1991, 0.2
        %v2248 = vmul.f32 %v1992, 0.2
        %v2249 = vmul.f32 %v1993, 0.2
        %v2250 = vmul.f32 %v1994, 0.2
        %v2251 = vmul.f32 %v1995, 0.2
        %v2252 = vmul.f32 %v1996, 0.2
        %v2253 = vmul.f32 %v1997, 0.2
        %v2254 = vmul.f32 %v1998, 0.2
        %v2255 = vmul.f32 %v1999, 0.2
        %v2256 = vmul.f32 %v2000, 0.2
        %v2257 = vmul.f32 %v2001, 0.2
        %v2258 = vmul.f32 %v2002, 0.2
        %v2259 = vmul.f32 %v2003, 0.2
        %v2260 = vmul.f32 %v2004, 0.2
        %v2261 = vmul.f32 %v2005, 0.2
        %v2262 = vmul.f32 %v2006, 0.2
        %v2263 = vmul.f32 %v2007, 0.2
        %v2264 = vmul.f32 %v2008, 0.2
        %v2265 = vmul.f32 %v2009, 0.2
        %v2266 = vmul.f32 %v2010, 0.2
        %v2267 = vmul.f32 %v2011, 0.2
        %v2268 = vmul.f32 %v2012, 0.2
        %v2269 = vmul.f32 %v2013, 0.2
        %v2270 = vmul.f32 %v2014, 0.2
        %v2271 = vmul.f32 %v2015, 0.2
        %v2272 = vmul.f32 %v2016, 0.2
        %v2273 = vmul.f32 %v2017, 0.2
        %v2274 = vmul.f32 %v2018, 0.2
        %v2275 = vmul.f32 %v2019, 0.2
        %v2276 = vmul.f32 %v2020, 0.2
        %v2277 = vmul.f32 %v2021, 0.2
        %v2278 = vmul.f32 %v2022, 0.2
        %v2279 = vmul.f32 %v2023, 0.2
        %v2280 = vmul.f32 %v2024, 0.2
        %v2281 = vmul.f32 %v2025, 0.2
        %v2282 = vmul.f32 %v2026, 0.2
        %v2283 = vmul.f32 %v2027, 0.2
        %v2284 = vmul.f32 %v2028, 0.2
        %v2285 = vmul.f32 %v2029, 0.2
        %v2286 = vmul.f32 %v2030, 0.2
        %v2287 = vmul.f32 %v2031, 0.2
        %v2288 = vmul.f32 %v2032, 0.2
        %v2289 = vmul.f32 %v2033, 0.2
        %v2290 = vmul.f32 %v2034, 0.2
        %v2291 = vmul.f32 %v2035, 0.2
        %v2292 = vmul.f32 %v2036, 0.2
        %v2293 = vsel %vm2037, %v1909, %v2165
        %v2294 = vsel %vm2038, %v1910, %v2166
        %v2295 = vsel %vm2039, %v1911, %v2167
        %v2296 = vsel %vm2040, %v1912, %v2168
        %v2297 = vsel %vm2041, %v1913, %v2169
        %v2298 = vsel %vm2042, %v1914, %v2170
        %v2299 = vsel %vm2043, %v1915, %v2171
        %v2300 = vsel %vm2044, %v1916, %v2172
        %v2301 = vsel %vm2045, %v1917, %v2173
        %v2302 = vsel %vm2046, %v1918, %v2174
        %v2303 = vsel %vm2047, %v1919, %v2175
        %v2304 = vsel %vm2048, %v1920, %v2176
        %v2305 = vsel %vm2049, %v1921, %v2177
        %v2306 = vsel %vm2050, %v1922, %v2178
        %v2307 = vsel %vm2051, %v1923, %v2179
        %v2308 = vsel %vm2052, %v1924, %v2180
        %v2309 = vsel %vm2053, %v1925, %v2181
        %v2310 = vsel %vm2054, %v1926, %v2182
        %v2311 = vsel %vm2055, %v1927, %v2183
        %v2312 = vsel %vm2056, %v1928, %v2184
        %v2313 = vsel %vm2057, %v1929, %v2185
        %v2314 = vsel %vm2058, %v1930, %v2186
        %v2315 = vsel %vm2059, %v1931, %v2187
        %v2316 = vsel %vm2060, %v1932, %v2188
        %v2317 = vsel %vm2061, %v1933, %v2189
        %v2318 = vsel %vm2062, %v1934, %v2190
        %v2319 = vsel %vm2063, %v1935, %v2191
        %v2320 = vsel %vm2064, %v1936, %v2192
        %v2321 = vsel %vm2065, %v1937, %v2193
        %v2322 = vsel %vm2066, %v1938, %v2194
        %v2323 = vsel %vm2067, %v1939, %v2195
        %v2324 = vsel %vm2068, %v1940, %v2196
        %v2325 = vsel %vm2069, %v1941, %v2197
        %v2326 = vsel %vm2070, %v1942, %v2198
        %v2327 = vsel %vm2071, %v1943, %v2199
        %v2328 = vsel %vm2072, %v1944, %v2200
        %v2329 = vsel %vm2073, %v1945, %v2201
        %v2330 = vsel %vm2074, %v1946, %v2202
        %v2331 = vsel %vm2075, %v1947, %v2203
        %v2332 = vsel %vm2076, %v1948, %v2204
        %v2333 = vsel %vm2077, %v1949, %v2205
        %v2334 = vsel %vm2078, %v1950, %v2206
        %v2335 = vsel %vm2079, %v1951, %v2207
        %v2336 = vsel %vm2080, %v1952, %v2208
        %v2337 = vsel %vm2081, %v1953, %v2209
        %v2338 = vsel %vm2082, %v1954, %v2210
        %v2339 = vsel %vm2083, %v1955, %v2211
        %v2340 = vsel %vm2084, %v1956, %v2212
        %v2341 = vsel %vm2085, %v1957, %v2213
        %v2342 = vsel %vm2086, %v1958, %v2214
        %v2343 = vsel %vm2087, %v1959, %v2215
        %v2344 = vsel %vm2088, %v1960, %v2216
        %v2345 = vsel %vm2089, %v1961, %v2217
        %v2346 = vsel %vm2090, %v1962, %v2218
        %v2347 = vsel %vm2091, %v1963, %v2219
        %v2348 = vsel %vm2092, %v1964, %v2220
        %v2349 = vsel %vm2093, %v1965, %v2221
        %v2350 = vsel %vm2094, %v1966, %v2222
        %v2351 = vsel %vm2095, %v1967, %v2223
        %v2352 = vsel %vm2096, %v1968, %v2224
        %v2353 = vsel %vm2097, %v1969, %v2225
        %v2354 = vsel %vm2098, %v1970, %v2226
        %v2355 = vsel %vm2099, %v1971, %v2227
        %v2356 = vsel %vm2100, %v1972, %v2228
        %v2357 = vsel %vm2101, %v1973, %v2229
        %v2358 = vsel %vm2102, %v1974, %v2230
        %v2359 = vsel %vm2103, %v1975, %v2231
        %v2360 = vsel %vm2104, %v1976, %v2232
        %v2361 = vsel %vm2105, %v1977, %v2233
        %v2362 = vsel %vm2106, %v1978, %v2234
        %v2363 = vsel %vm2107, %v1979, %v2235
        %v2364 = vsel %vm2108, %v1980, %v2236
        %v2365 = vsel %vm2109, %v1981, %v2237
        %v2366 = vsel %vm2110, %v1982, %v2238
        %v2367 = vsel %vm2111, %v1983, %v2239
        %v2368 = vsel %vm2112, %v1984, %v2240
        %v2369 = vsel %vm2113, %v1985, %v2241
        %v2370 = vsel %vm2114, %v1986, %v2242
        %v2371 = vsel %vm2115, %v1987, %v2243
        %v2372 = vsel %vm2116, %v1988, %v2244
        %v2373 = vsel %vm2117, %v1989, %v2245
        %v2374 = vsel %vm2118, %v1990, %v2246
        %v2375 = vsel %vm2119, %v1991, %v2247
        %v2376 = vsel %vm2120, %v1992, %v2248
        %v2377 = vsel %vm2121, %v1993, %v2249
        %v2378 = vsel %vm2122, %v1994, %v2250
        %v2379 = vsel %vm2123, %v1995, %v2251
        %v2380 = vsel %vm2124, %v1996, %v2252
        %v2381 = vsel %vm2125, %v1997, %v2253
        %v2382 = vsel %vm2126, %v1998, %v2254
        %v2383 = vsel %vm2127, %v1999, %v2255
        %v2384 = vsel %vm2128, %v2000, %v2256
        %v2385 = vsel %vm2129, %v2001, %v2257
        %v2386 = vsel %vm2130, %v2002, %v2258
        %v2387 = vsel %vm2131, %v2003, %v2259
        %v2388 = vsel %vm2132, %v2004, %v2260
        %v2389 = vsel %vm2133, %v2005, %v2261
        %v2390 = vsel %vm2134, %v2006, %v2262
        %v2391 = vsel %vm2135, %v2007, %v2263
        %v2392 = vsel %vm2136, %v2008, %v2264
        %v2393 = vsel %vm2137, %v2009, %v2265
        %v2394 = vsel %vm2138, %v2010, %v2266
        %v2395 = vsel %vm2139, %v2011, %v2267
        %v2396 = vsel %vm2140, %v2012, %v2268
        %v2397 = vsel %vm2141, %v2013, %v2269
        %v2398 = vsel %vm2142, %v2014, %v2270
        %v2399 = vsel %vm2143, %v2015, %v2271
        %v2400 = vsel %vm2144, %v2016, %v2272
        %v2401 = vsel %vm2145, %v2017, %v2273
        %v2402 = vsel %vm2146, %v2018, %v2274
        %v2403 = vsel %vm2147, %v2019, %v2275
        %v2404 = vsel %vm2148, %v2020, %v2276
        %v2405 = vsel %vm2149, %v2021, %v2277
        %v2406 = vsel %vm2150, %v2022, %v2278
        %v2407 = vsel %vm2151, %v2023, %v2279
        %v2408 = vsel %vm2152, %v2024, %v2280
        %v2409 = vsel %vm2153, %v2025, %v2281
        %v2410 = vsel %vm2154, %v2026, %v2282
        %v2411 = vsel %vm2155, %v2027, %v2283
        %v2412 = vsel %vm2156, %v2028, %v2284
        %v2413 = vsel %vm2157, %v2029, %v2285
        %v2414 = vsel %vm2158, %v2030, %v2286
        %v2415 = vsel %vm2159, %v2031, %v2287
        %v2416 = vsel %vm2160, %v2032, %v2288
        %v2417 = vsel %vm2161, %v2033, %v2289
        %v2418 = vsel %vm2162, %v2034, %v2290
        %v2419 = vsel %vm2163, %v2035, %v2291
        %v2420 = vsel %vm2164, %v2036, %v2292
        %v2421 = vpack.c.bf16 %v2294, %v2293
        %v2422 = vpack.c.bf16 %v2296, %v2295
        %v2423 = vpack.c.bf16 %v2298, %v2297
        %v2424 = vpack.c.bf16 %v2300, %v2299
        %v2425 = vpack.c.bf16 %v2302, %v2301
        %v2426 = vpack.c.bf16 %v2304, %v2303
        %v2427 = vpack.c.bf16 %v2306, %v2305
        %v2428 = vpack.c.bf16 %v2308, %v2307
        %v2429 = vpack.c.bf16 %v2310, %v2309
        %v2430 = vpack.c.bf16 %v2312, %v2311
        %v2431 = vpack.c.bf16 %v2314, %v2313
        %v2432 = vpack.c.bf16 %v2316, %v2315
        %v2433 = vpack.c.bf16 %v2318, %v2317
        %v2434 = vpack.c.bf16 %v2320, %v2319
        %v2435 = vpack.c.bf16 %v2322, %v2321
        %v2436 = vpack.c.bf16 %v2324, %v2323
        %v2437 = vpack.c.bf16 %v2326, %v2325
        %v2438 = vpack.c.bf16 %v2328, %v2327
        %v2439 = vpack.c.bf16 %v2330, %v2329
        %v2440 = vpack.c.bf16 %v2332, %v2331
        %v2441 = vpack.c.bf16 %v2334, %v2333
        %v2442 = vpack.c.bf16 %v2336, %v2335
        %v2443 = vpack.c.bf16 %v2338, %v2337
        %v2444 = vpack.c.bf16 %v2340, %v2339
        %v2445 = vpack.c.bf16 %v2342, %v2341
        %v2446 = vpack.c.bf16 %v2344, %v2343
        %v2447 = vpack.c.bf16 %v2346, %v2345
        %v2448 = vpack.c.bf16 %v2348, %v2347
        %v2449 = vpack.c.bf16 %v2350, %v2349
        %v2450 = vpack.c.bf16 %v2352, %v2351
        %v2451 = vpack.c.bf16 %v2354, %v2353
        %v2452 = vpack.c.bf16 %v2356, %v2355
        %v2453 = vpack.c.bf16 %v2358, %v2357
        %v2454 = vpack.c.bf16 %v2360, %v2359
        %v2455 = vpack.c.bf16 %v2362, %v2361
        %v2456 = vpack.c.bf16 %v2364, %v2363
        %v2457 = vpack.c.bf16 %v2366, %v2365
        %v2458 = vpack.c.bf16 %v2368, %v2367
        %v2459 = vpack.c.bf16 %v2370, %v2369
        %v2460 = vpack.c.bf16 %v2372, %v2371
        %v2461 = vpack.c.bf16 %v2374, %v2373
        %v2462 = vpack.c.bf16 %v2376, %v2375
        %v2463 = vpack.c.bf16 %v2378, %v2377
        %v2464 = vpack.c.bf16 %v2380, %v2379
        %v2465 = vpack.c.bf16 %v2382, %v2381
        %v2466 = vpack.c.bf16 %v2384, %v2383
        %v2467 = vpack.c.bf16 %v2386, %v2385
        %v2468 = vpack.c.bf16 %v2388, %v2387
        %v2469 = vpack.c.bf16 %v2390, %v2389
        %v2470 = vpack.c.bf16 %v2392, %v2391
        %v2471 = vpack.c.bf16 %v2394, %v2393
        %v2472 = vpack.c.bf16 %v2396, %v2395
        %v2473 = vpack.c.bf16 %v2398, %v2397
        %v2474 = vpack.c.bf16 %v2400, %v2399
        %v2475 = vpack.c.bf16 %v2402, %v2401
        %v2476 = vpack.c.bf16 %v2404, %v2403
        %v2477 = vpack.c.bf16 %v2406, %v2405
        %v2478 = vpack.c.bf16 %v2408, %v2407
        %v2479 = vpack.c.bf16 %v2410, %v2409
        %v2480 = vpack.c.bf16 %v2412, %v2411
        %v2481 = vpack.c.bf16 %v2414, %v2413
        %v2482 = vpack.c.bf16 %v2416, %v2415
        %v2483 = vpack.c.bf16 %v2418, %v2417
        %v2484 = vpack.c.bf16 %v2420, %v2419
        %v2549 = vunpack.c.l.b16 %v2421
        %v2550 = vunpack.c.h.b16 %v2421
        %v2551 = vunpack.c.l.b16 %v2422
        %v2552 = vunpack.c.h.b16 %v2422
        %v2553 = vunpack.c.l.b16 %v2423
        %v2554 = vunpack.c.h.b16 %v2423
        %v2555 = vunpack.c.l.b16 %v2424
        %v2556 = vunpack.c.h.b16 %v2424
        %v2557 = vunpack.c.l.b16 %v2425
        %v2558 = vunpack.c.h.b16 %v2425
        %v2559 = vunpack.c.l.b16 %v2426
        %v2560 = vunpack.c.h.b16 %v2426
        %v2561 = vunpack.c.l.b16 %v2427
        %v2562 = vunpack.c.h.b16 %v2427
        %v2563 = vunpack.c.l.b16 %v2428
        %v2564 = vunpack.c.h.b16 %v2428
        %v2565 = vunpack.c.l.b16 %v2429
        %v2566 = vunpack.c.h.b16 %v2429
        %v2567 = vunpack.c.l.b16 %v2430
        %v2568 = vunpack.c.h.b16 %v2430
        %v2569 = vunpack.c.l.b16 %v2431
        %v2570 = vunpack.c.h.b16 %v2431
        %v2571 = vunpack.c.l.b16 %v2432
        %v2572 = vunpack.c.h.b16 %v2432
        %v2573 = vunpack.c.l.b16 %v2433
        %v2574 = vunpack.c.h.b16 %v2433
        %v2575 = vunpack.c.l.b16 %v2434
        %v2576 = vunpack.c.h.b16 %v2434
        %v2577 = vunpack.c.l.b16 %v2435
        %v2578 = vunpack.c.h.b16 %v2435
        %v2579 = vunpack.c.l.b16 %v2436
        %v2580 = vunpack.c.h.b16 %v2436
        %v2581 = vunpack.c.l.b16 %v2437
        %v2582 = vunpack.c.h.b16 %v2437
        %v2583 = vunpack.c.l.b16 %v2438
        %v2584 = vunpack.c.h.b16 %v2438
        %v2585 = vunpack.c.l.b16 %v2439
        %v2586 = vunpack.c.h.b16 %v2439
        %v2587 = vunpack.c.l.b16 %v2440
        %v2588 = vunpack.c.h.b16 %v2440
        %v2589 = vunpack.c.l.b16 %v2441
        %v2590 = vunpack.c.h.b16 %v2441
        %v2591 = vunpack.c.l.b16 %v2442
        %v2592 = vunpack.c.h.b16 %v2442
        %v2593 = vunpack.c.l.b16 %v2443
        %v2594 = vunpack.c.h.b16 %v2443
        %v2595 = vunpack.c.l.b16 %v2444
        %v2596 = vunpack.c.h.b16 %v2444
        %v2597 = vunpack.c.l.b16 %v2445
        %v2598 = vunpack.c.h.b16 %v2445
        %v2599 = vunpack.c.l.b16 %v2446
        %v2600 = vunpack.c.h.b16 %v2446
        %v2601 = vunpack.c.l.b16 %v2447
        %v2602 = vunpack.c.h.b16 %v2447
        %v2603 = vunpack.c.l.b16 %v2448
        %v2604 = vunpack.c.h.b16 %v2448
        %v2605 = vunpack.c.l.b16 %v2449
        %v2606 = vunpack.c.h.b16 %v2449
        %v2607 = vunpack.c.l.b16 %v2450
        %v2608 = vunpack.c.h.b16 %v2450
        %v2609 = vunpack.c.l.b16 %v2451
        %v2610 = vunpack.c.h.b16 %v2451
        %v2611 = vunpack.c.l.b16 %v2452
        %v2612 = vunpack.c.h.b16 %v2452
        %v2613 = vunpack.c.l.b16 %v2453
        %v2614 = vunpack.c.h.b16 %v2453
        %v2615 = vunpack.c.l.b16 %v2454
        %v2616 = vunpack.c.h.b16 %v2454
        %v2617 = vunpack.c.l.b16 %v2455
        %v2618 = vunpack.c.h.b16 %v2455
        %v2619 = vunpack.c.l.b16 %v2456
        %v2620 = vunpack.c.h.b16 %v2456
        %v2621 = vunpack.c.l.b16 %v2457
        %v2622 = vunpack.c.h.b16 %v2457
        %v2623 = vunpack.c.l.b16 %v2458
        %v2624 = vunpack.c.h.b16 %v2458
        %v2625 = vunpack.c.l.b16 %v2459
        %v2626 = vunpack.c.h.b16 %v2459
        %v2627 = vunpack.c.l.b16 %v2460
        %v2628 = vunpack.c.h.b16 %v2460
        %v2629 = vunpack.c.l.b16 %v2461
        %v2630 = vunpack.c.h.b16 %v2461
        %v2631 = vunpack.c.l.b16 %v2462
        %v2632 = vunpack.c.h.b16 %v2462
        %v2633 = vunpack.c.l.b16 %v2463
        %v2634 = vunpack.c.h.b16 %v2463
        %v2635 = vunpack.c.l.b16 %v2464
        %v2636 = vunpack.c.h.b16 %v2464
        %v2637 = vunpack.c.l.b16 %v2465
        %v2638 = vunpack.c.h.b16 %v2465
        %v2639 = vunpack.c.l.b16 %v2466
        %v2640 = vunpack.c.h.b16 %v2466
        %v2641 = vunpack.c.l.b16 %v2467
        %v2642 = vunpack.c.h.b16 %v2467
        %v2643 = vunpack.c.l.b16 %v2468
        %v2644 = vunpack.c.h.b16 %v2468
        %v2645 = vunpack.c.l.b16 %v2469
        %v2646 = vunpack.c.h.b16 %v2469
        %v2647 = vunpack.c.l.b16 %v2470
        %v2648 = vunpack.c.h.b16 %v2470
        %v2649 = vunpack.c.l.b16 %v2471
        %v2650 = vunpack.c.h.b16 %v2471
        %v2651 = vunpack.c.l.b16 %v2472
        %v2652 = vunpack.c.h.b16 %v2472
        %v2653 = vunpack.c.l.b16 %v2473
        %v2654 = vunpack.c.h.b16 %v2473
        %v2655 = vunpack.c.l.b16 %v2474
        %v2656 = vunpack.c.h.b16 %v2474
        %v2657 = vunpack.c.l.b16 %v2475
        %v2658 = vunpack.c.h.b16 %v2475
        %v2659 = vunpack.c.l.b16 %v2476
        %v2660 = vunpack.c.h.b16 %v2476
        %v2661 = vunpack.c.l.b16 %v2477
        %v2662 = vunpack.c.h.b16 %v2477
        %v2663 = vunpack.c.l.b16 %v2478
        %v2664 = vunpack.c.h.b16 %v2478
        %v2665 = vunpack.c.l.b16 %v2479
        %v2666 = vunpack.c.h.b16 %v2479
        %v2667 = vunpack.c.l.b16 %v2480
        %v2668 = vunpack.c.h.b16 %v2480
        %v2669 = vunpack.c.l.b16 %v2481
        %v2670 = vunpack.c.h.b16 %v2481
        %v2671 = vunpack.c.l.b16 %v2482
        %v2672 = vunpack.c.h.b16 %v2482
        %v2673 = vunpack.c.l.b16 %v2483
        %v2674 = vunpack.c.h.b16 %v2483
        %v2675 = vunpack.c.l.b16 %v2484
        %v2676 = vunpack.c.h.b16 %v2484
        %v2677 = vpack.c.b16 %v2549, %v2549
        %v2678 = vpack.c.b16 %v2550, %v2550
        %v2679 = vpack.c.b16 %v2551, %v2551
        %v2680 = vpack.c.b16 %v2552, %v2552
        %v2681 = vpack.c.b16 %v2553, %v2553
        %v2682 = vpack.c.b16 %v2554, %v2554
        %v2683 = vpack.c.b16 %v2555, %v2555
        %v2684 = vpack.c.b16 %v2556, %v2556
        %v2685 = vpack.c.b16 %v2557, %v2557
        %v2686 = vpack.c.b16 %v2558, %v2558
        %v2687 = vpack.c.b16 %v2559, %v2559
        %v2688 = vpack.c.b16 %v2560, %v2560
        %v2689 = vpack.c.b16 %v2561, %v2561
        %v2690 = vpack.c.b16 %v2562, %v2562
        %v2691 = vpack.c.b16 %v2563, %v2563
        %v2692 = vpack.c.b16 %v2564, %v2564
        %v2693 = vpack.c.b16 %v2565, %v2565
        %v2694 = vpack.c.b16 %v2566, %v2566
        %v2695 = vpack.c.b16 %v2567, %v2567
        %v2696 = vpack.c.b16 %v2568, %v2568
        %v2697 = vpack.c.b16 %v2569, %v2569
        %v2698 = vpack.c.b16 %v2570, %v2570
        %v2699 = vpack.c.b16 %v2571, %v2571
        %v2700 = vpack.c.b16 %v2572, %v2572
        %v2701 = vpack.c.b16 %v2573, %v2573
        %v2702 = vpack.c.b16 %v2574, %v2574
        %v2703 = vpack.c.b16 %v2575, %v2575
        %v2704 = vpack.c.b16 %v2576, %v2576
        %v2705 = vpack.c.b16 %v2577, %v2577
        %v2706 = vpack.c.b16 %v2578, %v2578
        %v2707 = vpack.c.b16 %v2579, %v2579
        %v2708 = vpack.c.b16 %v2580, %v2580
        %v2709 = vpack.c.b16 %v2581, %v2581
        %v2710 = vpack.c.b16 %v2582, %v2582
        %v2711 = vpack.c.b16 %v2583, %v2583
        %v2712 = vpack.c.b16 %v2584, %v2584
        %v2713 = vpack.c.b16 %v2585, %v2585
        %v2714 = vpack.c.b16 %v2586, %v2586
        %v2715 = vpack.c.b16 %v2587, %v2587
        %v2716 = vpack.c.b16 %v2588, %v2588
        %v2717 = vpack.c.b16 %v2589, %v2589
        %v2718 = vpack.c.b16 %v2590, %v2590
        %v2719 = vpack.c.b16 %v2591, %v2591
        %v2720 = vpack.c.b16 %v2592, %v2592
        %v2721 = vpack.c.b16 %v2593, %v2593
        %v2722 = vpack.c.b16 %v2594, %v2594
        %v2723 = vpack.c.b16 %v2595, %v2595
        %v2724 = vpack.c.b16 %v2596, %v2596
        %v2725 = vpack.c.b16 %v2597, %v2597
        %v2726 = vpack.c.b16 %v2598, %v2598
        %v2727 = vpack.c.b16 %v2599, %v2599
        %v2728 = vpack.c.b16 %v2600, %v2600
        %v2729 = vpack.c.b16 %v2601, %v2601
        %v2730 = vpack.c.b16 %v2602, %v2602
        %v2731 = vpack.c.b16 %v2603, %v2603
        %v2732 = vpack.c.b16 %v2604, %v2604
        %v2733 = vpack.c.b16 %v2605, %v2605
        %v2734 = vpack.c.b16 %v2606, %v2606
        %v2735 = vpack.c.b16 %v2607, %v2607
        %v2736 = vpack.c.b16 %v2608, %v2608
        %v2737 = vpack.c.b16 %v2609, %v2609
        %v2738 = vpack.c.b16 %v2610, %v2610
        %v2739 = vpack.c.b16 %v2611, %v2611
        %v2740 = vpack.c.b16 %v2612, %v2612
        %v2741 = vpack.c.b16 %v2613, %v2613
        %v2742 = vpack.c.b16 %v2614, %v2614
        %v2743 = vpack.c.b16 %v2615, %v2615
        %v2744 = vpack.c.b16 %v2616, %v2616
        %v2745 = vpack.c.b16 %v2617, %v2617
        %v2746 = vpack.c.b16 %v2618, %v2618
        %v2747 = vpack.c.b16 %v2619, %v2619
        %v2748 = vpack.c.b16 %v2620, %v2620
        %v2749 = vpack.c.b16 %v2621, %v2621
        %v2750 = vpack.c.b16 %v2622, %v2622
        %v2751 = vpack.c.b16 %v2623, %v2623
        %v2752 = vpack.c.b16 %v2624, %v2624
        %v2753 = vpack.c.b16 %v2625, %v2625
        %v2754 = vpack.c.b16 %v2626, %v2626
        %v2755 = vpack.c.b16 %v2627, %v2627
        %v2756 = vpack.c.b16 %v2628, %v2628
        %v2757 = vpack.c.b16 %v2629, %v2629
        %v2758 = vpack.c.b16 %v2630, %v2630
        %v2759 = vpack.c.b16 %v2631, %v2631
        %v2760 = vpack.c.b16 %v2632, %v2632
        %v2761 = vpack.c.b16 %v2633, %v2633
        %v2762 = vpack.c.b16 %v2634, %v2634
        %v2763 = vpack.c.b16 %v2635, %v2635
        %v2764 = vpack.c.b16 %v2636, %v2636
        %v2765 = vpack.c.b16 %v2637, %v2637
        %v2766 = vpack.c.b16 %v2638, %v2638
        %v2767 = vpack.c.b16 %v2639, %v2639
        %v2768 = vpack.c.b16 %v2640, %v2640
        %v2769 = vpack.c.b16 %v2641, %v2641
        %v2770 = vpack.c.b16 %v2642, %v2642
        %v2771 = vpack.c.b16 %v2643, %v2643
        %v2772 = vpack.c.b16 %v2644, %v2644
        %v2773 = vpack.c.b16 %v2645, %v2645
        %v2774 = vpack.c.b16 %v2646, %v2646
        %v2775 = vpack.c.b16 %v2647, %v2647
        %v2776 = vpack.c.b16 %v2648, %v2648
        %v2777 = vpack.c.b16 %v2649, %v2649
        %v2778 = vpack.c.b16 %v2650, %v2650
        %v2779 = vpack.c.b16 %v2651, %v2651
        %v2780 = vpack.c.b16 %v2652, %v2652
        %v2781 = vpack.c.b16 %v2653, %v2653
        %v2782 = vpack.c.b16 %v2654, %v2654
        %v2783 = vpack.c.b16 %v2655, %v2655
        %v2784 = vpack.c.b16 %v2656, %v2656
        %v2785 = vpack.c.b16 %v2657, %v2657
        %v2786 = vpack.c.b16 %v2658, %v2658
        %v2787 = vpack.c.b16 %v2659, %v2659
        %v2788 = vpack.c.b16 %v2660, %v2660
        %v2789 = vpack.c.b16 %v2661, %v2661
        %v2790 = vpack.c.b16 %v2662, %v2662
        %v2791 = vpack.c.b16 %v2663, %v2663
        %v2792 = vpack.c.b16 %v2664, %v2664
        %v2793 = vpack.c.b16 %v2665, %v2665
        %v2794 = vpack.c.b16 %v2666, %v2666
        %v2795 = vpack.c.b16 %v2667, %v2667
        %v2796 = vpack.c.b16 %v2668, %v2668
        %v2797 = vpack.c.b16 %v2669, %v2669
        %v2798 = vpack.c.b16 %v2670, %v2670
        %v2799 = vpack.c.b16 %v2671, %v2671
        %v2800 = vpack.c.b16 %v2672, %v2672
        %v2801 = vpack.c.b16 %v2673, %v2673
        %v2802 = vpack.c.b16 %v2674, %v2674
        %v2803 = vpack.c.b16 %v2675, %v2675
        %v2804 = vpack.c.b16 %v2676, %v2676
        %2933 = vst [vmem:[%s215] sm:$0xf] %v2677
        %2934 = vst [vmem:[%s215 + $0x4] sm:$0xf] %v2678
        %2935 = vst [vmem:[%s215 + $0x8] sm:$0xf] %v2679
        %2936 = vst [vmem:[%s215 + $0xc] sm:$0xf] %v2680
        %2937 = vst [vmem:[%s215 + $0x10] sm:$0xf] %v2681
        %2938 = vst [vmem:[%s215 + $0x14] sm:$0xf] %v2682
        %2939 = vst [vmem:[%s215 + $0x18] sm:$0xf] %v2683
        %2940 = vst [vmem:[%s215 + $0x1c] sm:$0xf] %v2684
        %2941 = vst [vmem:[%s215 + $0x20] sm:$0xf] %v2685
        %2942 = vst [vmem:[%s215 + $0x24] sm:$0xf] %v2686
        %2943 = vst [vmem:[%s215 + $0x28] sm:$0xf] %v2687
        %2944 = vst [vmem:[%s215 + $0x2c] sm:$0xf] %v2688
        %2945 = vst [vmem:[%s215 + $0x30] sm:$0xf] %v2689
        %2946 = vst [vmem:[%s215 + $0x34] sm:$0xf] %v2690
        %2947 = vst [vmem:[%s215 + $0x38] sm:$0xf] %v2691
        %2948 = vst [vmem:[%s215 + $0x3c] sm:$0xf] %v2692
        %2949 = vst [vmem:[%s215 + $0x40] sm:$0xf] %v2693
        %2950 = vst [vmem:[%s215 + $0x44] sm:$0xf] %v2694
        %2951 = vst [vmem:[%s215 + $0x48] sm:$0xf] %v2695
        %2952 = vst [vmem:[%s215 + $0x4c] sm:$0xf] %v2696
        %2953 = vst [vmem:[%s215 + $0x50] sm:$0xf] %v2697
        %2954 = vst [vmem:[%s215 + $0x54] sm:$0xf] %v2698
        %2955 = vst [vmem:[%s215 + $0x58] sm:$0xf] %v2699
        %2956 = vst [vmem:[%s215 + $0x5c] sm:$0xf] %v2700
        %2957 = vst [vmem:[%s215 + $0x60] sm:$0xf] %v2701
        %2958 = vst [vmem:[%s215 + $0x64] sm:$0xf] %v2702
        %2959 = vst [vmem:[%s215 + $0x68] sm:$0xf] %v2703
        %2960 = vst [vmem:[%s215 + $0x6c] sm:$0xf] %v2704
        %2961 = vst [vmem:[%s215 + $0x70] sm:$0xf] %v2705
        %2962 = vst [vmem:[%s215 + $0x74] sm:$0xf] %v2706
        %2963 = vst [vmem:[%s215 + $0x78] sm:$0xf] %v2707
        %2964 = vst [vmem:[%s215 + $0x7c] sm:$0xf] %v2708
        %2965 = vst [vmem:[%s215 + $0x80] sm:$0xf] %v2709
        %2966 = vst [vmem:[%s215 + $0x84] sm:$0xf] %v2710
        %2967 = vst [vmem:[%s215 + $0x88] sm:$0xf] %v2711
        %2968 = vst [vmem:[%s215 + $0x8c] sm:$0xf] %v2712
        %2969 = vst [vmem:[%s215 + $0x90] sm:$0xf] %v2713
        %2970 = vst [vmem:[%s215 + $0x94] sm:$0xf] %v2714
        %2971 = vst [vmem:[%s215 + $0x98] sm:$0xf] %v2715
        %2972 = vst [vmem:[%s215 + $0x9c] sm:$0xf] %v2716
        %2973 = vst [vmem:[%s215 + $0xa0] sm:$0xf] %v2717
        %2974 = vst [vmem:[%s215 + $0xa4] sm:$0xf] %v2718
        %2975 = vst [vmem:[%s215 + $0xa8] sm:$0xf] %v2719
        %2976 = vst [vmem:[%s215 + $0xac] sm:$0xf] %v2720
        %2977 = vst [vmem:[%s215 + $0xb0] sm:$0xf] %v2721
        %2978 = vst [vmem:[%s215 + $0xb4] sm:$0xf] %v2722
        %2979 = vst [vmem:[%s215 + $0xb8] sm:$0xf] %v2723
        %2980 = vst [vmem:[%s215 + $0xbc] sm:$0xf] %v2724
        %2981 = vst [vmem:[%s215 + $0xc0] sm:$0xf] %v2725
        %2982 = vst [vmem:[%s215 + $0xc4] sm:$0xf] %v2726
        %2983 = vst [vmem:[%s215 + $0xc8] sm:$0xf] %v2727
        %2984 = vst [vmem:[%s215 + $0xcc] sm:$0xf] %v2728
        %2985 = vst [vmem:[%s215 + $0xd0] sm:$0xf] %v2729
        %2986 = vst [vmem:[%s215 + $0xd4] sm:$0xf] %v2730
        %2987 = vst [vmem:[%s215 + $0xd8] sm:$0xf] %v2731
        %2988 = vst [vmem:[%s215 + $0xdc] sm:$0xf] %v2732
        %2989 = vst [vmem:[%s215 + $0xe0] sm:$0xf] %v2733
        %2990 = vst [vmem:[%s215 + $0xe4] sm:$0xf] %v2734
        %2991 = vst [vmem:[%s215 + $0xe8] sm:$0xf] %v2735
        %2992 = vst [vmem:[%s215 + $0xec] sm:$0xf] %v2736
        %2993 = vst [vmem:[%s215 + $0xf0] sm:$0xf] %v2737
        %2994 = vst [vmem:[%s215 + $0xf4] sm:$0xf] %v2738
        %2995 = vst [vmem:[%s215 + $0xf8] sm:$0xf] %v2739
        %2996 = vst [vmem:[%s215 + $0xfc] sm:$0xf] %v2740
        %2997 = vst [vmem:[%s215 + $0x100] sm:$0xf] %v2741
        %2998 = vst [vmem:[%s215 + $0x104] sm:$0xf] %v2742
        %2999 = vst [vmem:[%s215 + $0x108] sm:$0xf] %v2743
        %3000 = vst [vmem:[%s215 + $0x10c] sm:$0xf] %v2744
        %3001 = vst [vmem:[%s215 + $0x110] sm:$0xf] %v2745
        %3002 = vst [vmem:[%s215 + $0x114] sm:$0xf] %v2746
        %3003 = vst [vmem:[%s215 + $0x118] sm:$0xf] %v2747
        %3004 = vst [vmem:[%s215 + $0x11c] sm:$0xf] %v2748
        %3005 = vst [vmem:[%s215 + $0x120] sm:$0xf] %v2749
        %3006 = vst [vmem:[%s215 + $0x124] sm:$0xf] %v2750
        %3007 = vst [vmem:[%s215 + $0x128] sm:$0xf] %v2751
        %3008 = vst [vmem:[%s215 + $0x12c] sm:$0xf] %v2752
        %3009 = vst [vmem:[%s215 + $0x130] sm:$0xf] %v2753
        %3010 = vst [vmem:[%s215 + $0x134] sm:$0xf] %v2754
        %3011 = vst [vmem:[%s215 + $0x138] sm:$0xf] %v2755
        %3012 = vst [vmem:[%s215 + $0x13c] sm:$0xf] %v2756
        %3013 = vst [vmem:[%s215 + $0x140] sm:$0xf] %v2757
        %3014 = vst [vmem:[%s215 + $0x144] sm:$0xf] %v2758
        %3015 = vst [vmem:[%s215 + $0x148] sm:$0xf] %v2759
        %3016 = vst [vmem:[%s215 + $0x14c] sm:$0xf] %v2760
        %3017 = vst [vmem:[%s215 + $0x150] sm:$0xf] %v2761
        %3018 = vst [vmem:[%s215 + $0x154] sm:$0xf] %v2762
        %3019 = vst [vmem:[%s215 + $0x158] sm:$0xf] %v2763
        %3020 = vst [vmem:[%s215 + $0x15c] sm:$0xf] %v2764
        %3021 = vst [vmem:[%s215 + $0x160] sm:$0xf] %v2765
        %3022 = vst [vmem:[%s215 + $0x164] sm:$0xf] %v2766
        %3023 = vst [vmem:[%s215 + $0x168] sm:$0xf] %v2767
        %3024 = vst [vmem:[%s215 + $0x16c] sm:$0xf] %v2768
        %3025 = vst [vmem:[%s215 + $0x170] sm:$0xf] %v2769
        %3026 = vst [vmem:[%s215 + $0x174] sm:$0xf] %v2770
        %3027 = vst [vmem:[%s215 + $0x178] sm:$0xf] %v2771
        %3028 = vst [vmem:[%s215 + $0x17c] sm:$0xf] %v2772
        %3029 = vst [vmem:[%s215 + $0x180] sm:$0xf] %v2773
        %3030 = vst [vmem:[%s215 + $0x184] sm:$0xf] %v2774
        %3031 = vst [vmem:[%s215 + $0x188] sm:$0xf] %v2775
        %3032 = vst [vmem:[%s215 + $0x18c] sm:$0xf] %v2776
        %3033 = vst [vmem:[%s215 + $0x190] sm:$0xf] %v2777
        %3034 = vst [vmem:[%s215 + $0x194] sm:$0xf] %v2778
        %3035 = vst [vmem:[%s215 + $0x198] sm:$0xf] %v2779
        %3036 = vst [vmem:[%s215 + $0x19c] sm:$0xf] %v2780
        %3037 = vst [vmem:[%s215 + $0x1a0] sm:$0xf] %v2781
        %3038 = vst [vmem:[%s215 + $0x1a4] sm:$0xf] %v2782
        %3039 = vst [vmem:[%s215 + $0x1a8] sm:$0xf] %v2783
        %3040 = vst [vmem:[%s215 + $0x1ac] sm:$0xf] %v2784
        %3041 = vst [vmem:[%s215 + $0x1b0] sm:$0xf] %v2785
        %3042 = vst [vmem:[%s215 + $0x1b4] sm:$0xf] %v2786
        %3043 = vst [vmem:[%s215 + $0x1b8] sm:$0xf] %v2787
        %3044 = vst [vmem:[%s215 + $0x1bc] sm:$0xf] %v2788
        %3045 = vst [vmem:[%s215 + $0x1c0] sm:$0xf] %v2789
        %3046 = vst [vmem:[%s215 + $0x1c4] sm:$0xf] %v2790
        %3047 = vst [vmem:[%s215 + $0x1c8] sm:$0xf] %v2791
        %3048 = vst [vmem:[%s215 + $0x1cc] sm:$0xf] %v2792
        %3049 = vst [vmem:[%s215 + $0x1d0] sm:$0xf] %v2793
        %3050 = vst [vmem:[%s215 + $0x1d4] sm:$0xf] %v2794
        %3051 = vst [vmem:[%s215 + $0x1d8] sm:$0xf] %v2795
        %3052 = vst [vmem:[%s215 + $0x1dc] sm:$0xf] %v2796
        %3053 = vst [vmem:[%s215 + $0x1e0] sm:$0xf] %v2797
        %3054 = vst [vmem:[%s215 + $0x1e4] sm:$0xf] %v2798
        %3055 = vst [vmem:[%s215 + $0x1e8] sm:$0xf] %v2799
        %3056 = vst [vmem:[%s215 + $0x1ec] sm:$0xf] %v2800
        %3057 = vst [vmem:[%s215 + $0x1f0] sm:$0xf] %v2801
        %3058 = vst [vmem:[%s215 + $0x1f4] sm:$0xf] %v2802
        %3059 = vst [vmem:[%s215 + $0x1f8] sm:$0xf] %v2803
        %3060 = vst [vmem:[%s215 + $0x1fc] sm:$0xf] %v2804
      $region48: #{discriminator64.4} parent=35 // pred_fallthru
        _
      %s3061 = smul.u32 %s19, %s20
      %s3062 = smul.u32 128, %s3061
      %p3063 = scmp.lt.s32.totalorder %s3062, 255
      %s3064 = scalar_select %p3063, %s3062, 255
      %s3065 = smul.addr %s3064, 4
      %s3066 = scalar_lea.vmem %s4, %s3065
      // Predicated region
      $region49: #{discriminator64.4} parent=35 // pred_check
        %p3067 = pneg %p136
      $region50: #{discriminator64.4} parent=35 // pred_check_branch
        %3069 = sbr.rel (%p3067) target = $region52
      $region51: #{discriminator64.4} parent=35 // pred_region
        %s3070 = smul.u32 %s19, %s20
        %s3071 = smul.u32 128, %s3070
      $region52: #{discriminator64.4} parent=35 // pred_fallthru
        _
    $region36: #{discriminator64.4} parent=5 // pred_fallthru
      _
    %p3072 = scmp.le.s32.totalorder 2, %s10
    // Predicated region
    $region53: #{discriminator64.4} parent=5 // pred_check
      %p3073 = pneg %p3072
    $region54: #{discriminator64.4} parent=5 // pred_check_branch
      %3075 = sbr.rel (%p3073) target = $region56
    $region55: #{discriminator64.4} parent=5 // pred_region
      %s3076 = ssub.s32 %s10, 2
      // Predicated region
      $region57: #{discriminator64.4} parent=55 // pred_check
        %p3077 = pneg %p142
      $region58: #{discriminator64.4} parent=55 // pred_check_branch
        %3079 = sbr.rel (%p3077) target = $region60
      $region59: #{discriminator64.4} parent=55 // pred_region
        %s3080 = smul.u32 %s21, %s22
        %s3081 = smul.u32 128, %s3080
        %p3082 = scmp.lt.s32.totalorder %s3081, 255
        %s3083 = scalar_select %p3082, %s3081, 255
        %s3084 = smul.addr %s3083, 4
        %s3085 = scalar_lea.vmem %s4, %s3084
      $region60: #{discriminator64.4} parent=55 // pred_fallthru
        _
    $region56: #{discriminator64.4} parent=5 // pred_fallthru
      _
  $region6: #{discriminator64.4} parent=0 // loop_footer
    %s14 = sadd.s32 1, %s10
  $region7: #{discriminator64.4} parent=0 // loop_footer_branch
    %9 = sbr.rel target = $region3
  $region8: #{discriminator64.4} parent=0 // loop_exit
    _

// kernel: discriminator64.5
$region0: #{discriminator64.5}
  #allocation0 [shape = 'u32[]', space=smem, size = 0x4, offset = 0x4, fixed_abs, tag = 'smem constant byte address 0x4 - core index']
  #allocation1 [shape = 'u32[144,128]{1,0:T(1,128)}', space=vmem, size = 0x12000, scoped, tag = 'internal scratch']
  #allocation2 [shape = 'f32[1,128]{1,0:T(1,128)}', space=vmem, size = 0x200, scoped, tag = 'scratch operand']
  #allocation3 [shape = 'f32[1,128]{1,0:T(1,128)}', space=vmem, size = 0x200, scoped, tag = 'scratch operand']
  %s0 = inlined_call_operand.vmem [shape: bf16[512,256], index: 0, kind: input, shape index: {}]
  %s1 = inlined_call_operand.vmem [shape: bf16[256,128], index: 1, kind: input, shape index: {}]
  %s2 = inlined_call_operand.vmem [shape: f32[1,128], index: 2, kind: input, shape index: {}]
  %s3 = inlined_call_operand.vmem [shape: f32[1,128], index: 3, kind: input, shape index: {}]
  %s4 = inlined_call_operand.vmem [shape: bf16[512,128], index: 4, kind: output, shape index: {}]
  %s5 = sld [smem:[#allocation0]]
  $region61: #{discriminator64.5} parent=0
    _
  %s7 = ssub.s32 1, %s5
  %s8 = scalar_select 0, %s7, %s5
  loop: start=0, step=1, limit=4
  $region2: #{discriminator64.5} parent=0 // loop_pre_header
    _
  $region3: #{discriminator64.5} parent=0 // loop_header
    %s10 = sphi 0, %s14
    %p11 = scmp.ge.s32.totalorder %s10, 4
    %s17 = sphi 0, %s29
    %s18 = sphi 0, %s25
    %s19 = sphi 0, %s17
    %s20 = sphi 0, %s18
    %s21 = sphi 0, %s19
    %s22 = sphi 0, %s20
    %s32 = sphi 0, %s34
    %s35 = sphi 0, %s32
    %s36 = sphi 0, %s35
    %s52 = sphi 0, %s36
    %s56 = sphi 0, %s56
    %s58 = sphi 0, %s56
    %s59 = sphi 0, %s58
    %s73 = sphi 0, %s59
    %s77 = sphi 0, %s77
    %s79 = sphi 0, %s77
    %s80 = sphi 0, %s79
    %s94 = sphi 0, %s80
    %s98 = sphi 0, %s98
    %s100 = sphi 0, %s98
    %s101 = sphi 0, %s100
    %s115 = sphi 0, %s101
    %s123 = sphi 0, %s125
    %s126 = sphi 0, %s123
    %s127 = sphi 0, %s126
    %s143 = sphi 0, %s127
  $region4: #{discriminator64.5} parent=0 // loop_header_branch
    %13 = sbr.rel (%p11) target = $region8
  $region5: #{discriminator64.5} parent=0 // loop_body
    %s15 = ssub.s32 %s10, 1
    %s16 = ssub.s32 %s10, 2
    %s23 = sadd.s32 1, %s18
    %p24 = scmp.ge.s32.totalorder %s23, 1
    %s25 = scalar_select %p24, 0, %s23
    %s26 = sadd.s32 1, %s17
    %s27 = scalar_select %p24, %s26, %s17
    %p28 = scmp.ge.s32.totalorder %s27, 2
    %s29 = scalar_select %p28, 0, %s27
    %s30 = ssub.s32 %s18, %s25
    %p31 = scmp.eq.s32.totalorder %s30, 0
    %s33 = sadd.s32 %s32, 1
    %s34 = scalar_select %p31, %s32, %s33
    %p37 = pneg %p31
    %p38 = scmp.eq.s32.totalorder %s10, 1
    %p39 = por %p37, %p38
    %p40 = scmp.ne.s32.totalorder %s32, %s35
    %p41 = scmp.eq.s32.totalorder %s10, 0
    %p42 = por %p40, %p41
    %p43 = scmp.ne.s32.totalorder %s32, %s35
    %p44 = scmp.eq.s32.totalorder %s15, 1
    %p45 = por %p43, %p44
    %p46 = scmp.ne.s32.totalorder %s35, %s36
    %p47 = scmp.eq.s32.totalorder %s15, 0
    %p48 = por %p46, %p47
    %p49 = scmp.ne.s32.totalorder %s35, %s36
    %p50 = scmp.eq.s32.totalorder %s16, 1
    %p51 = por %p49, %p50
    %p53 = scmp.ne.s32.totalorder %s36, %s52
    %p54 = scmp.eq.s32.totalorder %s16, 0
    %p55 = por %p53, %p54
    %s57 = sadd.s32 %s56, 1
    %p60 = scmp.eq.s32.totalorder %s10, 1
    %p61 = scmp.ne.s32.totalorder %s56, %s58
    %p62 = scmp.eq.s32.totalorder %s10, 0
    %p63 = por %p61, %p62
    %p64 = scmp.ne.s32.totalorder %s56, %s58
    %p65 = scmp.eq.s32.totalorder %s15, 1
    %p66 = por %p64, %p65
    %p67 = scmp.ne.s32.totalorder %s58, %s59
    %p68 = scmp.eq.s32.totalorder %s15, 0
    %p69 = por %p67, %p68
    %p70 = scmp.ne.s32.totalorder %s58, %s59
    %p71 = scmp.eq.s32.totalorder %s16, 1
    %p72 = por %p70, %p71
    %p74 = scmp.ne.s32.totalorder %s59, %s73
    %p75 = scmp.eq.s32.totalorder %s16, 0
    %p76 = por %p74, %p75
    %s78 = sadd.s32 %s77, 1
    %p81 = scmp.eq.s32.totalorder %s10, 1
    %p82 = scmp.ne.s32.totalorder %s77, %s79
    %p83 = scmp.eq.s32.totalorder %s10, 0
    %p84 = por %p82, %p83
    %p85 = scmp.ne.s32.totalorder %s77, %s79
    %p86 = scmp.eq.s32.totalorder %s15, 1
    %p87 = por %p85, %p86
    %p88 = scmp.ne.s32.totalorder %s79, %s80
    %p89 = scmp.eq.s32.totalorder %s15, 0
    %p90 = por %p88, %p89
    %p91 = scmp.ne.s32.totalorder %s79, %s80
    %p92 = scmp.eq.s32.totalorder %s16, 1
    %p93 = por %p91, %p92
    %p95 = scmp.ne.s32.totalorder %s80, %s94
    %p96 = scmp.eq.s32.totalorder %s16, 0
    %p97 = por %p95, %p96
    %s99 = sadd.s32 %s98, 1
    %p102 = scmp.eq.s32.totalorder %s10, 1
    %p103 = scmp.ne.s32.totalorder %s98, %s100
    %p104 = scmp.eq.s32.totalorder %s10, 0
    %p105 = por %p103, %p104
    %p106 = scmp.ne.s32.totalorder %s98, %s100
    %p107 = scmp.eq.s32.totalorder %s15, 1
    %p108 = por %p106, %p107
    %p109 = scmp.ne.s32.totalorder %s100, %s101
    %p110 = scmp.eq.s32.totalorder %s15, 0
    %p111 = por %p109, %p110
    %p112 = scmp.ne.s32.totalorder %s100, %s101
    %p113 = scmp.eq.s32.totalorder %s16, 1
    %p114 = por %p112, %p113
    %p116 = scmp.ne.s32.totalorder %s101, %s115
    %p117 = scmp.eq.s32.totalorder %s16, 0
    %p118 = por %p116, %p117
    %s119 = smul.u32 %s17, %s18
    %s120 = smul.u32 %s29, %s25
    %s121 = ssub.s32 %s119, %s120
    %p122 = scmp.eq.s32.totalorder %s121, 0
    %s124 = sadd.s32 %s123, 1
    %s125 = scalar_select %p122, %s123, %s124
    %p128 = pneg %p122
    %p129 = scmp.eq.s32.totalorder %s10, 1
    %p130 = por %p128, %p129
    %p131 = scmp.ne.s32.totalorder %s123, %s126
    %p132 = scmp.eq.s32.totalorder %s10, 0
    %p133 = por %p131, %p132
    %p134 = scmp.ne.s32.totalorder %s123, %s126
    %p135 = scmp.eq.s32.totalorder %s15, 1
    %p136 = por %p134, %p135
    %p137 = scmp.ne.s32.totalorder %s126, %s127
    %p138 = scmp.eq.s32.totalorder %s15, 0
    %p139 = por %p137, %p138
    %p140 = scmp.ne.s32.totalorder %s126, %s127
    %p141 = scmp.eq.s32.totalorder %s16, 1
    %p142 = por %p140, %p141
    %p144 = scmp.ne.s32.totalorder %s127, %s143
    %p145 = scmp.eq.s32.totalorder %s16, 0
    %p146 = por %p144, %p145
    %p147 = scmp.le.s32.totalorder 1, %s10
    %p148 = scmp.lt.s32.totalorder %s10, 3
    %p149 = pnand %p147, %p148
    %p150 = pneg %p149
    // Predicated region
    $region9: #{discriminator64.5} parent=5 // pred_check
      _
    $region10: #{discriminator64.5} parent=5 // pred_check_branch
      %152 = sbr.rel (%p149) target = $region12
    $region11: #{discriminator64.5} parent=5 // pred_region
      %s153 = ssub.s32 %s10, 1
      // Predicated region
      $region13: #{discriminator64.5} parent=11 // pred_check
        %p154 = pneg %p48
      $region14: #{discriminator64.5} parent=11 // pred_check_branch
        %156 = sbr.rel (%p154) target = $region16
      $region15: #{discriminator64.5} parent=11 // pred_region
        %s157 = smul.u32 64, %s20
        %p158 = scmp.lt.s32.totalorder %s157, 63
        %s159 = scalar_select %p158, %s157, 63
        %s160 = smul.addr %s159, 2
        %s161 = smul.addr %s160, 4
        %s162 = scalar_lea.vmem %s0, %s161
        %s163 = smul.u32 64, %s20
      $region16: #{discriminator64.5} parent=11 // pred_fallthru
        _
      // Predicated region
      $region17: #{discriminator64.5} parent=11 // pred_check
        %p164 = pneg %p69
      $region18: #{discriminator64.5} parent=11 // pred_check_branch
        %166 = sbr.rel (%p164) target = $region20
      $region19: #{discriminator64.5} parent=11 // pred_region
        _
      $region20: #{discriminator64.5} parent=11 // pred_fallthru
        _
      // Predicated region
      $region21: #{discriminator64.5} parent=11 // pred_check
        %p167 = pneg %p90
      $region22: #{discriminator64.5} parent=11 // pred_check_branch
        %169 = sbr.rel (%p167) target = $region24
      $region23: #{discriminator64.5} parent=11 // pred_region
        _
      $region24: #{discriminator64.5} parent=11 // pred_fallthru
        _
      // Predicated region
      $region25: #{discriminator64.5} parent=11 // pred_check
        %p170 = pneg %p111
      $region26: #{discriminator64.5} parent=11 // pred_check_branch
        %172 = sbr.rel (%p170) target = $region28
      $region27: #{discriminator64.5} parent=11 // pred_region
        _
      $region28: #{discriminator64.5} parent=11 // pred_fallthru
        _
    $region12: #{discriminator64.5} parent=5 // pred_fallthru
      _
    %p173 = scmp.lt.s32.totalorder %s10, 2
    // Predicated region
    $region29: #{discriminator64.5} parent=5 // pred_check
      %p174 = pneg %p173
    $region30: #{discriminator64.5} parent=5 // pred_check_branch
      %176 = sbr.rel (%p174) target = $region32
    $region31: #{discriminator64.5} parent=5 // pred_region
      _
    $region32: #{discriminator64.5} parent=5 // pred_fallthru
      _
    %p177 = scmp.le.s32.totalorder 1, %s10
    %p178 = scmp.lt.s32.totalorder %s10, 3
    %p179 = pnand %p177, %p178
    %p180 = pneg %p179
    // Predicated region
    $region33: #{discriminator64.5} parent=5 // pred_check
      _
    $region34: #{discriminator64.5} parent=5 // pred_check_branch
      %182 = sbr.rel (%p179) target = $region36
    $region35: #{discriminator64.5} parent=5 // pred_region
      %s183 = ssub.s32 %s10, 1
      %s184 = smul.u32 64, %s20
      %p185 = scmp.lt.s32.totalorder %s184, 63
      %s186 = scalar_select %p185, %s184, 63
      %s187 = smul.addr %s186, 2
      %s188 = smul.addr %s187, 4
      %s189 = scalar_lea.vmem %s0, %s188
      %p190 = pneg %p48
      %p191 = pneg %p45
      %p192 = pneg %p69
      %p193 = pneg %p66
      %p194 = pneg %p90
      %p195 = pneg %p87
      %p196 = pneg %p111
      %p197 = pneg %p108
      %p198 = pneg %p139
      %p199 = pneg %p136
      %s200 = smul.u32 %s19, %s20
      %s201 = smul.u32 64, %s200
      %p202 = scmp.lt.s32.totalorder %s201, 63
      %s203 = scalar_select %p202, %s201, 63
      %s204 = smul.addr %s203, 4
      %s205 = scalar_lea.vmem %s4, %s204
      %s206 = smul.u32 64, %s20
      %p207 = scmp.lt.s32.totalorder %s206, 63
      %s208 = scalar_select %p207, %s206, 63
      %s209 = smul.addr %s208, 2
      %s210 = smul.addr %s209, 4
      %s211 = scalar_lea.vmem %s0, %s210
      %s212 = smul.u32 64, %s20
      %s213 = smul.u32 %s19, %s20
      %s214 = smul.u32 64, %s213
      %p215 = scmp.lt.s32.totalorder %s214, 63
      %s216 = scalar_select %p215, %s214, 63
      %s217 = smul.addr %s216, 4
      %s218 = scalar_lea.vmem %s4, %s217
      %s219 = smul.u32 %s19, %s20
      %s220 = smul.u32 64, %s219
      %v222 = vld [vmem:[%s211] sm:$0xff]
      %v223 = vld [vmem:[%s211 + $0x8] sm:$0xff]
      %v224 = vld [vmem:[%s211 + $0x10] sm:$0xff]
      %v225 = vld [vmem:[%s211 + $0x18] sm:$0xff]
      %v226 = vld [vmem:[%s211 + $0x20] sm:$0xff]
      %v227 = vld [vmem:[%s211 + $0x28] sm:$0xff]
      %v228 = vld [vmem:[%s211 + $0x30] sm:$0xff]
      %v229 = vld [vmem:[%s211 + $0x38] sm:$0xff]
      %v230 = vld [vmem:[%s211 + $0x40] sm:$0xff]
      %v231 = vld [vmem:[%s211 + $0x48] sm:$0xff]
      %v232 = vld [vmem:[%s211 + $0x50] sm:$0xff]
      %v233 = vld [vmem:[%s211 + $0x58] sm:$0xff]
      %v234 = vld [vmem:[%s211 + $0x60] sm:$0xff]
      %v235 = vld [vmem:[%s211 + $0x68] sm:$0xff]
      %v236 = vld [vmem:[%s211 + $0x70] sm:$0xff]
      %v237 = vld [vmem:[%s211 + $0x78] sm:$0xff]
      %v238 = vld [vmem:[%s211 + $0x80] sm:$0xff]
      %v239 = vld [vmem:[%s211 + $0x88] sm:$0xff]
      %v240 = vld [vmem:[%s211 + $0x90] sm:$0xff]
      %v241 = vld [vmem:[%s211 + $0x98] sm:$0xff]
      %v242 = vld [vmem:[%s211 + $0xa0] sm:$0xff]
      %v243 = vld [vmem:[%s211 + $0xa8] sm:$0xff]
      %v244 = vld [vmem:[%s211 + $0xb0] sm:$0xff]
      %v245 = vld [vmem:[%s211 + $0xb8] sm:$0xff]
      %v246 = vld [vmem:[%s211 + $0xc0] sm:$0xff]
      %v247 = vld [vmem:[%s211 + $0xc8] sm:$0xff]
      %v248 = vld [vmem:[%s211 + $0xd0] sm:$0xff]
      %v249 = vld [vmem:[%s211 + $0xd8] sm:$0xff]
      %v250 = vld [vmem:[%s211 + $0xe0] sm:$0xff]
      %v251 = vld [vmem:[%s211 + $0xe8] sm:$0xff]
      %v252 = vld [vmem:[%s211 + $0xf0] sm:$0xff]
      %v253 = vld [vmem:[%s211 + $0xf8] sm:$0xff]
      %v254 = vld [vmem:[%s211 + $0x100] sm:$0xff]
      %v255 = vld [vmem:[%s211 + $0x108] sm:$0xff]
      %v256 = vld [vmem:[%s211 + $0x110] sm:$0xff]
      %v257 = vld [vmem:[%s211 + $0x118] sm:$0xff]
      %v258 = vld [vmem:[%s211 + $0x120] sm:$0xff]
      %v259 = vld [vmem:[%s211 + $0x128] sm:$0xff]
      %v260 = vld [vmem:[%s211 + $0x130] sm:$0xff]
      %v261 = vld [vmem:[%s211 + $0x138] sm:$0xff]
      %v262 = vld [vmem:[%s211 + $0x140] sm:$0xff]
      %v263 = vld [vmem:[%s211 + $0x148] sm:$0xff]
      %v264 = vld [vmem:[%s211 + $0x150] sm:$0xff]
      %v265 = vld [vmem:[%s211 + $0x158] sm:$0xff]
      %v266 = vld [vmem:[%s211 + $0x160] sm:$0xff]
      %v267 = vld [vmem:[%s211 + $0x168] sm:$0xff]
      %v268 = vld [vmem:[%s211 + $0x170] sm:$0xff]
      %v269 = vld [vmem:[%s211 + $0x178] sm:$0xff]
      %v270 = vld [vmem:[%s211 + $0x180] sm:$0xff]
      %v271 = vld [vmem:[%s211 + $0x188] sm:$0xff]
      %v272 = vld [vmem:[%s211 + $0x190] sm:$0xff]
      %v273 = vld [vmem:[%s211 + $0x198] sm:$0xff]
      %v274 = vld [vmem:[%s211 + $0x1a0] sm:$0xff]
      %v275 = vld [vmem:[%s211 + $0x1a8] sm:$0xff]
      %v276 = vld [vmem:[%s211 + $0x1b0] sm:$0xff]
      %v277 = vld [vmem:[%s211 + $0x1b8] sm:$0xff]
      %v278 = vld [vmem:[%s211 + $0x1c0] sm:$0xff]
      %v279 = vld [vmem:[%s211 + $0x1c8] sm:$0xff]
      %v280 = vld [vmem:[%s211 + $0x1d0] sm:$0xff]
      %v281 = vld [vmem:[%s211 + $0x1d8] sm:$0xff]
      %v282 = vld [vmem:[%s211 + $0x1e0] sm:$0xff]
      %v283 = vld [vmem:[%s211 + $0x1e8] sm:$0xff]
      %v284 = vld [vmem:[%s211 + $0x1f0] sm:$0xff]
      %v285 = vld [vmem:[%s211 + $0x1f8] sm:$0xff]
      %v286 = vld [vmem:[%s1] sm:$0xf]
      %v287 = vld [vmem:[%s1 + $0x4] sm:$0xf]
      %v288 = vld [vmem:[%s1 + $0x8] sm:$0xf]
      %v289 = vld [vmem:[%s1 + $0xc] sm:$0xf]
      %v290 = vld [vmem:[%s1 + $0x10] sm:$0xf]
      %v291 = vld [vmem:[%s1 + $0x14] sm:$0xf]
      %v292 = vld [vmem:[%s1 + $0x18] sm:$0xf]
      %v293 = vld [vmem:[%s1 + $0x1c] sm:$0xf]
      %v294 = vld [vmem:[%s1 + $0x20] sm:$0xf]
      %v295 = vld [vmem:[%s1 + $0x24] sm:$0xf]
      %v296 = vld [vmem:[%s1 + $0x28] sm:$0xf]
      %v297 = vld [vmem:[%s1 + $0x2c] sm:$0xf]
      %v298 = vld [vmem:[%s1 + $0x30] sm:$0xf]
      %v299 = vld [vmem:[%s1 + $0x34] sm:$0xf]
      %v300 = vld [vmem:[%s1 + $0x38] sm:$0xf]
      %v301 = vld [vmem:[%s1 + $0x3c] sm:$0xf]
      %v302 = vld [vmem:[%s1 + $0x40] sm:$0xf]
      %v303 = vld [vmem:[%s1 + $0x44] sm:$0xf]
      %v304 = vld [vmem:[%s1 + $0x48] sm:$0xf]
      %v305 = vld [vmem:[%s1 + $0x4c] sm:$0xf]
      %v306 = vld [vmem:[%s1 + $0x50] sm:$0xf]
      %v307 = vld [vmem:[%s1 + $0x54] sm:$0xf]
      %v308 = vld [vmem:[%s1 + $0x58] sm:$0xf]
      %v309 = vld [vmem:[%s1 + $0x5c] sm:$0xf]
      %v310 = vld [vmem:[%s1 + $0x60] sm:$0xf]
      %v311 = vld [vmem:[%s1 + $0x64] sm:$0xf]
      %v312 = vld [vmem:[%s1 + $0x68] sm:$0xf]
      %v313 = vld [vmem:[%s1 + $0x6c] sm:$0xf]
      %v314 = vld [vmem:[%s1 + $0x70] sm:$0xf]
      %v315 = vld [vmem:[%s1 + $0x74] sm:$0xf]
      %v316 = vld [vmem:[%s1 + $0x78] sm:$0xf]
      %v317 = vld [vmem:[%s1 + $0x7c] sm:$0xf]
      %v382 = vunpack.c.l.b16 %v222
      %v383 = vunpack.c.h.b16 %v222
      %v384 = vunpack.c.l.b16 %v223
      %v385 = vunpack.c.h.b16 %v223
      %v386 = vunpack.c.l.b16 %v224
      %v387 = vunpack.c.h.b16 %v224
      %v388 = vunpack.c.l.b16 %v225
      %v389 = vunpack.c.h.b16 %v225
      %v390 = vunpack.c.l.b16 %v226
      %v391 = vunpack.c.h.b16 %v226
      %v392 = vunpack.c.l.b16 %v227
      %v393 = vunpack.c.h.b16 %v227
      %v394 = vunpack.c.l.b16 %v228
      %v395 = vunpack.c.h.b16 %v228
      %v396 = vunpack.c.l.b16 %v229
      %v397 = vunpack.c.h.b16 %v229
      %v398 = vunpack.c.l.b16 %v230
      %v399 = vunpack.c.h.b16 %v230
      %v400 = vunpack.c.l.b16 %v231
      %v401 = vunpack.c.h.b16 %v231
      %v402 = vunpack.c.l.b16 %v232
      %v403 = vunpack.c.h.b16 %v232
      %v404 = vunpack.c.l.b16 %v233
      %v405 = vunpack.c.h.b16 %v233
      %v406 = vunpack.c.l.b16 %v234
      %v407 = vunpack.c.h.b16 %v234
      %v408 = vunpack.c.l.b16 %v235
      %v409 = vunpack.c.h.b16 %v235
      %v410 = vunpack.c.l.b16 %v236
      %v411 = vunpack.c.h.b16 %v236
      %v412 = vunpack.c.l.b16 %v237
      %v413 = vunpack.c.h.b16 %v237
      %v414 = vunpack.c.l.b16 %v238
      %v415 = vunpack.c.h.b16 %v238
      %v416 = vunpack.c.l.b16 %v239
      %v417 = vunpack.c.h.b16 %v239
      %v418 = vunpack.c.l.b16 %v240
      %v419 = vunpack.c.h.b16 %v240
      %v420 = vunpack.c.l.b16 %v241
      %v421 = vunpack.c.h.b16 %v241
      %v422 = vunpack.c.l.b16 %v242
      %v423 = vunpack.c.h.b16 %v242
      %v424 = vunpack.c.l.b16 %v243
      %v425 = vunpack.c.h.b16 %v243
      %v426 = vunpack.c.l.b16 %v244
      %v427 = vunpack.c.h.b16 %v244
      %v428 = vunpack.c.l.b16 %v245
      %v429 = vunpack.c.h.b16 %v245
      %v430 = vunpack.c.l.b16 %v246
      %v431 = vunpack.c.h.b16 %v246
      %v432 = vunpack.c.l.b16 %v247
      %v433 = vunpack.c.h.b16 %v247
      %v434 = vunpack.c.l.b16 %v248
      %v435 = vunpack.c.h.b16 %v248
      %v436 = vunpack.c.l.b16 %v249
      %v437 = vunpack.c.h.b16 %v249
      %v438 = vunpack.c.l.b16 %v250
      %v439 = vunpack.c.h.b16 %v250
      %v440 = vunpack.c.l.b16 %v251
      %v441 = vunpack.c.h.b16 %v251
      %v442 = vunpack.c.l.b16 %v252
      %v443 = vunpack.c.h.b16 %v252
      %v444 = vunpack.c.l.b16 %v253
      %v445 = vunpack.c.h.b16 %v253
      %v446 = vunpack.c.l.b16 %v254
      %v447 = vunpack.c.h.b16 %v254
      %v448 = vunpack.c.l.b16 %v255
      %v449 = vunpack.c.h.b16 %v255
      %v450 = vunpack.c.l.b16 %v256
      %v451 = vunpack.c.h.b16 %v256
      %v452 = vunpack.c.l.b16 %v257
      %v453 = vunpack.c.h.b16 %v257
      %v454 = vunpack.c.l.b16 %v258
      %v455 = vunpack.c.h.b16 %v258
      %v456 = vunpack.c.l.b16 %v259
      %v457 = vunpack.c.h.b16 %v259
      %v458 = vunpack.c.l.b16 %v260
      %v459 = vunpack.c.h.b16 %v260
      %v460 = vunpack.c.l.b16 %v261
      %v461 = vunpack.c.h.b16 %v261
      %v462 = vunpack.c.l.b16 %v262
      %v463 = vunpack.c.h.b16 %v262
      %v464 = vunpack.c.l.b16 %v263
      %v465 = vunpack.c.h.b16 %v263
      %v466 = vunpack.c.l.b16 %v264
      %v467 = vunpack.c.h.b16 %v264
      %v468 = vunpack.c.l.b16 %v265
      %v469 = vunpack.c.h.b16 %v265
      %v470 = vunpack.c.l.b16 %v266
      %v471 = vunpack.c.h.b16 %v266
      %v472 = vunpack.c.l.b16 %v267
      %v473 = vunpack.c.h.b16 %v267
      %v474 = vunpack.c.l.b16 %v268
      %v475 = vunpack.c.h.b16 %v268
      %v476 = vunpack.c.l.b16 %v269
      %v477 = vunpack.c.h.b16 %v269
      %v478 = vunpack.c.l.b16 %v270
      %v479 = vunpack.c.h.b16 %v270
      %v480 = vunpack.c.l.b16 %v271
      %v481 = vunpack.c.h.b16 %v271
      %v482 = vunpack.c.l.b16 %v272
      %v483 = vunpack.c.h.b16 %v272
      %v484 = vunpack.c.l.b16 %v273
      %v485 = vunpack.c.h.b16 %v273
      %v486 = vunpack.c.l.b16 %v274
      %v487 = vunpack.c.h.b16 %v274
      %v488 = vunpack.c.l.b16 %v275
      %v489 = vunpack.c.h.b16 %v275
      %v490 = vunpack.c.l.b16 %v276
      %v491 = vunpack.c.h.b16 %v276
      %v492 = vunpack.c.l.b16 %v277
      %v493 = vunpack.c.h.b16 %v277
      %v494 = vunpack.c.l.b16 %v278
      %v495 = vunpack.c.h.b16 %v278
      %v496 = vunpack.c.l.b16 %v279
      %v497 = vunpack.c.h.b16 %v279
      %v498 = vunpack.c.l.b16 %v280
      %v499 = vunpack.c.h.b16 %v280
      %v500 = vunpack.c.l.b16 %v281
      %v501 = vunpack.c.h.b16 %v281
      %v502 = vunpack.c.l.b16 %v282
      %v503 = vunpack.c.h.b16 %v282
      %v504 = vunpack.c.l.b16 %v283
      %v505 = vunpack.c.h.b16 %v283
      %v506 = vunpack.c.l.b16 %v284
      %v507 = vunpack.c.h.b16 %v284
      %v508 = vunpack.c.l.b16 %v285
      %v509 = vunpack.c.h.b16 %v285
      %v510 = vpack.c.b16 %v384, %v382
      %v511 = vpack.c.b16 %v385, %v383
      %v512 = vpack.c.b16 %v388, %v386
      %v513 = vpack.c.b16 %v389, %v387
      %v514 = vpack.c.b16 %v392, %v390
      %v515 = vpack.c.b16 %v393, %v391
      %v516 = vpack.c.b16 %v396, %v394
      %v517 = vpack.c.b16 %v397, %v395
      %v518 = vpack.c.b16 %v400, %v398
      %v519 = vpack.c.b16 %v401, %v399
      %v520 = vpack.c.b16 %v404, %v402
      %v521 = vpack.c.b16 %v405, %v403
      %v522 = vpack.c.b16 %v408, %v406
      %v523 = vpack.c.b16 %v409, %v407
      %v524 = vpack.c.b16 %v412, %v410
      %v525 = vpack.c.b16 %v413, %v411
      %v526 = vpack.c.b16 %v416, %v414
      %v527 = vpack.c.b16 %v417, %v415
      %v528 = vpack.c.b16 %v420, %v418
      %v529 = vpack.c.b16 %v421, %v419
      %v530 = vpack.c.b16 %v424, %v422
      %v531 = vpack.c.b16 %v425, %v423
      %v532 = vpack.c.b16 %v428, %v426
      %v533 = vpack.c.b16 %v429, %v427
      %v534 = vpack.c.b16 %v432, %v430
      %v535 = vpack.c.b16 %v433, %v431
      %v536 = vpack.c.b16 %v436, %v434
      %v537 = vpack.c.b16 %v437, %v435
      %v538 = vpack.c.b16 %v440, %v438
      %v539 = vpack.c.b16 %v441, %v439
      %v540 = vpack.c.b16 %v444, %v442
      %v541 = vpack.c.b16 %v445, %v443
      %v542 = vpack.c.b16 %v448, %v446
      %v543 = vpack.c.b16 %v449, %v447
      %v544 = vpack.c.b16 %v452, %v450
      %v545 = vpack.c.b16 %v453, %v451
      %v546 = vpack.c.b16 %v456, %v454
      %v547 = vpack.c.b16 %v457, %v455
      %v548 = vpack.c.b16 %v460, %v458
      %v549 = vpack.c.b16 %v461, %v459
      %v550 = vpack.c.b16 %v464, %v462
      %v551 = vpack.c.b16 %v465, %v463
      %v552 = vpack.c.b16 %v468, %v466
      %v553 = vpack.c.b16 %v469, %v467
      %v554 = vpack.c.b16 %v472, %v470
      %v555 = vpack.c.b16 %v473, %v471
      %v556 = vpack.c.b16 %v476, %v474
      %v557 = vpack.c.b16 %v477, %v475
      %v558 = vpack.c.b16 %v480, %v478
      %v559 = vpack.c.b16 %v481, %v479
      %v560 = vpack.c.b16 %v484, %v482
      %v561 = vpack.c.b16 %v485, %v483
      %v562 = vpack.c.b16 %v488, %v486
      %v563 = vpack.c.b16 %v489, %v487
      %v564 = vpack.c.b16 %v492, %v490
      %v565 = vpack.c.b16 %v493, %v491
      %v566 = vpack.c.b16 %v496, %v494
      %v567 = vpack.c.b16 %v497, %v495
      %v568 = vpack.c.b16 %v500, %v498
      %v569 = vpack.c.b16 %v501, %v499
      %v570 = vpack.c.b16 %v504, %v502
      %v571 = vpack.c.b16 %v505, %v503
      %v572 = vpack.c.b16 %v508, %v506
      %v573 = vpack.c.b16 %v509, %v507
      %v670 = vunpack.c.l.b16 %v286
      %v671 = vunpack.c.l.b16 %v287
      %v672 = vunpack.c.l.b16 %v288
      %v673 = vunpack.c.l.b16 %v289
      %v674 = vunpack.c.l.b16 %v290
      %v675 = vunpack.c.l.b16 %v291
      %v676 = vunpack.c.l.b16 %v292
      %v677 = vunpack.c.l.b16 %v293
      %v678 = vunpack.c.l.b16 %v294
      %v679 = vunpack.c.l.b16 %v295
      %v680 = vunpack.c.l.b16 %v296
      %v681 = vunpack.c.l.b16 %v297
      %v682 = vunpack.c.l.b16 %v298
      %v683 = vunpack.c.l.b16 %v299
      %v684 = vunpack.c.l.b16 %v300
      %v685 = vunpack.c.l.b16 %v301
      %v686 = vunpack.c.l.b16 %v302
      %v687 = vunpack.c.l.b16 %v303
      %v688 = vunpack.c.l.b16 %v304
      %v689 = vunpack.c.l.b16 %v305
      %v690 = vunpack.c.l.b16 %v306
      %v691 = vunpack.c.l.b16 %v307
      %v692 = vunpack.c.l.b16 %v308
      %v693 = vunpack.c.l.b16 %v309
      %v694 = vunpack.c.l.b16 %v310
      %v695 = vunpack.c.l.b16 %v311
      %v696 = vunpack.c.l.b16 %v312
      %v697 = vunpack.c.l.b16 %v313
      %v698 = vunpack.c.l.b16 %v314
      %v699 = vunpack.c.l.b16 %v315
      %v700 = vunpack.c.l.b16 %v316
      %v701 = vunpack.c.l.b16 %v317
      %v702 = vpack.c.b16 %v671, %v670
      %v703 = vpack.c.b16 %v673, %v672
      %v704 = vpack.c.b16 %v675, %v674
      %v705 = vpack.c.b16 %v677, %v676
      %v706 = vpack.c.b16 %v679, %v678
      %v707 = vpack.c.b16 %v681, %v680
      %v708 = vpack.c.b16 %v683, %v682
      %v709 = vpack.c.b16 %v685, %v684
      %v710 = vpack.c.b16 %v687, %v686
      %v711 = vpack.c.b16 %v689, %v688
      %v712 = vpack.c.b16 %v691, %v690
      %v713 = vpack.c.b16 %v693, %v692
      %v714 = vpack.c.b16 %v695, %v694
      %v715 = vpack.c.b16 %v697, %v696
      %v716 = vpack.c.b16 %v699, %v698
      %v717 = vpack.c.b16 %v701, %v700
      %734 = vmatprep.subr.bf16.mxu0 0
      %735 = vmatpush1.bf16.msra.mxu0 %v702
      %736 = vmatprep.subr.bf16.mxu0 0
      %737 = vmatpush1.bf16.msra.mxu0 %v703
      %738 = vmatprep.subr.bf16.mxu0 0
      %739 = vmatpush1.bf16.msra.mxu0 %v704
      %740 = vmatprep.subr.bf16.mxu0 0
      %741 = vmatpush1.bf16.msra.mxu0 %v705
      %742 = vmatprep.subr.bf16.mxu0 0
      %743 = vmatpush1.bf16.msra.mxu0 %v706
      %744 = vmatprep.subr.bf16.mxu0 0
      %745 = vmatpush1.bf16.msra.mxu0 %v707
      %746 = vmatprep.subr.bf16.mxu0 0
      %747 = vmatpush1.bf16.msra.mxu0 %v708
      %748 = vmatprep.subr.bf16.mxu0 0
      %749 = vmatpush1.bf16.msra.mxu0 %v709
      %750 = vmatprep.subr.bf16.mxu0 0
      %751 = vmatpush1.bf16.msra.mxu0 %v710
      %752 = vmatprep.subr.bf16.mxu0 0
      %753 = vmatpush1.bf16.msra.mxu0 %v711
      %754 = vmatprep.subr.bf16.mxu0 0
      %755 = vmatpush1.bf16.msra.mxu0 %v712
      %756 = vmatprep.subr.bf16.mxu0 0
      %757 = vmatpush1.bf16.msra.mxu0 %v713
      %758 = vmatprep.subr.bf16.mxu0 0
      %759 = vmatpush1.bf16.msra.mxu0 %v714
      %760 = vmatprep.subr.bf16.mxu0 0
      %761 = vmatpush1.bf16.msra.mxu0 %v715
      %762 = vmatprep.subr.bf16.mxu0 0
      %763 = vmatpush1.bf16.msra.mxu0 %v716
      %764 = vmatprep.subr.bf16.mxu0 0
      %765 = vmatpush1.bf16.msra.mxu0 %v717
      %766 = vmatprep.mubr.bf16.mxu0 %v511
      %767 = vmatmul.mubr.bf16.gmra.mrb[0].mxu0 %v510
      %v768 = vpop.f32.mrb[0].mxu0
      %v769 = vadd.f32 0.0, %v768
      %v770 = vpop.f32.mrb[0].mxu0
      %v771 = vpop.f32.mrb[0].mxu0
      %v772 = vadd.f32 0.0, %v771
      %v773 = vpop.f32.mrb[0].mxu0
      %774 = vmatprep.mubr.bf16.mxu0 %v513
      %775 = vmatmul.mubr.bf16.gmra.mrb[0].mxu0 %v512
      %v776 = vpop.f32.mrb[0].mxu0
      %v777 = vadd.f32 0.0, %v776
      %v778 = vpop.f32.mrb[0].mxu0
      %v779 = vpop.f32.mrb[0].mxu0
      %v780 = vadd.f32 0.0, %v779
      %v781 = vpop.f32.mrb[0].mxu0
      %782 = vmatprep.mubr.bf16.mxu0 %v515
      %783 = vmatmul.mubr.bf16.gmra.mrb[0].mxu0 %v514
      %v784 = vpop.f32.mrb[0].mxu0
      %v785 = vadd.f32 0.0, %v784
      %v786 = vpop.f32.mrb[0].mxu0
      %v787 = vpop.f32.mrb[0].mxu0
      %v788 = vadd.f32 0.0, %v787
      %v789 = vpop.f32.mrb[0].mxu0
      %790 = vmatprep.mubr.bf16.mxu0 %v517
      %791 = vmatmul.mubr.bf16.gmra.mrb[0].mxu0 %v516
      %v792 = vpop.f32.mrb[0].mxu0
      %v793 = vadd.f32 0.0, %v792
      %v794 = vpop.f32.mrb[0].mxu0
      %v795 = vpop.f32.mrb[0].mxu0
      %v796 = vadd.f32 0.0, %v795
      %v797 = vpop.f32.mrb[0].mxu0
      %798 = vmatprep.mubr.bf16.mxu0 %v519
      %799 = vmatmul.mubr.bf16.gmra.mrb[0].mxu0 %v518
      %v800 = vpop.f32.mrb[0].mxu0
      %v801 = vadd.f32 0.0, %v800
      %v802 = vpop.f32.mrb[0].mxu0
      %v803 = vpop.f32.mrb[0].mxu0
      %v804 = vadd.f32 0.0, %v803
      %v805 = vpop.f32.mrb[0].mxu0
      %806 = vmatprep.mubr.bf16.mxu0 %v521
      %807 = vmatmul.mubr.bf16.gmra.mrb[0].mxu0 %v520
      %v808 = vpop.f32.mrb[0].mxu0
      %v809 = vadd.f32 0.0, %v808
      %v810 = vpop.f32.mrb[0].mxu0
      %v811 = vpop.f32.mrb[0].mxu0
      %v812 = vadd.f32 0.0, %v811
      %v813 = vpop.f32.mrb[0].mxu0
      %814 = vmatprep.mubr.bf16.mxu0 %v523
      %815 = vmatmul.mubr.bf16.gmra.mrb[0].mxu0 %v522
      %v816 = vpop.f32.mrb[0].mxu0
      %v817 = vadd.f32 0.0, %v816
      %v818 = vpop.f32.mrb[0].mxu0
      %v819 = vpop.f32.mrb[0].mxu0
      %v820 = vadd.f32 0.0, %v819
      %v821 = vpop.f32.mrb[0].mxu0
      %822 = vmatprep.mubr.bf16.mxu0 %v525
      %823 = vmatmul.mubr.bf16.gmra.mrb[0].mxu0 %v524
      %v824 = vpop.f32.mrb[0].mxu0
      %v825 = vadd.f32 0.0, %v824
      %v826 = vpop.f32.mrb[0].mxu0
      %v827 = vpop.f32.mrb[0].mxu0
      %v828 = vadd.f32 0.0, %v827
      %v829 = vpop.f32.mrb[0].mxu0
      %830 = vmatprep.mubr.bf16.mxu0 %v527
      %831 = vmatmul.mubr.bf16.gmra.mrb[0].mxu0 %v526
      %v832 = vpop.f32.mrb[0].mxu0
      %v833 = vadd.f32 0.0, %v832
      %v834 = vpop.f32.mrb[0].mxu0
      %v835 = vpop.f32.mrb[0].mxu0
      %v836 = vadd.f32 0.0, %v835
      %v837 = vpop.f32.mrb[0].mxu0
      %838 = vmatprep.mubr.bf16.mxu0 %v529
      %839 = vmatmul.mubr.bf16.gmra.mrb[0].mxu0 %v528
      %v840 = vpop.f32.mrb[0].mxu0
      %v841 = vadd.f32 0.0, %v840
      %v842 = vpop.f32.mrb[0].mxu0
      %v843 = vpop.f32.mrb[0].mxu0
      %v844 = vadd.f32 0.0, %v843
      %v845 = vpop.f32.mrb[0].mxu0
      %846 = vmatprep.mubr.bf16.mxu0 %v531
      %847 = vmatmul.mubr.bf16.gmra.mrb[0].mxu0 %v530
      %v848 = vpop.f32.mrb[0].mxu0
      %v849 = vadd.f32 0.0, %v848
      %v850 = vpop.f32.mrb[0].mxu0
      %v851 = vpop.f32.mrb[0].mxu0
      %v852 = vadd.f32 0.0, %v851
      %v853 = vpop.f32.mrb[0].mxu0
      %854 = vmatprep.mubr.bf16.mxu0 %v533
      %855 = vmatmul.mubr.bf16.gmra.mrb[0].mxu0 %v532
      %v856 = vpop.f32.mrb[0].mxu0
      %v857 = vadd.f32 0.0, %v856
      %v858 = vpop.f32.mrb[0].mxu0
      %v859 = vpop.f32.mrb[0].mxu0
      %v860 = vadd.f32 0.0, %v859
      %v861 = vpop.f32.mrb[0].mxu0
      %862 = vmatprep.mubr.bf16.mxu0 %v535
      %863 = vmatmul.mubr.bf16.gmra.mrb[0].mxu0 %v534
      %v864 = vpop.f32.mrb[0].mxu0
      %v865 = vadd.f32 0.0, %v864
      %v866 = vpop.f32.mrb[0].mxu0
      %v867 = vpop.f32.mrb[0].mxu0
      %v868 = vadd.f32 0.0, %v867
      %v869 = vpop.f32.mrb[0].mxu0
      %870 = vmatprep.mubr.bf16.mxu0 %v537
      %871 = vmatmul.mubr.bf16.gmra.mrb[0].mxu0 %v536
      %v872 = vpop.f32.mrb[0].mxu0
      %v873 = vadd.f32 0.0, %v872
      %v874 = vpop.f32.mrb[0].mxu0
      %v875 = vpop.f32.mrb[0].mxu0
      %v876 = vadd.f32 0.0, %v875
      %v877 = vpop.f32.mrb[0].mxu0
      %878 = vmatprep.mubr.bf16.mxu0 %v539
      %879 = vmatmul.mubr.bf16.gmra.mrb[0].mxu0 %v538
      %v880 = vpop.f32.mrb[0].mxu0
      %v881 = vadd.f32 0.0, %v880
      %v882 = vpop.f32.mrb[0].mxu0
      %v883 = vpop.f32.mrb[0].mxu0
      %v884 = vadd.f32 0.0, %v883
      %v885 = vpop.f32.mrb[0].mxu0
      %886 = vmatprep.mubr.bf16.mxu0 %v541
      %887 = vmatmul.mubr.bf16.gmra.mrb[0].mxu0 %v540
      %v888 = vpop.f32.mrb[0].mxu0
      %v889 = vadd.f32 0.0, %v888
      %v890 = vpop.f32.mrb[0].mxu0
      %v891 = vpop.f32.mrb[0].mxu0
      %v892 = vadd.f32 0.0, %v891
      %v893 = vpop.f32.mrb[0].mxu0
      %894 = vmatprep.mubr.bf16.mxu0 %v543
      %895 = vmatmul.mubr.bf16.gmra.mrb[0].mxu0 %v542
      %v896 = vpop.f32.mrb[0].mxu0
      %v897 = vadd.f32 0.0, %v896
      %v898 = vpop.f32.mrb[0].mxu0
      %v899 = vpop.f32.mrb[0].mxu0
      %v900 = vadd.f32 0.0, %v899
      %v901 = vpop.f32.mrb[0].mxu0
      %902 = vmatprep.mubr.bf16.mxu0 %v545
      %903 = vmatmul.mubr.bf16.gmra.mrb[0].mxu0 %v544
      %v904 = vpop.f32.mrb[0].mxu0
      %v905 = vadd.f32 0.0, %v904
      %v906 = vpop.f32.mrb[0].mxu0
      %v907 = vpop.f32.mrb[0].mxu0
      %v908 = vadd.f32 0.0, %v907
      %v909 = vpop.f32.mrb[0].mxu0
      %910 = vmatprep.mubr.bf16.mxu0 %v547
      %911 = vmatmul.mubr.bf16.gmra.mrb[0].mxu0 %v546
      %v912 = vpop.f32.mrb[0].mxu0
      %v913 = vadd.f32 0.0, %v912
      %v914 = vpop.f32.mrb[0].mxu0
      %v915 = vpop.f32.mrb[0].mxu0
      %v916 = vadd.f32 0.0, %v915
      %v917 = vpop.f32.mrb[0].mxu0
      %918 = vmatprep.mubr.bf16.mxu0 %v549
      %919 = vmatmul.mubr.bf16.gmra.mrb[0].mxu0 %v548
      %v920 = vpop.f32.mrb[0].mxu0
      %v921 = vadd.f32 0.0, %v920
      %v922 = vpop.f32.mrb[0].mxu0
      %v923 = vpop.f32.mrb[0].mxu0
      %v924 = vadd.f32 0.0, %v923
      %v925 = vpop.f32.mrb[0].mxu0
      %926 = vmatprep.mubr.bf16.mxu0 %v551
      %927 = vmatmul.mubr.bf16.gmra.mrb[0].mxu0 %v550
      %v928 = vpop.f32.mrb[0].mxu0
      %v929 = vadd.f32 0.0, %v928
      %v930 = vpop.f32.mrb[0].mxu0
      %v931 = vpop.f32.mrb[0].mxu0
      %v932 = vadd.f32 0.0, %v931
      %v933 = vpop.f32.mrb[0].mxu0
      %934 = vmatprep.mubr.bf16.mxu0 %v553
      %935 = vmatmul.mubr.bf16.gmra.mrb[0].mxu0 %v552
      %v936 = vpop.f32.mrb[0].mxu0
      %v937 = vadd.f32 0.0, %v936
      %v938 = vpop.f32.mrb[0].mxu0
      %v939 = vpop.f32.mrb[0].mxu0
      %v940 = vadd.f32 0.0, %v939
      %v941 = vpop.f32.mrb[0].mxu0
      %942 = vmatprep.mubr.bf16.mxu0 %v555
      %943 = vmatmul.mubr.bf16.gmra.mrb[0].mxu0 %v554
      %v944 = vpop.f32.mrb[0].mxu0
      %v945 = vadd.f32 0.0, %v944
      %v946 = vpop.f32.mrb[0].mxu0
      %v947 = vpop.f32.mrb[0].mxu0
      %v948 = vadd.f32 0.0, %v947
      %v949 = vpop.f32.mrb[0].mxu0
      %950 = vmatprep.mubr.bf16.mxu0 %v557
      %951 = vmatmul.mubr.bf16.gmra.mrb[0].mxu0 %v556
      %v952 = vpop.f32.mrb[0].mxu0
      %v953 = vadd.f32 0.0, %v952
      %v954 = vpop.f32.mrb[0].mxu0
      %v955 = vpop.f32.mrb[0].mxu0
      %v956 = vadd.f32 0.0, %v955
      %v957 = vpop.f32.mrb[0].mxu0
      %958 = vmatprep.mubr.bf16.mxu0 %v559
      %959 = vmatmul.mubr.bf16.gmra.mrb[0].mxu0 %v558
      %v960 = vpop.f32.mrb[0].mxu0
      %v961 = vadd.f32 0.0, %v960
      %v962 = vpop.f32.mrb[0].mxu0
      %v963 = vpop.f32.mrb[0].mxu0
      %v964 = vadd.f32 0.0, %v963
      %v965 = vpop.f32.mrb[0].mxu0
      %966 = vmatprep.mubr.bf16.mxu0 %v561
      %967 = vmatmul.mubr.bf16.gmra.mrb[0].mxu0 %v560
      %v968 = vpop.f32.mrb[0].mxu0
      %v969 = vadd.f32 0.0, %v968
      %v970 = vpop.f32.mrb[0].mxu0
      %v971 = vpop.f32.mrb[0].mxu0
      %v972 = vadd.f32 0.0, %v971
      %v973 = vpop.f32.mrb[0].mxu0
      %974 = vmatprep.mubr.bf16.mxu0 %v563
      %975 = vmatmul.mubr.bf16.gmra.mrb[0].mxu0 %v562
      %v976 = vpop.f32.mrb[0].mxu0
      %v977 = vadd.f32 0.0, %v976
      %v978 = vpop.f32.mrb[0].mxu0
      %v979 = vpop.f32.mrb[0].mxu0
      %v980 = vadd.f32 0.0, %v979
      %v981 = vpop.f32.mrb[0].mxu0
      %982 = vmatprep.mubr.bf16.mxu0 %v565
      %983 = vmatmul.mubr.bf16.gmra.mrb[0].mxu0 %v564
      %v984 = vpop.f32.mrb[0].mxu0
      %v985 = vadd.f32 0.0, %v984
      %v986 = vpop.f32.mrb[0].mxu0
      %v987 = vpop.f32.mrb[0].mxu0
      %v988 = vadd.f32 0.0, %v987
      %v989 = vpop.f32.mrb[0].mxu0
      %990 = vmatprep.mubr.bf16.mxu0 %v567
      %991 = vmatmul.mubr.bf16.gmra.mrb[0].mxu0 %v566
      %v992 = vpop.f32.mrb[0].mxu0
      %v993 = vadd.f32 0.0, %v992
      %v994 = vpop.f32.mrb[0].mxu0
      %v995 = vpop.f32.mrb[0].mxu0
      %v996 = vadd.f32 0.0, %v995
      %v997 = vpop.f32.mrb[0].mxu0
      %998 = vmatprep.mubr.bf16.mxu0 %v569
      %999 = vmatmul.mubr.bf16.gmra.mrb[0].mxu0 %v568
      %v1000 = vpop.f32.mrb[0].mxu0
      %v1001 = vadd.f32 0.0, %v1000
      %v1002 = vpop.f32.mrb[0].mxu0
      %v1003 = vpop.f32.mrb[0].mxu0
      %v1004 = vadd.f32 0.0, %v1003
      %v1005 = vpop.f32.mrb[0].mxu0
      %1006 = vmatprep.mubr.bf16.mxu0 %v571
      %1007 = vmatmul.mubr.bf16.gmra.mrb[0].mxu0 %v570
      %v1008 = vpop.f32.mrb[0].mxu0
      %v1009 = vadd.f32 0.0, %v1008
      %v1010 = vpop.f32.mrb[0].mxu0
      %v1011 = vpop.f32.mrb[0].mxu0
      %v1012 = vadd.f32 0.0, %v1011
      %v1013 = vpop.f32.mrb[0].mxu0
      %1014 = vmatprep.mubr.bf16.mxu0 %v573
      %1015 = vmatmul.mubr.bf16.gmra.mrb[0].mxu0 %v572
      %v1016 = vpop.f32.mrb[0].mxu0
      %v1017 = vadd.f32 0.0, %v1016
      %v1018 = vpop.f32.mrb[0].mxu0
      %v1019 = vpop.f32.mrb[0].mxu0
      %v1020 = vadd.f32 0.0, %v1019
      %v1021 = vpop.f32.mrb[0].mxu0
      %1022 = vdwg.mxu0
      %p1023 = scmp.eq.s32.totalorder %s19, 0
      %p1024 = scmp.eq.s32.totalorder %s20, 0
      %p1025 = pnand %p1023, %p1024
      %p1026 = pneg %p1025
      // Predicated region
      $region37: #{discriminator64.5} parent=35 // pred_check
        _
      $region38: #{discriminator64.5} parent=35 // pred_check_branch
        %1028 = sbr.rel (%p1025) target = $region40
      $region39: #{discriminator64.5} parent=35 // pred_region
        %1029 = vst [vmem:[#allocation2] sm:$0x1] 0.0
        %1030 = vst [vmem:[#allocation3] sm:$0x1] 0.0
      $region40: #{discriminator64.5} parent=35 // pred_fallthru
        _
      // Predicated region
      $region41: #{discriminator64.5} parent=35 // pred_check
        %p1031 = pneg %p1023
      $region42: #{discriminator64.5} parent=35 // pred_check_branch
        %1033 = sbr.rel (%p1031) target = $region44
      $region43: #{discriminator64.5} parent=35 // pred_region
        %v1034 = vld [vmem:[#allocation2] sm:$0x1]
        %v1035 = vadd.f32 %v769, %v772
        %v1036 = vadd.f32 %v1035, %v777
        %v1037 = vadd.f32 %v1036, %v780
        %v1038 = vadd.f32 %v1037, %v785
        %v1039 = vadd.f32 %v1038, %v788
        %v1040 = vadd.f32 %v1039, %v793
        %v1041 = vadd.f32 %v1040, %v796
        %v1042 = vadd.f32 %v1041, %v801
        %v1043 = vadd.f32 %v1042, %v804
        %v1044 = vadd.f32 %v1043, %v809
        %v1045 = vadd.f32 %v1044, %v812
        %v1046 = vadd.f32 %v1045, %v817
        %v1047 = vadd.f32 %v1046, %v820
        %v1048 = vadd.f32 %v1047, %v825
        %v1049 = vadd.f32 %v1048, %v828
        %v1050 = vadd.f32 %v1049, %v833
        %v1051 = vadd.f32 %v1050, %v836
        %v1052 = vadd.f32 %v1051, %v841
        %v1053 = vadd.f32 %v1052, %v844
        %v1054 = vadd.f32 %v1053, %v849
        %v1055 = vadd.f32 %v1054, %v852
        %v1056 = vadd.f32 %v1055, %v857
        %v1057 = vadd.f32 %v1056, %v860
        %v1058 = vadd.f32 %v1057, %v865
        %v1059 = vadd.f32 %v1058, %v868
        %v1060 = vadd.f32 %v1059, %v873
        %v1061 = vadd.f32 %v1060, %v876
        %v1062 = vadd.f32 %v1061, %v881
        %v1063 = vadd.f32 %v1062, %v884
        %v1064 = vadd.f32 %v1063, %v889
        %v1065 = vadd.f32 %v1064, %v892
        %v1066 = vadd.f32 %v1065, %v897
        %v1067 = vadd.f32 %v1066, %v900
        %v1068 = vadd.f32 %v1067, %v905
        %v1069 = vadd.f32 %v1068, %v908
        %v1070 = vadd.f32 %v1069, %v913
        %v1071 = vadd.f32 %v1070, %v916
        %v1072 = vadd.f32 %v1071, %v921
        %v1073 = vadd.f32 %v1072, %v924
        %v1074 = vadd.f32 %v1073, %v929
        %v1075 = vadd.f32 %v1074, %v932
        %v1076 = vadd.f32 %v1075, %v937
        %v1077 = vadd.f32 %v1076, %v940
        %v1078 = vadd.f32 %v1077, %v945
        %v1079 = vadd.f32 %v1078, %v948
        %v1080 = vadd.f32 %v1079, %v953
        %v1081 = vadd.f32 %v1080, %v956
        %v1082 = vadd.f32 %v1081, %v961
        %v1083 = vadd.f32 %v1082, %v964
        %v1084 = vadd.f32 %v1083, %v969
        %v1085 = vadd.f32 %v1084, %v972
        %v1086 = vadd.f32 %v1085, %v977
        %v1087 = vadd.f32 %v1086, %v980
        %v1088 = vadd.f32 %v1087, %v985
        %v1089 = vadd.f32 %v1088, %v988
        %v1090 = vadd.f32 %v1089, %v993
        %v1091 = vadd.f32 %v1090, %v996
        %v1092 = vadd.f32 %v1091, %v1001
        %v1093 = vadd.f32 %v1092, %v1004
        %v1094 = vadd.f32 %v1093, %v1009
        %v1095 = vadd.f32 %v1094, %v1012
        %v1096 = vadd.f32 %v1095, %v1017
        %v1097 = vadd.f32 %v1096, %v1020
        %v1098 = vrot.slane %v1097, 4
        %v1099 = vadd.f32 %v1097, %v1098
        %v1100 = vrot.slane %v1099, 2
        %v1101 = vadd.f32 %v1099, %v1100
        %v1102 = vrot.slane %v1101, 1
        %v1103 = vadd.f32 %v1101, %v1102
        %v1104 = vadd.f32 %v1034, %v1103
        %1105 = vst [vmem:[#allocation2] sm:$0x1] %v1104
        %v1106 = vld [vmem:[#allocation3] sm:$0x1]
        %v1107 = vmul.f32 %v769, %v769
        %v1108 = vmul.f32 %v772, %v772
        %v1109 = vmul.f32 %v777, %v777
        %v1110 = vmul.f32 %v780, %v780
        %v1111 = vmul.f32 %v785, %v785
        %v1112 = vmul.f32 %v788, %v788
        %v1113 = vmul.f32 %v793, %v793
        %v1114 = vmul.f32 %v796, %v796
        %v1115 = vmul.f32 %v801, %v801
        %v1116 = vmul.f32 %v804, %v804
        %v1117 = vmul.f32 %v809, %v809
        %v1118 = vmul.f32 %v812, %v812
        %v1119 = vmul.f32 %v817, %v817
        %v1120 = vmul.f32 %v820, %v820
        %v1121 = vmul.f32 %v825, %v825
        %v1122 = vmul.f32 %v828, %v828
        %v1123 = vmul.f32 %v833, %v833
        %v1124 = vmul.f32 %v836, %v836
        %v1125 = vmul.f32 %v841, %v841
        %v1126 = vmul.f32 %v844, %v844
        %v1127 = vmul.f32 %v849, %v849
        %v1128 = vmul.f32 %v852, %v852
        %v1129 = vmul.f32 %v857, %v857
        %v1130 = vmul.f32 %v860, %v860
        %v1131 = vmul.f32 %v865, %v865
        %v1132 = vmul.f32 %v868, %v868
        %v1133 = vmul.f32 %v873, %v873
        %v1134 = vmul.f32 %v876, %v876
        %v1135 = vmul.f32 %v881, %v881
        %v1136 = vmul.f32 %v884, %v884
        %v1137 = vmul.f32 %v889, %v889
        %v1138 = vmul.f32 %v892, %v892
        %v1139 = vmul.f32 %v897, %v897
        %v1140 = vmul.f32 %v900, %v900
        %v1141 = vmul.f32 %v905, %v905
        %v1142 = vmul.f32 %v908, %v908
        %v1143 = vmul.f32 %v913, %v913
        %v1144 = vmul.f32 %v916, %v916
        %v1145 = vmul.f32 %v921, %v921
        %v1146 = vmul.f32 %v924, %v924
        %v1147 = vmul.f32 %v929, %v929
        %v1148 = vmul.f32 %v932, %v932
        %v1149 = vmul.f32 %v937, %v937
        %v1150 = vmul.f32 %v940, %v940
        %v1151 = vmul.f32 %v945, %v945
        %v1152 = vmul.f32 %v948, %v948
        %v1153 = vmul.f32 %v953, %v953
        %v1154 = vmul.f32 %v956, %v956
        %v1155 = vmul.f32 %v961, %v961
        %v1156 = vmul.f32 %v964, %v964
        %v1157 = vmul.f32 %v969, %v969
        %v1158 = vmul.f32 %v972, %v972
        %v1159 = vmul.f32 %v977, %v977
        %v1160 = vmul.f32 %v980, %v980
        %v1161 = vmul.f32 %v985, %v985
        %v1162 = vmul.f32 %v988, %v988
        %v1163 = vmul.f32 %v993, %v993
        %v1164 = vmul.f32 %v996, %v996
        %v1165 = vmul.f32 %v1001, %v1001
        %v1166 = vmul.f32 %v1004, %v1004
        %v1167 = vmul.f32 %v1009, %v1009
        %v1168 = vmul.f32 %v1012, %v1012
        %v1169 = vmul.f32 %v1017, %v1017
        %v1170 = vmul.f32 %v1020, %v1020
        %v1171 = vadd.f32 %v1107, %v1108
        %v1172 = vadd.f32 %v1171, %v1109
        %v1173 = vadd.f32 %v1172, %v1110
        %v1174 = vadd.f32 %v1173, %v1111
        %v1175 = vadd.f32 %v1174, %v1112
        %v1176 = vadd.f32 %v1175, %v1113
        %v1177 = vadd.f32 %v1176, %v1114
        %v1178 = vadd.f32 %v1177, %v1115
        %v1179 = vadd.f32 %v1178, %v1116
        %v1180 = vadd.f32 %v1179, %v1117
        %v1181 = vadd.f32 %v1180, %v1118
        %v1182 = vadd.f32 %v1181, %v1119
        %v1183 = vadd.f32 %v1182, %v1120
        %v1184 = vadd.f32 %v1183, %v1121
        %v1185 = vadd.f32 %v1184, %v1122
        %v1186 = vadd.f32 %v1185, %v1123
        %v1187 = vadd.f32 %v1186, %v1124
        %v1188 = vadd.f32 %v1187, %v1125
        %v1189 = vadd.f32 %v1188, %v1126
        %v1190 = vadd.f32 %v1189, %v1127
        %v1191 = vadd.f32 %v1190, %v1128
        %v1192 = vadd.f32 %v1191, %v1129
        %v1193 = vadd.f32 %v1192, %v1130
        %v1194 = vadd.f32 %v1193, %v1131
        %v1195 = vadd.f32 %v1194, %v1132
        %v1196 = vadd.f32 %v1195, %v1133
        %v1197 = vadd.f32 %v1196, %v1134
        %v1198 = vadd.f32 %v1197, %v1135
        %v1199 = vadd.f32 %v1198, %v1136
        %v1200 = vadd.f32 %v1199, %v1137
        %v1201 = vadd.f32 %v1200, %v1138
        %v1202 = vadd.f32 %v1201, %v1139
        %v1203 = vadd.f32 %v1202, %v1140
        %v1204 = vadd.f32 %v1203, %v1141
        %v1205 = vadd.f32 %v1204, %v1142
        %v1206 = vadd.f32 %v1205, %v1143
        %v1207 = vadd.f32 %v1206, %v1144
        %v1208 = vadd.f32 %v1207, %v1145
        %v1209 = vadd.f32 %v1208, %v1146
        %v1210 = vadd.f32 %v1209, %v1147
        %v1211 = vadd.f32 %v1210, %v1148
        %v1212 = vadd.f32 %v1211, %v1149
        %v1213 = vadd.f32 %v1212, %v1150
        %v1214 = vadd.f32 %v1213, %v1151
        %v1215 = vadd.f32 %v1214, %v1152
        %v1216 = vadd.f32 %v1215, %v1153
        %v1217 = vadd.f32 %v1216, %v1154
        %v1218 = vadd.f32 %v1217, %v1155
        %v1219 = vadd.f32 %v1218, %v1156
        %v1220 = vadd.f32 %v1219, %v1157
        %v1221 = vadd.f32 %v1220, %v1158
        %v1222 = vadd.f32 %v1221, %v1159
        %v1223 = vadd.f32 %v1222, %v1160
        %v1224 = vadd.f32 %v1223, %v1161
        %v1225 = vadd.f32 %v1224, %v1162
        %v1226 = vadd.f32 %v1225, %v1163
        %v1227 = vadd.f32 %v1226, %v1164
        %v1228 = vadd.f32 %v1227, %v1165
        %v1229 = vadd.f32 %v1228, %v1166
        %v1230 = vadd.f32 %v1229, %v1167
        %v1231 = vadd.f32 %v1230, %v1168
        %v1232 = vadd.f32 %v1231, %v1169
        %v1233 = vadd.f32 %v1232, %v1170
        %v1234 = vrot.slane %v1233, 4
        %v1235 = vadd.f32 %v1233, %v1234
        %v1236 = vrot.slane %v1235, 2
        %v1237 = vadd.f32 %v1235, %v1236
        %v1238 = vrot.slane %v1237, 1
        %v1239 = vadd.f32 %v1237, %v1238
        %v1240 = vadd.f32 %v1106, %v1239
        %1241 = vst [vmem:[#allocation3] sm:$0x1] %v1240
      $region44: #{discriminator64.5} parent=35 // pred_fallthru
        _
      %p1242 = scmp.eq.s32.totalorder %s19, 1
      // Predicated region
      $region45: #{discriminator64.5} parent=35 // pred_check
        %p1243 = pneg %p1242
      $region46: #{discriminator64.5} parent=35 // pred_check_branch
        %1245 = sbr.rel (%p1243) target = $region48
      $region47: #{discriminator64.5} parent=35 // pred_region
        %v1246 = vld [vmem:[#allocation2] sm:$0x1]
        %v1247 = vmul.f32 %v1246, 0.001953125
        %v1248 = vld [vmem:[#allocation3] sm:$0x1]
        %v1249 = vmul.f32 %v1248, 0.001953125
        %v1250 = vmul.f32 %v1247, %v1247
        %v1251 = vsub.f32 %v1249, %v1250
        %v1252 = vmax.f32 %v1251, 0.0
        %v1253 = vld [vmem:[%s2] sm:$0x1]
        %v1254 = vadd.f32 %v1252, 1e-05
        %v1255 = vrsqrt.pop %v1254
        %v1256 = vmul.f32 %v1253, %v1255
        %v1257 = vld [vmem:[%s3] sm:$0x1]
        %v1258 = vmul.f32 %v1247, %v1256
        %v1259 = vsub.f32 %v1257, %v1258
        %v1261 = vlaneseq
        %v1262 = vshrl.u32 %v1261, 7
        %v1263 = vsub.s32 0, %v1262
        %v1264 = vrot.slane %v1256, %v1263
        %v1266 = vmul.f32 %v769, %v1264
        %v1267 = vmul.f32 %v772, %v1264
        %v1268 = vmul.f32 %v777, %v1264
        %v1269 = vmul.f32 %v780, %v1264
        %v1270 = vmul.f32 %v785, %v1264
        %v1271 = vmul.f32 %v788, %v1264
        %v1272 = vmul.f32 %v793, %v1264
        %v1273 = vmul.f32 %v796, %v1264
        %v1274 = vmul.f32 %v801, %v1264
        %v1275 = vmul.f32 %v804, %v1264
        %v1276 = vmul.f32 %v809, %v1264
        %v1277 = vmul.f32 %v812, %v1264
        %v1278 = vmul.f32 %v817, %v1264
        %v1279 = vmul.f32 %v820, %v1264
        %v1280 = vmul.f32 %v825, %v1264
        %v1281 = vmul.f32 %v828, %v1264
        %v1282 = vmul.f32 %v833, %v1264
        %v1283 = vmul.f32 %v836, %v1264
        %v1284 = vmul.f32 %v841, %v1264
        %v1285 = vmul.f32 %v844, %v1264
        %v1286 = vmul.f32 %v849, %v1264
        %v1287 = vmul.f32 %v852, %v1264
        %v1288 = vmul.f32 %v857, %v1264
        %v1289 = vmul.f32 %v860, %v1264
        %v1290 = vmul.f32 %v865, %v1264
        %v1291 = vmul.f32 %v868, %v1264
        %v1292 = vmul.f32 %v873, %v1264
        %v1293 = vmul.f32 %v876, %v1264
        %v1294 = vmul.f32 %v881, %v1264
        %v1295 = vmul.f32 %v884, %v1264
        %v1296 = vmul.f32 %v889, %v1264
        %v1297 = vmul.f32 %v892, %v1264
        %v1298 = vmul.f32 %v897, %v1264
        %v1299 = vmul.f32 %v900, %v1264
        %v1300 = vmul.f32 %v905, %v1264
        %v1301 = vmul.f32 %v908, %v1264
        %v1302 = vmul.f32 %v913, %v1264
        %v1303 = vmul.f32 %v916, %v1264
        %v1304 = vmul.f32 %v921, %v1264
        %v1305 = vmul.f32 %v924, %v1264
        %v1306 = vmul.f32 %v929, %v1264
        %v1307 = vmul.f32 %v932, %v1264
        %v1308 = vmul.f32 %v937, %v1264
        %v1309 = vmul.f32 %v940, %v1264
        %v1310 = vmul.f32 %v945, %v1264
        %v1311 = vmul.f32 %v948, %v1264
        %v1312 = vmul.f32 %v953, %v1264
        %v1313 = vmul.f32 %v956, %v1264
        %v1314 = vmul.f32 %v961, %v1264
        %v1315 = vmul.f32 %v964, %v1264
        %v1316 = vmul.f32 %v969, %v1264
        %v1317 = vmul.f32 %v972, %v1264
        %v1318 = vmul.f32 %v977, %v1264
        %v1319 = vmul.f32 %v980, %v1264
        %v1320 = vmul.f32 %v985, %v1264
        %v1321 = vmul.f32 %v988, %v1264
        %v1322 = vmul.f32 %v993, %v1264
        %v1323 = vmul.f32 %v996, %v1264
        %v1324 = vmul.f32 %v1001, %v1264
        %v1325 = vmul.f32 %v1004, %v1264
        %v1326 = vmul.f32 %v1009, %v1264
        %v1327 = vmul.f32 %v1012, %v1264
        %v1328 = vmul.f32 %v1017, %v1264
        %v1329 = vmul.f32 %v1020, %v1264
        %v1331 = vlaneseq
        %v1332 = vshrl.u32 %v1331, 7
        %v1333 = vsub.s32 0, %v1332
        %v1334 = vrot.slane %v1259, %v1333
        %v1336 = vadd.f32 %v1266, %v1334
        %v1337 = vadd.f32 %v1267, %v1334
        %v1338 = vadd.f32 %v1268, %v1334
        %v1339 = vadd.f32 %v1269, %v1334
        %v1340 = vadd.f32 %v1270, %v1334
        %v1341 = vadd.f32 %v1271, %v1334
        %v1342 = vadd.f32 %v1272, %v1334
        %v1343 = vadd.f32 %v1273, %v1334
        %v1344 = vadd.f32 %v1274, %v1334
        %v1345 = vadd.f32 %v1275, %v1334
        %v1346 = vadd.f32 %v1276, %v1334
        %v1347 = vadd.f32 %v1277, %v1334
        %v1348 = vadd.f32 %v1278, %v1334
        %v1349 = vadd.f32 %v1279, %v1334
        %v1350 = vadd.f32 %v1280, %v1334
        %v1351 = vadd.f32 %v1281, %v1334
        %v1352 = vadd.f32 %v1282, %v1334
        %v1353 = vadd.f32 %v1283, %v1334
        %v1354 = vadd.f32 %v1284, %v1334
        %v1355 = vadd.f32 %v1285, %v1334
        %v1356 = vadd.f32 %v1286, %v1334
        %v1357 = vadd.f32 %v1287, %v1334
        %v1358 = vadd.f32 %v1288, %v1334
        %v1359 = vadd.f32 %v1289, %v1334
        %v1360 = vadd.f32 %v1290, %v1334
        %v1361 = vadd.f32 %v1291, %v1334
        %v1362 = vadd.f32 %v1292, %v1334
        %v1363 = vadd.f32 %v1293, %v1334
        %v1364 = vadd.f32 %v1294, %v1334
        %v1365 = vadd.f32 %v1295, %v1334
        %v1366 = vadd.f32 %v1296, %v1334
        %v1367 = vadd.f32 %v1297, %v1334
        %v1368 = vadd.f32 %v1298, %v1334
        %v1369 = vadd.f32 %v1299, %v1334
        %v1370 = vadd.f32 %v1300, %v1334
        %v1371 = vadd.f32 %v1301, %v1334
        %v1372 = vadd.f32 %v1302, %v1334
        %v1373 = vadd.f32 %v1303, %v1334
        %v1374 = vadd.f32 %v1304, %v1334
        %v1375 = vadd.f32 %v1305, %v1334
        %v1376 = vadd.f32 %v1306, %v1334
        %v1377 = vadd.f32 %v1307, %v1334
        %v1378 = vadd.f32 %v1308, %v1334
        %v1379 = vadd.f32 %v1309, %v1334
        %v1380 = vadd.f32 %v1310, %v1334
        %v1381 = vadd.f32 %v1311, %v1334
        %v1382 = vadd.f32 %v1312, %v1334
        %v1383 = vadd.f32 %v1313, %v1334
        %v1384 = vadd.f32 %v1314, %v1334
        %v1385 = vadd.f32 %v1315, %v1334
        %v1386 = vadd.f32 %v1316, %v1334
        %v1387 = vadd.f32 %v1317, %v1334
        %v1388 = vadd.f32 %v1318, %v1334
        %v1389 = vadd.f32 %v1319, %v1334
        %v1390 = vadd.f32 %v1320, %v1334
        %v1391 = vadd.f32 %v1321, %v1334
        %v1392 = vadd.f32 %v1322, %v1334
        %v1393 = vadd.f32 %v1323, %v1334
        %v1394 = vadd.f32 %v1324, %v1334
        %v1395 = vadd.f32 %v1325, %v1334
        %v1396 = vadd.f32 %v1326, %v1334
        %v1397 = vadd.f32 %v1327, %v1334
        %v1398 = vadd.f32 %v1328, %v1334
        %v1399 = vadd.f32 %v1329, %v1334
        %vm1400 = vcmp.gt.f32.partialorder %v1336, 0.0
        %vm1401 = vcmp.gt.f32.partialorder %v1337, 0.0
        %vm1402 = vcmp.gt.f32.partialorder %v1338, 0.0
        %vm1403 = vcmp.gt.f32.partialorder %v1339, 0.0
        %vm1404 = vcmp.gt.f32.partialorder %v1340, 0.0
        %vm1405 = vcmp.gt.f32.partialorder %v1341, 0.0
        %vm1406 = vcmp.gt.f32.partialorder %v1342, 0.0
        %vm1407 = vcmp.gt.f32.partialorder %v1343, 0.0
        %vm1408 = vcmp.gt.f32.partialorder %v1344, 0.0
        %vm1409 = vcmp.gt.f32.partialorder %v1345, 0.0
        %vm1410 = vcmp.gt.f32.partialorder %v1346, 0.0
        %vm1411 = vcmp.gt.f32.partialorder %v1347, 0.0
        %vm1412 = vcmp.gt.f32.partialorder %v1348, 0.0
        %vm1413 = vcmp.gt.f32.partialorder %v1349, 0.0
        %vm1414 = vcmp.gt.f32.partialorder %v1350, 0.0
        %vm1415 = vcmp.gt.f32.partialorder %v1351, 0.0
        %vm1416 = vcmp.gt.f32.partialorder %v1352, 0.0
        %vm1417 = vcmp.gt.f32.partialorder %v1353, 0.0
        %vm1418 = vcmp.gt.f32.partialorder %v1354, 0.0
        %vm1419 = vcmp.gt.f32.partialorder %v1355, 0.0
        %vm1420 = vcmp.gt.f32.partialorder %v1356, 0.0
        %vm1421 = vcmp.gt.f32.partialorder %v1357, 0.0
        %vm1422 = vcmp.gt.f32.partialorder %v1358, 0.0
        %vm1423 = vcmp.gt.f32.partialorder %v1359, 0.0
        %vm1424 = vcmp.gt.f32.partialorder %v1360, 0.0
        %vm1425 = vcmp.gt.f32.partialorder %v1361, 0.0
        %vm1426 = vcmp.gt.f32.partialorder %v1362, 0.0
        %vm1427 = vcmp.gt.f32.partialorder %v1363, 0.0
        %vm1428 = vcmp.gt.f32.partialorder %v1364, 0.0
        %vm1429 = vcmp.gt.f32.partialorder %v1365, 0.0
        %vm1430 = vcmp.gt.f32.partialorder %v1366, 0.0
        %vm1431 = vcmp.gt.f32.partialorder %v1367, 0.0
        %vm1432 = vcmp.gt.f32.partialorder %v1368, 0.0
        %vm1433 = vcmp.gt.f32.partialorder %v1369, 0.0
        %vm1434 = vcmp.gt.f32.partialorder %v1370, 0.0
        %vm1435 = vcmp.gt.f32.partialorder %v1371, 0.0
        %vm1436 = vcmp.gt.f32.partialorder %v1372, 0.0
        %vm1437 = vcmp.gt.f32.partialorder %v1373, 0.0
        %vm1438 = vcmp.gt.f32.partialorder %v1374, 0.0
        %vm1439 = vcmp.gt.f32.partialorder %v1375, 0.0
        %vm1440 = vcmp.gt.f32.partialorder %v1376, 0.0
        %vm1441 = vcmp.gt.f32.partialorder %v1377, 0.0
        %vm1442 = vcmp.gt.f32.partialorder %v1378, 0.0
        %vm1443 = vcmp.gt.f32.partialorder %v1379, 0.0
        %vm1444 = vcmp.gt.f32.partialorder %v1380, 0.0
        %vm1445 = vcmp.gt.f32.partialorder %v1381, 0.0
        %vm1446 = vcmp.gt.f32.partialorder %v1382, 0.0
        %vm1447 = vcmp.gt.f32.partialorder %v1383, 0.0
        %vm1448 = vcmp.gt.f32.partialorder %v1384, 0.0
        %vm1449 = vcmp.gt.f32.partialorder %v1385, 0.0
        %vm1450 = vcmp.gt.f32.partialorder %v1386, 0.0
        %vm1451 = vcmp.gt.f32.partialorder %v1387, 0.0
        %vm1452 = vcmp.gt.f32.partialorder %v1388, 0.0
        %vm1453 = vcmp.gt.f32.partialorder %v1389, 0.0
        %vm1454 = vcmp.gt.f32.partialorder %v1390, 0.0
        %vm1455 = vcmp.gt.f32.partialorder %v1391, 0.0
        %vm1456 = vcmp.gt.f32.partialorder %v1392, 0.0
        %vm1457 = vcmp.gt.f32.partialorder %v1393, 0.0
        %vm1458 = vcmp.gt.f32.partialorder %v1394, 0.0
        %vm1459 = vcmp.gt.f32.partialorder %v1395, 0.0
        %vm1460 = vcmp.gt.f32.partialorder %v1396, 0.0
        %vm1461 = vcmp.gt.f32.partialorder %v1397, 0.0
        %vm1462 = vcmp.gt.f32.partialorder %v1398, 0.0
        %vm1463 = vcmp.gt.f32.partialorder %v1399, 0.0
        %v1464 = vmul.f32 %v1336, 0.2
        %v1465 = vmul.f32 %v1337, 0.2
        %v1466 = vmul.f32 %v1338, 0.2
        %v1467 = vmul.f32 %v1339, 0.2
        %v1468 = vmul.f32 %v1340, 0.2
        %v1469 = vmul.f32 %v1341, 0.2
        %v1470 = vmul.f32 %v1342, 0.2
        %v1471 = vmul.f32 %v1343, 0.2
        %v1472 = vmul.f32 %v1344, 0.2
        %v1473 = vmul.f32 %v1345, 0.2
        %v1474 = vmul.f32 %v1346, 0.2
        %v1475 = vmul.f32 %v1347, 0.2
        %v1476 = vmul.f32 %v1348, 0.2
        %v1477 = vmul.f32 %v1349, 0.2
        %v1478 = vmul.f32 %v1350, 0.2
        %v1479 = vmul.f32 %v1351, 0.2
        %v1480 = vmul.f32 %v1352, 0.2
        %v1481 = vmul.f32 %v1353, 0.2
        %v1482 = vmul.f32 %v1354, 0.2
        %v1483 = vmul.f32 %v1355, 0.2
        %v1484 = vmul.f32 %v1356, 0.2
        %v1485 = vmul.f32 %v1357, 0.2
        %v1486 = vmul.f32 %v1358, 0.2
        %v1487 = vmul.f32 %v1359, 0.2
        %v1488 = vmul.f32 %v1360, 0.2
        %v1489 = vmul.f32 %v1361, 0.2
        %v1490 = vmul.f32 %v1362, 0.2
        %v1491 = vmul.f32 %v1363, 0.2
        %v1492 = vmul.f32 %v1364, 0.2
        %v1493 = vmul.f32 %v1365, 0.2
        %v1494 = vmul.f32 %v1366, 0.2
        %v1495 = vmul.f32 %v1367, 0.2
        %v1496 = vmul.f32 %v1368, 0.2
        %v1497 = vmul.f32 %v1369, 0.2
        %v1498 = vmul.f32 %v1370, 0.2
        %v1499 = vmul.f32 %v1371, 0.2
        %v1500 = vmul.f32 %v1372, 0.2
        %v1501 = vmul.f32 %v1373, 0.2
        %v1502 = vmul.f32 %v1374, 0.2
        %v1503 = vmul.f32 %v1375, 0.2
        %v1504 = vmul.f32 %v1376, 0.2
        %v1505 = vmul.f32 %v1377, 0.2
        %v1506 = vmul.f32 %v1378, 0.2
        %v1507 = vmul.f32 %v1379, 0.2
        %v1508 = vmul.f32 %v1380, 0.2
        %v1509 = vmul.f32 %v1381, 0.2
        %v1510 = vmul.f32 %v1382, 0.2
        %v1511 = vmul.f32 %v1383, 0.2
        %v1512 = vmul.f32 %v1384, 0.2
        %v1513 = vmul.f32 %v1385, 0.2
        %v1514 = vmul.f32 %v1386, 0.2
        %v1515 = vmul.f32 %v1387, 0.2
        %v1516 = vmul.f32 %v1388, 0.2
        %v1517 = vmul.f32 %v1389, 0.2
        %v1518 = vmul.f32 %v1390, 0.2
        %v1519 = vmul.f32 %v1391, 0.2
        %v1520 = vmul.f32 %v1392, 0.2
        %v1521 = vmul.f32 %v1393, 0.2
        %v1522 = vmul.f32 %v1394, 0.2
        %v1523 = vmul.f32 %v1395, 0.2
        %v1524 = vmul.f32 %v1396, 0.2
        %v1525 = vmul.f32 %v1397, 0.2
        %v1526 = vmul.f32 %v1398, 0.2
        %v1527 = vmul.f32 %v1399, 0.2
        %v1528 = vsel %vm1400, %v1336, %v1464
        %v1529 = vsel %vm1401, %v1337, %v1465
        %v1530 = vsel %vm1402, %v1338, %v1466
        %v1531 = vsel %vm1403, %v1339, %v1467
        %v1532 = vsel %vm1404, %v1340, %v1468
        %v1533 = vsel %vm1405, %v1341, %v1469
        %v1534 = vsel %vm1406, %v1342, %v1470
        %v1535 = vsel %vm1407, %v1343, %v1471
        %v1536 = vsel %vm1408, %v1344, %v1472
        %v1537 = vsel %vm1409, %v1345, %v1473
        %v1538 = vsel %vm1410, %v1346, %v1474
        %v1539 = vsel %vm1411, %v1347, %v1475
        %v1540 = vsel %vm1412, %v1348, %v1476
        %v1541 = vsel %vm1413, %v1349, %v1477
        %v1542 = vsel %vm1414, %v1350, %v1478
        %v1543 = vsel %vm1415, %v1351, %v1479
        %v1544 = vsel %vm1416, %v1352, %v1480
        %v1545 = vsel %vm1417, %v1353, %v1481
        %v1546 = vsel %vm1418, %v1354, %v1482
        %v1547 = vsel %vm1419, %v1355, %v1483
        %v1548 = vsel %vm1420, %v1356, %v1484
        %v1549 = vsel %vm1421, %v1357, %v1485
        %v1550 = vsel %vm1422, %v1358, %v1486
        %v1551 = vsel %vm1423, %v1359, %v1487
        %v1552 = vsel %vm1424, %v1360, %v1488
        %v1553 = vsel %vm1425, %v1361, %v1489
        %v1554 = vsel %vm1426, %v1362, %v1490
        %v1555 = vsel %vm1427, %v1363, %v1491
        %v1556 = vsel %vm1428, %v1364, %v1492
        %v1557 = vsel %vm1429, %v1365, %v1493
        %v1558 = vsel %vm1430, %v1366, %v1494
        %v1559 = vsel %vm1431, %v1367, %v1495
        %v1560 = vsel %vm1432, %v1368, %v1496
        %v1561 = vsel %vm1433, %v1369, %v1497
        %v1562 = vsel %vm1434, %v1370, %v1498
        %v1563 = vsel %vm1435, %v1371, %v1499
        %v1564 = vsel %vm1436, %v1372, %v1500
        %v1565 = vsel %vm1437, %v1373, %v1501
        %v1566 = vsel %vm1438, %v1374, %v1502
        %v1567 = vsel %vm1439, %v1375, %v1503
        %v1568 = vsel %vm1440, %v1376, %v1504
        %v1569 = vsel %vm1441, %v1377, %v1505
        %v1570 = vsel %vm1442, %v1378, %v1506
        %v1571 = vsel %vm1443, %v1379, %v1507
        %v1572 = vsel %vm1444, %v1380, %v1508
        %v1573 = vsel %vm1445, %v1381, %v1509
        %v1574 = vsel %vm1446, %v1382, %v1510
        %v1575 = vsel %vm1447, %v1383, %v1511
        %v1576 = vsel %vm1448, %v1384, %v1512
        %v1577 = vsel %vm1449, %v1385, %v1513
        %v1578 = vsel %vm1450, %v1386, %v1514
        %v1579 = vsel %vm1451, %v1387, %v1515
        %v1580 = vsel %vm1452, %v1388, %v1516
        %v1581 = vsel %vm1453, %v1389, %v1517
        %v1582 = vsel %vm1454, %v1390, %v1518
        %v1583 = vsel %vm1455, %v1391, %v1519
        %v1584 = vsel %vm1456, %v1392, %v1520
        %v1585 = vsel %vm1457, %v1393, %v1521
        %v1586 = vsel %vm1458, %v1394, %v1522
        %v1587 = vsel %vm1459, %v1395, %v1523
        %v1588 = vsel %vm1460, %v1396, %v1524
        %v1589 = vsel %vm1461, %v1397, %v1525
        %v1590 = vsel %vm1462, %v1398, %v1526
        %v1591 = vsel %vm1463, %v1399, %v1527
        %v1592 = vpack.c.bf16 %v1529, %v1528
        %v1593 = vpack.c.bf16 %v1531, %v1530
        %v1594 = vpack.c.bf16 %v1533, %v1532
        %v1595 = vpack.c.bf16 %v1535, %v1534
        %v1596 = vpack.c.bf16 %v1537, %v1536
        %v1597 = vpack.c.bf16 %v1539, %v1538
        %v1598 = vpack.c.bf16 %v1541, %v1540
        %v1599 = vpack.c.bf16 %v1543, %v1542
        %v1600 = vpack.c.bf16 %v1545, %v1544
        %v1601 = vpack.c.bf16 %v1547, %v1546
        %v1602 = vpack.c.bf16 %v1549, %v1548
        %v1603 = vpack.c.bf16 %v1551, %v1550
        %v1604 = vpack.c.bf16 %v1553, %v1552
        %v1605 = vpack.c.bf16 %v1555, %v1554
        %v1606 = vpack.c.bf16 %v1557, %v1556
        %v1607 = vpack.c.bf16 %v1559, %v1558
        %v1608 = vpack.c.bf16 %v1561, %v1560
        %v1609 = vpack.c.bf16 %v1563, %v1562
        %v1610 = vpack.c.bf16 %v1565, %v1564
        %v1611 = vpack.c.bf16 %v1567, %v1566
        %v1612 = vpack.c.bf16 %v1569, %v1568
        %v1613 = vpack.c.bf16 %v1571, %v1570
        %v1614 = vpack.c.bf16 %v1573, %v1572
        %v1615 = vpack.c.bf16 %v1575, %v1574
        %v1616 = vpack.c.bf16 %v1577, %v1576
        %v1617 = vpack.c.bf16 %v1579, %v1578
        %v1618 = vpack.c.bf16 %v1581, %v1580
        %v1619 = vpack.c.bf16 %v1583, %v1582
        %v1620 = vpack.c.bf16 %v1585, %v1584
        %v1621 = vpack.c.bf16 %v1587, %v1586
        %v1622 = vpack.c.bf16 %v1589, %v1588
        %v1623 = vpack.c.bf16 %v1591, %v1590
        %v1656 = vunpack.c.l.b16 %v1592
        %v1657 = vunpack.c.h.b16 %v1592
        %v1658 = vunpack.c.l.b16 %v1593
        %v1659 = vunpack.c.h.b16 %v1593
        %v1660 = vunpack.c.l.b16 %v1594
        %v1661 = vunpack.c.h.b16 %v1594
        %v1662 = vunpack.c.l.b16 %v1595
        %v1663 = vunpack.c.h.b16 %v1595
        %v1664 = vunpack.c.l.b16 %v1596
        %v1665 = vunpack.c.h.b16 %v1596
        %v1666 = vunpack.c.l.b16 %v1597
        %v1667 = vunpack.c.h.b16 %v1597
        %v1668 = vunpack.c.l.b16 %v1598
        %v1669 = vunpack.c.h.b16 %v1598
        %v1670 = vunpack.c.l.b16 %v1599
        %v1671 = vunpack.c.h.b16 %v1599
        %v1672 = vunpack.c.l.b16 %v1600
        %v1673 = vunpack.c.h.b16 %v1600
        %v1674 = vunpack.c.l.b16 %v1601
        %v1675 = vunpack.c.h.b16 %v1601
        %v1676 = vunpack.c.l.b16 %v1602
        %v1677 = vunpack.c.h.b16 %v1602
        %v1678 = vunpack.c.l.b16 %v1603
        %v1679 = vunpack.c.h.b16 %v1603
        %v1680 = vunpack.c.l.b16 %v1604
        %v1681 = vunpack.c.h.b16 %v1604
        %v1682 = vunpack.c.l.b16 %v1605
        %v1683 = vunpack.c.h.b16 %v1605
        %v1684 = vunpack.c.l.b16 %v1606
        %v1685 = vunpack.c.h.b16 %v1606
        %v1686 = vunpack.c.l.b16 %v1607
        %v1687 = vunpack.c.h.b16 %v1607
        %v1688 = vunpack.c.l.b16 %v1608
        %v1689 = vunpack.c.h.b16 %v1608
        %v1690 = vunpack.c.l.b16 %v1609
        %v1691 = vunpack.c.h.b16 %v1609
        %v1692 = vunpack.c.l.b16 %v1610
        %v1693 = vunpack.c.h.b16 %v1610
        %v1694 = vunpack.c.l.b16 %v1611
        %v1695 = vunpack.c.h.b16 %v1611
        %v1696 = vunpack.c.l.b16 %v1612
        %v1697 = vunpack.c.h.b16 %v1612
        %v1698 = vunpack.c.l.b16 %v1613
        %v1699 = vunpack.c.h.b16 %v1613
        %v1700 = vunpack.c.l.b16 %v1614
        %v1701 = vunpack.c.h.b16 %v1614
        %v1702 = vunpack.c.l.b16 %v1615
        %v1703 = vunpack.c.h.b16 %v1615
        %v1704 = vunpack.c.l.b16 %v1616
        %v1705 = vunpack.c.h.b16 %v1616
        %v1706 = vunpack.c.l.b16 %v1617
        %v1707 = vunpack.c.h.b16 %v1617
        %v1708 = vunpack.c.l.b16 %v1618
        %v1709 = vunpack.c.h.b16 %v1618
        %v1710 = vunpack.c.l.b16 %v1619
        %v1711 = vunpack.c.h.b16 %v1619
        %v1712 = vunpack.c.l.b16 %v1620
        %v1713 = vunpack.c.h.b16 %v1620
        %v1714 = vunpack.c.l.b16 %v1621
        %v1715 = vunpack.c.h.b16 %v1621
        %v1716 = vunpack.c.l.b16 %v1622
        %v1717 = vunpack.c.h.b16 %v1622
        %v1718 = vunpack.c.l.b16 %v1623
        %v1719 = vunpack.c.h.b16 %v1623
        %v1720 = vpack.c.b16 %v1656, %v1656
        %v1721 = vpack.c.b16 %v1657, %v1657
        %v1722 = vpack.c.b16 %v1658, %v1658
        %v1723 = vpack.c.b16 %v1659, %v1659
        %v1724 = vpack.c.b16 %v1660, %v1660
        %v1725 = vpack.c.b16 %v1661, %v1661
        %v1726 = vpack.c.b16 %v1662, %v1662
        %v1727 = vpack.c.b16 %v1663, %v1663
        %v1728 = vpack.c.b16 %v1664, %v1664
        %v1729 = vpack.c.b16 %v1665, %v1665
        %v1730 = vpack.c.b16 %v1666, %v1666
        %v1731 = vpack.c.b16 %v1667, %v1667
        %v1732 = vpack.c.b16 %v1668, %v1668
        %v1733 = vpack.c.b16 %v1669, %v1669
        %v1734 = vpack.c.b16 %v1670, %v1670
        %v1735 = vpack.c.b16 %v1671, %v1671
        %v1736 = vpack.c.b16 %v1672, %v1672
        %v1737 = vpack.c.b16 %v1673, %v1673
        %v1738 = vpack.c.b16 %v1674, %v1674
        %v1739 = vpack.c.b16 %v1675, %v1675
        %v1740 = vpack.c.b16 %v1676, %v1676
        %v1741 = vpack.c.b16 %v1677, %v1677
        %v1742 = vpack.c.b16 %v1678, %v1678
        %v1743 = vpack.c.b16 %v1679, %v1679
        %v1744 = vpack.c.b16 %v1680, %v1680
        %v1745 = vpack.c.b16 %v1681, %v1681
        %v1746 = vpack.c.b16 %v1682, %v1682
        %v1747 = vpack.c.b16 %v1683, %v1683
        %v1748 = vpack.c.b16 %v1684, %v1684
        %v1749 = vpack.c.b16 %v1685, %v1685
        %v1750 = vpack.c.b16 %v1686, %v1686
        %v1751 = vpack.c.b16 %v1687, %v1687
        %v1752 = vpack.c.b16 %v1688, %v1688
        %v1753 = vpack.c.b16 %v1689, %v1689
        %v1754 = vpack.c.b16 %v1690, %v1690
        %v1755 = vpack.c.b16 %v1691, %v1691
        %v1756 = vpack.c.b16 %v1692, %v1692
        %v1757 = vpack.c.b16 %v1693, %v1693
        %v1758 = vpack.c.b16 %v1694, %v1694
        %v1759 = vpack.c.b16 %v1695, %v1695
        %v1760 = vpack.c.b16 %v1696, %v1696
        %v1761 = vpack.c.b16 %v1697, %v1697
        %v1762 = vpack.c.b16 %v1698, %v1698
        %v1763 = vpack.c.b16 %v1699, %v1699
        %v1764 = vpack.c.b16 %v1700, %v1700
        %v1765 = vpack.c.b16 %v1701, %v1701
        %v1766 = vpack.c.b16 %v1702, %v1702
        %v1767 = vpack.c.b16 %v1703, %v1703
        %v1768 = vpack.c.b16 %v1704, %v1704
        %v1769 = vpack.c.b16 %v1705, %v1705
        %v1770 = vpack.c.b16 %v1706, %v1706
        %v1771 = vpack.c.b16 %v1707, %v1707
        %v1772 = vpack.c.b16 %v1708, %v1708
        %v1773 = vpack.c.b16 %v1709, %v1709
        %v1774 = vpack.c.b16 %v1710, %v1710
        %v1775 = vpack.c.b16 %v1711, %v1711
        %v1776 = vpack.c.b16 %v1712, %v1712
        %v1777 = vpack.c.b16 %v1713, %v1713
        %v1778 = vpack.c.b16 %v1714, %v1714
        %v1779 = vpack.c.b16 %v1715, %v1715
        %v1780 = vpack.c.b16 %v1716, %v1716
        %v1781 = vpack.c.b16 %v1717, %v1717
        %v1782 = vpack.c.b16 %v1718, %v1718
        %v1783 = vpack.c.b16 %v1719, %v1719
        %1848 = vst [vmem:[%s218] sm:$0xf] %v1720
        %1849 = vst [vmem:[%s218 + $0x4] sm:$0xf] %v1721
        %1850 = vst [vmem:[%s218 + $0x8] sm:$0xf] %v1722
        %1851 = vst [vmem:[%s218 + $0xc] sm:$0xf] %v1723
        %1852 = vst [vmem:[%s218 + $0x10] sm:$0xf] %v1724
        %1853 = vst [vmem:[%s218 + $0x14] sm:$0xf] %v1725
        %1854 = vst [vmem:[%s218 + $0x18] sm:$0xf] %v1726
        %1855 = vst [vmem:[%s218 + $0x1c] sm:$0xf] %v1727
        %1856 = vst [vmem:[%s218 + $0x20] sm:$0xf] %v1728
        %1857 = vst [vmem:[%s218 + $0x24] sm:$0xf] %v1729
        %1858 = vst [vmem:[%s218 + $0x28] sm:$0xf] %v1730
        %1859 = vst [vmem:[%s218 + $0x2c] sm:$0xf] %v1731
        %1860 = vst [vmem:[%s218 + $0x30] sm:$0xf] %v1732
        %1861 = vst [vmem:[%s218 + $0x34] sm:$0xf] %v1733
        %1862 = vst [vmem:[%s218 + $0x38] sm:$0xf] %v1734
        %1863 = vst [vmem:[%s218 + $0x3c] sm:$0xf] %v1735
        %1864 = vst [vmem:[%s218 + $0x40] sm:$0xf] %v1736
        %1865 = vst [vmem:[%s218 + $0x44] sm:$0xf] %v1737
        %1866 = vst [vmem:[%s218 + $0x48] sm:$0xf] %v1738
        %1867 = vst [vmem:[%s218 + $0x4c] sm:$0xf] %v1739
        %1868 = vst [vmem:[%s218 + $0x50] sm:$0xf] %v1740
        %1869 = vst [vmem:[%s218 + $0x54] sm:$0xf] %v1741
        %1870 = vst [vmem:[%s218 + $0x58] sm:$0xf] %v1742
        %1871 = vst [vmem:[%s218 + $0x5c] sm:$0xf] %v1743
        %1872 = vst [vmem:[%s218 + $0x60] sm:$0xf] %v1744
        %1873 = vst [vmem:[%s218 + $0x64] sm:$0xf] %v1745
        %1874 = vst [vmem:[%s218 + $0x68] sm:$0xf] %v1746
        %1875 = vst [vmem:[%s218 + $0x6c] sm:$0xf] %v1747
        %1876 = vst [vmem:[%s218 + $0x70] sm:$0xf] %v1748
        %1877 = vst [vmem:[%s218 + $0x74] sm:$0xf] %v1749
        %1878 = vst [vmem:[%s218 + $0x78] sm:$0xf] %v1750
        %1879 = vst [vmem:[%s218 + $0x7c] sm:$0xf] %v1751
        %1880 = vst [vmem:[%s218 + $0x80] sm:$0xf] %v1752
        %1881 = vst [vmem:[%s218 + $0x84] sm:$0xf] %v1753
        %1882 = vst [vmem:[%s218 + $0x88] sm:$0xf] %v1754
        %1883 = vst [vmem:[%s218 + $0x8c] sm:$0xf] %v1755
        %1884 = vst [vmem:[%s218 + $0x90] sm:$0xf] %v1756
        %1885 = vst [vmem:[%s218 + $0x94] sm:$0xf] %v1757
        %1886 = vst [vmem:[%s218 + $0x98] sm:$0xf] %v1758
        %1887 = vst [vmem:[%s218 + $0x9c] sm:$0xf] %v1759
        %1888 = vst [vmem:[%s218 + $0xa0] sm:$0xf] %v1760
        %1889 = vst [vmem:[%s218 + $0xa4] sm:$0xf] %v1761
        %1890 = vst [vmem:[%s218 + $0xa8] sm:$0xf] %v1762
        %1891 = vst [vmem:[%s218 + $0xac] sm:$0xf] %v1763
        %1892 = vst [vmem:[%s218 + $0xb0] sm:$0xf] %v1764
        %1893 = vst [vmem:[%s218 + $0xb4] sm:$0xf] %v1765
        %1894 = vst [vmem:[%s218 + $0xb8] sm:$0xf] %v1766
        %1895 = vst [vmem:[%s218 + $0xbc] sm:$0xf] %v1767
        %1896 = vst [vmem:[%s218 + $0xc0] sm:$0xf] %v1768
        %1897 = vst [vmem:[%s218 + $0xc4] sm:$0xf] %v1769
        %1898 = vst [vmem:[%s218 + $0xc8] sm:$0xf] %v1770
        %1899 = vst [vmem:[%s218 + $0xcc] sm:$0xf] %v1771
        %1900 = vst [vmem:[%s218 + $0xd0] sm:$0xf] %v1772
        %1901 = vst [vmem:[%s218 + $0xd4] sm:$0xf] %v1773
        %1902 = vst [vmem:[%s218 + $0xd8] sm:$0xf] %v1774
        %1903 = vst [vmem:[%s218 + $0xdc] sm:$0xf] %v1775
        %1904 = vst [vmem:[%s218 + $0xe0] sm:$0xf] %v1776
        %1905 = vst [vmem:[%s218 + $0xe4] sm:$0xf] %v1777
        %1906 = vst [vmem:[%s218 + $0xe8] sm:$0xf] %v1778
        %1907 = vst [vmem:[%s218 + $0xec] sm:$0xf] %v1779
        %1908 = vst [vmem:[%s218 + $0xf0] sm:$0xf] %v1780
        %1909 = vst [vmem:[%s218 + $0xf4] sm:$0xf] %v1781
        %1910 = vst [vmem:[%s218 + $0xf8] sm:$0xf] %v1782
        %1911 = vst [vmem:[%s218 + $0xfc] sm:$0xf] %v1783
      $region48: #{discriminator64.5} parent=35 // pred_fallthru
        _
      %s1912 = smul.u32 %s19, %s20
      %s1913 = smul.u32 64, %s1912
      %p1914 = scmp.lt.s32.totalorder %s1913, 63
      %s1915 = scalar_select %p1914, %s1913, 63
      %s1916 = smul.addr %s1915, 4
      %s1917 = scalar_lea.vmem %s4, %s1916
      // Predicated region
      $region49: #{discriminator64.5} parent=35 // pred_check
        %p1918 = pneg %p136
      $region50: #{discriminator64.5} parent=35 // pred_check_branch
        %1920 = sbr.rel (%p1918) target = $region52
      $region51: #{discriminator64.5} parent=35 // pred_region
        %s1921 = smul.u32 %s19, %s20
        %s1922 = smul.u32 64, %s1921
      $region52: #{discriminator64.5} parent=35 // pred_fallthru
        _
    $region36: #{discriminator64.5} parent=5 // pred_fallthru
      _
    %p1923 = scmp.le.s32.totalorder 2, %s10
    // Predicated region
    $region53: #{discriminator64.5} parent=5 // pred_check
      %p1924 = pneg %p1923
    $region54: #{discriminator64.5} parent=5 // pred_check_branch
      %1926 = sbr.rel (%p1924) target = $region56
    $region55: #{discriminator64.5} parent=5 // pred_region
      %s1927 = ssub.s32 %s10, 2
      // Predicated region
      $region57: #{discriminator64.5} parent=55 // pred_check
        %p1928 = pneg %p142
      $region58: #{discriminator64.5} parent=55 // pred_check_branch
        %1930 = sbr.rel (%p1928) target = $region60
      $region59: #{discriminator64.5} parent=55 // pred_region
        %s1931 = smul.u32 %s21, %s22
        %s1932 = smul.u32 64, %s1931
        %p1933 = scmp.lt.s32.totalorder %s1932, 63
        %s1934 = scalar_select %p1933, %s1932, 63
        %s1935 = smul.addr %s1934, 4
        %s1936 = scalar_lea.vmem %s4, %s1935
      $region60: #{discriminator64.5} parent=55 // pred_fallthru
        _
    $region56: #{discriminator64.5} parent=5 // pred_fallthru
      _
  $region6: #{discriminator64.5} parent=0 // loop_footer
    %s14 = sadd.s32 1, %s10
  $region7: #{discriminator64.5} parent=0 // loop_footer_branch
    %9 = sbr.rel target = $region3
  $region8: #{discriminator64.5} parent=0 // loop_exit
    _

// kernel: discriminator64.6
$region0: #{discriminator64.6}
  #allocation0 [shape = 'u32[]', space=smem, size = 0x4, offset = 0x4, fixed_abs, tag = 'smem constant byte address 0x4 - core index']
  #allocation1 [shape = 'u32[144,128]{1,0:T(1,128)}', space=vmem, size = 0x12000, scoped, tag = 'internal scratch']
  #allocation2 [shape = 'f32[1,128]{1,0:T(1,128)}', space=vmem, size = 0x200, scoped, tag = 'scratch operand']
  #allocation3 [shape = 'f32[1,128]{1,0:T(1,128)}', space=vmem, size = 0x200, scoped, tag = 'scratch operand']
  %s0 = inlined_call_operand.vmem [shape: bf16[128,640], index: 0, kind: input, shape index: {}]
  %s1 = inlined_call_operand.vmem [shape: bf16[640,128], index: 1, kind: input, shape index: {}]
  %s2 = inlined_call_operand.vmem [shape: f32[1,128], index: 2, kind: input, shape index: {}]
  %s3 = inlined_call_operand.vmem [shape: f32[1,128], index: 3, kind: input, shape index: {}]
  %s4 = inlined_call_operand.vmem [shape: bf16[128,128], index: 4, kind: output, shape index: {}]
  %s5 = sld [smem:[#allocation0]]
  $region61: #{discriminator64.6} parent=0
    _
  %s7 = ssub.s32 1, %s5
  %s8 = scalar_select 0, %s7, %s5
  loop: start=0, step=1, limit=4
  $region2: #{discriminator64.6} parent=0 // loop_pre_header
    _
  $region3: #{discriminator64.6} parent=0 // loop_header
    %s10 = sphi 0, %s14
    %p11 = scmp.ge.s32.totalorder %s10, 4
    %s17 = sphi 0, %s29
    %s18 = sphi 0, %s25
    %s19 = sphi 0, %s17
    %s20 = sphi 0, %s18
    %s21 = sphi 0, %s19
    %s22 = sphi 0, %s20
    %s32 = sphi 0, %s34
    %s35 = sphi 0, %s32
    %s36 = sphi 0, %s35
    %s52 = sphi 0, %s36
    %s56 = sphi 0, %s56
    %s58 = sphi 0, %s56
    %s59 = sphi 0, %s58
    %s73 = sphi 0, %s59
    %s77 = sphi 0, %s77
    %s79 = sphi 0, %s77
    %s80 = sphi 0, %s79
    %s94 = sphi 0, %s80
    %s98 = sphi 0, %s98
    %s100 = sphi 0, %s98
    %s101 = sphi 0, %s100
    %s115 = sphi 0, %s101
    %s123 = sphi 0, %s125
    %s126 = sphi 0, %s123
    %s127 = sphi 0, %s126
    %s143 = sphi 0, %s127
  $region4: #{discriminator64.6} parent=0 // loop_header_branch
    %13 = sbr.rel (%p11) target = $region8
  $region5: #{discriminator64.6} parent=0 // loop_body
    %s15 = ssub.s32 %s10, 1
    %s16 = ssub.s32 %s10, 2
    %s23 = sadd.s32 1, %s18
    %p24 = scmp.ge.s32.totalorder %s23, 1
    %s25 = scalar_select %p24, 0, %s23
    %s26 = sadd.s32 1, %s17
    %s27 = scalar_select %p24, %s26, %s17
    %p28 = scmp.ge.s32.totalorder %s27, 2
    %s29 = scalar_select %p28, 0, %s27
    %s30 = ssub.s32 %s18, %s25
    %p31 = scmp.eq.s32.totalorder %s30, 0
    %s33 = sadd.s32 %s32, 1
    %s34 = scalar_select %p31, %s32, %s33
    %p37 = pneg %p31
    %p38 = scmp.eq.s32.totalorder %s10, 1
    %p39 = por %p37, %p38
    %p40 = scmp.ne.s32.totalorder %s32, %s35
    %p41 = scmp.eq.s32.totalorder %s10, 0
    %p42 = por %p40, %p41
    %p43 = scmp.ne.s32.totalorder %s32, %s35
    %p44 = scmp.eq.s32.totalorder %s15, 1
    %p45 = por %p43, %p44
    %p46 = scmp.ne.s32.totalorder %s35, %s36
    %p47 = scmp.eq.s32.totalorder %s15, 0
    %p48 = por %p46, %p47
    %p49 = scmp.ne.s32.totalorder %s35, %s36
    %p50 = scmp.eq.s32.totalorder %s16, 1
    %p51 = por %p49, %p50
    %p53 = scmp.ne.s32.totalorder %s36, %s52
    %p54 = scmp.eq.s32.totalorder %s16, 0
    %p55 = por %p53, %p54
    %s57 = sadd.s32 %s56, 1
    %p60 = scmp.eq.s32.totalorder %s10, 1
    %p61 = scmp.ne.s32.totalorder %s56, %s58
    %p62 = scmp.eq.s32.totalorder %s10, 0
    %p63 = por %p61, %p62
    %p64 = scmp.ne.s32.totalorder %s56, %s58
    %p65 = scmp.eq.s32.totalorder %s15, 1
    %p66 = por %p64, %p65
    %p67 = scmp.ne.s32.totalorder %s58, %s59
    %p68 = scmp.eq.s32.totalorder %s15, 0
    %p69 = por %p67, %p68
    %p70 = scmp.ne.s32.totalorder %s58, %s59
    %p71 = scmp.eq.s32.totalorder %s16, 1
    %p72 = por %p70, %p71
    %p74 = scmp.ne.s32.totalorder %s59, %s73
    %p75 = scmp.eq.s32.totalorder %s16, 0
    %p76 = por %p74, %p75
    %s78 = sadd.s32 %s77, 1
    %p81 = scmp.eq.s32.totalorder %s10, 1
    %p82 = scmp.ne.s32.totalorder %s77, %s79
    %p83 = scmp.eq.s32.totalorder %s10, 0
    %p84 = por %p82, %p83
    %p85 = scmp.ne.s32.totalorder %s77, %s79
    %p86 = scmp.eq.s32.totalorder %s15, 1
    %p87 = por %p85, %p86
    %p88 = scmp.ne.s32.totalorder %s79, %s80
    %p89 = scmp.eq.s32.totalorder %s15, 0
    %p90 = por %p88, %p89
    %p91 = scmp.ne.s32.totalorder %s79, %s80
    %p92 = scmp.eq.s32.totalorder %s16, 1
    %p93 = por %p91, %p92
    %p95 = scmp.ne.s32.totalorder %s80, %s94
    %p96 = scmp.eq.s32.totalorder %s16, 0
    %p97 = por %p95, %p96
    %s99 = sadd.s32 %s98, 1
    %p102 = scmp.eq.s32.totalorder %s10, 1
    %p103 = scmp.ne.s32.totalorder %s98, %s100
    %p104 = scmp.eq.s32.totalorder %s10, 0
    %p105 = por %p103, %p104
    %p106 = scmp.ne.s32.totalorder %s98, %s100
    %p107 = scmp.eq.s32.totalorder %s15, 1
    %p108 = por %p106, %p107
    %p109 = scmp.ne.s32.totalorder %s100, %s101
    %p110 = scmp.eq.s32.totalorder %s15, 0
    %p111 = por %p109, %p110
    %p112 = scmp.ne.s32.totalorder %s100, %s101
    %p113 = scmp.eq.s32.totalorder %s16, 1
    %p114 = por %p112, %p113
    %p116 = scmp.ne.s32.totalorder %s101, %s115
    %p117 = scmp.eq.s32.totalorder %s16, 0
    %p118 = por %p116, %p117
    %s119 = smul.u32 %s17, %s18
    %s120 = smul.u32 %s29, %s25
    %s121 = ssub.s32 %s119, %s120
    %p122 = scmp.eq.s32.totalorder %s121, 0
    %s124 = sadd.s32 %s123, 1
    %s125 = scalar_select %p122, %s123, %s124
    %p128 = pneg %p122
    %p129 = scmp.eq.s32.totalorder %s10, 1
    %p130 = por %p128, %p129
    %p131 = scmp.ne.s32.totalorder %s123, %s126
    %p132 = scmp.eq.s32.totalorder %s10, 0
    %p133 = por %p131, %p132
    %p134 = scmp.ne.s32.totalorder %s123, %s126
    %p135 = scmp.eq.s32.totalorder %s15, 1
    %p136 = por %p134, %p135
    %p137 = scmp.ne.s32.totalorder %s126, %s127
    %p138 = scmp.eq.s32.totalorder %s15, 0
    %p139 = por %p137, %p138
    %p140 = scmp.ne.s32.totalorder %s126, %s127
    %p141 = scmp.eq.s32.totalorder %s16, 1
    %p142 = por %p140, %p141
    %p144 = scmp.ne.s32.totalorder %s127, %s143
    %p145 = scmp.eq.s32.totalorder %s16, 0
    %p146 = por %p144, %p145
    %p147 = scmp.le.s32.totalorder 1, %s10
    %p148 = scmp.lt.s32.totalorder %s10, 3
    %p149 = pnand %p147, %p148
    %p150 = pneg %p149
    // Predicated region
    $region9: #{discriminator64.6} parent=5 // pred_check
      _
    $region10: #{discriminator64.6} parent=5 // pred_check_branch
      %152 = sbr.rel (%p149) target = $region12
    $region11: #{discriminator64.6} parent=5 // pred_region
      %s153 = ssub.s32 %s10, 1
      // Predicated region
      $region13: #{discriminator64.6} parent=11 // pred_check
        %p154 = pneg %p48
      $region14: #{discriminator64.6} parent=11 // pred_check_branch
        %156 = sbr.rel (%p154) target = $region16
      $region15: #{discriminator64.6} parent=11 // pred_region
        %s157 = smul.u32 16, %s20
        %p158 = scmp.lt.s32.totalorder %s157, 15
        %s159 = scalar_select %p158, %s157, 15
        %s160 = smul.addr %s159, 5
        %s161 = smul.addr %s160, 4
        %s162 = scalar_lea.vmem %s0, %s161
        %s163 = smul.u32 16, %s20
      $region16: #{discriminator64.6} parent=11 // pred_fallthru
        _
      // Predicated region
      $region17: #{discriminator64.6} parent=11 // pred_check
        %p164 = pneg %p69
      $region18: #{discriminator64.6} parent=11 // pred_check_branch
        %166 = sbr.rel (%p164) target = $region20
      $region19: #{discriminator64.6} parent=11 // pred_region
        _
      $region20: #{discriminator64.6} parent=11 // pred_fallthru
        _
      // Predicated region
      $region21: #{discriminator64.6} parent=11 // pred_check
        %p167 = pneg %p90
      $region22: #{discriminator64.6} parent=11 // pred_check_branch
        %169 = sbr.rel (%p167) target = $region24
      $region23: #{discriminator64.6} parent=11 // pred_region
        _
      $region24: #{discriminator64.6} parent=11 // pred_fallthru
        _
      // Predicated region
      $region25: #{discriminator64.6} parent=11 // pred_check
        %p170 = pneg %p111
      $region26: #{discriminator64.6} parent=11 // pred_check_branch
        %172 = sbr.rel (%p170) target = $region28
      $region27: #{discriminator64.6} parent=11 // pred_region
        _
      $region28: #{discriminator64.6} parent=11 // pred_fallthru
        _
    $region12: #{discriminator64.6} parent=5 // pred_fallthru
      _
    %p173 = scmp.lt.s32.totalorder %s10, 2
    // Predicated region
    $region29: #{discriminator64.6} parent=5 // pred_check
      %p174 = pneg %p173
    $region30: #{discriminator64.6} parent=5 // pred_check_branch
      %176 = sbr.rel (%p174) target = $region32
    $region31: #{discriminator64.6} parent=5 // pred_region
      _
    $region32: #{discriminator64.6} parent=5 // pred_fallthru
      _
    %p177 = scmp.le.s32.totalorder 1, %s10
    %p178 = scmp.lt.s32.totalorder %s10, 3
    %p179 = pnand %p177, %p178
    %p180 = pneg %p179
    // Predicated region
    $region33: #{discriminator64.6} parent=5 // pred_check
      _
    $region34: #{discriminator64.6} parent=5 // pred_check_branch
      %182 = sbr.rel (%p179) target = $region36
    $region35: #{discriminator64.6} parent=5 // pred_region
      %s183 = ssub.s32 %s10, 1
      %s184 = smul.u32 16, %s20
      %p185 = scmp.lt.s32.totalorder %s184, 15
      %s186 = scalar_select %p185, %s184, 15
      %s187 = smul.addr %s186, 5
      %s188 = smul.addr %s187, 4
      %s189 = scalar_lea.vmem %s0, %s188
      %p190 = pneg %p48
      %p191 = pneg %p45
      %p192 = pneg %p69
      %p193 = pneg %p66
      %p194 = pneg %p90
      %p195 = pneg %p87
      %p196 = pneg %p111
      %p197 = pneg %p108
      %p198 = pneg %p139
      %p199 = pneg %p136
      %s200 = smul.u32 %s19, %s20
      %s201 = smul.u32 16, %s200
      %p202 = scmp.lt.s32.totalorder %s201, 15
      %s203 = scalar_select %p202, %s201, 15
      %s204 = smul.addr %s203, 4
      %s205 = scalar_lea.vmem %s4, %s204
      %s206 = smul.u32 16, %s20
      %p207 = scmp.lt.s32.totalorder %s206, 15
      %s208 = scalar_select %p207, %s206, 15
      %s209 = smul.addr %s208, 5
      %s210 = smul.addr %s209, 4
      %s211 = scalar_lea.vmem %s0, %s210
      %s212 = smul.u32 16, %s20
      %s213 = smul.u32 %s19, %s20
      %s214 = smul.u32 16, %s213
      %p215 = scmp.lt.s32.totalorder %s214, 15
      %s216 = scalar_select %p215, %s214, 15
      %s217 = smul.addr %s216, 4
      %s218 = scalar_lea.vmem %s4, %s217
      %s219 = smul.u32 %s19, %s20
      %s220 = smul.u32 16, %s219
      %v222 = vld [vmem:[%s211] sm:$0xff]
      %v223 = vld [vmem:[%s211 + $0x8] sm:$0xff]
      %v224 = vld [vmem:[%s211 + $0x10] sm:$0xf]
      %v225 = vld [vmem:[%s211 + $0x14] sm:$0xff]
      %v226 = vld [vmem:[%s211 + $0x1c] sm:$0xff]
      %v227 = vld [vmem:[%s211 + $0x24] sm:$0xf]
      %v228 = vld [vmem:[%s211 + $0x28] sm:$0xff]
      %v229 = vld [vmem:[%s211 + $0x30] sm:$0xff]
      %v230 = vld [vmem:[%s211 + $0x38] sm:$0xf]
      %v231 = vld [vmem:[%s211 + $0x3c] sm:$0xff]
      %v232 = vld [vmem:[%s211 + $0x44] sm:$0xff]
      %v233 = vld [vmem:[%s211 + $0x4c] sm:$0xf]
      %v234 = vld [vmem:[%s211 + $0x50] sm:$0xff]
      %v235 = vld [vmem:[%s211 + $0x58] sm:$0xff]
      %v236 = vld [vmem:[%s211 + $0x60] sm:$0xf]
      %v237 = vld [vmem:[%s211 + $0x64] sm:$0xff]
      %v238 = vld [vmem:[%s211 + $0x6c] sm:$0xff]
      %v239 = vld [vmem:[%s211 + $0x74] sm:$0xf]
      %v240 = vld [vmem:[%s211 + $0x78] sm:$0xff]
      %v241 = vld [vmem:[%s211 + $0x80] sm:$0xff]
      %v242 = vld [vmem:[%s211 + $0x88] sm:$0xf]
      %v243 = vld [vmem:[%s211 + $0x8c] sm:$0xff]
      %v244 = vld [vmem:[%s211 + $0x94] sm:$0xff]
      %v245 = vld [vmem:[%s211 + $0x9c] sm:$0xf]
      %v246 = vld [vmem:[%s211 + $0xa0] sm:$0xff]
      %v247 = vld [vmem:[%s211 + $0xa8] sm:$0xff]
      %v248 = vld [vmem:[%s211 + $0xb0] sm:$0xf]
      %v249 = vld [vmem:[%s211 + $0xb4] sm:$0xff]
      %v250 = vld [vmem:[%s211 + $0xbc] sm:$0xff]
      %v251 = vld [vmem:[%s211 + $0xc4] sm:$0xf]
      %v252 = vld [vmem:[%s211 + $0xc8] sm:$0xff]
      %v253 = vld [vmem:[%s211 + $0xd0] sm:$0xff]
      %v254 = vld [vmem:[%s211 + $0xd8] sm:$0xf]
      %v255 = vld [vmem:[%s211 + $0xdc] sm:$0xff]
      %v256 = vld [vmem:[%s211 + $0xe4] sm:$0xff]
      %v257 = vld [vmem:[%s211 + $0xec] sm:$0xf]
      %v258 = vld [vmem:[%s211 + $0xf0] sm:$0xff]
      %v259 = vld [vmem:[%s211 + $0xf8] sm:$0xff]
      %v260 = vld [vmem:[%s211 + $0x100] sm:$0xf]
      %v261 = vld [vmem:[%s211 + $0x104] sm:$0xff]
      %v262 = vld [vmem:[%s211 + $0x10c] sm:$0xff]
      %v263 = vld [vmem:[%s211 + $0x114] sm:$0xf]
      %v264 = vld [vmem:[%s211 + $0x118] sm:$0xff]
      %v265 = vld [vmem:[%s211 + $0x120] sm:$0xff]
      %v266 = vld [vmem:[%s211 + $0x128] sm:$0xf]
      %v267 = vld [vmem:[%s211 + $0x12c] sm:$0xff]
      %v268 = vld [vmem:[%s211 + $0x134] sm:$0xff]
      %v269 = vld [vmem:[%s211 + $0x13c] sm:$0xf]
      %v270 = vld [vmem:[%s1] sm:$0xf]
      %v271 = vld [vmem:[%s1 + $0x4] sm:$0xf]
      %v272 = vld [vmem:[%s1 + $0x8] sm:$0xf]
      %v273 = vld [vmem:[%s1 + $0xc] sm:$0xf]
      %v274 = vld [vmem:[%s1 + $0x10] sm:$0xf]
      %v275 = vld [vmem:[%s1 + $0x14] sm:$0xf]
      %v276 = vld [vmem:[%s1 + $0x18] sm:$0xf]
      %v277 = vld [vmem:[%s1 + $0x1c] sm:$0xf]
      %v278 = vld [vmem:[%s1 + $0x20] sm:$0xf]
      %v279 = vld [vmem:[%s1 + $0x24] sm:$0xf]
      %v280 = vld [vmem:[%s1 + $0x28] sm:$0xf]
      %v281 = vld [vmem:[%s1 + $0x2c] sm:$0xf]
      %v282 = vld [vmem:[%s1 + $0x30] sm:$0xf]
      %v283 = vld [vmem:[%s1 + $0x34] sm:$0xf]
      %v284 = vld [vmem:[%s1 + $0x38] sm:$0xf]
      %v285 = vld [vmem:[%s1 + $0x3c] sm:$0xf]
      %v286 = vld [vmem:[%s1 + $0x40] sm:$0xf]
      %v287 = vld [vmem:[%s1 + $0x44] sm:$0xf]
      %v288 = vld [vmem:[%s1 + $0x48] sm:$0xf]
      %v289 = vld [vmem:[%s1 + $0x4c] sm:$0xf]
      %v290 = vld [vmem:[%s1 + $0x50] sm:$0xf]
      %v291 = vld [vmem:[%s1 + $0x54] sm:$0xf]
      %v292 = vld [vmem:[%s1 + $0x58] sm:$0xf]
      %v293 = vld [vmem:[%s1 + $0x5c] sm:$0xf]
      %v294 = vld [vmem:[%s1 + $0x60] sm:$0xf]
      %v295 = vld [vmem:[%s1 + $0x64] sm:$0xf]
      %v296 = vld [vmem:[%s1 + $0x68] sm:$0xf]
      %v297 = vld [vmem:[%s1 + $0x6c] sm:$0xf]
      %v298 = vld [vmem:[%s1 + $0x70] sm:$0xf]
      %v299 = vld [vmem:[%s1 + $0x74] sm:$0xf]
      %v300 = vld [vmem:[%s1 + $0x78] sm:$0xf]
      %v301 = vld [vmem:[%s1 + $0x7c] sm:$0xf]
      %v302 = vld [vmem:[%s1 + $0x80] sm:$0xf]
      %v303 = vld [vmem:[%s1 + $0x84] sm:$0xf]
      %v304 = vld [vmem:[%s1 + $0x88] sm:$0xf]
      %v305 = vld [vmem:[%s1 + $0x8c] sm:$0xf]
      %v306 = vld [vmem:[%s1 + $0x90] sm:$0xf]
      %v307 = vld [vmem:[%s1 + $0x94] sm:$0xf]
      %v308 = vld [vmem:[%s1 + $0x98] sm:$0xf]
      %v309 = vld [vmem:[%s1 + $0x9c] sm:$0xf]
      %v310 = vld [vmem:[%s1 + $0xa0] sm:$0xf]
      %v311 = vld [vmem:[%s1 + $0xa4] sm:$0xf]
      %v312 = vld [vmem:[%s1 + $0xa8] sm:$0xf]
      %v313 = vld [vmem:[%s1 + $0xac] sm:$0xf]
      %v314 = vld [vmem:[%s1 + $0xb0] sm:$0xf]
      %v315 = vld [vmem:[%s1 + $0xb4] sm:$0xf]
      %v316 = vld [vmem:[%s1 + $0xb8] sm:$0xf]
      %v317 = vld [vmem:[%s1 + $0xbc] sm:$0xf]
      %v318 = vld [vmem:[%s1 + $0xc0] sm:$0xf]
      %v319 = vld [vmem:[%s1 + $0xc4] sm:$0xf]
      %v320 = vld [vmem:[%s1 + $0xc8] sm:$0xf]
      %v321 = vld [vmem:[%s1 + $0xcc] sm:$0xf]
      %v322 = vld [vmem:[%s1 + $0xd0] sm:$0xf]
      %v323 = vld [vmem:[%s1 + $0xd4] sm:$0xf]
      %v324 = vld [vmem:[%s1 + $0xd8] sm:$0xf]
      %v325 = vld [vmem:[%s1 + $0xdc] sm:$0xf]
      %v326 = vld [vmem:[%s1 + $0xe0] sm:$0xf]
      %v327 = vld [vmem:[%s1 + $0xe4] sm:$0xf]
      %v328 = vld [vmem:[%s1 + $0xe8] sm:$0xf]
      %v329 = vld [vmem:[%s1 + $0xec] sm:$0xf]
      %v330 = vld [vmem:[%s1 + $0xf0] sm:$0xf]
      %v331 = vld [vmem:[%s1 + $0xf4] sm:$0xf]
      %v332 = vld [vmem:[%s1 + $0xf8] sm:$0xf]
      %v333 = vld [vmem:[%s1 + $0xfc] sm:$0xf]
      %v334 = vld [vmem:[%s1 + $0x100] sm:$0xf]
      %v335 = vld [vmem:[%s1 + $0x104] sm:$0xf]
      %v336 = vld [vmem:[%s1 + $0x108] sm:$0xf]
      %v337 = vld [vmem:[%s1 + $0x10c] sm:$0xf]
      %v338 = vld [vmem:[%s1 + $0x110] sm:$0xf]
      %v339 = vld [vmem:[%s1 + $0x114] sm:$0xf]
      %v340 = vld [vmem:[%s1 + $0x118] sm:$0xf]
      %v341 = vld [vmem:[%s1 + $0x11c] sm:$0xf]
      %v342 = vld [vmem:[%s1 + $0x120] sm:$0xf]
      %v343 = vld [vmem:[%s1 + $0x124] sm:$0xf]
      %v344 = vld [vmem:[%s1 + $0x128] sm:$0xf]
      %v345 = vld [vmem:[%s1 + $0x12c] sm:$0xf]
      %v346 = vld [vmem:[%s1 + $0x130] sm:$0xf]
      %v347 = vld [vmem:[%s1 + $0x134] sm:$0xf]
      %v348 = vld [vmem:[%s1 + $0x138] sm:$0xf]
      %v349 = vld [vmem:[%s1 + $0x13c] sm:$0xf]
      %v398 = vunpack.c.l.b16 %v222
      %v399 = vunpack.c.h.b16 %v222
      %v400 = vunpack.c.l.b16 %v223
      %v401 = vunpack.c.h.b16 %v223
      %v402 = vunpack.c.l.b16 %v224
      %v403 = vunpack.c.l.b16 %v225
      %v404 = vunpack.c.h.b16 %v225
      %v405 = vunpack.c.l.b16 %v226
      %v406 = vunpack.c.h.b16 %v226
      %v407 = vunpack.c.l.b16 %v227
      %v408 = vunpack.c.l.b16 %v228
      %v409 = vunpack.c.h.b16 %v228
      %v410 = vunpack.c.l.b16 %v229
      %v411 = vunpack.c.h.b16 %v229
      %v412 = vunpack.c.l.b16 %v230
      %v413 = vunpack.c.l.b16 %v231
      %v414 = vunpack.c.h.b16 %v231
      %v415 = vunpack.c.l.b16 %v232
      %v416 = vunpack.c.h.b16 %v232
      %v417 = vunpack.c.l.b16 %v233
      %v418 = vunpack.c.l.b16 %v234
      %v419 = vunpack.c.h.b16 %v234
      %v420 = vunpack.c.l.b16 %v235
      %v421 = vunpack.c.h.b16 %v235
      %v422 = vunpack.c.l.b16 %v236
      %v423 = vunpack.c.l.b16 %v237
      %v424 = vunpack.c.h.b16 %v237
      %v425 = vunpack.c.l.b16 %v238
      %v426 = vunpack.c.h.b16 %v238
      %v427 = vunpack.c.l.b16 %v239
      %v428 = vunpack.c.l.b16 %v240
      %v429 = vunpack.c.h.b16 %v240
      %v430 = vunpack.c.l.b16 %v241
      %v431 = vunpack.c.h.b16 %v241
      %v432 = vunpack.c.l.b16 %v242
      %v433 = vunpack.c.l.b16 %v243
      %v434 = vunpack.c.h.b16 %v243
      %v435 = vunpack.c.l.b16 %v244
      %v436 = vunpack.c.h.b16 %v244
      %v437 = vunpack.c.l.b16 %v245
      %v438 = vunpack.c.l.b16 %v246
      %v439 = vunpack.c.h.b16 %v246
      %v440 = vunpack.c.l.b16 %v247
      %v441 = vunpack.c.h.b16 %v247
      %v442 = vunpack.c.l.b16 %v248
      %v443 = vunpack.c.l.b16 %v249
      %v444 = vunpack.c.h.b16 %v249
      %v445 = vunpack.c.l.b16 %v250
      %v446 = vunpack.c.h.b16 %v250
      %v447 = vunpack.c.l.b16 %v251
      %v448 = vunpack.c.l.b16 %v252
      %v449 = vunpack.c.h.b16 %v252
      %v450 = vunpack.c.l.b16 %v253
      %v451 = vunpack.c.h.b16 %v253
      %v452 = vunpack.c.l.b16 %v254
      %v453 = vunpack.c.l.b16 %v255
      %v454 = vunpack.c.h.b16 %v255
      %v455 = vunpack.c.l.b16 %v256
      %v456 = vunpack.c.h.b16 %v256
      %v457 = vunpack.c.l.b16 %v257
      %v458 = vunpack.c.l.b16 %v258
      %v459 = vunpack.c.h.b16 %v258
      %v460 = vunpack.c.l.b16 %v259
      %v461 = vunpack.c.h.b16 %v259
      %v462 = vunpack.c.l.b16 %v260
      %v463 = vunpack.c.l.b16 %v261
      %v464 = vunpack.c.h.b16 %v261
      %v465 = vunpack.c.l.b16 %v262
      %v466 = vunpack.c.h.b16 %v262
      %v467 = vunpack.c.l.b16 %v263
      %v468 = vunpack.c.l.b16 %v264
      %v469 = vunpack.c.h.b16 %v264
      %v470 = vunpack.c.l.b16 %v265
      %v471 = vunpack.c.h.b16 %v265
      %v472 = vunpack.c.l.b16 %v266
      %v473 = vunpack.c.l.b16 %v267
      %v474 = vunpack.c.h.b16 %v267
      %v475 = vunpack.c.l.b16 %v268
      %v476 = vunpack.c.h.b16 %v268
      %v477 = vunpack.c.l.b16 %v269
      %v478 = vpack.c.b16 %v403, %v398
      %v479 = vpack.c.b16 %v404, %v399
      %v480 = vpack.c.b16 %v405, %v400
      %v481 = vpack.c.b16 %v406, %v401
      %v482 = vpack.c.b16 %v407, %v402
      %v483 = vpack.c.b16 %v413, %v408
      %v484 = vpack.c.b16 %v414, %v409
      %v485 = vpack.c.b16 %v415, %v410
      %v486 = vpack.c.b16 %v416, %v411
      %v487 = vpack.c.b16 %v417, %v412
      %v488 = vpack.c.b16 %v423, %v418
      %v489 = vpack.c.b16 %v424, %v419
      %v490 = vpack.c.b16 %v425, %v420
      %v491 = vpack.c.b16 %v426, %v421
      %v492 = vpack.c.b16 %v427, %v422
      %v493 = vpack.c.b16 %v433, %v428
      %v494 = vpack.c.b16 %v434, %v429
      %v495 = vpack.c.b16 %v435, %v430
      %v496 = vpack.c.b16 %v436, %v431
      %v497 = vpack.c.b16 %v437, %v432
      %v498 = vpack.c.b16 %v443, %v438
      %v499 = vpack.c.b16 %v444, %v439
      %v500 = vpack.c.b16 %v445, %v440
      %v501 = vpack.c.b16 %v446, %v441
      %v502 = vpack.c.b16 %v447, %v442
      %v503 = vpack.c.b16 %v453, %v448
      %v504 = vpack.c.b16 %v454, %v449
      %v505 = vpack.c.b16 %v455, %v450
      %v506 = vpack.c.b16 %v456, %v451
      %v507 = vpack.c.b16 %v457, %v452
      %v508 = vpack.c.b16 %v463, %v458
      %v509 = vpack.c.b16 %v464, %v459
      %v510 = vpack.c.b16 %v465, %v460
      %v511 = vpack.c.b16 %v466, %v461
      %v512 = vpack.c.b16 %v467, %v462
      %v513 = vpack.c.b16 %v473, %v468
      %v514 = vpack.c.b16 %v474, %v469
      %v515 = vpack.c.b16 %v475, %v470
      %v516 = vpack.c.b16 %v476, %v471
      %v517 = vpack.c.b16 %v477, %v472
      %v638 = vunpack.c.l.b16 %v270
      %v639 = vunpack.c.l.b16 %v271
      %v640 = vunpack.c.l.b16 %v272
      %v641 = vunpack.c.l.b16 %v273
      %v642 = vunpack.c.l.b16 %v274
      %v643 = vunpack.c.l.b16 %v275
      %v644 = vunpack.c.l.b16 %v276
      %v645 = vunpack.c.l.b16 %v277
      %v646 = vunpack.c.l.b16 %v278
      %v647 = vunpack.c.l.b16 %v279
      %v648 = vunpack.c.l.b16 %v280
      %v649 = vunpack.c.l.b16 %v281
      %v650 = vunpack.c.l.b16 %v282
      %v651 = vunpack.c.l.b16 %v283
      %v652 = vunpack.c.l.b16 %v284
      %v653 = vunpack.c.l.b16 %v285
      %v654 = vunpack.c.l.b16 %v286
      %v655 = vunpack.c.l.b16 %v287
      %v656 = vunpack.c.l.b16 %v288
      %v657 = vunpack.c.l.b16 %v289
      %v658 = vunpack.c.l.b16 %v290
      %v659 = vunpack.c.l.b16 %v291
      %v660 = vunpack.c.l.b16 %v292
      %v661 = vunpack.c.l.b16 %v293
      %v662 = vunpack.c.l.b16 %v294
      %v663 = vunpack.c.l.b16 %v295
      %v664 = vunpack.c.l.b16 %v296
      %v665 = vunpack.c.l.b16 %v297
      %v666 = vunpack.c.l.b16 %v298
      %v667 = vunpack.c.l.b16 %v299
      %v668 = vunpack.c.l.b16 %v300
      %v669 = vunpack.c.l.b16 %v301
      %v670 = vunpack.c.l.b16 %v302
      %v671 = vunpack.c.l.b16 %v303
      %v672 = vunpack.c.l.b16 %v304
      %v673 = vunpack.c.l.b16 %v305
      %v674 = vunpack.c.l.b16 %v306
      %v675 = vunpack.c.l.b16 %v307
      %v676 = vunpack.c.l.b16 %v308
      %v677 = vunpack.c.l.b16 %v309
      %v678 = vunpack.c.l.b16 %v310
      %v679 = vunpack.c.l.b16 %v311
      %v680 = vunpack.c.l.b16 %v312
      %v681 = vunpack.c.l.b16 %v313
      %v682 = vunpack.c.l.b16 %v314
      %v683 = vunpack.c.l.b16 %v315
      %v684 = vunpack.c.l.b16 %v316
      %v685 = vunpack.c.l.b16 %v317
      %v686 = vunpack.c.l.b16 %v318
      %v687 = vunpack.c.l.b16 %v319
      %v688 = vunpack.c.l.b16 %v320
      %v689 = vunpack.c.l.b16 %v321
      %v690 = vunpack.c.l.b16 %v322
      %v691 = vunpack.c.l.b16 %v323
      %v692 = vunpack.c.l.b16 %v324
      %v693 = vunpack.c.l.b16 %v325
      %v694 = vunpack.c.l.b16 %v326
      %v695 = vunpack.c.l.b16 %v327
      %v696 = vunpack.c.l.b16 %v328
      %v697 = vunpack.c.l.b16 %v329
      %v698 = vunpack.c.l.b16 %v330
      %v699 = vunpack.c.l.b16 %v331
      %v700 = vunpack.c.l.b16 %v332
      %v701 = vunpack.c.l.b16 %v333
      %v702 = vunpack.c.l.b16 %v334
      %v703 = vunpack.c.l.b16 %v335
      %v704 = vunpack.c.l.b16 %v336
      %v705 = vunpack.c.l.b16 %v337
      %v706 = vunpack.c.l.b16 %v338
      %v707 = vunpack.c.l.b16 %v339
      %v708 = vunpack.c.l.b16 %v340
      %v709 = vunpack.c.l.b16 %v341
      %v710 = vunpack.c.l.b16 %v342
      %v711 = vunpack.c.l.b16 %v343
      %v712 = vunpack.c.l.b16 %v344
      %v713 = vunpack.c.l.b16 %v345
      %v714 = vunpack.c.l.b16 %v346
      %v715 = vunpack.c.l.b16 %v347
      %v716 = vunpack.c.l.b16 %v348
      %v717 = vunpack.c.l.b16 %v349
      %v718 = vpack.c.b16 %v639, %v638
      %v719 = vpack.c.b16 %v641, %v640
      %v720 = vpack.c.b16 %v643, %v642
      %v721 = vpack.c.b16 %v645, %v644
      %v722 = vpack.c.b16 %v647, %v646
      %v723 = vpack.c.b16 %v649, %v648
      %v724 = vpack.c.b16 %v651, %v650
      %v725 = vpack.c.b16 %v653, %v652
      %v726 = vpack.c.b16 %v655, %v654
      %v727 = vpack.c.b16 %v657, %v656
      %v728 = vpack.c.b16 %v659, %v658
      %v729 = vpack.c.b16 %v661, %v660
      %v730 = vpack.c.b16 %v663, %v662
      %v731 = vpack.c.b16 %v665, %v664
      %v732 = vpack.c.b16 %v667, %v666
      %v733 = vpack.c.b16 %v669, %v668
      %v734 = vpack.c.b16 %v671, %v670
      %v735 = vpack.c.b16 %v673, %v672
      %v736 = vpack.c.b16 %v675, %v674
      %v737 = vpack.c.b16 %v677, %v676
      %v738 = vpack.c.b16 %v679, %v678
      %v739 = vpack.c.b16 %v681, %v680
      %v740 = vpack.c.b16 %v683, %v682
      %v741 = vpack.c.b16 %v685, %v684
      %v742 = vpack.c.b16 %v687, %v686
      %v743 = vpack.c.b16 %v689, %v688
      %v744 = vpack.c.b16 %v691, %v690
      %v745 = vpack.c.b16 %v693, %v692
      %v746 = vpack.c.b16 %v695, %v694
      %v747 = vpack.c.b16 %v697, %v696
      %v748 = vpack.c.b16 %v699, %v698
      %v749 = vpack.c.b16 %v701, %v700
      %v750 = vpack.c.b16 %v703, %v702
      %v751 = vpack.c.b16 %v705, %v704
      %v752 = vpack.c.b16 %v707, %v706
      %v753 = vpack.c.b16 %v709, %v708
      %v754 = vpack.c.b16 %v711, %v710
      %v755 = vpack.c.b16 %v713, %v712
      %v756 = vpack.c.b16 %v715, %v714
      %v757 = vpack.c.b16 %v717, %v716
      %798 = vmatprep.subr.bf16.mxu0 0
      %799 = vmatpush1.bf16.msra.mxu0 %v718
      %800 = vmatprep.subr.bf16.mxu0 0
      %801 = vmatpush1.bf16.msra.mxu0 %v719
      %802 = vmatprep.subr.bf16.mxu0 0
      %803 = vmatpush1.bf16.msra.mxu0 %v720
      %804 = vmatprep.subr.bf16.mxu0 0
      %805 = vmatpush1.bf16.msra.mxu0 %v721
      %806 = vmatprep.subr.bf16.mxu0 0
      %807 = vmatpush1.bf16.msra.mxu0 %v722
      %808 = vmatprep.subr.bf16.mxu0 0
      %809 = vmatpush1.bf16.msra.mxu0 %v723
      %810 = vmatprep.subr.bf16.mxu0 0
      %811 = vmatpush1.bf16.msra.mxu0 %v724
      %812 = vmatprep.subr.bf16.mxu0 0
      %813 = vmatpush1.bf16.msra.mxu0 %v725
      %814 = vmatprep.subr.bf16.mxu0 0
      %815 = vmatpush1.bf16.msra.mxu0 %v726
      %816 = vmatprep.subr.bf16.mxu0 0
      %817 = vmatpush1.bf16.msra.mxu0 %v727
      %818 = vmatprep.subr.bf16.mxu0 0
      %819 = vmatpush1.bf16.msra.mxu0 %v728
      %820 = vmatprep.subr.bf16.mxu0 0
      %821 = vmatpush1.bf16.msra.mxu0 %v729
      %822 = vmatprep.subr.bf16.mxu0 0
      %823 = vmatpush1.bf16.msra.mxu0 %v730
      %824 = vmatprep.subr.bf16.mxu0 0
      %825 = vmatpush1.bf16.msra.mxu0 %v731
      %826 = vmatprep.subr.bf16.mxu0 0
      %827 = vmatpush1.bf16.msra.mxu0 %v732
      %828 = vmatprep.subr.bf16.mxu0 0
      %829 = vmatpush1.bf16.msra.mxu0 %v733
      %830 = vmatprep.mubr.bf16.mxu0 %v479
      %831 = vmatmul.mubr.bf16.gmra.mrb[0].mxu0 %v478
      %v832 = vpop.f32.mrb[0].mxu0
      %v833 = vadd.f32 0.0, %v832
      %v834 = vpop.f32.mrb[0].mxu0
      %v835 = vpop.f32.mrb[0].mxu0
      %v836 = vadd.f32 0.0, %v835
      %v837 = vpop.f32.mrb[0].mxu0
      %838 = vmatprep.mubr.bf16.mxu0 %v484
      %839 = vmatmul.mubr.bf16.gmra.mrb[0].mxu0 %v483
      %v840 = vpop.f32.mrb[0].mxu0
      %v841 = vadd.f32 0.0, %v840
      %v842 = vpop.f32.mrb[0].mxu0
      %v843 = vpop.f32.mrb[0].mxu0
      %v844 = vadd.f32 0.0, %v843
      %v845 = vpop.f32.mrb[0].mxu0
      %846 = vmatprep.mubr.bf16.mxu0 %v489
      %847 = vmatmul.mubr.bf16.gmra.mrb[0].mxu0 %v488
      %v848 = vpop.f32.mrb[0].mxu0
      %v849 = vadd.f32 0.0, %v848
      %v850 = vpop.f32.mrb[0].mxu0
      %v851 = vpop.f32.mrb[0].mxu0
      %v852 = vadd.f32 0.0, %v851
      %v853 = vpop.f32.mrb[0].mxu0
      %854 = vmatprep.mubr.bf16.mxu0 %v494
      %855 = vmatmul.mubr.bf16.gmra.mrb[0].mxu0 %v493
      %v856 = vpop.f32.mrb[0].mxu0
      %v857 = vadd.f32 0.0, %v856
      %v858 = vpop.f32.mrb[0].mxu0
      %v859 = vpop.f32.mrb[0].mxu0
      %v860 = vadd.f32 0.0, %v859
      %v861 = vpop.f32.mrb[0].mxu0
      %862 = vmatprep.mubr.bf16.mxu0 %v499
      %863 = vmatmul.mubr.bf16.gmra.mrb[0].mxu0 %v498
      %v864 = vpop.f32.mrb[0].mxu0
      %v865 = vadd.f32 0.0, %v864
      %v866 = vpop.f32.mrb[0].mxu0
      %v867 = vpop.f32.mrb[0].mxu0
      %v868 = vadd.f32 0.0, %v867
      %v869 = vpop.f32.mrb[0].mxu0
      %870 = vmatprep.mubr.bf16.mxu0 %v504
      %871 = vmatmul.mubr.bf16.gmra.mrb[0].mxu0 %v503
      %v872 = vpop.f32.mrb[0].mxu0
      %v873 = vadd.f32 0.0, %v872
      %v874 = vpop.f32.mrb[0].mxu0
      %v875 = vpop.f32.mrb[0].mxu0
      %v876 = vadd.f32 0.0, %v875
      %v877 = vpop.f32.mrb[0].mxu0
      %878 = vmatprep.mubr.bf16.mxu0 %v509
      %879 = vmatmul.mubr.bf16.gmra.mrb[0].mxu0 %v508
      %v880 = vpop.f32.mrb[0].mxu0
      %v881 = vadd.f32 0.0, %v880
      %v882 = vpop.f32.mrb[0].mxu0
      %v883 = vpop.f32.mrb[0].mxu0
      %v884 = vadd.f32 0.0, %v883
      %v885 = vpop.f32.mrb[0].mxu0
      %886 = vmatprep.mubr.bf16.mxu0 %v514
      %887 = vmatmul.mubr.bf16.gmra.mrb[0].mxu0 %v513
      %v888 = vpop.f32.mrb[0].mxu0
      %v889 = vadd.f32 0.0, %v888
      %v890 = vpop.f32.mrb[0].mxu0
      %v891 = vpop.f32.mrb[0].mxu0
      %v892 = vadd.f32 0.0, %v891
      %v893 = vpop.f32.mrb[0].mxu0
      %894 = vdwg.mxu0
      %895 = vmatprep.subr.bf16.mxu0 0
      %896 = vmatpush1.bf16.msra.mxu0 %v734
      %897 = vmatprep.subr.bf16.mxu0 0
      %898 = vmatpush1.bf16.msra.mxu0 %v735
      %899 = vmatprep.subr.bf16.mxu0 0
      %900 = vmatpush1.bf16.msra.mxu0 %v736
      %901 = vmatprep.subr.bf16.mxu0 0
      %902 = vmatpush1.bf16.msra.mxu0 %v737
      %903 = vmatprep.subr.bf16.mxu0 0
      %904 = vmatpush1.bf16.msra.mxu0 %v738
      %905 = vmatprep.subr.bf16.mxu0 0
      %906 = vmatpush1.bf16.msra.mxu0 %v739
      %907 = vmatprep.subr.bf16.mxu0 0
      %908 = vmatpush1.bf16.msra.mxu0 %v740
      %909 = vmatprep.subr.bf16.mxu0 0
      %910 = vmatpush1.bf16.msra.mxu0 %v741
      %911 = vmatprep.subr.bf16.mxu0 0
      %912 = vmatpush1.bf16.msra.mxu0 %v742
      %913 = vmatprep.subr.bf16.mxu0 0
      %914 = vmatpush1.bf16.msra.mxu0 %v743
      %915 = vmatprep.subr.bf16.mxu0 0
      %916 = vmatpush1.bf16.msra.mxu0 %v744
      %917 = vmatprep.subr.bf16.mxu0 0
      %918 = vmatpush1.bf16.msra.mxu0 %v745
      %919 = vmatprep.subr.bf16.mxu0 0
      %920 = vmatpush1.bf16.msra.mxu0 %v746
      %921 = vmatprep.subr.bf16.mxu0 0
      %922 = vmatpush1.bf16.msra.mxu0 %v747
      %923 = vmatprep.subr.bf16.mxu0 0
      %924 = vmatpush1.bf16.msra.mxu0 %v748
      %925 = vmatprep.subr.bf16.mxu0 0
      %926 = vmatpush1.bf16.msra.mxu0 %v749
      %927 = vmatprep.mubr.bf16.mxu0 %v481
      %928 = vmatmul.mubr.bf16.gmra.mrb[0].mxu0 %v480
      %v929 = vpop.f32.mrb[0].mxu0
      %v930 = vadd.f32 %v833, %v929
      %v931 = vpop.f32.mrb[0].mxu0
      %v932 = vpop.f32.mrb[0].mxu0
      %v933 = vadd.f32 %v836, %v932
      %v934 = vpop.f32.mrb[0].mxu0
      %935 = vmatprep.mubr.bf16.mxu0 %v486
      %936 = vmatmul.mubr.bf16.gmra.mrb[0].mxu0 %v485
      %v937 = vpop.f32.mrb[0].mxu0
      %v938 = vadd.f32 %v841, %v937
      %v939 = vpop.f32.mrb[0].mxu0
      %v940 = vpop.f32.mrb[0].mxu0
      %v941 = vadd.f32 %v844, %v940
      %v942 = vpop.f32.mrb[0].mxu0
      %943 = vmatprep.mubr.bf16.mxu0 %v491
      %944 = vmatmul.mubr.bf16.gmra.mrb[0].mxu0 %v490
      %v945 = vpop.f32.mrb[0].mxu0
      %v946 = vadd.f32 %v849, %v945
      %v947 = vpop.f32.mrb[0].mxu0
      %v948 = vpop.f32.mrb[0].mxu0
      %v949 = vadd.f32 %v852, %v948
      %v950 = vpop.f32.mrb[0].mxu0
      %951 = vmatprep.mubr.bf16.mxu0 %v496
      %952 = vmatmul.mubr.bf16.gmra.mrb[0].mxu0 %v495
      %v953 = vpop.f32.mrb[0].mxu0
      %v954 = vadd.f32 %v857, %v953
      %v955 = vpop.f32.mrb[0].mxu0
      %v956 = vpop.f32.mrb[0].mxu0
      %v957 = vadd.f32 %v860, %v956
      %v958 = vpop.f32.mrb[0].mxu0
      %959 = vmatprep.mubr.bf16.mxu0 %v501
      %960 = vmatmul.mubr.bf16.gmra.mrb[0].mxu0 %v500
      %v961 = vpop.f32.mrb[0].mxu0
      %v962 = vadd.f32 %v865, %v961
      %v963 = vpop.f32.mrb[0].mxu0
      %v964 = vpop.f32.mrb[0].mxu0
      %v965 = vadd.f32 %v868, %v964
      %v966 = vpop.f32.mrb[0].mxu0
      %967 = vmatprep.mubr.bf16.mxu0 %v506
      %968 = vmatmul.mubr.bf16.gmra.mrb[0].mxu0 %v505
      %v969 = vpop.f32.mrb[0].mxu0
      %v970 = vadd.f32 %v873, %v969
      %v971 = vpop.f32.mrb[0].mxu0
      %v972 = vpop.f32.mrb[0].mxu0
      %v973 = vadd.f32 %v876, %v972
      %v974 = vpop.f32.mrb[0].mxu0
      %975 = vmatprep.mubr.bf16.mxu0 %v511
      %976 = vmatmul.mubr.bf16.gmra.mrb[0].mxu0 %v510
      %v977 = vpop.f32.mrb[0].mxu0
      %v978 = vadd.f32 %v881, %v977
      %v979 = vpop.f32.mrb[0].mxu0
      %v980 = vpop.f32.mrb[0].mxu0
      %v981 = vadd.f32 %v884, %v980
      %v982 = vpop.f32.mrb[0].mxu0
      %983 = vmatprep.mubr.bf16.mxu0 %v516
      %984 = vmatmul.mubr.bf16.gmra.mrb[0].mxu0 %v515
      %v985 = vpop.f32.mrb[0].mxu0
      %v986 = vadd.f32 %v889, %v985
      %v987 = vpop.f32.mrb[0].mxu0
      %v988 = vpop.f32.mrb[0].mxu0
      %v989 = vadd.f32 %v892, %v988
      %v990 = vpop.f32.mrb[0].mxu0
      %991 = vdwg.mxu0
      %992 = vmatprep.subr.bf16.mxu0 0
      %993 = vmatpush1.bf16.msra.mxu0 %v750
      %994 = vmatprep.subr.bf16.mxu0 0
      %995 = vmatpush1.bf16.msra.mxu0 %v751
      %996 = vmatprep.subr.bf16.mxu0 0
      %997 = vmatpush1.bf16.msra.mxu0 %v752
      %998 = vmatprep.subr.bf16.mxu0 0
      %999 = vmatpush1.bf16.msra.mxu0 %v753
      %1000 = vmatprep.subr.bf16.mxu0 0
      %1001 = vmatpush1.bf16.msra.mxu0 %v754
      %1002 = vmatprep.subr.bf16.mxu0 0
      %1003 = vmatpush1.bf16.msra.mxu0 %v755
      %1004 = vmatprep.subr.bf16.mxu0 0
      %1005 = vmatpush1.bf16.msra.mxu0 %v756
      %1006 = vmatprep.subr.bf16.mxu0 0
      %1007 = vmatpush1.bf16.msra.mxu0 %v757
      %1008 = vmatprep.subr.bf16.mxu0 0
      %1009 = vmatpush1.bf16.msra.mxu0 0
      %1010 = vmatprep.subr.bf16.mxu0 0
      %1011 = vmatpush1.bf16.msra.mxu0 0
      %1012 = vmatprep.subr.bf16.mxu0 0
      %1013 = vmatpush1.bf16.msra.mxu0 0
      %1014 = vmatprep.subr.bf16.mxu0 0
      %1015 = vmatpush1.bf16.msra.mxu0 0
      %1016 = vmatprep.subr.bf16.mxu0 0
      %1017 = vmatpush1.bf16.msra.mxu0 0
      %1018 = vmatprep.subr.bf16.mxu0 0
      %1019 = vmatpush1.bf16.msra.mxu0 0
      %1020 = vmatprep.subr.bf16.mxu0 0
      %1021 = vmatpush1.bf16.msra.mxu0 0
      %1022 = vmatprep.subr.bf16.mxu0 0
      %1023 = vmatpush1.bf16.msra.mxu0 0
      %1024 = vmatprep.mubr.bf16.mxu0 0
      %1025 = vmatmul.mubr.bf16.gmra.mrb[0].mxu0 %v482
      %v1026 = vpop.f32.mrb[0].mxu0
      %v1027 = vadd.f32 %v930, %v1026
      %v1028 = vpop.f32.mrb[0].mxu0
      %v1029 = vpop.f32.mrb[0].mxu0
      %v1030 = vadd.f32 %v933, %v1029
      %v1031 = vpop.f32.mrb[0].mxu0
      %1032 = vmatprep.mubr.bf16.mxu0 0
      %1033 = vmatmul.mubr.bf16.gmra.mrb[0].mxu0 %v487
      %v1034 = vpop.f32.mrb[0].mxu0
      %v1035 = vadd.f32 %v938, %v1034
      %v1036 = vpop.f32.mrb[0].mxu0
      %v1037 = vpop.f32.mrb[0].mxu0
      %v1038 = vadd.f32 %v941, %v1037
      %v1039 = vpop.f32.mrb[0].mxu0
      %1040 = vmatprep.mubr.bf16.mxu0 0
      %1041 = vmatmul.mubr.bf16.gmra.mrb[0].mxu0 %v492
      %v1042 = vpop.f32.mrb[0].mxu0
      %v1043 = vadd.f32 %v946, %v1042
      %v1044 = vpop.f32.mrb[0].mxu0
      %v1045 = vpop.f32.mrb[0].mxu0
      %v1046 = vadd.f32 %v949, %v1045
      %v1047 = vpop.f32.mrb[0].mxu0
      %1048 = vmatprep.mubr.bf16.mxu0 0
      %1049 = vmatmul.mubr.bf16.gmra.mrb[0].mxu0 %v497
      %v1050 = vpop.f32.mrb[0].mxu0
      %v1051 = vadd.f32 %v954, %v1050
      %v1052 = vpop.f32.mrb[0].mxu0
      %v1053 = vpop.f32.mrb[0].mxu0
      %v1054 = vadd.f32 %v957, %v1053
      %v1055 = vpop.f32.mrb[0].mxu0
      %1056 = vmatprep.mubr.bf16.mxu0 0
      %1057 = vmatmul.mubr.bf16.gmra.mrb[0].mxu0 %v502
      %v1058 = vpop.f32.mrb[0].mxu0
      %v1059 = vadd.f32 %v962, %v1058
      %v1060 = vpop.f32.mrb[0].mxu0
      %v1061 = vpop.f32.mrb[0].mxu0
      %v1062 = vadd.f32 %v965, %v1061
      %v1063 = vpop.f32.mrb[0].mxu0
      %1064 = vmatprep.mubr.bf16.mxu0 0
      %1065 = vmatmul.mubr.bf16.gmra.mrb[0].mxu0 %v507
      %v1066 = vpop.f32.mrb[0].mxu0
      %v1067 = vadd.f32 %v970, %v1066
      %v1068 = vpop.f32.mrb[0].mxu0
      %v1069 = vpop.f32.mrb[0].mxu0
      %v1070 = vadd.f32 %v973, %v1069
      %v1071 = vpop.f32.mrb[0].mxu0
      %1072 = vmatprep.mubr.bf16.mxu0 0
      %1073 = vmatmul.mubr.bf16.gmra.mrb[0].mxu0 %v512
      %v1074 = vpop.f32.mrb[0].mxu0
      %v1075 = vadd.f32 %v978, %v1074
      %v1076 = vpop.f32.mrb[0].mxu0
      %v1077 = vpop.f32.mrb[0].mxu0
      %v1078 = vadd.f32 %v981, %v1077
      %v1079 = vpop.f32.mrb[0].mxu0
      %1080 = vmatprep.mubr.bf16.mxu0 0
      %1081 = vmatmul.mubr.bf16.gmra.mrb[0].mxu0 %v517
      %v1082 = vpop.f32.mrb[0].mxu0
      %v1083 = vadd.f32 %v986, %v1082
      %v1084 = vpop.f32.mrb[0].mxu0
      %v1085 = vpop.f32.mrb[0].mxu0
      %v1086 = vadd.f32 %v989, %v1085
      %v1087 = vpop.f32.mrb[0].mxu0
      %1088 = vdwg.mxu0
      %p1089 = scmp.eq.s32.totalorder %s19, 0
      %p1090 = scmp.eq.s32.totalorder %s20, 0
      %p1091 = pnand %p1089, %p1090
      %p1092 = pneg %p1091
      // Predicated region
      $region37: #{discriminator64.6} parent=35 // pred_check
        _
      $region38: #{discriminator64.6} parent=35 // pred_check_branch
        %1094 = sbr.rel (%p1091) target = $region40
      $region39: #{discriminator64.6} parent=35 // pred_region
        %1095 = vst [vmem:[#allocation2] sm:$0x1] 0.0
        %1096 = vst [vmem:[#allocation3] sm:$0x1] 0.0
      $region40: #{discriminator64.6} parent=35 // pred_fallthru
        _
      // Predicated region
      $region41: #{discriminator64.6} parent=35 // pred_check
        %p1097 = pneg %p1089
      $region42: #{discriminator64.6} parent=35 // pred_check_branch
        %1099 = sbr.rel (%p1097) target = $region44
      $region43: #{discriminator64.6} parent=35 // pred_region
        %v1100 = vld [vmem:[#allocation2] sm:$0x1]
        %v1101 = vadd.f32 %v1027, %v1030
        %v1102 = vadd.f32 %v1101, %v1035
        %v1103 = vadd.f32 %v1102, %v1038
        %v1104 = vadd.f32 %v1103, %v1043
        %v1105 = vadd.f32 %v1104, %v1046
        %v1106 = vadd.f32 %v1105, %v1051
        %v1107 = vadd.f32 %v1106, %v1054
        %v1108 = vadd.f32 %v1107, %v1059
        %v1109 = vadd.f32 %v1108, %v1062
        %v1110 = vadd.f32 %v1109, %v1067
        %v1111 = vadd.f32 %v1110, %v1070
        %v1112 = vadd.f32 %v1111, %v1075
        %v1113 = vadd.f32 %v1112, %v1078
        %v1114 = vadd.f32 %v1113, %v1083
        %v1115 = vadd.f32 %v1114, %v1086
        %v1116 = vrot.slane %v1115, 4
        %v1117 = vadd.f32 %v1115, %v1116
        %v1118 = vrot.slane %v1117, 2
        %v1119 = vadd.f32 %v1117, %v1118
        %v1120 = vrot.slane %v1119, 1
        %v1121 = vadd.f32 %v1119, %v1120
        %v1122 = vadd.f32 %v1100, %v1121
        %1123 = vst [vmem:[#allocation2] sm:$0x1] %v1122
        %v1124 = vld [vmem:[#allocation3] sm:$0x1]
        %v1125 = vmul.f32 %v1027, %v1027
        %v1126 = vmul.f32 %v1030, %v1030
        %v1127 = vmul.f32 %v1035, %v1035
        %v1128 = vmul.f32 %v1038, %v1038
        %v1129 = vmul.f32 %v1043, %v1043
        %v1130 = vmul.f32 %v1046, %v1046
        %v1131 = vmul.f32 %v1051, %v1051
        %v1132 = vmul.f32 %v1054, %v1054
        %v1133 = vmul.f32 %v1059, %v1059
        %v1134 = vmul.f32 %v1062, %v1062
        %v1135 = vmul.f32 %v1067, %v1067
        %v1136 = vmul.f32 %v1070, %v1070
        %v1137 = vmul.f32 %v1075, %v1075
        %v1138 = vmul.f32 %v1078, %v1078
        %v1139 = vmul.f32 %v1083, %v1083
        %v1140 = vmul.f32 %v1086, %v1086
        %v1141 = vadd.f32 %v1125, %v1126
        %v1142 = vadd.f32 %v1141, %v1127
        %v1143 = vadd.f32 %v1142, %v1128
        %v1144 = vadd.f32 %v1143, %v1129
        %v1145 = vadd.f32 %v1144, %v1130
        %v1146 = vadd.f32 %v1145, %v1131
        %v1147 = vadd.f32 %v1146, %v1132
        %v1148 = vadd.f32 %v1147, %v1133
        %v1149 = vadd.f32 %v1148, %v1134
        %v1150 = vadd.f32 %v1149, %v1135
        %v1151 = vadd.f32 %v1150, %v1136
        %v1152 = vadd.f32 %v1151, %v1137
        %v1153 = vadd.f32 %v1152, %v1138
        %v1154 = vadd.f32 %v1153, %v1139
        %v1155 = vadd.f32 %v1154, %v1140
        %v1156 = vrot.slane %v1155, 4
        %v1157 = vadd.f32 %v1155, %v1156
        %v1158 = vrot.slane %v1157, 2
        %v1159 = vadd.f32 %v1157, %v1158
        %v1160 = vrot.slane %v1159, 1
        %v1161 = vadd.f32 %v1159, %v1160
        %v1162 = vadd.f32 %v1124, %v1161
        %1163 = vst [vmem:[#allocation3] sm:$0x1] %v1162
      $region44: #{discriminator64.6} parent=35 // pred_fallthru
        _
      %p1164 = scmp.eq.s32.totalorder %s19, 1
      // Predicated region
      $region45: #{discriminator64.6} parent=35 // pred_check
        %p1165 = pneg %p1164
      $region46: #{discriminator64.6} parent=35 // pred_check_branch
        %1167 = sbr.rel (%p1165) target = $region48
      $region47: #{discriminator64.6} parent=35 // pred_region
        %v1168 = vld [vmem:[#allocation2] sm:$0x1]
        %v1169 = vmul.f32 %v1168, 0.0078125
        %v1170 = vld [vmem:[#allocation3] sm:$0x1]
        %v1171 = vmul.f32 %v1170, 0.0078125
        %v1172 = vmul.f32 %v1169, %v1169
        %v1173 = vsub.f32 %v1171, %v1172
        %v1174 = vmax.f32 %v1173, 0.0
        %v1175 = vld [vmem:[%s2] sm:$0x1]
        %v1176 = vadd.f32 %v1174, 1e-05
        %v1177 = vrsqrt.pop %v1176
        %v1178 = vmul.f32 %v1175, %v1177
        %v1179 = vld [vmem:[%s3] sm:$0x1]
        %v1180 = vmul.f32 %v1169, %v1178
        %v1181 = vsub.f32 %v1179, %v1180
        %v1183 = vlaneseq
        %v1184 = vshrl.u32 %v1183, 7
        %v1185 = vsub.s32 0, %v1184
        %v1186 = vrot.slane %v1178, %v1185
        %v1188 = vmul.f32 %v1027, %v1186
        %v1189 = vmul.f32 %v1030, %v1186
        %v1190 = vmul.f32 %v1035, %v1186
        %v1191 = vmul.f32 %v1038, %v1186
        %v1192 = vmul.f32 %v1043, %v1186
        %v1193 = vmul.f32 %v1046, %v1186
        %v1194 = vmul.f32 %v1051, %v1186
        %v1195 = vmul.f32 %v1054, %v1186
        %v1196 = vmul.f32 %v1059, %v1186
        %v1197 = vmul.f32 %v1062, %v1186
        %v1198 = vmul.f32 %v1067, %v1186
        %v1199 = vmul.f32 %v1070, %v1186
        %v1200 = vmul.f32 %v1075, %v1186
        %v1201 = vmul.f32 %v1078, %v1186
        %v1202 = vmul.f32 %v1083, %v1186
        %v1203 = vmul.f32 %v1086, %v1186
        %v1205 = vlaneseq
        %v1206 = vshrl.u32 %v1205, 7
        %v1207 = vsub.s32 0, %v1206
        %v1208 = vrot.slane %v1181, %v1207
        %v1210 = vadd.f32 %v1188, %v1208
        %v1211 = vadd.f32 %v1189, %v1208
        %v1212 = vadd.f32 %v1190, %v1208
        %v1213 = vadd.f32 %v1191, %v1208
        %v1214 = vadd.f32 %v1192, %v1208
        %v1215 = vadd.f32 %v1193, %v1208
        %v1216 = vadd.f32 %v1194, %v1208
        %v1217 = vadd.f32 %v1195, %v1208
        %v1218 = vadd.f32 %v1196, %v1208
        %v1219 = vadd.f32 %v1197, %v1208
        %v1220 = vadd.f32 %v1198, %v1208
        %v1221 = vadd.f32 %v1199, %v1208
        %v1222 = vadd.f32 %v1200, %v1208
        %v1223 = vadd.f32 %v1201, %v1208
        %v1224 = vadd.f32 %v1202, %v1208
        %v1225 = vadd.f32 %v1203, %v1208
        %vm1226 = vcmp.gt.f32.partialorder %v1210, 0.0
        %vm1227 = vcmp.gt.f32.partialorder %v1211, 0.0
        %vm1228 = vcmp.gt.f32.partialorder %v1212, 0.0
        %vm1229 = vcmp.gt.f32.partialorder %v1213, 0.0
        %vm1230 = vcmp.gt.f32.partialorder %v1214, 0.0
        %vm1231 = vcmp.gt.f32.partialorder %v1215, 0.0
        %vm1232 = vcmp.gt.f32.partialorder %v1216, 0.0
        %vm1233 = vcmp.gt.f32.partialorder %v1217, 0.0
        %vm1234 = vcmp.gt.f32.partialorder %v1218, 0.0
        %vm1235 = vcmp.gt.f32.partialorder %v1219, 0.0
        %vm1236 = vcmp.gt.f32.partialorder %v1220, 0.0
        %vm1237 = vcmp.gt.f32.partialorder %v1221, 0.0
        %vm1238 = vcmp.gt.f32.partialorder %v1222, 0.0
        %vm1239 = vcmp.gt.f32.partialorder %v1223, 0.0
        %vm1240 = vcmp.gt.f32.partialorder %v1224, 0.0
        %vm1241 = vcmp.gt.f32.partialorder %v1225, 0.0
        %v1242 = vmul.f32 %v1210, 0.2
        %v1243 = vmul.f32 %v1211, 0.2
        %v1244 = vmul.f32 %v1212, 0.2
        %v1245 = vmul.f32 %v1213, 0.2
        %v1246 = vmul.f32 %v1214, 0.2
        %v1247 = vmul.f32 %v1215, 0.2
        %v1248 = vmul.f32 %v1216, 0.2
        %v1249 = vmul.f32 %v1217, 0.2
        %v1250 = vmul.f32 %v1218, 0.2
        %v1251 = vmul.f32 %v1219, 0.2
        %v1252 = vmul.f32 %v1220, 0.2
        %v1253 = vmul.f32 %v1221, 0.2
        %v1254 = vmul.f32 %v1222, 0.2
        %v1255 = vmul.f32 %v1223, 0.2
        %v1256 = vmul.f32 %v1224, 0.2
        %v1257 = vmul.f32 %v1225, 0.2
        %v1258 = vsel %vm1226, %v1210, %v1242
        %v1259 = vsel %vm1227, %v1211, %v1243
        %v1260 = vsel %vm1228, %v1212, %v1244
        %v1261 = vsel %vm1229, %v1213, %v1245
        %v1262 = vsel %vm1230, %v1214, %v1246
        %v1263 = vsel %vm1231, %v1215, %v1247
        %v1264 = vsel %vm1232, %v1216, %v1248
        %v1265 = vsel %vm1233, %v1217, %v1249
        %v1266 = vsel %vm1234, %v1218, %v1250
        %v1267 = vsel %vm1235, %v1219, %v1251
        %v1268 = vsel %vm1236, %v1220, %v1252
        %v1269 = vsel %vm1237, %v1221, %v1253
        %v1270 = vsel %vm1238, %v1222, %v1254
        %v1271 = vsel %vm1239, %v1223, %v1255
        %v1272 = vsel %vm1240, %v1224, %v1256
        %v1273 = vsel %vm1241, %v1225, %v1257
        %v1274 = vpack.c.bf16 %v1259, %v1258
        %v1275 = vpack.c.bf16 %v1261, %v1260
        %v1276 = vpack.c.bf16 %v1263, %v1262
        %v1277 = vpack.c.bf16 %v1265, %v1264
        %v1278 = vpack.c.bf16 %v1267, %v1266
        %v1279 = vpack.c.bf16 %v1269, %v1268
        %v1280 = vpack.c.bf16 %v1271, %v1270
        %v1281 = vpack.c.bf16 %v1273, %v1272
        %v1290 = vunpack.c.l.b16 %v1274
        %v1291 = vunpack.c.h.b16 %v1274
        %v1292 = vunpack.c.l.b16 %v1275
        %v1293 = vunpack.c.h.b16 %v1275
        %v1294 = vunpack.c.l.b16 %v1276
        %v1295 = vunpack.c.h.b16 %v1276
        %v1296 = vunpack.c.l.b16 %v1277
        %v1297 = vunpack.c.h.b16 %v1277
        %v1298 = vunpack.c.l.b16 %v1278
        %v1299 = vunpack.c.h.b16 %v1278
        %v1300 = vunpack.c.l.b16 %v1279
        %v1301 = vunpack.c.h.b16 %v1279
        %v1302 = vunpack.c.l.b16 %v1280
        %v1303 = vunpack.c.h.b16 %v1280
        %v1304 = vunpack.c.l.b16 %v1281
        %v1305 = vunpack.c.h.b16 %v1281
        %v1306 = vpack.c.b16 %v1290, %v1290
        %v1307 = vpack.c.b16 %v1291, %v1291
        %v1308 = vpack.c.b16 %v1292, %v1292
        %v1309 = vpack.c.b16 %v1293, %v1293
        %v1310 = vpack.c.b16 %v1294, %v1294
        %v1311 = vpack.c.b16 %v1295, %v1295
        %v1312 = vpack.c.b16 %v1296, %v1296
        %v1313 = vpack.c.b16 %v1297, %v1297
        %v1314 = vpack.c.b16 %v1298, %v1298
        %v1315 = vpack.c.b16 %v1299, %v1299
        %v1316 = vpack.c.b16 %v1300, %v1300
        %v1317 = vpack.c.b16 %v1301, %v1301
        %v1318 = vpack.c.b16 %v1302, %v1302
        %v1319 = vpack.c.b16 %v1303, %v1303
        %v1320 = vpack.c.b16 %v1304, %v1304
        %v1321 = vpack.c.b16 %v1305, %v1305
        %1338 = vst [vmem:[%s218] sm:$0xf] %v1306
        %1339 = vst [vmem:[%s218 + $0x4] sm:$0xf] %v1307
        %1340 = vst [vmem:[%s218 + $0x8] sm:$0xf] %v1308
        %1341 = vst [vmem:[%s218 + $0xc] sm:$0xf] %v1309
        %1342 = vst [vmem:[%s218 + $0x10] sm:$0xf] %v1310
        %1343 = vst [vmem:[%s218 + $0x14] sm:$0xf] %v1311
        %1344 = vst [vmem:[%s218 + $0x18] sm:$0xf] %v1312
        %1345 = vst [vmem:[%s218 + $0x1c] sm:$0xf] %v1313
        %1346 = vst [vmem:[%s218 + $0x20] sm:$0xf] %v1314
        %1347 = vst [vmem:[%s218 + $0x24] sm:$0xf] %v1315
        %1348 = vst [vmem:[%s218 + $0x28] sm:$0xf] %v1316
        %1349 = vst [vmem:[%s218 + $0x2c] sm:$0xf] %v1317
        %1350 = vst [vmem:[%s218 + $0x30] sm:$0xf] %v1318
        %1351 = vst [vmem:[%s218 + $0x34] sm:$0xf] %v1319
        %1352 = vst [vmem:[%s218 + $0x38] sm:$0xf] %v1320
        %1353 = vst [vmem:[%s218 + $0x3c] sm:$0xf] %v1321
      $region48: #{discriminator64.6} parent=35 // pred_fallthru
        _
      %s1354 = smul.u32 %s19, %s20
      %s1355 = smul.u32 16, %s1354
      %p1356 = scmp.lt.s32.totalorder %s1355, 15
      %s1357 = scalar_select %p1356, %s1355, 15
      %s1358 = smul.addr %s1357, 4
      %s1359 = scalar_lea.vmem %s4, %s1358
      // Predicated region
      $region49: #{discriminator64.6} parent=35 // pred_check
        %p1360 = pneg %p136
      $region50: #{discriminator64.6} parent=35 // pred_check_branch
        %1362 = sbr.rel (%p1360) target = $region52
      $region51: #{discriminator64.6} parent=35 // pred_region
        %s1363 = smul.u32 %s19, %s20
        %s1364 = smul.u32 16, %s1363
      $region52: #{discriminator64.6} parent=35 // pred_fallthru
        _
    $region36: #{discriminator64.6} parent=5 // pred_fallthru
      _
    %p1365 = scmp.le.s32.totalorder 2, %s10
    // Predicated region
    $region53: #{discriminator64.6} parent=5 // pred_check
      %p1366 = pneg %p1365
    $region54: #{discriminator64.6} parent=5 // pred_check_branch
      %1368 = sbr.rel (%p1366) target = $region56
    $region55: #{discriminator64.6} parent=5 // pred_region
      %s1369 = ssub.s32 %s10, 2
      // Predicated region
      $region57: #{discriminator64.6} parent=55 // pred_check
        %p1370 = pneg %p142
      $region58: #{discriminator64.6} parent=55 // pred_check_branch
        %1372 = sbr.rel (%p1370) target = $region60
      $region59: #{discriminator64.6} parent=55 // pred_region
        %s1373 = smul.u32 %s21, %s22
        %s1374 = smul.u32 16, %s1373
        %p1375 = scmp.lt.s32.totalorder %s1374, 15
        %s1376 = scalar_select %p1375, %s1374, 15
        %s1377 = smul.addr %s1376, 4
        %s1378 = scalar_lea.vmem %s4, %s1377
      $region60: #{discriminator64.6} parent=55 // pred_fallthru
        _
    $region56: #{discriminator64.6} parent=5 // pred_fallthru
      _
  $region6: #{discriminator64.6} parent=0 // loop_footer
    %s14 = sadd.s32 1, %s10
  $region7: #{discriminator64.6} parent=0 // loop_footer_branch
    %9 = sbr.rel target = $region3
  $region8: #{discriminator64.6} parent=0 // loop_exit
    _

// kernel: discriminator64.7
$region0: #{discriminator64.7}
  #allocation0 [shape = 'u32[]', space=smem, size = 0x4, offset = 0x4, fixed_abs, tag = 'smem constant byte address 0x4 - core index']
  #allocation1 [shape = 'u32[144,128]{1,0:T(1,128)}', space=vmem, size = 0x12000, scoped, tag = 'internal scratch']
  #allocation2 [shape = 'f32[1,1]{1,0:T(1,128)S(1)}', space=vmem, size = 0x200, scoped, tag = 'scoped memory for discriminator64.7']
  %s0 = inlined_call_operand.vmem [shape: bf16[32,1408], index: 0, kind: input, shape index: {}]
  %s1 = inlined_call_operand.vmem [shape: bf16[1408,128], index: 1, kind: input, shape index: {}]
  %s2 = inlined_call_operand.vmem [shape: f32[1,128], index: 2, kind: input, shape index: {}]
  %s3 = inlined_call_operand.vmem [shape: f32[1,128], index: 3, kind: input, shape index: {}]
  %s4 = inlined_call_operand.vmem [shape: f32[16,128], index: 4, kind: input, shape index: {}]
  %s5 = inlined_call_operand.<no memory space> [shape: f32[1,1], index: 5, kind: input, shape index: {}]
  %s6 = inlined_call_operand.vmem [shape: f32[2,1], index: 6, kind: output, shape index: {}]
  %s7 = sld [smem:[#allocation0]]
  $region34: #{discriminator64.7} parent=0
    _
  %s9 = ssub.s32 1, %s7
  %s10 = scalar_select 0, %s9, %s7
  %v11 = vstv %s5
  %12 = vst [vmem:[#allocation2] sm:$0x1] %v11
  // Predicated region
  $region2: #{discriminator64.7} parent=0 // pred_check
    _
  $region3: #{discriminator64.7} parent=0 // pred_check_branch
    %14 = sbr.rel (0) target = $region5
  $region4: #{discriminator64.7} parent=0 // pred_region
    _
  $region5: #{discriminator64.7} parent=0 // pred_fallthru
    _
  // Predicated region
  $region6: #{discriminator64.7} parent=0 // pred_check
    _
  $region7: #{discriminator64.7} parent=0 // pred_check_branch
    %16 = sbr.rel (0) target = $region9
  $region8: #{discriminator64.7} parent=0 // pred_region
    _
  $region9: #{discriminator64.7} parent=0 // pred_fallthru
    _
  // Predicated region
  $region10: #{discriminator64.7} parent=0 // pred_check
    _
  $region11: #{discriminator64.7} parent=0 // pred_check_branch
    %18 = sbr.rel (0) target = $region13
  $region12: #{discriminator64.7} parent=0 // pred_region
    _
  $region13: #{discriminator64.7} parent=0 // pred_fallthru
    _
  // Predicated region
  $region14: #{discriminator64.7} parent=0 // pred_check
    _
  $region15: #{discriminator64.7} parent=0 // pred_check_branch
    %20 = sbr.rel (0) target = $region17
  $region16: #{discriminator64.7} parent=0 // pred_region
    _
  $region17: #{discriminator64.7} parent=0 // pred_fallthru
    _
  // Predicated region
  $region18: #{discriminator64.7} parent=0 // pred_check
    _
  $region19: #{discriminator64.7} parent=0 // pred_check_branch
    %22 = sbr.rel (0) target = $region21
  $region20: #{discriminator64.7} parent=0 // pred_region
    _
  $region21: #{discriminator64.7} parent=0 // pred_fallthru
    _
  // Predicated region
  $region22: #{discriminator64.7} parent=0 // pred_check
    _
  $region23: #{discriminator64.7} parent=0 // pred_check_branch
    %24 = sbr.rel (0) target = $region25
  $region24: #{discriminator64.7} parent=0 // pred_region
    _
  $region25: #{discriminator64.7} parent=0 // pred_fallthru
    _
  %v26 = vld [vmem:[%s0] sm:$0xff]
  %v27 = vld [vmem:[%s0 + $0x8] sm:$0xff]
  %v28 = vld [vmem:[%s0 + $0x10] sm:$0xff]
  %v29 = vld [vmem:[%s0 + $0x18] sm:$0xff]
  %v30 = vld [vmem:[%s0 + $0x20] sm:$0xff]
  %v31 = vld [vmem:[%s0 + $0x28] sm:$0xf]
  %v32 = vld [vmem:[%s0 + $0x2c] sm:$0xff]
  %v33 = vld [vmem:[%s0 + $0x34] sm:$0xff]
  %v34 = vld [vmem:[%s0 + $0x3c] sm:$0xff]
  %v35 = vld [vmem:[%s0 + $0x44] sm:$0xff]
  %v36 = vld [vmem:[%s0 + $0x4c] sm:$0xff]
  %v37 = vld [vmem:[%s0 + $0x54] sm:$0xf]
  %v38 = vld [vmem:[%s0 + $0x58] sm:$0xff]
  %v39 = vld [vmem:[%s0 + $0x60] sm:$0xff]
  %v40 = vld [vmem:[%s0 + $0x68] sm:$0xff]
  %v41 = vld [vmem:[%s0 + $0x70] sm:$0xff]
  %v42 = vld [vmem:[%s0 + $0x78] sm:$0xff]
  %v43 = vld [vmem:[%s0 + $0x80] sm:$0xf]
  %v44 = vld [vmem:[%s0 + $0x84] sm:$0xff]
  %v45 = vld [vmem:[%s0 + $0x8c] sm:$0xff]
  %v46 = vld [vmem:[%s0 + $0x94] sm:$0xff]
  %v47 = vld [vmem:[%s0 + $0x9c] sm:$0xff]
  %v48 = vld [vmem:[%s0 + $0xa4] sm:$0xff]
  %v49 = vld [vmem:[%s0 + $0xac] sm:$0xf]
  %v50 = vld [vmem:[%s1] sm:$0xf]
  %v51 = vld [vmem:[%s1 + $0x4] sm:$0xf]
  %v52 = vld [vmem:[%s1 + $0x8] sm:$0xf]
  %v53 = vld [vmem:[%s1 + $0xc] sm:$0xf]
  %v54 = vld [vmem:[%s1 + $0x10] sm:$0xf]
  %v55 = vld [vmem:[%s1 + $0x14] sm:$0xf]
  %v56 = vld [vmem:[%s1 + $0x18] sm:$0xf]
  %v57 = vld [vmem:[%s1 + $0x1c] sm:$0xf]
  %v58 = vld [vmem:[%s1 + $0x20] sm:$0xf]
  %v59 = vld [vmem:[%s1 + $0x24] sm:$0xf]
  %v60 = vld [vmem:[%s1 + $0x28] sm:$0xf]
  %v61 = vld [vmem:[%s1 + $0x2c] sm:$0xf]
  %v62 = vld [vmem:[%s1 + $0x30] sm:$0xf]
  %v63 = vld [vmem:[%s1 + $0x34] sm:$0xf]
  %v64 = vld [vmem:[%s1 + $0x38] sm:$0xf]
  %v65 = vld [vmem:[%s1 + $0x3c] sm:$0xf]
  %v66 = vld [vmem:[%s1 + $0x40] sm:$0xf]
  %v67 = vld [vmem:[%s1 + $0x44] sm:$0xf]
  %v68 = vld [vmem:[%s1 + $0x48] sm:$0xf]
  %v69 = vld [vmem:[%s1 + $0x4c] sm:$0xf]
  %v70 = vld [vmem:[%s1 + $0x50] sm:$0xf]
  %v71 = vld [vmem:[%s1 + $0x54] sm:$0xf]
  %v72 = vld [vmem:[%s1 + $0x58] sm:$0xf]
  %v73 = vld [vmem:[%s1 + $0x5c] sm:$0xf]
  %v74 = vld [vmem:[%s1 + $0x60] sm:$0xf]
  %v75 = vld [vmem:[%s1 + $0x64] sm:$0xf]
  %v76 = vld [vmem:[%s1 + $0x68] sm:$0xf]
  %v77 = vld [vmem:[%s1 + $0x6c] sm:$0xf]
  %v78 = vld [vmem:[%s1 + $0x70] sm:$0xf]
  %v79 = vld [vmem:[%s1 + $0x74] sm:$0xf]
  %v80 = vld [vmem:[%s1 + $0x78] sm:$0xf]
  %v81 = vld [vmem:[%s1 + $0x7c] sm:$0xf]
  %v82 = vld [vmem:[%s1 + $0x80] sm:$0xf]
  %v83 = vld [vmem:[%s1 + $0x84] sm:$0xf]
  %v84 = vld [vmem:[%s1 + $0x88] sm:$0xf]
  %v85 = vld [vmem:[%s1 + $0x8c] sm:$0xf]
  %v86 = vld [vmem:[%s1 + $0x90] sm:$0xf]
  %v87 = vld [vmem:[%s1 + $0x94] sm:$0xf]
  %v88 = vld [vmem:[%s1 + $0x98] sm:$0xf]
  %v89 = vld [vmem:[%s1 + $0x9c] sm:$0xf]
  %v90 = vld [vmem:[%s1 + $0xa0] sm:$0xf]
  %v91 = vld [vmem:[%s1 + $0xa4] sm:$0xf]
  %v92 = vld [vmem:[%s1 + $0xa8] sm:$0xf]
  %v93 = vld [vmem:[%s1 + $0xac] sm:$0xf]
  %v94 = vld [vmem:[%s1 + $0xb0] sm:$0xf]
  %v95 = vld [vmem:[%s1 + $0xb4] sm:$0xf]
  %v96 = vld [vmem:[%s1 + $0xb8] sm:$0xf]
  %v97 = vld [vmem:[%s1 + $0xbc] sm:$0xf]
  %v98 = vld [vmem:[%s1 + $0xc0] sm:$0xf]
  %v99 = vld [vmem:[%s1 + $0xc4] sm:$0xf]
  %v100 = vld [vmem:[%s1 + $0xc8] sm:$0xf]
  %v101 = vld [vmem:[%s1 + $0xcc] sm:$0xf]
  %v102 = vld [vmem:[%s1 + $0xd0] sm:$0xf]
  %v103 = vld [vmem:[%s1 + $0xd4] sm:$0xf]
  %v104 = vld [vmem:[%s1 + $0xd8] sm:$0xf]
  %v105 = vld [vmem:[%s1 + $0xdc] sm:$0xf]
  %v106 = vld [vmem:[%s1 + $0xe0] sm:$0xf]
  %v107 = vld [vmem:[%s1 + $0xe4] sm:$0xf]
  %v108 = vld [vmem:[%s1 + $0xe8] sm:$0xf]
  %v109 = vld [vmem:[%s1 + $0xec] sm:$0xf]
  %v110 = vld [vmem:[%s1 + $0xf0] sm:$0xf]
  %v111 = vld [vmem:[%s1 + $0xf4] sm:$0xf]
  %v112 = vld [vmem:[%s1 + $0xf8] sm:$0xf]
  %v113 = vld [vmem:[%s1 + $0xfc] sm:$0xf]
  %v114 = vld [vmem:[%s1 + $0x100] sm:$0xf]
  %v115 = vld [vmem:[%s1 + $0x104] sm:$0xf]
  %v116 = vld [vmem:[%s1 + $0x108] sm:$0xf]
  %v117 = vld [vmem:[%s1 + $0x10c] sm:$0xf]
  %v118 = vld [vmem:[%s1 + $0x110] sm:$0xf]
  %v119 = vld [vmem:[%s1 + $0x114] sm:$0xf]
  %v120 = vld [vmem:[%s1 + $0x118] sm:$0xf]
  %v121 = vld [vmem:[%s1 + $0x11c] sm:$0xf]
  %v122 = vld [vmem:[%s1 + $0x120] sm:$0xf]
  %v123 = vld [vmem:[%s1 + $0x124] sm:$0xf]
  %v124 = vld [vmem:[%s1 + $0x128] sm:$0xf]
  %v125 = vld [vmem:[%s1 + $0x12c] sm:$0xf]
  %v126 = vld [vmem:[%s1 + $0x130] sm:$0xf]
  %v127 = vld [vmem:[%s1 + $0x134] sm:$0xf]
  %v128 = vld [vmem:[%s1 + $0x138] sm:$0xf]
  %v129 = vld [vmem:[%s1 + $0x13c] sm:$0xf]
  %v130 = vld [vmem:[%s1 + $0x140] sm:$0xf]
  %v131 = vld [vmem:[%s1 + $0x144] sm:$0xf]
  %v132 = vld [vmem:[%s1 + $0x148] sm:$0xf]
  %v133 = vld [vmem:[%s1 + $0x14c] sm:$0xf]
  %v134 = vld [vmem:[%s1 + $0x150] sm:$0xf]
  %v135 = vld [vmem:[%s1 + $0x154] sm:$0xf]
  %v136 = vld [vmem:[%s1 + $0x158] sm:$0xf]
  %v137 = vld [vmem:[%s1 + $0x15c] sm:$0xf]
  %v138 = vld [vmem:[%s1 + $0x160] sm:$0xf]
  %v139 = vld [vmem:[%s1 + $0x164] sm:$0xf]
  %v140 = vld [vmem:[%s1 + $0x168] sm:$0xf]
  %v141 = vld [vmem:[%s1 + $0x16c] sm:$0xf]
  %v142 = vld [vmem:[%s1 + $0x170] sm:$0xf]
  %v143 = vld [vmem:[%s1 + $0x174] sm:$0xf]
  %v144 = vld [vmem:[%s1 + $0x178] sm:$0xf]
  %v145 = vld [vmem:[%s1 + $0x17c] sm:$0xf]
  %v146 = vld [vmem:[%s1 + $0x180] sm:$0xf]
  %v147 = vld [vmem:[%s1 + $0x184] sm:$0xf]
  %v148 = vld [vmem:[%s1 + $0x188] sm:$0xf]
  %v149 = vld [vmem:[%s1 + $0x18c] sm:$0xf]
  %v150 = vld [vmem:[%s1 + $0x190] sm:$0xf]
  %v151 = vld [vmem:[%s1 + $0x194] sm:$0xf]
  %v152 = vld [vmem:[%s1 + $0x198] sm:$0xf]
  %v153 = vld [vmem:[%s1 + $0x19c] sm:$0xf]
  %v154 = vld [vmem:[%s1 + $0x1a0] sm:$0xf]
  %v155 = vld [vmem:[%s1 + $0x1a4] sm:$0xf]
  %v156 = vld [vmem:[%s1 + $0x1a8] sm:$0xf]
  %v157 = vld [vmem:[%s1 + $0x1ac] sm:$0xf]
  %v158 = vld [vmem:[%s1 + $0x1b0] sm:$0xf]
  %v159 = vld [vmem:[%s1 + $0x1b4] sm:$0xf]
  %v160 = vld [vmem:[%s1 + $0x1b8] sm:$0xf]
  %v161 = vld [vmem:[%s1 + $0x1bc] sm:$0xf]
  %v162 = vld [vmem:[%s1 + $0x1c0] sm:$0xf]
  %v163 = vld [vmem:[%s1 + $0x1c4] sm:$0xf]
  %v164 = vld [vmem:[%s1 + $0x1c8] sm:$0xf]
  %v165 = vld [vmem:[%s1 + $0x1cc] sm:$0xf]
  %v166 = vld [vmem:[%s1 + $0x1d0] sm:$0xf]
  %v167 = vld [vmem:[%s1 + $0x1d4] sm:$0xf]
  %v168 = vld [vmem:[%s1 + $0x1d8] sm:$0xf]
  %v169 = vld [vmem:[%s1 + $0x1dc] sm:$0xf]
  %v170 = vld [vmem:[%s1 + $0x1e0] sm:$0xf]
  %v171 = vld [vmem:[%s1 + $0x1e4] sm:$0xf]
  %v172 = vld [vmem:[%s1 + $0x1e8] sm:$0xf]
  %v173 = vld [vmem:[%s1 + $0x1ec] sm:$0xf]
  %v174 = vld [vmem:[%s1 + $0x1f0] sm:$0xf]
  %v175 = vld [vmem:[%s1 + $0x1f4] sm:$0xf]
  %v176 = vld [vmem:[%s1 + $0x1f8] sm:$0xf]
  %v177 = vld [vmem:[%s1 + $0x1fc] sm:$0xf]
  %v178 = vld [vmem:[%s1 + $0x200] sm:$0xf]
  %v179 = vld [vmem:[%s1 + $0x204] sm:$0xf]
  %v180 = vld [vmem:[%s1 + $0x208] sm:$0xf]
  %v181 = vld [vmem:[%s1 + $0x20c] sm:$0xf]
  %v182 = vld [vmem:[%s1 + $0x210] sm:$0xf]
  %v183 = vld [vmem:[%s1 + $0x214] sm:$0xf]
  %v184 = vld [vmem:[%s1 + $0x218] sm:$0xf]
  %v185 = vld [vmem:[%s1 + $0x21c] sm:$0xf]
  %v186 = vld [vmem:[%s1 + $0x220] sm:$0xf]
  %v187 = vld [vmem:[%s1 + $0x224] sm:$0xf]
  %v188 = vld [vmem:[%s1 + $0x228] sm:$0xf]
  %v189 = vld [vmem:[%s1 + $0x22c] sm:$0xf]
  %v190 = vld [vmem:[%s1 + $0x230] sm:$0xf]
  %v191 = vld [vmem:[%s1 + $0x234] sm:$0xf]
  %v192 = vld [vmem:[%s1 + $0x238] sm:$0xf]
  %v193 = vld [vmem:[%s1 + $0x23c] sm:$0xf]
  %v194 = vld [vmem:[%s1 + $0x240] sm:$0xf]
  %v195 = vld [vmem:[%s1 + $0x244] sm:$0xf]
  %v196 = vld [vmem:[%s1 + $0x248] sm:$0xf]
  %v197 = vld [vmem:[%s1 + $0x24c] sm:$0xf]
  %v198 = vld [vmem:[%s1 + $0x250] sm:$0xf]
  %v199 = vld [vmem:[%s1 + $0x254] sm:$0xf]
  %v200 = vld [vmem:[%s1 + $0x258] sm:$0xf]
  %v201 = vld [vmem:[%s1 + $0x25c] sm:$0xf]
  %v202 = vld [vmem:[%s1 + $0x260] sm:$0xf]
  %v203 = vld [vmem:[%s1 + $0x264] sm:$0xf]
  %v204 = vld [vmem:[%s1 + $0x268] sm:$0xf]
  %v205 = vld [vmem:[%s1 + $0x26c] sm:$0xf]
  %v206 = vld [vmem:[%s1 + $0x270] sm:$0xf]
  %v207 = vld [vmem:[%s1 + $0x274] sm:$0xf]
  %v208 = vld [vmem:[%s1 + $0x278] sm:$0xf]
  %v209 = vld [vmem:[%s1 + $0x27c] sm:$0xf]
  %v210 = vld [vmem:[%s1 + $0x280] sm:$0xf]
  %v211 = vld [vmem:[%s1 + $0x284] sm:$0xf]
  %v212 = vld [vmem:[%s1 + $0x288] sm:$0xf]
  %v213 = vld [vmem:[%s1 + $0x28c] sm:$0xf]
  %v214 = vld [vmem:[%s1 + $0x290] sm:$0xf]
  %v215 = vld [vmem:[%s1 + $0x294] sm:$0xf]
  %v216 = vld [vmem:[%s1 + $0x298] sm:$0xf]
  %v217 = vld [vmem:[%s1 + $0x29c] sm:$0xf]
  %v218 = vld [vmem:[%s1 + $0x2a0] sm:$0xf]
  %v219 = vld [vmem:[%s1 + $0x2a4] sm:$0xf]
  %v220 = vld [vmem:[%s1 + $0x2a8] sm:$0xf]
  %v221 = vld [vmem:[%s1 + $0x2ac] sm:$0xf]
  %v222 = vld [vmem:[%s1 + $0x2b0] sm:$0xf]
  %v223 = vld [vmem:[%s1 + $0x2b4] sm:$0xf]
  %v224 = vld [vmem:[%s1 + $0x2b8] sm:$0xf]
  %v225 = vld [vmem:[%s1 + $0x2bc] sm:$0xf]
  %v250 = vunpack.c.l.b16 %v26
  %v251 = vunpack.c.h.b16 %v26
  %v252 = vunpack.c.l.b16 %v27
  %v253 = vunpack.c.h.b16 %v27
  %v254 = vunpack.c.l.b16 %v28
  %v255 = vunpack.c.h.b16 %v28
  %v256 = vunpack.c.l.b16 %v29
  %v257 = vunpack.c.h.b16 %v29
  %v258 = vunpack.c.l.b16 %v30
  %v259 = vunpack.c.h.b16 %v30
  %v260 = vunpack.c.l.b16 %v31
  %v261 = vunpack.c.l.b16 %v32
  %v262 = vunpack.c.h.b16 %v32
  %v263 = vunpack.c.l.b16 %v33
  %v264 = vunpack.c.h.b16 %v33
  %v265 = vunpack.c.l.b16 %v34
  %v266 = vunpack.c.h.b16 %v34
  %v267 = vunpack.c.l.b16 %v35
  %v268 = vunpack.c.h.b16 %v35
  %v269 = vunpack.c.l.b16 %v36
  %v270 = vunpack.c.h.b16 %v36
  %v271 = vunpack.c.l.b16 %v37
  %v272 = vunpack.c.l.b16 %v38
  %v273 = vunpack.c.h.b16 %v38
  %v274 = vunpack.c.l.b16 %v39
  %v275 = vunpack.c.h.b16 %v39
  %v276 = vunpack.c.l.b16 %v40
  %v277 = vunpack.c.h.b16 %v40
  %v278 = vunpack.c.l.b16 %v41
  %v279 = vunpack.c.h.b16 %v41
  %v280 = vunpack.c.l.b16 %v42
  %v281 = vunpack.c.h.b16 %v42
  %v282 = vunpack.c.l.b16 %v43
  %v283 = vunpack.c.l.b16 %v44
  %v284 = vunpack.c.h.b16 %v44
  %v285 = vunpack.c.l.b16 %v45
  %v286 = vunpack.c.h.b16 %v45
  %v287 = vunpack.c.l.b16 %v46
  %v288 = vunpack.c.h.b16 %v46
  %v289 = vunpack.c.l.b16 %v47
  %v290 = vunpack.c.h.b16 %v47
  %v291 = vunpack.c.l.b16 %v48
  %v292 = vunpack.c.h.b16 %v48
  %v293 = vunpack.c.l.b16 %v49
  %v294 = vpack.c.b16 %v261, %v250
  %v295 = vpack.c.b16 %v262, %v251
  %v296 = vpack.c.b16 %v263, %v252
  %v297 = vpack.c.b16 %v264, %v253
  %v298 = vpack.c.b16 %v265, %v254
  %v299 = vpack.c.b16 %v266, %v255
  %v300 = vpack.c.b16 %v267, %v256
  %v301 = vpack.c.b16 %v268, %v257
  %v302 = vpack.c.b16 %v269, %v258
  %v303 = vpack.c.b16 %v270, %v259
  %v304 = vpack.c.b16 %v271, %v260
  %v305 = vpack.c.b16 %v283, %v272
  %v306 = vpack.c.b16 %v284, %v273
  %v307 = vpack.c.b16 %v285, %v274
  %v308 = vpack.c.b16 %v286, %v275
  %v309 = vpack.c.b16 %v287, %v276
  %v310 = vpack.c.b16 %v288, %v277
  %v311 = vpack.c.b16 %v289, %v278
  %v312 = vpack.c.b16 %v290, %v279
  %v313 = vpack.c.b16 %v291, %v280
  %v314 = vpack.c.b16 %v292, %v281
  %v315 = vpack.c.b16 %v293, %v282
  %v514 = vunpack.c.l.b16 %v50
  %v515 = vunpack.c.l.b16 %v51
  %v516 = vunpack.c.l.b16 %v52
  %v517 = vunpack.c.l.b16 %v53
  %v518 = vunpack.c.l.b16 %v54
  %v519 = vunpack.c.l.b16 %v55
  %v520 = vunpack.c.l.b16 %v56
  %v521 = vunpack.c.l.b16 %v57
  %v522 = vunpack.c.l.b16 %v58
  %v523 = vunpack.c.l.b16 %v59
  %v524 = vunpack.c.l.b16 %v60
  %v525 = vunpack.c.l.b16 %v61
  %v526 = vunpack.c.l.b16 %v62
  %v527 = vunpack.c.l.b16 %v63
  %v528 = vunpack.c.l.b16 %v64
  %v529 = vunpack.c.l.b16 %v65
  %v530 = vunpack.c.l.b16 %v66
  %v531 = vunpack.c.l.b16 %v67
  %v532 = vunpack.c.l.b16 %v68
  %v533 = vunpack.c.l.b16 %v69
  %v534 = vunpack.c.l.b16 %v70
  %v535 = vunpack.c.l.b16 %v71
  %v536 = vunpack.c.l.b16 %v72
  %v537 = vunpack.c.l.b16 %v73
  %v538 = vunpack.c.l.b16 %v74
  %v539 = vunpack.c.l.b16 %v75
  %v540 = vunpack.c.l.b16 %v76
  %v541 = vunpack.c.l.b16 %v77
  %v542 = vunpack.c.l.b16 %v78
  %v543 = vunpack.c.l.b16 %v79
  %v544 = vunpack.c.l.b16 %v80
  %v545 = vunpack.c.l.b16 %v81
  %v546 = vunpack.c.l.b16 %v82
  %v547 = vunpack.c.l.b16 %v83
  %v548 = vunpack.c.l.b16 %v84
  %v549 = vunpack.c.l.b16 %v85
  %v550 = vunpack.c.l.b16 %v86
  %v551 = vunpack.c.l.b16 %v87
  %v552 = vunpack.c.l.b16 %v88
  %v553 = vunpack.c.l.b16 %v89
  %v554 = vunpack.c.l.b16 %v90
  %v555 = vunpack.c.l.b16 %v91
  %v556 = vunpack.c.l.b16 %v92
  %v557 = vunpack.c.l.b16 %v93
  %v558 = vunpack.c.l.b16 %v94
  %v559 = vunpack.c.l.b16 %v95
  %v560 = vunpack.c.l.b16 %v96
  %v561 = vunpack.c.l.b16 %v97
  %v562 = vunpack.c.l.b16 %v98
  %v563 = vunpack.c.l.b16 %v99
  %v564 = vunpack.c.l.b16 %v100
  %v565 = vunpack.c.l.b16 %v101
  %v566 = vunpack.c.l.b16 %v102
  %v567 = vunpack.c.l.b16 %v103
  %v568 = vunpack.c.l.b16 %v104
  %v569 = vunpack.c.l.b16 %v105
  %v570 = vunpack.c.l.b16 %v106
  %v571 = vunpack.c.l.b16 %v107
  %v572 = vunpack.c.l.b16 %v108
  %v573 = vunpack.c.l.b16 %v109
  %v574 = vunpack.c.l.b16 %v110
  %v575 = vunpack.c.l.b16 %v111
  %v576 = vunpack.c.l.b16 %v112
  %v577 = vunpack.c.l.b16 %v113
  %v578 = vunpack.c.l.b16 %v114
  %v579 = vunpack.c.l.b16 %v115
  %v580 = vunpack.c.l.b16 %v116
  %v581 = vunpack.c.l.b16 %v117
  %v582 = vunpack.c.l.b16 %v118
  %v583 = vunpack.c.l.b16 %v119
  %v584 = vunpack.c.l.b16 %v120
  %v585 = vunpack.c.l.b16 %v121
  %v586 = vunpack.c.l.b16 %v122
  %v587 = vunpack.c.l.b16 %v123
  %v588 = vunpack.c.l.b16 %v124
  %v589 = vunpack.c.l.b16 %v125
  %v590 = vunpack.c.l.b16 %v126
  %v591 = vunpack.c.l.b16 %v127
  %v592 = vunpack.c.l.b16 %v128
  %v593 = vunpack.c.l.b16 %v129
  %v594 = vunpack.c.l.b16 %v130
  %v595 = vunpack.c.l.b16 %v131
  %v596 = vunpack.c.l.b16 %v132
  %v597 = vunpack.c.l.b16 %v133
  %v598 = vunpack.c.l.b16 %v134
  %v599 = vunpack.c.l.b16 %v135
  %v600 = vunpack.c.l.b16 %v136
  %v601 = vunpack.c.l.b16 %v137
  %v602 = vunpack.c.l.b16 %v138
  %v603 = vunpack.c.l.b16 %v139
  %v604 = vunpack.c.l.b16 %v140
  %v605 = vunpack.c.l.b16 %v141
  %v606 = vunpack.c.l.b16 %v142
  %v607 = vunpack.c.l.b16 %v143
  %v608 = vunpack.c.l.b16 %v144
  %v609 = vunpack.c.l.b16 %v145
  %v610 = vunpack.c.l.b16 %v146
  %v611 = vunpack.c.l.b16 %v147
  %v612 = vunpack.c.l.b16 %v148
  %v613 = vunpack.c.l.b16 %v149
  %v614 = vunpack.c.l.b16 %v150
  %v615 = vunpack.c.l.b16 %v151
  %v616 = vunpack.c.l.b16 %v152
  %v617 = vunpack.c.l.b16 %v153
  %v618 = vunpack.c.l.b16 %v154
  %v619 = vunpack.c.l.b16 %v155
  %v620 = vunpack.c.l.b16 %v156
  %v621 = vunpack.c.l.b16 %v157
  %v622 = vunpack.c.l.b16 %v158
  %v623 = vunpack.c.l.b16 %v159
  %v624 = vunpack.c.l.b16 %v160
  %v625 = vunpack.c.l.b16 %v161
  %v626 = vunpack.c.l.b16 %v162
  %v627 = vunpack.c.l.b16 %v163
  %v628 = vunpack.c.l.b16 %v164
  %v629 = vunpack.c.l.b16 %v165
  %v630 = vunpack.c.l.b16 %v166
  %v631 = vunpack.c.l.b16 %v167
  %v632 = vunpack.c.l.b16 %v168
  %v633 = vunpack.c.l.b16 %v169
  %v634 = vunpack.c.l.b16 %v170
  %v635 = vunpack.c.l.b16 %v171
  %v636 = vunpack.c.l.b16 %v172
  %v637 = vunpack.c.l.b16 %v173
  %v638 = vunpack.c.l.b16 %v174
  %v639 = vunpack.c.l.b16 %v175
  %v640 = vunpack.c.l.b16 %v176
  %v641 = vunpack.c.l.b16 %v177
  %v642 = vunpack.c.l.b16 %v178
  %v643 = vunpack.c.l.b16 %v179
  %v644 = vunpack.c.l.b16 %v180
  %v645 = vunpack.c.l.b16 %v181
  %v646 = vunpack.c.l.b16 %v182
  %v647 = vunpack.c.l.b16 %v183
  %v648 = vunpack.c.l.b16 %v184
  %v649 = vunpack.c.l.b16 %v185
  %v650 = vunpack.c.l.b16 %v186
  %v651 = vunpack.c.l.b16 %v187
  %v652 = vunpack.c.l.b16 %v188
  %v653 = vunpack.c.l.b16 %v189
  %v654 = vunpack.c.l.b16 %v190
  %v655 = vunpack.c.l.b16 %v191
  %v656 = vunpack.c.l.b16 %v192
  %v657 = vunpack.c.l.b16 %v193
  %v658 = vunpack.c.l.b16 %v194
  %v659 = vunpack.c.l.b16 %v195
  %v660 = vunpack.c.l.b16 %v196
  %v661 = vunpack.c.l.b16 %v197
  %v662 = vunpack.c.l.b16 %v198
  %v663 = vunpack.c.l.b16 %v199
  %v664 = vunpack.c.l.b16 %v200
  %v665 = vunpack.c.l.b16 %v201
  %v666 = vunpack.c.l.b16 %v202
  %v667 = vunpack.c.l.b16 %v203
  %v668 = vunpack.c.l.b16 %v204
  %v669 = vunpack.c.l.b16 %v205
  %v670 = vunpack.c.l.b16 %v206
  %v671 = vunpack.c.l.b16 %v207
  %v672 = vunpack.c.l.b16 %v208
  %v673 = vunpack.c.l.b16 %v209
  %v674 = vunpack.c.l.b16 %v210
  %v675 = vunpack.c.l.b16 %v211
  %v676 = vunpack.c.l.b16 %v212
  %v677 = vunpack.c.l.b16 %v213
  %v678 = vunpack.c.l.b16 %v214
  %v679 = vunpack.c.l.b16 %v215
  %v680 = vunpack.c.l.b16 %v216
  %v681 = vunpack.c.l.b16 %v217
  %v682 = vunpack.c.l.b16 %v218
  %v683 = vunpack.c.l.b16 %v219
  %v684 = vunpack.c.l.b16 %v220
  %v685 = vunpack.c.l.b16 %v221
  %v686 = vunpack.c.l.b16 %v222
  %v687 = vunpack.c.l.b16 %v223
  %v688 = vunpack.c.l.b16 %v224
  %v689 = vunpack.c.l.b16 %v225
  %v690 = vpack.c.b16 %v515, %v514
  %v691 = vpack.c.b16 %v517, %v516
  %v692 = vpack.c.b16 %v519, %v518
  %v693 = vpack.c.b16 %v521, %v520
  %v694 = vpack.c.b16 %v523, %v522
  %v695 = vpack.c.b16 %v525, %v524
  %v696 = vpack.c.b16 %v527, %v526
  %v697 = vpack.c.b16 %v529, %v528
  %v698 = vpack.c.b16 %v531, %v530
  %v699 = vpack.c.b16 %v533, %v532
  %v700 = vpack.c.b16 %v535, %v534
  %v701 = vpack.c.b16 %v537, %v536
  %v702 = vpack.c.b16 %v539, %v538
  %v703 = vpack.c.b16 %v541, %v540
  %v704 = vpack.c.b16 %v543, %v542
  %v705 = vpack.c.b16 %v545, %v544
  %v706 = vpack.c.b16 %v547, %v546
  %v707 = vpack.c.b16 %v549, %v548
  %v708 = vpack.c.b16 %v551, %v550
  %v709 = vpack.c.b16 %v553, %v552
  %v710 = vpack.c.b16 %v555, %v554
  %v711 = vpack.c.b16 %v557, %v556
  %v712 = vpack.c.b16 %v559, %v558
  %v713 = vpack.c.b16 %v561, %v560
  %v714 = vpack.c.b16 %v563, %v562
  %v715 = vpack.c.b16 %v565, %v564
  %v716 = vpack.c.b16 %v567, %v566
  %v717 = vpack.c.b16 %v569, %v568
  %v718 = vpack.c.b16 %v571, %v570
  %v719 = vpack.c.b16 %v573, %v572
  %v720 = vpack.c.b16 %v575, %v574
  %v721 = vpack.c.b16 %v577, %v576
  %v722 = vpack.c.b16 %v579, %v578
  %v723 = vpack.c.b16 %v581, %v580
  %v724 = vpack.c.b16 %v583, %v582
  %v725 = vpack.c.b16 %v585, %v584
  %v726 = vpack.c.b16 %v587, %v586
  %v727 = vpack.c.b16 %v589, %v588
  %v728 = vpack.c.b16 %v591, %v590
  %v729 = vpack.c.b16 %v593, %v592
  %v730 = vpack.c.b16 %v595, %v594
  %v731 = vpack.c.b16 %v597, %v596
  %v732 = vpack.c.b16 %v599, %v598
  %v733 = vpack.c.b16 %v601, %v600
  %v734 = vpack.c.b16 %v603, %v602
  %v735 = vpack.c.b16 %v605, %v604
  %v736 = vpack.c.b16 %v607, %v606
  %v737 = vpack.c.b16 %v609, %v608
  %v738 = vpack.c.b16 %v611, %v610
  %v739 = vpack.c.b16 %v613, %v612
  %v740 = vpack.c.b16 %v615, %v614
  %v741 = vpack.c.b16 %v617, %v616
  %v742 = vpack.c.b16 %v619, %v618
  %v743 = vpack.c.b16 %v621, %v620
  %v744 = vpack.c.b16 %v623, %v622
  %v745 = vpack.c.b16 %v625, %v624
  %v746 = vpack.c.b16 %v627, %v626
  %v747 = vpack.c.b16 %v629, %v628
  %v748 = vpack.c.b16 %v631, %v630
  %v749 = vpack.c.b16 %v633, %v632
  %v750 = vpack.c.b16 %v635, %v634
  %v751 = vpack.c.b16 %v637, %v636
  %v752 = vpack.c.b16 %v639, %v638
  %v753 = vpack.c.b16 %v641, %v640
  %v754 = vpack.c.b16 %v643, %v642
  %v755 = vpack.c.b16 %v645, %v644
  %v756 = vpack.c.b16 %v647, %v646
  %v757 = vpack.c.b16 %v649, %v648
  %v758 = vpack.c.b16 %v651, %v650
  %v759 = vpack.c.b16 %v653, %v652
  %v760 = vpack.c.b16 %v655, %v654
  %v761 = vpack.c.b16 %v657, %v656
  %v762 = vpack.c.b16 %v659, %v658
  %v763 = vpack.c.b16 %v661, %v660
  %v764 = vpack.c.b16 %v663, %v662
  %v765 = vpack.c.b16 %v665, %v664
  %v766 = vpack.c.b16 %v667, %v666
  %v767 = vpack.c.b16 %v669, %v668
  %v768 = vpack.c.b16 %v671, %v670
  %v769 = vpack.c.b16 %v673, %v672
  %v770 = vpack.c.b16 %v675, %v674
  %v771 = vpack.c.b16 %v677, %v676
  %v772 = vpack.c.b16 %v679, %v678
  %v773 = vpack.c.b16 %v681, %v680
  %v774 = vpack.c.b16 %v683, %v682
  %v775 = vpack.c.b16 %v685, %v684
  %v776 = vpack.c.b16 %v687, %v686
  %v777 = vpack.c.b16 %v689, %v688
  %866 = vmatprep.subr.bf16.mxu0 0
  %867 = vmatpush1.bf16.msra.mxu0 %v690
  %868 = vmatprep.subr.bf16.mxu0 0
  %869 = vmatpush1.bf16.msra.mxu0 %v691
  %870 = vmatprep.subr.bf16.mxu0 0
  %871 = vmatpush1.bf16.msra.mxu0 %v692
  %872 = vmatprep.subr.bf16.mxu0 0
  %873 = vmatpush1.bf16.msra.mxu0 %v693
  %874 = vmatprep.subr.bf16.mxu0 0
  %875 = vmatpush1.bf16.msra.mxu0 %v694
  %876 = vmatprep.subr.bf16.mxu0 0
  %877 = vmatpush1.bf16.msra.mxu0 %v695
  %878 = vmatprep.subr.bf16.mxu0 0
  %879 = vmatpush1.bf16.msra.mxu0 %v696
  %880 = vmatprep.subr.bf16.mxu0 0
  %881 = vmatpush1.bf16.msra.mxu0 %v697
  %882 = vmatprep.subr.bf16.mxu0 0
  %883 = vmatpush1.bf16.msra.mxu0 %v698
  %884 = vmatprep.subr.bf16.mxu0 0
  %885 = vmatpush1.bf16.msra.mxu0 %v699
  %886 = vmatprep.subr.bf16.mxu0 0
  %887 = vmatpush1.bf16.msra.mxu0 %v700
  %888 = vmatprep.subr.bf16.mxu0 0
  %889 = vmatpush1.bf16.msra.mxu0 %v701
  %890 = vmatprep.subr.bf16.mxu0 0
  %891 = vmatpush1.bf16.msra.mxu0 %v702
  %892 = vmatprep.subr.bf16.mxu0 0
  %893 = vmatpush1.bf16.msra.mxu0 %v703
  %894 = vmatprep.subr.bf16.mxu0 0
  %895 = vmatpush1.bf16.msra.mxu0 %v704
  %896 = vmatprep.subr.bf16.mxu0 0
  %897 = vmatpush1.bf16.msra.mxu0 %v705
  %898 = vmatprep.mubr.bf16.mxu0 %v295
  %899 = vmatmul.mubr.bf16.gmra.mrb[0].mxu0 %v294
  %v900 = vpop.f32.mrb[0].mxu0
  %v901 = vadd.f32 0.0, %v900
  %v902 = vpop.f32.mrb[0].mxu0
  %v903 = vpop.f32.mrb[0].mxu0
  %v904 = vadd.f32 0.0, %v903
  %v905 = vpop.f32.mrb[0].mxu0
  %906 = vmatprep.mubr.bf16.mxu0 %v306
  %907 = vmatmul.mubr.bf16.gmra.mrb[0].mxu0 %v305
  %v908 = vpop.f32.mrb[0].mxu0
  %v909 = vadd.f32 0.0, %v908
  %v910 = vpop.f32.mrb[0].mxu0
  %v911 = vpop.f32.mrb[0].mxu0
  %v912 = vadd.f32 0.0, %v911
  %v913 = vpop.f32.mrb[0].mxu0
  %914 = vdwg.mxu0
  %915 = vmatprep.subr.bf16.mxu0 0
  %916 = vmatpush1.bf16.msra.mxu0 %v706
  %917 = vmatprep.subr.bf16.mxu0 0
  %918 = vmatpush1.bf16.msra.mxu0 %v707
  %919 = vmatprep.subr.bf16.mxu0 0
  %920 = vmatpush1.bf16.msra.mxu0 %v708
  %921 = vmatprep.subr.bf16.mxu0 0
  %922 = vmatpush1.bf16.msra.mxu0 %v709
  %923 = vmatprep.subr.bf16.mxu0 0
  %924 = vmatpush1.bf16.msra.mxu0 %v710
  %925 = vmatprep.subr.bf16.mxu0 0
  %926 = vmatpush1.bf16.msra.mxu0 %v711
  %927 = vmatprep.subr.bf16.mxu0 0
  %928 = vmatpush1.bf16.msra.mxu0 %v712
  %929 = vmatprep.subr.bf16.mxu0 0
  %930 = vmatpush1.bf16.msra.mxu0 %v713
  %931 = vmatprep.subr.bf16.mxu0 0
  %932 = vmatpush1.bf16.msra.mxu0 %v714
  %933 = vmatprep.subr.bf16.mxu0 0
  %934 = vmatpush1.bf16.msra.mxu0 %v715
  %935 = vmatprep.subr.bf16.mxu0 0
  %936 = vmatpush1.bf16.msra.mxu0 %v716
  %937 = vmatprep.subr.bf16.mxu0 0
  %938 = vmatpush1.bf16.msra.mxu0 %v717
  %939 = vmatprep.subr.bf16.mxu0 0
  %940 = vmatpush1.bf16.msra.mxu0 %v718
  %941 = vmatprep.subr.bf16.mxu0 0
  %942 = vmatpush1.bf16.msra.mxu0 %v719
  %943 = vmatprep.subr.bf16.mxu0 0
  %944 = vmatpush1.bf16.msra.mxu0 %v720
  %945 = vmatprep.subr.bf16.mxu0 0
  %946 = vmatpush1.bf16.msra.mxu0 %v721
  %947 = vmatprep.mubr.bf16.mxu0 %v297
  %948 = vmatmul.mubr.bf16.gmra.mrb[0].mxu0 %v296
  %v949 = vpop.f32.mrb[0].mxu0
  %v950 = vadd.f32 %v901, %v949
  %v951 = vpop.f32.mrb[0].mxu0
  %v952 = vpop.f32.mrb[0].mxu0
  %v953 = vadd.f32 %v904, %v952
  %v954 = vpop.f32.mrb[0].mxu0
  %955 = vmatprep.mubr.bf16.mxu0 %v308
  %956 = vmatmul.mubr.bf16.gmra.mrb[0].mxu0 %v307
  %v957 = vpop.f32.mrb[0].mxu0
  %v958 = vadd.f32 %v909, %v957
  %v959 = vpop.f32.mrb[0].mxu0
  %v960 = vpop.f32.mrb[0].mxu0
  %v961 = vadd.f32 %v912, %v960
  %v962 = vpop.f32.mrb[0].mxu0
  %963 = vdwg.mxu0
  %964 = vmatprep.subr.bf16.mxu0 0
  %965 = vmatpush1.bf16.msra.mxu0 %v722
  %966 = vmatprep.subr.bf16.mxu0 0
  %967 = vmatpush1.bf16.msra.mxu0 %v723
  %968 = vmatprep.subr.bf16.mxu0 0
  %969 = vmatpush1.bf16.msra.mxu0 %v724
  %970 = vmatprep.subr.bf16.mxu0 0
  %971 = vmatpush1.bf16.msra.mxu0 %v725
  %972 = vmatprep.subr.bf16.mxu0 0
  %973 = vmatpush1.bf16.msra.mxu0 %v726
  %974 = vmatprep.subr.bf16.mxu0 0
  %975 = vmatpush1.bf16.msra.mxu0 %v727
  %976 = vmatprep.subr.bf16.mxu0 0
  %977 = vmatpush1.bf16.msra.mxu0 %v728
  %978 = vmatprep.subr.bf16.mxu0 0
  %979 = vmatpush1.bf16.msra.mxu0 %v729
  %980 = vmatprep.subr.bf16.mxu0 0
  %981 = vmatpush1.bf16.msra.mxu0 %v730
  %982 = vmatprep.subr.bf16.mxu0 0
  %983 = vmatpush1.bf16.msra.mxu0 %v731
  %984 = vmatprep.subr.bf16.mxu0 0
  %985 = vmatpush1.bf16.msra.mxu0 %v732
  %986 = vmatprep.subr.bf16.mxu0 0
  %987 = vmatpush1.bf16.msra.mxu0 %v733
  %988 = vmatprep.subr.bf16.mxu0 0
  %989 = vmatpush1.bf16.msra.mxu0 %v734
  %990 = vmatprep.subr.bf16.mxu0 0
  %991 = vmatpush1.bf16.msra.mxu0 %v735
  %992 = vmatprep.subr.bf16.mxu0 0
  %993 = vmatpush1.bf16.msra.mxu0 %v736
  %994 = vmatprep.subr.bf16.mxu0 0
  %995 = vmatpush1.bf16.msra.mxu0 %v737
  %996 = vmatprep.mubr.bf16.mxu0 %v299
  %997 = vmatmul.mubr.bf16.gmra.mrb[0].mxu0 %v298
  %v998 = vpop.f32.mrb[0].mxu0
  %v999 = vadd.f32 %v950, %v998
  %v1000 = vpop.f32.mrb[0].mxu0
  %v1001 = vpop.f32.mrb[0].mxu0
  %v1002 = vadd.f32 %v953, %v1001
  %v1003 = vpop.f32.mrb[0].mxu0
  %1004 = vmatprep.mubr.bf16.mxu0 %v310
  %1005 = vmatmul.mubr.bf16.gmra.mrb[0].mxu0 %v309
  %v1006 = vpop.f32.mrb[0].mxu0
  %v1007 = vadd.f32 %v958, %v1006
  %v1008 = vpop.f32.mrb[0].mxu0
  %v1009 = vpop.f32.mrb[0].mxu0
  %v1010 = vadd.f32 %v961, %v1009
  %v1011 = vpop.f32.mrb[0].mxu0
  %1012 = vdwg.mxu0
  %1013 = vmatprep.subr.bf16.mxu0 0
  %1014 = vmatpush1.bf16.msra.mxu0 %v738
  %1015 = vmatprep.subr.bf16.mxu0 0
  %1016 = vmatpush1.bf16.msra.mxu0 %v739
  %1017 = vmatprep.subr.bf16.mxu0 0
  %1018 = vmatpush1.bf16.msra.mxu0 %v740
  %1019 = vmatprep.subr.bf16.mxu0 0
  %1020 = vmatpush1.bf16.msra.mxu0 %v741
  %1021 = vmatprep.subr.bf16.mxu0 0
  %1022 = vmatpush1.bf16.msra.mxu0 %v742
  %1023 = vmatprep.subr.bf16.mxu0 0
  %1024 = vmatpush1.bf16.msra.mxu0 %v743
  %1025 = vmatprep.subr.bf16.mxu0 0
  %1026 = vmatpush1.bf16.msra.mxu0 %v744
  %1027 = vmatprep.subr.bf16.mxu0 0
  %1028 = vmatpush1.bf16.msra.mxu0 %v745
  %1029 = vmatprep.subr.bf16.mxu0 0
  %1030 = vmatpush1.bf16.msra.mxu0 %v746
  %1031 = vmatprep.subr.bf16.mxu0 0
  %1032 = vmatpush1.bf16.msra.mxu0 %v747
  %1033 = vmatprep.subr.bf16.mxu0 0
  %1034 = vmatpush1.bf16.msra.mxu0 %v748
  %1035 = vmatprep.subr.bf16.mxu0 0
  %1036 = vmatpush1.bf16.msra.mxu0 %v749
  %1037 = vmatprep.subr.bf16.mxu0 0
  %1038 = vmatpush1.bf16.msra.mxu0 %v750
  %1039 = vmatprep.subr.bf16.mxu0 0
  %1040 = vmatpush1.bf16.msra.mxu0 %v751
  %1041 = vmatprep.subr.bf16.mxu0 0
  %1042 = vmatpush1.bf16.msra.mxu0 %v752
  %1043 = vmatprep.subr.bf16.mxu0 0
  %1044 = vmatpush1.bf16.msra.mxu0 %v753
  %1045 = vmatprep.mubr.bf16.mxu0 %v301
  %1046 = vmatmul.mubr.bf16.gmra.mrb[0].mxu0 %v300
  %v1047 = vpop.f32.mrb[0].mxu0
  %v1048 = vadd.f32 %v999, %v1047
  %v1049 = vpop.f32.mrb[0].mxu0
  %v1050 = vpop.f32.mrb[0].mxu0
  %v1051 = vadd.f32 %v1002, %v1050
  %v1052 = vpop.f32.mrb[0].mxu0
  %1053 = vmatprep.mubr.bf16.mxu0 %v312
  %1054 = vmatmul.mubr.bf16.gmra.mrb[0].mxu0 %v311
  %v1055 = vpop.f32.mrb[0].mxu0
  %v1056 = vadd.f32 %v1007, %v1055
  %v1057 = vpop.f32.mrb[0].mxu0
  %v1058 = vpop.f32.mrb[0].mxu0
  %v1059 = vadd.f32 %v1010, %v1058
  %v1060 = vpop.f32.mrb[0].mxu0
  %1061 = vdwg.mxu0
  %1062 = vmatprep.subr.bf16.mxu0 0
  %1063 = vmatpush1.bf16.msra.mxu0 %v754
  %1064 = vmatprep.subr.bf16.mxu0 0
  %1065 = vmatpush1.bf16.msra.mxu0 %v755
  %1066 = vmatprep.subr.bf16.mxu0 0
  %1067 = vmatpush1.bf16.msra.mxu0 %v756
  %1068 = vmatprep.subr.bf16.mxu0 0
  %1069 = vmatpush1.bf16.msra.mxu0 %v757
  %1070 = vmatprep.subr.bf16.mxu0 0
  %1071 = vmatpush1.bf16.msra.mxu0 %v758
  %1072 = vmatprep.subr.bf16.mxu0 0
  %1073 = vmatpush1.bf16.msra.mxu0 %v759
  %1074 = vmatprep.subr.bf16.mxu0 0
  %1075 = vmatpush1.bf16.msra.mxu0 %v760
  %1076 = vmatprep.subr.bf16.mxu0 0
  %1077 = vmatpush1.bf16.msra.mxu0 %v761
  %1078 = vmatprep.subr.bf16.mxu0 0
  %1079 = vmatpush1.bf16.msra.mxu0 %v762
  %1080 = vmatprep.subr.bf16.mxu0 0
  %1081 = vmatpush1.bf16.msra.mxu0 %v763
  %1082 = vmatprep.subr.bf16.mxu0 0
  %1083 = vmatpush1.bf16.msra.mxu0 %v764
  %1084 = vmatprep.subr.bf16.mxu0 0
  %1085 = vmatpush1.bf16.msra.mxu0 %v765
  %1086 = vmatprep.subr.bf16.mxu0 0
  %1087 = vmatpush1.bf16.msra.mxu0 %v766
  %1088 = vmatprep.subr.bf16.mxu0 0
  %1089 = vmatpush1.bf16.msra.mxu0 %v767
  %1090 = vmatprep.subr.bf16.mxu0 0
  %1091 = vmatpush1.bf16.msra.mxu0 %v768
  %1092 = vmatprep.subr.bf16.mxu0 0
  %1093 = vmatpush1.bf16.msra.mxu0 %v769
  %1094 = vmatprep.mubr.bf16.mxu0 %v303
  %1095 = vmatmul.mubr.bf16.gmra.mrb[0].mxu0 %v302
  %v1096 = vpop.f32.mrb[0].mxu0
  %v1097 = vadd.f32 %v1048, %v1096
  %v1098 = vpop.f32.mrb[0].mxu0
  %v1099 = vpop.f32.mrb[0].mxu0
  %v1100 = vadd.f32 %v1051, %v1099
  %v1101 = vpop.f32.mrb[0].mxu0
  %1102 = vmatprep.mubr.bf16.mxu0 %v314
  %1103 = vmatmul.mubr.bf16.gmra.mrb[0].mxu0 %v313
  %v1104 = vpop.f32.mrb[0].mxu0
  %v1105 = vadd.f32 %v1056, %v1104
  %v1106 = vpop.f32.mrb[0].mxu0
  %v1107 = vpop.f32.mrb[0].mxu0
  %v1108 = vadd.f32 %v1059, %v1107
  %v1109 = vpop.f32.mrb[0].mxu0
  %1110 = vdwg.mxu0
  %1111 = vmatprep.subr.bf16.mxu0 0
  %1112 = vmatpush1.bf16.msra.mxu0 %v770
  %1113 = vmatprep.subr.bf16.mxu0 0
  %1114 = vmatpush1.bf16.msra.mxu0 %v771
  %1115 = vmatprep.subr.bf16.mxu0 0
  %1116 = vmatpush1.bf16.msra.mxu0 %v772
  %1117 = vmatprep.subr.bf16.mxu0 0
  %1118 = vmatpush1.bf16.msra.mxu0 %v773
  %1119 = vmatprep.subr.bf16.mxu0 0
  %1120 = vmatpush1.bf16.msra.mxu0 %v774
  %1121 = vmatprep.subr.bf16.mxu0 0
  %1122 = vmatpush1.bf16.msra.mxu0 %v775
  %1123 = vmatprep.subr.bf16.mxu0 0
  %1124 = vmatpush1.bf16.msra.mxu0 %v776
  %1125 = vmatprep.subr.bf16.mxu0 0
  %1126 = vmatpush1.bf16.msra.mxu0 %v777
  %1127 = vmatprep.subr.bf16.mxu0 0
  %1128 = vmatpush1.bf16.msra.mxu0 0
  %1129 = vmatprep.subr.bf16.mxu0 0
  %1130 = vmatpush1.bf16.msra.mxu0 0
  %1131 = vmatprep.subr.bf16.mxu0 0
  %1132 = vmatpush1.bf16.msra.mxu0 0
  %1133 = vmatprep.subr.bf16.mxu0 0
  %1134 = vmatpush1.bf16.msra.mxu0 0
  %1135 = vmatprep.subr.bf16.mxu0 0
  %1136 = vmatpush1.bf16.msra.mxu0 0
  %1137 = vmatprep.subr.bf16.mxu0 0
  %1138 = vmatpush1.bf16.msra.mxu0 0
  %1139 = vmatprep.subr.bf16.mxu0 0
  %1140 = vmatpush1.bf16.msra.mxu0 0
  %1141 = vmatprep.subr.bf16.mxu0 0
  %1142 = vmatpush1.bf16.msra.mxu0 0
  %1143 = vmatprep.mubr.bf16.mxu0 0
  %1144 = vmatmul.mubr.bf16.gmra.mrb[0].mxu0 %v304
  %v1145 = vpop.f32.mrb[0].mxu0
  %v1146 = vadd.f32 %v1097, %v1145
  %v1147 = vpop.f32.mrb[0].mxu0
  %v1148 = vpop.f32.mrb[0].mxu0
  %v1149 = vadd.f32 %v1100, %v1148
  %v1150 = vpop.f32.mrb[0].mxu0
  %1151 = vmatprep.mubr.bf16.mxu0 0
  %1152 = vmatmul.mubr.bf16.gmra.mrb[0].mxu0 %v315
  %v1153 = vpop.f32.mrb[0].mxu0
  %v1154 = vadd.f32 %v1105, %v1153
  %v1155 = vpop.f32.mrb[0].mxu0
  %v1156 = vpop.f32.mrb[0].mxu0
  %v1157 = vadd.f32 %v1108, %v1156
  %v1158 = vpop.f32.mrb[0].mxu0
  %1159 = vdwg.mxu0
  %v1160 = vadd.f32 %v1146, %v1149
  %v1161 = vadd.f32 %v1160, %v1154
  %v1162 = vadd.f32 %v1161, %v1157
  %v1163 = vrot.slane %v1162, 4
  %v1164 = vadd.f32 %v1162, %v1163
  %v1165 = vrot.slane %v1164, 2
  %v1166 = vadd.f32 %v1164, %v1165
  %v1167 = vrot.slane %v1166, 1
  %v1168 = vadd.f32 %v1166, %v1167
  %v1169 = vmul.f32 %v1168, 0.03125
  %v1170 = vmul.f32 %v1146, %v1146
  %v1171 = vmul.f32 %v1149, %v1149
  %v1172 = vmul.f32 %v1154, %v1154
  %v1173 = vmul.f32 %v1157, %v1157
  %v1174 = vadd.f32 %v1170, %v1171
  %v1175 = vadd.f32 %v1174, %v1172
  %v1176 = vadd.f32 %v1175, %v1173
  %v1177 = vrot.slane %v1176, 4
  %v1178 = vadd.f32 %v1176, %v1177
  %v1179 = vrot.slane %v1178, 2
  %v1180 = vadd.f32 %v1178, %v1179
  %v1181 = vrot.slane %v1180, 1
  %v1182 = vadd.f32 %v1180, %v1181
  %v1183 = vmul.f32 %v1182, 0.03125
  %v1184 = vmul.f32 %v1169, %v1169
  %v1185 = vsub.f32 %v1183, %v1184
  %v1186 = vmax.f32 %v1185, 0.0
  %v1187 = vld [vmem:[%s2] sm:$0x1]
  %v1188 = vadd.f32 %v1186, 1e-05
  %v1189 = vrsqrt.pop %v1188
  %v1190 = vmul.f32 %v1187, %v1189
  %v1191 = vld [vmem:[%s3] sm:$0x1]
  %v1192 = vmul.f32 %v1169, %v1190
  %v1193 = vsub.f32 %v1191, %v1192
  %v1195 = vlaneseq
  %v1196 = vshrl.u32 %v1195, 7
  %v1197 = vsub.s32 0, %v1196
  %v1198 = vrot.slane %v1190, %v1197
  %v1200 = vmul.f32 %v1146, %v1198
  %v1201 = vmul.f32 %v1149, %v1198
  %v1202 = vmul.f32 %v1154, %v1198
  %v1203 = vmul.f32 %v1157, %v1198
  %v1205 = vlaneseq
  %v1206 = vshrl.u32 %v1205, 7
  %v1207 = vsub.s32 0, %v1206
  %v1208 = vrot.slane %v1193, %v1207
  %v1210 = vadd.f32 %v1200, %v1208
  %v1211 = vadd.f32 %v1201, %v1208
  %v1212 = vadd.f32 %v1202, %v1208
  %v1213 = vadd.f32 %v1203, %v1208
  %vm1214 = vcmp.gt.f32.partialorder %v1210, 0.0
  %vm1215 = vcmp.gt.f32.partialorder %v1211, 0.0
  %vm1216 = vcmp.gt.f32.partialorder %v1212, 0.0
  %vm1217 = vcmp.gt.f32.partialorder %v1213, 0.0
  %v1218 = vmul.f32 %v1210, 0.2
  %v1219 = vmul.f32 %v1211, 0.2
  %v1220 = vmul.f32 %v1212, 0.2
  %v1221 = vmul.f32 %v1213, 0.2
  %v1222 = vsel %vm1214, %v1210, %v1218
  %v1223 = vsel %vm1215, %v1211, %v1219
  %v1224 = vsel %vm1216, %v1212, %v1220
  %v1225 = vsel %vm1217, %v1213, %v1221
  %v1226 = vld [vmem:[%s4] sm:$0xff]
  %v1227 = vld [vmem:[%s4 + $0x8] sm:$0xff]
  %v1228 = vmul.f32 %v1222, %v1226
  %v1229 = vmul.f32 %v1223, %v1227
  %v1230 = vmul.f32 %v1224, %v1226
  %v1231 = vmul.f32 %v1225, %v1227
  %1232 = vadd.xlane.f32.xlu0 %v1228
  %v1233 = vpop.xlane.xlu0 %1232
  %1234 = vadd.xlane.f32.xlu0 %v1229
  %v1235 = vpop.xlane.xlu0 %1234
  %1236 = vadd.xlane.f32.xlu0 %v1230
  %v1237 = vpop.xlane.xlu0 %1236
  %1238 = vadd.xlane.f32.xlu0 %v1231
  %v1239 = vpop.xlane.xlu0 %1238
  %v1244 = vlaneseq
  %v1245 = vand.u32 %v1244, 127
  %v1246 = vlaneseq
  %v1247 = vshrl.u32 %v1246, 7
  %v1248 = vsub.s32 %v1245, %v1247
  %v1249 = vrot.slane %v1233, %v1248
  %v1250 = vadd.s32 %v1245, 4294967288
  %v1251 = vlaneseq
  %v1252 = vshrl.u32 %v1251, 7
  %v1253 = vsub.s32 %v1250, %v1252
  %v1254 = vrot.slane %v1235, %v1253
  %vm1255 = vcmask 130112
  %v1256 = vsel %vm1255, %v1254, %v1249
  %v1257 = vlaneseq
  %v1258 = vshrl.u32 %v1257, 7
  %v1259 = vsub.s32 %v1245, %v1258
  %v1260 = vrot.slane %v1237, %v1259
  %v1261 = vlaneseq
  %v1262 = vshrl.u32 %v1261, 7
  %v1263 = vsub.s32 %v1250, %v1262
  %v1264 = vrot.slane %v1239, %v1263
  %v1265 = vsel %vm1255, %v1264, %v1260
  %vm1266 = vcmask 1041409
  %v1267 = vsel %vm1266, %v1265, %v1256
  %vm1269 = vcmask 123904
  %v1270 = vsel %vm1269, %v1267, 0.0
  %1271 = vadd.xlane.f32.xlu0 %v1270
  %v1272 = vpop.xlane.xlu0 %1271
  %v1273 = vld [vmem:[#allocation2] sm:$0x1]
  %v1275 = vlaneseq
  %v1276 = vshrl.u32 %v1275, 7
  %v1277 = vsub.s32 0, %v1276
  %v1278 = vrot.slane %v1273, %v1277
  %v1280 = vadd.f32 %v1272, %v1278
  %v1281 = vxor.u32 %v1280, 2147483648
  %v1282 = vmul.f32 %v1281, 1.442695
  %v1283 = vpow.pop %v1282
  %v1284 = vadd.f32 %v1283, 1.0
  %v1285 = vrcp.pop %v1284
  %v1286 = vmul.f32 1.0, %v1285
  %vm1287 = vcmask 1024
  %1288 = vst.msk [vmem:[%s6] sm:$0x3] %vm1287, %v1286
  // Predicated region
  $region26: #{discriminator64.7} parent=0 // pred_check
    _
  $region27: #{discriminator64.7} parent=0 // pred_check_branch
    %1290 = sbr.rel (0) target = $region29
  $region28: #{discriminator64.7} parent=0 // pred_region
    _
  $region29: #{discriminator64.7} parent=0 // pred_fallthru
    _
  // Predicated region
  $region30: #{discriminator64.7} parent=0 // pred_check
    _
  $region31: #{discriminator64.7} parent=0 // pred_check_branch
    %1292 = sbr.rel (0) target = $region33
  $region32: #{discriminator64.7} parent=0 // pred_region
    _
  $region33: #{discriminator64.7} parent=0 // pred_fallthru
    _

</llo_original>
